<compile_context>
chip_gen: v7x
topology: tpu7x:2x2x1
jax: 0.10.0
libtpu: 0.0.40
codegen_flags: <defaults>
</compile_context>

<pallas_src>
import functools

import jax
import jax.numpy as jnp
import numpy as np
from jax.experimental import pallas as pl
from jax.experimental.pallas import tpu as pltpu

_VMEM_LIMIT = 32 * 1024 * 1024   # safe on v5e/v6e/v7x; raise on v5e/v6e if needed


def _pick_tile(n, cap):
    """Largest divisor of n that is <= cap and sublane aligned (multiple of 8).
    Falls back to n itself (a full-extent block is always legal — correct but
    unpipelined for awkward/odd n)."""
    best = None
    for d in range(1, min(n, cap) + 1):
        if n % d == 0 and d % 8 == 0:
            best = d
    return best if best is not None else n


# ---------------------------------------------------------------------------
# One-time parameter preparation (folding / packing), hoisted out of forward.
# ---------------------------------------------------------------------------
def prepare_params(p):
    C = p["conv_w"].shape[2]
    scale = p["bn_gamma"] * jax.lax.rsqrt(p["bn_var"] + 1e-5)          # (1, C)
    shift = p["bn_beta"] + (p["conv_b"] - p["bn_mean"]) * scale        # (1, C)
    conv_w_fold = (p["conv_w"] * scale[0]).reshape(-1)                 # (9*C,)

    H = p["whh_f"].shape[0]
    G = 3 * H
    wih_cat = jnp.concatenate([p["wih_f"], p["wih_b"]], axis=1)        # (F, 6H) bf16
    bih_cat = jnp.concatenate([p["bih_f"], p["bih_b"]], axis=1)        # (1, 6H)
    whh_cat = jnp.zeros((2 * H, 2 * G), jnp.bfloat16)                  # block-diag
    whh_cat = whh_cat.at[:H, :G].set(p["whh_f"])
    whh_cat = whh_cat.at[H:, G:].set(p["whh_b"])
    bhh_cat = jnp.concatenate([p["bhh_f"], p["bhh_b"]], axis=1)        # (1, 6H)

    V = p["cls_w"].shape[1]
    Vp = pl.cdiv(V, 128) * 128
    cls_w_pad = jnp.zeros((2 * H, Vp), p["cls_w"].dtype).at[:, :V].set(p["cls_w"])
    cls_b_pad = jnp.zeros((1, Vp), jnp.float32).at[:, :V].set(p["cls_b"])

    return dict(conv_w_fold=conv_w_fold, conv_shift=shift[0],
                wih_cat=wih_cat, bih_cat=bih_cat,
                whh_cat=whh_cat, bhh_cat=bhh_cat,
                cls_w_pad=cls_w_pad, cls_b_pad=cls_b_pad,
                cls_b=p["cls_b"])        # unpadded bias kept as static V carrier


# ---------------------------------------------------------------------------
# Kernel 1: Conv2d(1->32,k3,p1) + BN(eval, folded) + ReLU + MaxPool2d((2,1)).
#           Tiled over (batch, time tile); emits (B, T, F) bf16 with
#           F = 32*(n_mels//2), feature index f = c*(n_mels//2) + h.
# ---------------------------------------------------------------------------
def _conv_bn_relu_pool_kernel(xt_ref, w_ref, shift_ref, o_ref):
    # xt_ref   : (1, 1, H+2, tt+2) VMEM f32  halo'd window for (batch b, tile i)
    # w_ref    : (9*C,) SMEM f32             BN-scale-folded conv weights,
    #                                        index (dh*3 + dw)*C + c
    # shift_ref: (C,)   SMEM f32             beta + (conv_bias - mean) * scale
    # o_ref    : (1, tt, F) VMEM bf16
    H = xt_ref.shape[2] - 2
    tt = xt_ref.shape[3] - 2
    C = shift_ref.shape[0]
    xp = xt_ref[0, 0]                                     # (H+2, tt+2)
    taps = [(dh, dw) for dh in range(3) for dw in range(3)]
    feats = []
    for c in range(C):                                    # static channel loop:
        acc = w_ref[c] * xp[0:H, 0:tt]                    # only (H, tt) live
        for dh, dw in taps[1:]:
            acc = acc + w_ref[(dh * 3 + dw) * C + c] * xp[dh:dh + H, dw:dw + tt]
        y = jnp.maximum(acc + shift_ref[c], 0.0)          # fused bias/BN + ReLU
        feats.append(jnp.max(y.reshape(H // 2, 2, tt), axis=1))   # MaxPool(2,1)
    feat = jnp.concatenate(feats, axis=0)                 # (F, tt)
    o_ref[0] = jnp.transpose(feat, (1, 0)).astype(o_ref.dtype)    # lane-dense


def conv_bn_relu_pool(x_nhw, conv_w_fold, conv_shift, *, t_cap=256):
    B, Hm, T = x_nhw.shape
    C = conv_shift.shape[0]
    F = C * (Hm // 2)
    tt = _pick_tile(T, t_cap)
    nT = T // tt
    xp = jnp.pad(x_nhw, ((0, 0), (1, 1), (1, 1)))         # (B, Hm+2, T+2)
    # Overlapping (halo=2) time windows, built once in XLA; input is the
    # smallest tensor in the pipeline so this extra copy is negligible.
    xt = jnp.stack([xp[:, :, i * tt:i * tt + tt + 2] for i in range(nT)], axis=1)
    return pl.pallas_call(
        _conv_bn_relu_pool_kernel,
        out_shape=jax.ShapeDtypeStruct((B, T, F), jnp.bfloat16),
        grid=(B, nT),
        in_specs=[
            pl.BlockSpec((1, 1, Hm + 2, tt + 2), lambda b, i: (b, i, 0, 0)),
            pl.BlockSpec(memory_space=pltpu.MemorySpace.SMEM),
            pl.BlockSpec(memory_space=pltpu.MemorySpace.SMEM),
        ],
        out_specs=pl.BlockSpec((1, tt, F), lambda b, i: (b, i, 0)),
        compiler_params=pltpu.CompilerParams(
            dimension_semantics=("parallel", "parallel"),
            vmem_limit_bytes=_VMEM_LIMIT),
    )(xt, conv_w_fold, conv_shift)


# ---------------------------------------------------------------------------
# Kernel 2: hoisted GRU input projection, both directions fused into one
#           (B*tt, F) @ (F, 6H) matmul; emits gates time-major (T, B, 3H) bf16.
# ---------------------------------------------------------------------------
def _gru_input_proj_kernel(x_ref, w_ref, b_ref, gif_ref, gib_ref):
    # x_ref : (B, tt, F) bf16 ; w_ref: (F, 6H) bf16 ; b_ref: (1, 6H) f32
    # gif/gib : (tt, B, 3H) bf16
    B, tt, F = x_ref.shape
    G = w_ref.shape[1] // 2
    x = x_ref[...].reshape(B * tt, F)
    g = jnp.dot(x, w_ref[...], preferred_element_type=jnp.float32) + b_ref[...]
    gt = jnp.transpose(g.reshape(B, tt, 2 * G), (1, 0, 2))   # (tt, B, 6H), XLU
    gif_ref[...] = gt[:, :, :G].astype(gif_ref.dtype)        # full-block stores
    gib_ref[...] = gt[:, :, G:].astype(gib_ref.dtype)


def gru_input_projection(feat_btf, wih_cat, bih_cat, *, t_cap=256):
    B, T, F = feat_btf.shape
    G = wih_cat.shape[1] // 2            # 3 * hidden
    tt = _pick_tile(T, t_cap)
    nT = T // tt
    return pl.pallas_call(
        _gru_input_proj_kernel,
        out_shape=(jax.ShapeDtypeStruct((T, B, G), jnp.bfloat16),
                   jax.ShapeDtypeStruct((T, B, G), jnp.bfloat16)),
        grid=(nT,),
        in_specs=[
            pl.BlockSpec((B, tt, F), lambda i: (0, i, 0)),
            pl.BlockSpec((F, 2 * G), lambda i: (0, 0)),
            pl.BlockSpec((1, 2 * G), lambda i: (0, 0)),
        ],
        out_specs=(pl.BlockSpec((tt, B, G), lambda i: (i, 0, 0)),
                   pl.BlockSpec((tt, B, G), lambda i: (i, 0, 0))),
        compiler_params=pltpu.CompilerParams(
            dimension_semantics=("parallel",),
            vmem_limit_bytes=_VMEM_LIMIT),
    )(feat_btf, wih_cat, bih_cat)


# ---------------------------------------------------------------------------
# Kernel 3: bidirectional GRU recurrence (PyTorch gate order r, z, n).
#           Grid over T-tiles ("arbitrary"); h_fwd|h_bwd carried as one (B, 2H)
#           VMEM scratch; one block-diagonal recurrent matmul per timestep.
#           Backward direction reads/writes tile nT-1-i via reversed index_maps.
# ---------------------------------------------------------------------------
def _bigru_kernel(gif_ref, gib_ref, whh_ref, bhh_ref, of_ref, ob_ref, h_scr):
    H = of_ref.shape[2]
    tt = gif_ref.shape[0]

    @pl.when(pl.program_id(0) == 0)
    def _():
        h_scr[...] = jnp.zeros_like(h_scr)

    def gates(gi, gh_d, h_d):
        r = jax.nn.sigmoid(gi[:, 0:H] + gh_d[:, 0:H])
        z = jax.nn.sigmoid(gi[:, H:2 * H] + gh_d[:, H:2 * H])
        n = jnp.tanh(gi[:, 2 * H:3 * H] + r * gh_d[:, 2 * H:3 * H])
        return (1.0 - z) * n + z * h_d

    def step(j, carry):
        h_cat = h_scr[...]                                        # (B, 2H) f32
        # Single fused recurrent matmul for both directions (block-diag weights).
        gh = jnp.dot(h_cat.astype(jnp.bfloat16), whh_ref[...],
                     preferred_element_type=jnp.float32) + bhh_ref[...]  # (B,6H)
        jb = tt - 1 - j
        gif = gif_ref[j].astype(jnp.float32)                      # fwd, time asc
        gib = gib_ref[jb].astype(jnp.float32)                     # bwd, time desc
        hf = gates(gif, gh[:, :3 * H], h_cat[:, :H])
        hb = gates(gib, gh[:, 3 * H:], h_cat[:, H:])
        h_scr[...] = jnp.concatenate([hf, hb], axis=-1)
        of_ref[j] = hf.astype(of_ref.dtype)
        ob_ref[jb] = hb.astype(ob_ref.dtype)
        return carry

    jax.lax.fori_loop(0, tt, step, 0)


def bigru(gi_f, gi_b, whh_cat, bhh_cat, *, t_cap=256):
    T, B, G = gi_f.shape
    H = whh_cat.shape[0] // 2
    tt = _pick_tile(T, t_cap)
    nT = T // tt
    return pl.pallas_call(
        _bigru_kernel,
        out_shape=(jax.ShapeDtypeStruct((T, B, H), jnp.bfloat16),
                   jax.ShapeDtypeStruct((T, B, H), jnp.bfloat16)),
        grid=(nT,),
        in_specs=[
            pl.BlockSpec((tt, B, G), lambda i: (i, 0, 0)),
            pl.BlockSpec((tt, B, G), lambda i: (nT - 1 - i, 0, 0)),
            pl.BlockSpec((2 * H, 2 * G), lambda i: (0, 0)),
            pl.BlockSpec((1, 2 * G), lambda i: (0, 0)),
        ],
        out_specs=(pl.BlockSpec((tt, B, H), lambda i: (i, 0, 0)),
                   pl.BlockSpec((tt, B, H), lambda i: (nT - 1 - i, 0, 0))),
        scratch_shapes=[pltpu.VMEM((B, 2 * H), jnp.float32)],
        compiler_params=pltpu.CompilerParams(
            dimension_semantics=("arbitrary",),      # h carried across grid steps
            vmem_limit_bytes=_VMEM_LIMIT),
    )(gi_f, gi_b, whh_cat, bhh_cat)


# ---------------------------------------------------------------------------
# Kernel 4: Linear classifier + log_softmax.  Row-tiled over T*B; directions
#           concatenated in-kernel (K = 2H dot); vocab pre-padded to 128 lanes,
#           padded lanes masked with where().
# ---------------------------------------------------------------------------
def _classifier_logsoftmax_kernel(hf_ref, hb_ref, w_ref, b_ref, o_ref, *, valid):
    h = jnp.concatenate([hf_ref[...], hb_ref[...]], axis=-1)       # (tr, 2H) bf16
    logits = (jnp.dot(h, w_ref[...], preferred_element_type=jnp.float32)
              + b_ref[...])                                        # (tr, Vp)
    Vp = logits.shape[-1]
    lane_ok = jax.lax.broadcasted_iota(jnp.int32, (1, Vp), 1) < valid
    logits = jnp.where(lane_ok, logits, -1e30)
    m = jnp.max(logits, axis=-1, keepdims=True)
    lse = jnp.log(jnp.sum(jnp.exp(logits - m), axis=-1, keepdims=True)) + m
    o_ref[...] = logits - lse


def classifier_logsoftmax(h_f, h_b, cls_w_pad, cls_b_pad, vocab, *, row_cap=512):
    N, H = h_f.shape
    Vp = cls_w_pad.shape[1]
    tr = _pick_tile(N, row_cap)
    kern = functools.partial(_classifier_logsoftmax_kernel, valid=vocab)
    logp = pl.pallas_call(
        kern,
        out_shape=jax.ShapeDtypeStruct((N, Vp), jnp.float32),
        grid=(N // tr,),
        in_specs=[
            pl.BlockSpec((tr, H), lambda i: (i, 0)),
            pl.BlockSpec((tr, H), lambda i: (i, 0)),
            pl.BlockSpec((2 * H, Vp), lambda i: (0, 0)),
            pl.BlockSpec((1, Vp), lambda i: (0, 0)),
        ],
        out_specs=pl.BlockSpec((tr, Vp), lambda i: (i, 0)),
        compiler_params=pltpu.CompilerParams(
            dimension_semantics=("parallel",),
            vmem_limit_bytes=_VMEM_LIMIT),
    )(h_f, h_b, cls_w_pad, cls_b_pad)
    return logp[:, :vocab]


# ---------------------------------------------------------------------------
# Full forward pass.
# ---------------------------------------------------------------------------
def asr_forward(prep, x_nchw):
    x = x_nchw[:, 0]                                              # (B, n_mels, T)
    B, _, T = x.shape
    feat = conv_bn_relu_pool(x, prep["conv_w_fold"], prep["conv_shift"])  # (B,T,F) bf16
    gi_f, gi_b = gru_input_projection(feat, prep["wih_cat"], prep["bih_cat"])
    out_f, out_b = bigru(gi_f, gi_b, prep["whh_cat"], prep["bhh_cat"])    # (T,B,H) bf16
    H = prep["whh_cat"].shape[0] // 2
    V = prep["cls_b"].shape[1]
    logp = classifier_logsoftmax(out_f.reshape(T * B, H),
                                 out_b.reshape(T * B, H),
                                 prep["cls_w_pad"], prep["cls_b_pad"], V)  # (T*B, V)
    return jnp.transpose(logp.reshape(T, B, V), (1, 0, 2))                 # (B, T, V)


# ---------------------------------------------------------------------------
# Pure-JAX f32 reference (same math, same bf16-quantized weight values).
# ---------------------------------------------------------------------------
def asr_forward_ref(params, x_nchw):
    f32 = lambda a: a.astype(jnp.float32)
    x = x_nchw[:, 0]
    B, H, T = x.shape
    xp = jnp.pad(x, ((0, 0), (1, 1), (1, 1)))
    w = f32(params["conv_w"])
    C = w.shape[2]
    acc = jnp.zeros((B, H, T, C), jnp.float32)
    for dh in range(3):
        for dw in range(3):
            acc = acc + xp[:, dh:dh + H, dw:dw + T][..., None] * w[dh, dw]
    y = acc + params["conv_b"][0]
    y = (y - params["bn_mean"][0]) * (params["bn_gamma"][0] /
                                      jnp.sqrt(params["bn_var"][0] + 1e-5)) \
        + params["bn_beta"][0]
    y = jnp.maximum(y, 0.0)
    y = y.reshape(B, H // 2, 2, T, C).max(axis=2)            # (B, H//2, T, C)
    seq = jnp.transpose(y, (0, 2, 3, 1)).reshape(B, T, -1)   # (B, T, C*(H//2))

    def gru_dir(x_tm, wih, whh, bih, bhh):
        Hh = whh.shape[0]

        def step(h, x_t):
            gi = x_t @ wih + bih
            gh = h @ whh + bhh
            r = jax.nn.sigmoid(gi[:, :Hh] + gh[:, :Hh])
            z = jax.nn.sigmoid(gi[:, Hh:2 * Hh] + gh[:, Hh:2 * Hh])
            n = jnp.tanh(gi[:, 2 * Hh:] + r * gh[:, 2 * Hh:])
            h_new = (1.0 - z) * n + z * h
            return h_new, h_new

        _, ys = jax.lax.scan(step, jnp.zeros((x_tm.shape[1], Hh), jnp.float32),
                             x_tm)
        return ys

    x_tm = jnp.transpose(seq, (1, 0, 2))
    fwd = gru_dir(x_tm, f32(params["wih_f"]), f32(params["whh_f"]),
                  params["bih_f"], params["bhh_f"])
    bwd = gru_dir(x_tm[::-1], f32(params["wih_b"]), f32(params["whh_b"]),
                  params["bih_b"], params["bhh_b"])[::-1]
    h = jnp.concatenate([fwd, bwd], axis=-1).transpose(1, 0, 2)
    logits = h @ f32(params["cls_w"]) + params["cls_b"][0]
    return jax.nn.log_softmax(logits, axis=-1)


# ---------------------------------------------------------------------------
# Deterministic synthetic parameters (shapes follow the nn.Module __init__).
# ---------------------------------------------------------------------------
def init_params(key, n_mels, hidden, vocab):
    F = 16 * n_mels                      # gru_input_size = 32 * (n_mels // 2)
    ks = jax.random.split(key, 16)

    def nrm(k, shape, s=0.1):
        return (s * jax.random.normal(k, shape)).astype(jnp.float32)

    bf16 = lambda a: a.astype(jnp.bfloat16)
    return dict(
        conv_w=nrm(ks[0], (3, 3, 32)),
        conv_b=nrm(ks[1], (1, 32)),
        bn_gamma=(1.0 + nrm(ks[2], (1, 32))).astype(jnp.float32),
        bn_beta=nrm(ks[3], (1, 32)),
        bn_mean=nrm(ks[4], (1, 32)),
        bn_var=(1.0 + 0.1 * jnp.abs(jax.random.normal(ks[5], (1, 32)))
                ).astype(jnp.float32),
        wih_f=bf16(nrm(ks[6], (F, 3 * hidden))),
        whh_f=bf16(nrm(ks[7], (hidden, 3 * hidden))),
        bih_f=nrm(ks[8], (1, 3 * hidden)),
        bhh_f=nrm(ks[9], (1, 3 * hidden)),
        wih_b=bf16(nrm(ks[10], (F, 3 * hidden))),
        whh_b=bf16(nrm(ks[11], (hidden, 3 * hidden))),
        bih_b=nrm(ks[12], (1, 3 * hidden)),
        bhh_b=nrm(ks[13], (1, 3 * hidden)),
        cls_w=bf16(nrm(ks[14], (2 * hidden, vocab))),
        cls_b=nrm(ks[15], (1, vocab)),
    )


if __name__ == "__main__":
    n_mels, hidden, vocab = 8, 32, 16      # small shapes consistent with module
    B, T = 2, 8
    key = jax.random.PRNGKey(0)
    pkey, xkey = jax.random.split(key)
    params = init_params(pkey, n_mels, hidden, vocab)
    prep = prepare_params(params)                         # one-time weight prep
    x = jax.random.normal(xkey, (B, 1, n_mels, T), jnp.float32)   # NCHW input

    out = jax.jit(asr_forward)(prep, x)
    out = jax.block_until_ready(out)
    assert out.shape == (B, T, vocab)
    assert bool(jnp.all(jnp.isfinite(out)))

    ref = asr_forward_ref(params, x)
    # Loose tolerance: bf16 matmul operands + bf16 HBM intermediates, f32 accum.
    np.testing.assert_allclose(np.asarray(out), np.asarray(ref),
                               rtol=5e-2, atol=5e-2)
    print("KERNEL_OK")
</pallas_src>

<mosaic_0001>
module attributes {stable_mosaic.version = 11 : i64} {
  func.func @_gru_input_proj_kernel(%arg0: i32, %arg1: memref<2x8x128xbf16, #tpu.memory_space<vmem>>, %arg2: memref<128x192xbf16, #tpu.memory_space<vmem>>, %arg3: memref<1x192xf32, #tpu.memory_space<vmem>>, %arg4: memref<8x2x96xbf16, #tpu.memory_space<vmem>>, %arg5: memref<8x2x96xbf16, #tpu.memory_space<vmem>>) attributes {dimension_semantics = [#tpu.dimension_semantics<parallel>], iteration_bounds = array<i64: 1>, scalar_prefetch = 0 : i64, scratch_operands = 0 : i64, tpu.core_type = #tpu.core_type<tc>, window_params = [{transform_indices = @transform_0, window_bounds = array<i64: 2, 8, 128>}, {pipeline_mode = #tpu.pipeline_mode<synchronous>, transform_indices = @transform_1, window_bounds = array<i64: 128, 192>}, {pipeline_mode = #tpu.pipeline_mode<synchronous>, transform_indices = @transform_2, window_bounds = array<i64: 1, 192>}, {transform_indices = @transform_3, window_bounds = array<i64: 8, 2, 96>}, {transform_indices = @transform_4, window_bounds = array<i64: 8, 2, 96>}]} {
    %c0 = arith.constant 0 : index
    %c0_0 = arith.constant 0 : index
    %c0_1 = arith.constant 0 : index
    %0 = vector.load %arg1[%c0, %c0_0, %c0_1] : memref<2x8x128xbf16, #tpu.memory_space<vmem>>, vector<2x8x128xbf16>
    %1 = vector.shape_cast %0 : vector<2x8x128xbf16> to vector<16x128xbf16>
    %c0_2 = arith.constant 0 : index
    %c0_3 = arith.constant 0 : index
    %2 = vector.load %arg2[%c0_2, %c0_3] : memref<128x192xbf16, #tpu.memory_space<vmem>>, vector<128x192xbf16>
    %cst = arith.constant dense<0.000000e+00> : vector<16x192xf32>
    %3 = tpu.matmul %1, %2, %cst {dimension_numbers = #tpu.dot_dimension_numbers<[1], [0], [0], [1], [0, 0, 1, 1], [], []>} : vector<16x128xbf16>, vector<128x192xbf16>, vector<16x192xf32> -> vector<16x192xf32>
    %c0_4 = arith.constant 0 : index
    %c0_5 = arith.constant 0 : index
    %4 = vector.load %arg3[%c0_4, %c0_5] : memref<1x192xf32, #tpu.memory_space<vmem>>, vector<1x192xf32>
    %5 = vector.broadcast %4 : vector<1x192xf32> to vector<16x192xf32>
    %6 = arith.addf %3, %5 : vector<16x192xf32>
    %7 = vector.shape_cast %6 : vector<16x192xf32> to vector<2x8x192xf32>
    %8 = tpu.transpose %7, [1, 0, 2] : vector<2x8x192xf32> -> vector<8x2x192xf32>
    %9 = vector.extract_strided_slice %8 {offsets = [0, 0, 0], sizes = [8, 2, 96], strides = [1, 1, 1]} : vector<8x2x192xf32> to vector<8x2x96xf32>
    %10 = arith.truncf %9 : vector<8x2x96xf32> to vector<8x2x96xbf16>
    %c0_6 = arith.constant 0 : index
    %c0_7 = arith.constant 0 : index
    %c0_8 = arith.constant 0 : index
    %11 = vector.load %arg4[%c0_6, %c0_7, %c0_8] : memref<8x2x96xbf16, #tpu.memory_space<vmem>>, vector<8x2x96xbf16>
    tpu.vector_store %arg4[%c0_6, %c0_7, %c0_8], %10 {strides = array<i32>} : memref<8x2x96xbf16, #tpu.memory_space<vmem>>, vector<8x2x96xbf16>,
    %12 = vector.extract_strided_slice %8 {offsets = [0, 0, 96], sizes = [8, 2, 96], strides = [1, 1, 1]} : vector<8x2x192xf32> to vector<8x2x96xf32>
    %13 = arith.truncf %12 : vector<8x2x96xf32> to vector<8x2x96xbf16>
    %c0_9 = arith.constant 0 : index
    %c0_10 = arith.constant 0 : index
    %c0_11 = arith.constant 0 : index
    %14 = vector.load %arg5[%c0_9, %c0_10, %c0_11] : memref<8x2x96xbf16, #tpu.memory_space<vmem>>, vector<8x2x96xbf16>
    tpu.vector_store %arg5[%c0_9, %c0_10, %c0_11], %13 {strides = array<i32>} : memref<8x2x96xbf16, #tpu.memory_space<vmem>>, vector<8x2x96xbf16>,
    return
  }
  func.func @transform_0(%arg0: i32) -> (i32, i32, i32) {
    %c0_i32 = arith.constant 0 : i32
    %c0_i32_0 = arith.constant 0 : i32
    %c0_i32_1 = arith.constant 0 : i32
    return %c0_i32, %arg0, %c0_i32_0 : i32, i32, i32
  }
  func.func @transform_1(%arg0: i32) -> (i32, i32) {
    %c0_i32 = arith.constant 0 : i32
    %c0_i32_0 = arith.constant 0 : i32
    %c0_i32_1 = arith.constant 0 : i32
    return %c0_i32, %c0_i32_0 : i32, i32
  }
  func.func @transform_2(%arg0: i32) -> (i32, i32) {
    %c0_i32 = arith.constant 0 : i32
    %c0_i32_0 = arith.constant 0 : i32
    %c0_i32_1 = arith.constant 0 : i32
    return %c0_i32, %c0_i32_0 : i32, i32
  }
  func.func @transform_3(%arg0: i32) -> (i32, i32, i32) {
    %c0_i32 = arith.constant 0 : i32
    %c0_i32_0 = arith.constant 0 : i32
    %c0_i32_1 = arith.constant 0 : i32
    return %arg0, %c0_i32, %c0_i32_0 : i32, i32, i32
  }
  func.func @transform_4(%arg0: i32) -> (i32, i32, i32) {
    %c0_i32 = arith.constant 0 : i32
    %c0_i32_0 = arith.constant 0 : i32
    %c0_i32_1 = arith.constant 0 : i32
    return %arg0, %c0_i32, %c0_i32_0 : i32, i32, i32
  }
}

module attributes {stable_mosaic.version = 11 : i64} {
  func.func @_bigru_kernel(%arg0: i32, %arg1: memref<8x2x96xbf16, #tpu.memory_space<vmem>>, %arg2: memref<8x2x96xbf16, #tpu.memory_space<vmem>>, %arg3: memref<64x192xbf16, #tpu.memory_space<vmem>>, %arg4: memref<1x192xf32, #tpu.memory_space<vmem>>, %arg5: memref<8x2x32xbf16, #tpu.memory_space<vmem>>, %arg6: memref<8x2x32xbf16, #tpu.memory_space<vmem>>, %arg7: memref<2x64xf32, #tpu.memory_space<vmem>>) attributes {dimension_semantics = [#tpu.dimension_semantics<arbitrary>], iteration_bounds = array<i64: 1>, scalar_prefetch = 0 : i64, scratch_operands = 1 : i64, tpu.core_type = #tpu.core_type<tc>, window_params = [{transform_indices = @transform_0, window_bounds = array<i64: 8, 2, 96>}, {transform_indices = @transform_1, window_bounds = array<i64: 8, 2, 96>}, {pipeline_mode = #tpu.pipeline_mode<synchronous>, transform_indices = @transform_2, window_bounds = array<i64: 64, 192>}, {pipeline_mode = #tpu.pipeline_mode<synchronous>, transform_indices = @transform_3, window_bounds = array<i64: 1, 192>}, {transform_indices = @transform_4, window_bounds = array<i64: 8, 2, 32>}, {transform_indices = @transform_5, window_bounds = array<i64: 8, 2, 32>}]} {
    %c0_i32 = arith.constant 0 : i32
    %0 = arith.cmpi eq, %arg0, %c0_i32 : i32
    %1 = arith.extui %0 : i1 to i32
    %c0_i32_0 = arith.constant 0 : i32
    %2 = arith.cmpi ne, %1, %c0_i32_0 : i32
    scf.if %2 {
      %cst = arith.constant 0.000000e+00 : f32
      %4 = vector.broadcast %cst : f32 to vector<2x64xf32>
      %c0 = arith.constant 0 : index
      %c0_3 = arith.constant 0 : index
      %5 = vector.load %arg7[%c0, %c0_3] : memref<2x64xf32, #tpu.memory_space<vmem>>, vector<2x64xf32>
      tpu.vector_store %arg7[%c0, %c0_3], %4 {strides = array<i32>} : memref<2x64xf32, #tpu.memory_space<vmem>>, vector<2x64xf32>,
    } else {
    }
    %c0_i32_1 = arith.constant 0 : i32
    %c8_i32 = arith.constant 8 : i32
    %3 = arith.addi %c0_i32_1, %c8_i32 : i32
    %c1_i32 = arith.constant 1 : i32
    scf.for %arg8 = %c0_i32_1 to %3 step %c1_i32  : i32 {
      %c0 = arith.constant 0 : index
      %c0_3 = arith.constant 0 : index
      %4 = vector.load %arg7[%c0, %c0_3] : memref<2x64xf32, #tpu.memory_space<vmem>>, vector<2x64xf32>
      %5 = arith.truncf %4 : vector<2x64xf32> to vector<2x64xbf16>
      %c0_4 = arith.constant 0 : index
      %c0_5 = arith.constant 0 : index
      %6 = vector.load %arg3[%c0_4, %c0_5] : memref<64x192xbf16, #tpu.memory_space<vmem>>, vector<64x192xbf16>
      %cst = arith.constant dense<0.000000e+00> : vector<2x192xf32>
      %7 = tpu.matmul %5, %6, %cst {dimension_numbers = #tpu.dot_dimension_numbers<[1], [0], [0], [1], [0, 0, 1, 1], [], []>} : vector<2x64xbf16>, vector<64x192xbf16>, vector<2x192xf32> -> vector<2x192xf32>
      %c0_6 = arith.constant 0 : index
      %c0_7 = arith.constant 0 : index
      %8 = vector.load %arg4[%c0_6, %c0_7] : memref<1x192xf32, #tpu.memory_space<vmem>>, vector<1x192xf32>
      %9 = vector.broadcast %8 : vector<1x192xf32> to vector<2x192xf32>
      %10 = arith.addf %7, %9 : vector<2x192xf32>
      %c7_i32 = arith.constant 7 : i32
      %11 = arith.subi %c7_i32, %arg8 : i32
      %12 = arith.index_cast %arg8 : i32 to index
      %c0_8 = arith.constant 0 : index
      %c0_9 = arith.constant 0 : index
      %13 = vector.load %arg1[%12, %c0_8, %c0_9] : memref<8x2x96xbf16, #tpu.memory_space<vmem>>, vector<1x2x96xbf16>
      %14 = vector.shape_cast %13 : vector<1x2x96xbf16> to vector<2x96xbf16>
      %15 = arith.extf %14 : vector<2x96xbf16> to vector<2x96xf32>
      %16 = arith.index_cast %11 : i32 to index
      %c0_10 = arith.constant 0 : index
      %c0_11 = arith.constant 0 : index
      %17 = vector.load %arg2[%16, %c0_10, %c0_11] : memref<8x2x96xbf16, #tpu.memory_space<vmem>>, vector<1x2x96xbf16>
      %18 = vector.shape_cast %17 : vector<1x2x96xbf16> to vector<2x96xbf16>
      %19 = arith.extf %18 : vector<2x96xbf16> to vector<2x96xf32>
      %20 = vector.extract_strided_slice %10 {offsets = [0, 0], sizes = [2, 96], strides = [1, 1]} : vector<2x192xf32> to vector<2x96xf32>
      %21 = vector.extract_strided_slice %4 {offsets = [0, 0], sizes = [2, 32], strides = [1, 1]} : vector<2x64xf32> to vector<2x32xf32>
      %22 = vector.extract_strided_slice %15 {offsets = [0, 0], sizes = [2, 32], strides = [1, 1]} : vector<2x96xf32> to vector<2x32xf32>
      %23 = vector.extract_strided_slice %20 {offsets = [0, 0], sizes = [2, 32], strides = [1, 1]} : vector<2x96xf32> to vector<2x32xf32>
      %24 = arith.addf %22, %23 : vector<2x32xf32>
      %25 = arith.negf %24 : vector<2x32xf32>
      %26 = math.exp %25 : vector<2x32xf32>
      %cst_12 = arith.constant 1.000000e+00 : f32
      %27 = vector.broadcast %cst_12 : f32 to vector<2x32xf32>
      %28 = arith.addf %27, %26 : vector<2x32xf32>
      %29 = arith.divf %27, %28 : vector<2x32xf32>
      %30 = vector.extract_strided_slice %15 {offsets = [0, 32], sizes = [2, 32], strides = [1, 1]} : vector<2x96xf32> to vector<2x32xf32>
      %31 = vector.extract_strided_slice %20 {offsets = [0, 32], sizes = [2, 32], strides = [1, 1]} : vector<2x96xf32> to vector<2x32xf32>
      %32 = arith.addf %30, %31 : vector<2x32xf32>
      %33 = arith.negf %32 : vector<2x32xf32>
      %34 = math.exp %33 : vector<2x32xf32>
      %cst_13 = arith.constant 1.000000e+00 : f32
      %35 = vector.broadcast %cst_13 : f32 to vector<2x32xf32>
      %36 = arith.addf %35, %34 : vector<2x32xf32>
      %37 = arith.divf %35, %36 : vector<2x32xf32>
      %38 = vector.extract_strided_slice %15 {offsets = [0, 64], sizes = [2, 32], strides = [1, 1]} : vector<2x96xf32> to vector<2x32xf32>
      %39 = vector.extract_strided_slice %20 {offsets = [0, 64], sizes = [2, 32], strides = [1, 1]} : vector<2x96xf32> to vector<2x32xf32>
      %40 = arith.mulf %29, %39 : vector<2x32xf32>
      %41 = arith.addf %38, %40 : vector<2x32xf32>
      %42 = math.tanh %41 : vector<2x32xf32>
      %cst_14 = arith.constant 1.000000e+00 : f32
      %43 = vector.broadcast %cst_14 : f32 to vector<2x32xf32>
      %44 = arith.subf %43, %37 : vector<2x32xf32>
      %45 = arith.mulf %44, %42 : vector<2x32xf32>
      %46 = arith.mulf %37, %21 : vector<2x32xf32>
      %47 = arith.addf %45, %46 : vector<2x32xf32>
      %48 = vector.extract_strided_slice %10 {offsets = [0, 96], sizes = [2, 96], strides = [1, 1]} : vector<2x192xf32> to vector<2x96xf32>
      %49 = vector.extract_strided_slice %4 {offsets = [0, 32], sizes = [2, 32], strides = [1, 1]} : vector<2x64xf32> to vector<2x32xf32>
      %50 = vector.extract_strided_slice %19 {offsets = [0, 0], sizes = [2, 32], strides = [1, 1]} : vector<2x96xf32> to vector<2x32xf32>
      %51 = vector.extract_strided_slice %48 {offsets = [0, 0], sizes = [2, 32], strides = [1, 1]} : vector<2x96xf32> to vector<2x32xf32>
      %52 = arith.addf %50, %51 : vector<2x32xf32>
      %53 = arith.negf %52 : vector<2x32xf32>
      %54 = math.exp %53 : vector<2x32xf32>
      %cst_15 = arith.constant 1.000000e+00 : f32
      %55 = vector.broadcast %cst_15 : f32 to vector<2x32xf32>
      %56 = arith.addf %55, %54 : vector<2x32xf32>
      %57 = arith.divf %55, %56 : vector<2x32xf32>
      %58 = vector.extract_strided_slice %19 {offsets = [0, 32], sizes = [2, 32], strides = [1, 1]} : vector<2x96xf32> to vector<2x32xf32>
      %59 = vector.extract_strided_slice %48 {offsets = [0, 32], sizes = [2, 32], strides = [1, 1]} : vector<2x96xf32> to vector<2x32xf32>
      %60 = arith.addf %58, %59 : vector<2x32xf32>
      %61 = arith.negf %60 : vector<2x32xf32>
      %62 = math.exp %61 : vector<2x32xf32>
      %cst_16 = arith.constant 1.000000e+00 : f32
      %63 = vector.broadcast %cst_16 : f32 to vector<2x32xf32>
      %64 = arith.addf %63, %62 : vector<2x32xf32>
      %65 = arith.divf %63, %64 : vector<2x32xf32>
      %66 = vector.extract_strided_slice %19 {offsets = [0, 64], sizes = [2, 32], strides = [1, 1]} : vector<2x96xf32> to vector<2x32xf32>
      %67 = vector.extract_strided_slice %48 {offsets = [0, 64], sizes = [2, 32], strides = [1, 1]} : vector<2x96xf32> to vector<2x32xf32>
      %68 = arith.mulf %57, %67 : vector<2x32xf32>
      %69 = arith.addf %66, %68 : vector<2x32xf32>
      %70 = math.tanh %69 : vector<2x32xf32>
      %cst_17 = arith.constant 1.000000e+00 : f32
      %71 = vector.broadcast %cst_17 : f32 to vector<2x32xf32>
      %72 = arith.subf %71, %65 : vector<2x32xf32>
      %73 = arith.mulf %72, %70 : vector<2x32xf32>
      %74 = arith.mulf %65, %49 : vector<2x32xf32>
      %75 = arith.addf %73, %74 : vector<2x32xf32>
      %76 = tpu.concatenate %47, %75 in 1 : vector<2x32xf32>, vector<2x32xf32> -> vector<2x64xf32>
      %c0_18 = arith.constant 0 : index
      %c0_19 = arith.constant 0 : index
      %77 = vector.load %arg7[%c0_18, %c0_19] : memref<2x64xf32, #tpu.memory_space<vmem>>, vector<2x64xf32>
      tpu.vector_store %arg7[%c0_18, %c0_19], %76 {strides = array<i32>} : memref<2x64xf32, #tpu.memory_space<vmem>>, vector<2x64xf32>,
      %78 = arith.truncf %47 : vector<2x32xf32> to vector<2x32xbf16>
      %79 = arith.index_cast %arg8 : i32 to index
      %c0_20 = arith.constant 0 : index
      %c0_21 = arith.constant 0 : index
      %80 = vector.load %arg5[%79, %c0_20, %c0_21] : memref<8x2x32xbf16, #tpu.memory_space<vmem>>, vector<1x2x32xbf16>
      %81 = vector.shape_cast %80 : vector<1x2x32xbf16> to vector<2x32xbf16>
      %82 = vector.shape_cast %78 : vector<2x32xbf16> to vector<1x2x32xbf16>
      tpu.vector_store %arg5[%79, %c0_20, %c0_21], %82 {strides = array<i32>} : memref<8x2x32xbf16, #tpu.memory_space<vmem>>, vector<1x2x32xbf16>,
      %83 = arith.truncf %75 : vector<2x32xf32> to vector<2x32xbf16>
      %84 = arith.index_cast %11 : i32 to index
      %c0_22 = arith.constant 0 : index
      %c0_23 = arith.constant 0 : index
      %85 = vector.load %arg6[%84, %c0_22, %c0_23] : memref<8x2x32xbf16, #tpu.memory_space<vmem>>, vector<1x2x32xbf16>
      %86 = vector.shape_cast %85 : vector<1x2x32xbf16> to vector<2x32xbf16>
      %87 = vector.shape_cast %83 : vector<2x32xbf16> to vector<1x2x32xbf16>
      tpu.vector_store %arg6[%84, %c0_22, %c0_23], %87 {strides = array<i32>} : memref<8x2x32xbf16, #tpu.memory_space<vmem>>, vector<1x2x32xbf16>,
    }
    %c8_i32_2 = arith.constant 8 : i32
    return
  }
  func.func @transform_0(%arg0: i32) -> (i32, i32, i32) {
    %c0_i32 = arith.constant 0 : i32
    %c0_i32_0 = arith.constant 0 : i32
    %c0_i32_1 = arith.constant 0 : i32
    return %arg0, %c0_i32, %c0_i32_0 : i32, i32, i32
  }
  func.func @transform_1(%arg0: i32) -> (i32, i32, i32) {
    %c0_i32 = arith.constant 0 : i32
    %0 = arith.subi %c0_i32, %arg0 : i32
    %c0_i32_0 = arith.constant 0 : i32
    %c0_i32_1 = arith.constant 0 : i32
    %c0_i32_2 = arith.constant 0 : i32
    return %0, %c0_i32_0, %c0_i32_1 : i32, i32, i32
  }
  func.func @transform_2(%arg0: i32) -> (i32, i32) {
    %c0_i32 = arith.constant 0 : i32
    %c0_i32_0 = arith.constant 0 : i32
    %c0_i32_1 = arith.constant 0 : i32
    return %c0_i32, %c0_i32_0 : i32, i32
  }
  func.func @transform_3(%arg0: i32) -> (i32, i32) {
    %c0_i32 = arith.constant 0 : i32
    %c0_i32_0 = arith.constant 0 : i32
    %c0_i32_1 = arith.constant 0 : i32
    return %c0_i32, %c0_i32_0 : i32, i32
  }
  func.func @transform_4(%arg0: i32) -> (i32, i32, i32) {
    %c0_i32 = arith.constant 0 : i32
    %c0_i32_0 = arith.constant 0 : i32
    %c0_i32_1 = arith.constant 0 : i32
    return %arg0, %c0_i32, %c0_i32_0 : i32, i32, i32
  }
  func.func @transform_5(%arg0: i32) -> (i32, i32, i32) {
    %c0_i32 = arith.constant 0 : i32
    %0 = arith.subi %c0_i32, %arg0 : i32
    %c0_i32_0 = arith.constant 0 : i32
    %c0_i32_1 = arith.constant 0 : i32
    %c0_i32_2 = arith.constant 0 : i32
    return %0, %c0_i32_0, %c0_i32_1 : i32, i32, i32
  }
}

module attributes {stable_mosaic.version = 11 : i64} {
  func.func @_conv_bn_relu_pool_kernel(%arg0: i32, %arg1: i32, %arg2: memref<1x1x10x10xf32, #tpu.memory_space<vmem>>, %arg3: memref<288xf32, #tpu.memory_space<smem>>, %arg4: memref<32xf32, #tpu.memory_space<smem>>, %arg5: memref<1x8x128xbf16, #tpu.memory_space<vmem>>) attributes {dimension_semantics = [#tpu.dimension_semantics<parallel>, #tpu.dimension_semantics<parallel>], iteration_bounds = array<i64: 2, 1>, scalar_prefetch = 0 : i64, scratch_operands = 0 : i64, tpu.core_type = #tpu.core_type<tc>, window_params = [{transform_indices = @transform_0, window_bounds = array<i64: 1, 1, 10, 10>}, {transform_indices = @transform_1, window_bounds = array<i64: 288>}, {transform_indices = @transform_2, window_bounds = array<i64: 32>}, {transform_indices = @transform_3, window_bounds = array<i64: 1, 8, 128>}]} {
    %c0 = arith.constant 0 : index
    %c0_0 = arith.constant 0 : index
    %c0_1 = arith.constant 0 : index
    %c0_2 = arith.constant 0 : index
    %0 = vector.load %arg2[%c0, %c0_0, %c0_1, %c0_2] : memref<1x1x10x10xf32, #tpu.memory_space<vmem>>, vector<1x1x10x10xf32>
    %1 = vector.shape_cast %0 : vector<1x1x10x10xf32> to vector<10x10xf32>
    %c0_3 = arith.constant 0 : index
    %2 = memref.load %arg3[%c0_3] : memref<288xf32, #tpu.memory_space<smem>>
    %3 = vector.extract_strided_slice %1 {offsets = [0, 0], sizes = [8, 8], strides = [1, 1]} : vector<10x10xf32> to vector<8x8xf32>
    %4 = vector.broadcast %2 : f32 to vector<8x8xf32>
    %5 = arith.mulf %4, %3 : vector<8x8xf32>
    %c32 = arith.constant 32 : index
    %6 = memref.load %arg3[%c32] : memref<288xf32, #tpu.memory_space<smem>>
    %7 = vector.extract_strided_slice %1 {offsets = [0, 1], sizes = [8, 8], strides = [1, 1]} : vector<10x10xf32> to vector<8x8xf32>
    %8 = vector.broadcast %6 : f32 to vector<8x8xf32>
    %9 = arith.mulf %8, %7 : vector<8x8xf32>
    %10 = arith.addf %5, %9 : vector<8x8xf32>
    %c64 = arith.constant 64 : index
    %11 = memref.load %arg3[%c64] : memref<288xf32, #tpu.memory_space<smem>>
    %12 = vector.extract_strided_slice %1 {offsets = [0, 2], sizes = [8, 8], strides = [1, 1]} : vector<10x10xf32> to vector<8x8xf32>
    %13 = vector.broadcast %11 : f32 to vector<8x8xf32>
    %14 = arith.mulf %13, %12 : vector<8x8xf32>
    %15 = arith.addf %10, %14 : vector<8x8xf32>
    %c96 = arith.constant 96 : index
    %16 = memref.load %arg3[%c96] : memref<288xf32, #tpu.memory_space<smem>>
    %17 = vector.extract_strided_slice %1 {offsets = [1, 0], sizes = [8, 8], strides = [1, 1]} : vector<10x10xf32> to vector<8x8xf32>
    %18 = vector.broadcast %16 : f32 to vector<8x8xf32>
    %19 = arith.mulf %18, %17 : vector<8x8xf32>
    %20 = arith.addf %15, %19 : vector<8x8xf32>
    %c128 = arith.constant 128 : index
    %21 = memref.load %arg3[%c128] : memref<288xf32, #tpu.memory_space<smem>>
    %22 = vector.extract_strided_slice %1 {offsets = [1, 1], sizes = [8, 8], strides = [1, 1]} : vector<10x10xf32> to vector<8x8xf32>
    %23 = vector.broadcast %21 : f32 to vector<8x8xf32>
    %24 = arith.mulf %23, %22 : vector<8x8xf32>
    %25 = arith.addf %20, %24 : vector<8x8xf32>
    %c160 = arith.constant 160 : index
    %26 = memref.load %arg3[%c160] : memref<288xf32, #tpu.memory_space<smem>>
    %27 = vector.extract_strided_slice %1 {offsets = [1, 2], sizes = [8, 8], strides = [1, 1]} : vector<10x10xf32> to vector<8x8xf32>
    %28 = vector.broadcast %26 : f32 to vector<8x8xf32>
    %29 = arith.mulf %28, %27 : vector<8x8xf32>
    %30 = arith.addf %25, %29 : vector<8x8xf32>
    %c192 = arith.constant 192 : index
    %31 = memref.load %arg3[%c192] : memref<288xf32, #tpu.memory_space<smem>>
    %32 = vector.extract_strided_slice %1 {offsets = [2, 0], sizes = [8, 8], strides = [1, 1]} : vector<10x10xf32> to vector<8x8xf32>
    %33 = vector.broadcast %31 : f32 to vector<8x8xf32>
    %34 = arith.mulf %33, %32 : vector<8x8xf32>
    %35 = arith.addf %30, %34 : vector<8x8xf32>
    %c224 = arith.constant 224 : index
    %36 = memref.load %arg3[%c224] : memref<288xf32, #tpu.memory_space<smem>>
    %37 = vector.extract_strided_slice %1 {offsets = [2, 1], sizes = [8, 8], strides = [1, 1]} : vector<10x10xf32> to vector<8x8xf32>
    %38 = vector.broadcast %36 : f32 to vector<8x8xf32>
    %39 = arith.mulf %38, %37 : vector<8x8xf32>
    %40 = arith.addf %35, %39 : vector<8x8xf32>
    %c256 = arith.constant 256 : index
    %41 = memref.load %arg3[%c256] : memref<288xf32, #tpu.memory_space<smem>>
    %42 = vector.extract_strided_slice %1 {offsets = [2, 2], sizes = [8, 8], strides = [1, 1]} : vector<10x10xf32> to vector<8x8xf32>
    %43 = vector.broadcast %41 : f32 to vector<8x8xf32>
    %44 = arith.mulf %43, %42 : vector<8x8xf32>
    %45 = arith.addf %40, %44 : vector<8x8xf32>
    %c0_4 = arith.constant 0 : index
    %46 = memref.load %arg4[%c0_4] : memref<32xf32, #tpu.memory_space<smem>>
    %47 = vector.broadcast %46 : f32 to vector<8x8xf32>
    %48 = arith.addf %45, %47 : vector<8x8xf32>
    %cst = arith.constant 0.000000e+00 : f32
    %49 = vector.broadcast %cst : f32 to vector<8x8xf32>
    %50 = arith.maximumf %48, %49 : vector<8x8xf32>
    %51 = vector.shape_cast %50 : vector<8x8xf32> to vector<4x2x8xf32>
    %cst_5 = arith.constant dense<0xFF800000> : vector<4x8xf32>
    %52 = vector.multi_reduction <maximumf>, %51, %cst_5 [1] : vector<4x2x8xf32> to vector<4x8xf32>
    %c1 = arith.constant 1 : index
    %53 = memref.load %arg3[%c1] : memref<288xf32, #tpu.memory_space<smem>>
    %54 = vector.extract_strided_slice %1 {offsets = [0, 0], sizes = [8, 8], strides = [1, 1]} : vector<10x10xf32> to vector<8x8xf32>
    %55 = vector.broadcast %53 : f32 to vector<8x8xf32>
    %56 = arith.mulf %55, %54 : vector<8x8xf32>
    %c33 = arith.constant 33 : index
    %57 = memref.load %arg3[%c33] : memref<288xf32, #tpu.memory_space<smem>>
    %58 = vector.extract_strided_slice %1 {offsets = [0, 1], sizes = [8, 8], strides = [1, 1]} : vector<10x10xf32> to vector<8x8xf32>
    %59 = vector.broadcast %57 : f32 to vector<8x8xf32>
    %60 = arith.mulf %59, %58 : vector<8x8xf32>
    %61 = arith.addf %56, %60 : vector<8x8xf32>
    %c65 = arith.constant 65 : index
    %62 = memref.load %arg3[%c65] : memref<288xf32, #tpu.memory_space<smem>>
    %63 = vector.extract_strided_slice %1 {offsets = [0, 2], sizes = [8, 8], strides = [1, 1]} : vector<10x10xf32> to vector<8x8xf32>
    %64 = vector.broadcast %62 : f32 to vector<8x8xf32>
    %65 = arith.mulf %64, %63 : vector<8x8xf32>
    %66 = arith.addf %61, %65 : vector<8x8xf32>
    %c97 = arith.constant 97 : index
    %67 = memref.load %arg3[%c97] : memref<288xf32, #tpu.memory_space<smem>>
    %68 = vector.extract_strided_slice %1 {offsets = [1, 0], sizes = [8, 8], strides = [1, 1]} : vector<10x10xf32> to vector<8x8xf32>
    %69 = vector.broadcast %67 : f32 to vector<8x8xf32>
    %70 = arith.mulf %69, %68 : vector<8x8xf32>
    %71 = arith.addf %66, %70 : vector<8x8xf32>
    %c129 = arith.constant 129 : index
    %72 = memref.load %arg3[%c129] : memref<288xf32, #tpu.memory_space<smem>>
    %73 = vector.extract_strided_slice %1 {offsets = [1, 1], sizes = [8, 8], strides = [1, 1]} : vector<10x10xf32> to vector<8x8xf32>
    %74 = vector.broadcast %72 : f32 to vector<8x8xf32>
    %75 = arith.mulf %74, %73 : vector<8x8xf32>
    %76 = arith.addf %71, %75 : vector<8x8xf32>
    %c161 = arith.constant 161 : index
    %77 = memref.load %arg3[%c161] : memref<288xf32, #tpu.memory_space<smem>>
    %78 = vector.extract_strided_slice %1 {offsets = [1, 2], sizes = [8, 8], strides = [1, 1]} : vector<10x10xf32> to vector<8x8xf32>
    %79 = vector.broadcast %77 : f32 to vector<8x8xf32>
    %80 = arith.mulf %79, %78 : vector<8x8xf32>
    %81 = arith.addf %76, %80 : vector<8x8xf32>
    %c193 = arith.constant 193 : index
    %82 = memref.load %arg3[%c193] : memref<288xf32, #tpu.memory_space<smem>>
    %83 = vector.extract_strided_slice %1 {offsets = [2, 0], sizes = [8, 8], strides = [1, 1]} : vector<10x10xf32> to vector<8x8xf32>
    %84 = vector.broadcast %82 : f32 to vector<8x8xf32>
    %85 = arith.mulf %84, %83 : vector<8x8xf32>
    %86 = arith.addf %81, %85 : vector<8x8xf32>
    %c225 = arith.constant 225 : index
    %87 = memref.load %arg3[%c225] : memref<288xf32, #tpu.memory_space<smem>>
    %88 = vector.extract_strided_slice %1 {offsets = [2, 1], sizes = [8, 8], strides = [1, 1]} : vector<10x10xf32> to vector<8x8xf32>
    %89 = vector.broadcast %87 : f32 to vector<8x8xf32>
    %90 = arith.mulf %89, %88 : vector<8x8xf32>
    %91 = arith.addf %86, %90 : vector<8x8xf32>
    %c257 = arith.constant 257 : index
    %92 = memref.load %arg3[%c257] : memref<288xf32, #tpu.memory_space<smem>>
    %93 = vector.extract_strided_slice %1 {offsets = [2, 2], sizes = [8, 8], strides = [1, 1]} : vector<10x10xf32> to vector<8x8xf32>
    %94 = vector.broadcast %92 : f32 to vector<8x8xf32>
    %95 = arith.mulf %94, %93 : vector<8x8xf32>
    %96 = arith.addf %91, %95 : vector<8x8xf32>
    %c1_6 = arith.constant 1 : index
    %97 = memref.load %arg4[%c1_6] : memref<32xf32, #tpu.memory_space<smem>>
    %98 = vector.broadcast %97 : f32 to vector<8x8xf32>
    %99 = arith.addf %96, %98 : vector<8x8xf32>
    %cst_7 = arith.constant 0.000000e+00 : f32
    %100 = vector.broadcast %cst_7 : f32 to vector<8x8xf32>
    %101 = arith.maximumf %99, %100 : vector<8x8xf32>
    %102 = vector.shape_cast %101 : vector<8x8xf32> to vector<4x2x8xf32>
    %cst_8 = arith.constant dense<0xFF800000> : vector<4x8xf32>
    %103 = vector.multi_reduction <maximumf>, %102, %cst_8 [1] : vector<4x2x8xf32> to vector<4x8xf32>
    %c2 = arith.constant 2 : index
    %104 = memref.load %arg3[%c2] : memref<288xf32, #tpu.memory_space<smem>>
    %105 = vector.extract_strided_slice %1 {offsets = [0, 0], sizes = [8, 8], strides = [1, 1]} : vector<10x10xf32> to vector<8x8xf32>
    %106 = vector.broadcast %104 : f32 to vector<8x8xf32>
    %107 = arith.mulf %106, %105 : vector<8x8xf32>
    %c34 = arith.constant 34 : index
    %108 = memref.load %arg3[%c34] : memref<288xf32, #tpu.memory_space<smem>>
    %109 = vector.extract_strided_slice %1 {offsets = [0, 1], sizes = [8, 8], strides = [1, 1]} : vector<10x10xf32> to vector<8x8xf32>
    %110 = vector.broadcast %108 : f32 to vector<8x8xf32>
    %111 = arith.mulf %110, %109 : vector<8x8xf32>
    %112 = arith.addf %107, %111 : vector<8x8xf32>
    %c66 = arith.constant 66 : index
    %113 = memref.load %arg3[%c66] : memref<288xf32, #tpu.memory_space<smem>>
    %114 = vector.extract_strided_slice %1 {offsets = [0, 2], sizes = [8, 8], strides = [1, 1]} : vector<10x10xf32> to vector<8x8xf32>
    %115 = vector.broadcast %113 : f32 to vector<8x8xf32>
    %116 = arith.mulf %115, %114 : vector<8x8xf32>
    %117 = arith.addf %112, %116 : vector<8x8xf32>
    %c98 = arith.constant 98 : index
    %118 = memref.load %arg3[%c98] : memref<288xf32, #tpu.memory_space<smem>>
    %119 = vector.extract_strided_slice %1 {offsets = [1, 0], sizes = [8, 8], strides = [1, 1]} : vector<10x10xf32> to vector<8x8xf32>
    %120 = vector.broadcast %118 : f32 to vector<8x8xf32>
    %121 = arith.mulf %120, %119 : vector<8x8xf32>
    %122 = arith.addf %117, %121 : vector<8x8xf32>
    %c130 = arith.constant 130 : index
    %123 = memref.load %arg3[%c130] : memref<288xf32, #tpu.memory_space<smem>>
    %124 = vector.extract_strided_slice %1 {offsets = [1, 1], sizes = [8, 8], strides = [1, 1]} : vector<10x10xf32> to vector<8x8xf32>
    %125 = vector.broadcast %123 : f32 to vector<8x8xf32>
    %126 = arith.mulf %125, %124 : vector<8x8xf32>
    %127 = arith.addf %122, %126 : vector<8x8xf32>
    %c162 = arith.constant 162 : index
    %128 = memref.load %arg3[%c162] : memref<288xf32, #tpu.memory_space<smem>>
    %129 = vector.extract_strided_slice %1 {offsets = [1, 2], sizes = [8, 8], strides = [1, 1]} : vector<10x10xf32> to vector<8x8xf32>
    %130 = vector.broadcast %128 : f32 to vector<8x8xf32>
    %131 = arith.mulf %130, %129 : vector<8x8xf32>
    %132 = arith.addf %127, %131 : vector<8x8xf32>
    %c194 = arith.constant 194 : index
    %133 = memref.load %arg3[%c194] : memref<288xf32, #tpu.memory_space<smem>>
    %134 = vector.extract_strided_slice %1 {offsets = [2, 0], sizes = [8, 8], strides = [1, 1]} : vector<10x10xf32> to vector<8x8xf32>
    %135 = vector.broadcast %133 : f32 to vector<8x8xf32>
    %136 = arith.mulf %135, %134 : vector<8x8xf32>
    %137 = arith.addf %132, %136 : vector<8x8xf32>
    %c226 = arith.constant 226 : index
    %138 = memref.load %arg3[%c226] : memref<288xf32, #tpu.memory_space<smem>>
    %139 = vector.extract_strided_slice %1 {offsets = [2, 1], sizes = [8, 8], strides = [1, 1]} : vector<10x10xf32> to vector<8x8xf32>
    %140 = vector.broadcast %138 : f32 to vector<8x8xf32>
    %141 = arith.mulf %140, %139 : vector<8x8xf32>
    %142 = arith.addf %137, %141 : vector<8x8xf32>
    %c258 = arith.constant 258 : index
    %143 = memref.load %arg3[%c258] : memref<288xf32, #tpu.memory_space<smem>>
    %144 = vector.extract_strided_slice %1 {offsets = [2, 2], sizes = [8, 8], strides = [1, 1]} : vector<10x10xf32> to vector<8x8xf32>
    %145 = vector.broadcast %143 : f32 to vector<8x8xf32>
    %146 = arith.mulf %145, %144 : vector<8x8xf32>
    %147 = arith.addf %142, %146 : vector<8x8xf32>
    %c2_9 = arith.constant 2 : index
    %148 = memref.load %arg4[%c2_9] : memref<32xf32, #tpu.memory_space<smem>>
    %149 = vector.broadcast %148 : f32 to vector<8x8xf32>
    %150 = arith.addf %147, %149 : vector<8x8xf32>
    %cst_10 = arith.constant 0.000000e+00 : f32
    %151 = vector.broadcast %cst_10 : f32 to vector<8x8xf32>
    %152 = arith.maximumf %150, %151 : vector<8x8xf32>
    %153 = vector.shape_cast %152 : vector<8x8xf32> to vector<4x2x8xf32>
    %cst_11 = arith.constant dense<0xFF800000> : vector<4x8xf32>
    %154 = vector.multi_reduction <maximumf>, %153, %cst_11 [1] : vector<4x2x8xf32> to vector<4x8xf32>
    %c3 = arith.constant 3 : index
    %155 = memref.load %arg3[%c3] : memref<288xf32, #tpu.memory_space<smem>>
    %156 = vector.extract_strided_slice %1 {offsets = [0, 0], sizes = [8, 8], strides = [1, 1]} : vector<10x10xf32> to vector<8x8xf32>
    %157 = vector.broadcast %155 : f32 to vector<8x8xf32>
    %158 = arith.mulf %157, %156 : vector<8x8xf32>
    %c35 = arith.constant 35 : index
    %159 = memref.load %arg3[%c35] : memref<288xf32, #tpu.memory_space<smem>>
    %160 = vector.extract_strided_slice %1 {offsets = [0, 1], sizes = [8, 8], strides = [1, 1]} : vector<10x10xf32> to vector<8x8xf32>
    %161 = vector.broadcast %159 : f32 to vector<8x8xf32>
    %162 = arith.mulf %161, %160 : vector<8x8xf32>
    %163 = arith.addf %158, %162 : vector<8x8xf32>
    %c67 = arith.constant 67 : index
    %164 = memref.load %arg3[%c67] : memref<288xf32, #tpu.memory_space<smem>>
    %165 = vector.extract_strided_slice %1 {offsets = [0, 2], sizes = [8, 8], strides = [1, 1]} : vector<10x10xf32> to vector<8x8xf32>
    %166 = vector.broadcast %164 : f32 to vector<8x8xf32>
    %167 = arith.mulf %166, %165 : vector<8x8xf32>
    %168 = arith.addf %163, %167 : vector<8x8xf32>
    %c99 = arith.constant 99 : index
    %169 = memref.load %arg3[%c99] : memref<288xf32, #tpu.memory_space<smem>>
    %170 = vector.extract_strided_slice %1 {offsets = [1, 0], sizes = [8, 8], strides = [1, 1]} : vector<10x10xf32> to vector<8x8xf32>
    %171 = vector.broadcast %169 : f32 to vector<8x8xf32>
    %172 = arith.mulf %171, %170 : vector<8x8xf32>
    %173 = arith.addf %168, %172 : vector<8x8xf32>
    %c131 = arith.constant 131 : index
    %174 = memref.load %arg3[%c131] : memref<288xf32, #tpu.memory_space<smem>>
    %175 = vector.extract_strided_slice %1 {offsets = [1, 1], sizes = [8, 8], strides = [1, 1]} : vector<10x10xf32> to vector<8x8xf32>
    %176 = vector.broadcast %174 : f32 to vector<8x8xf32>
    %177 = arith.mulf %176, %175 : vector<8x8xf32>
    %178 = arith.addf %173, %177 : vector<8x8xf32>
    %c163 = arith.constant 163 : index
    %179 = memref.load %arg3[%c163] : memref<288xf32, #tpu.memory_space<smem>>
    %180 = vector.extract_strided_slice %1 {offsets = [1, 2], sizes = [8, 8], strides = [1, 1]} : vector<10x10xf32> to vector<8x8xf32>
    %181 = vector.broadcast %179 : f32 to vector<8x8xf32>
    %182 = arith.mulf %181, %180 : vector<8x8xf32>
    %183 = arith.addf %178, %182 : vector<8x8xf32>
    %c195 = arith.constant 195 : index
    %184 = memref.load %arg3[%c195] : memref<288xf32, #tpu.memory_space<smem>>
    %185 = vector.extract_strided_slice %1 {offsets = [2, 0], sizes = [8, 8], strides = [1, 1]} : vector<10x10xf32> to vector<8x8xf32>
    %186 = vector.broadcast %184 : f32 to vector<8x8xf32>
    %187 = arith.mulf %186, %185 : vector<8x8xf32>
    %188 = arith.addf %183, %187 : vector<8x8xf32>
    %c227 = arith.constant 227 : index
    %189 = memref.load %arg3[%c227] : memref<288xf32, #tpu.memory_space<smem>>
    %190 = vector.extract_strided_slice %1 {offsets = [2, 1], sizes = [8, 8], strides = [1, 1]} : vector<10x10xf32> to vector<8x8xf32>
    %191 = vector.broadcast %189 : f32 to vector<8x8xf32>
    %192 = arith.mulf %191, %190 : vector<8x8xf32>
    %193 = arith.addf %188, %192 : vector<8x8xf32>
    %c259 = arith.constant 259 : index
    %194 = memref.load %arg3[%c259] : memref<288xf32, #tpu.memory_space<smem>>
    %195 = vector.extract_strided_slice %1 {offsets = [2, 2], sizes = [8, 8], strides = [1, 1]} : vector<10x10xf32> to vector<8x8xf32>
    %196 = vector.broadcast %194 : f32 to vector<8x8xf32>
    %197 = arith.mulf %196, %195 : vector<8x8xf32>
    %198 = arith.addf %193, %197 : vector<8x8xf32>
    %c3_12 = arith.constant 3 : index
    %199 = memref.load %arg4[%c3_12] : memref<32xf32, #tpu.memory_space<smem>>
    %200 = vector.broadcast %199 : f32 to vector<8x8xf32>
    %201 = arith.addf %198, %200 : vector<8x8xf32>
    %cst_13 = arith.constant 0.000000e+00 : f32
    %202 = vector.broadcast %cst_13 : f32 to vector<8x8xf32>
    %203 = arith.maximumf %201, %202 : vector<8x8xf32>
    %204 = vector.shape_cast %203 : vector<8x8xf32> to vector<4x2x8xf32>
    %cst_14 = arith.constant dense<0xFF800000> : vector<4x8xf32>
    %205 = vector.multi_reduction <maximumf>, %204, %cst_14 [1] : vector<4x2x8xf32> to vector<4x8xf32>
    %c4 = arith.constant 4 : index
    %206 = memref.load %arg3[%c4] : memref<288xf32, #tpu.memory_space<smem>>
    %207 = vector.extract_strided_slice %1 {offsets = [0, 0], sizes = [8, 8], strides = [1, 1]} : vector<10x10xf32> to vector<8x8xf32>
    %208 = vector.broadcast %206 : f32 to vector<8x8xf32>
    %209 = arith.mulf %208, %207 : vector<8x8xf32>
    %c36 = arith.constant 36 : index
    %210 = memref.load %arg3[%c36] : memref<288xf32, #tpu.memory_space<smem>>
    %211 = vector.extract_strided_slice %1 {offsets = [0, 1], sizes = [8, 8], strides = [1, 1]} : vector<10x10xf32> to vector<8x8xf32>
    %212 = vector.broadcast %210 : f32 to vector<8x8xf32>
    %213 = arith.mulf %212, %211 : vector<8x8xf32>
    %214 = arith.addf %209, %213 : vector<8x8xf32>
    %c68 = arith.constant 68 : index
    %215 = memref.load %arg3[%c68] : memref<288xf32, #tpu.memory_space<smem>>
    %216 = vector.extract_strided_slice %1 {offsets = [0, 2], sizes = [8, 8], strides = [1, 1]} : vector<10x10xf32> to vector<8x8xf32>
    %217 = vector.broadcast %215 : f32 to vector<8x8xf32>
    %218 = arith.mulf %217, %216 : vector<8x8xf32>
    %219 = arith.addf %214, %218 : vector<8x8xf32>
    %c100 = arith.constant 100 : index
    %220 = memref.load %arg3[%c100] : memref<288xf32, #tpu.memory_space<smem>>
    %221 = vector.extract_strided_slice %1 {offsets = [1, 0], sizes = [8, 8], strides = [1, 1]} : vector<10x10xf32> to vector<8x8xf32>
    %222 = vector.broadcast %220 : f32 to vector<8x8xf32>
    %223 = arith.mulf %222, %221 : vector<8x8xf32>
    %224 = arith.addf %219, %223 : vector<8x8xf32>
    %c132 = arith.constant 132 : index
    %225 = memref.load %arg3[%c132] : memref<288xf32, #tpu.memory_space<smem>>
    %226 = vector.extract_strided_slice %1 {offsets = [1, 1], sizes = [8, 8], strides = [1, 1]} : vector<10x10xf32> to vector<8x8xf32>
    %227 = vector.broadcast %225 : f32 to vector<8x8xf32>
    %228 = arith.mulf %227, %226 : vector<8x8xf32>
    %229 = arith.addf %224, %228 : vector<8x8xf32>
    %c164 = arith.constant 164 : index
    %230 = memref.load %arg3[%c164] : memref<288xf32, #tpu.memory_space<smem>>
    %231 = vector.extract_strided_slice %1 {offsets = [1, 2], sizes = [8, 8], strides = [1, 1]} : vector<10x10xf32> to vector<8x8xf32>
    %232 = vector.broadcast %230 : f32 to vector<8x8xf32>
    %233 = arith.mulf %232, %231 : vector<8x8xf32>
    %234 = arith.addf %229, %233 : vector<8x8xf32>
    %c196 = arith.constant 196 : index
    %235 = memref.load %arg3[%c196] : memref<288xf32, #tpu.memory_space<smem>>
    %236 = vector.extract_strided_slice %1 {offsets = [2, 0], sizes = [8, 8], strides = [1, 1]} : vector<10x10xf32> to vector<8x8xf32>
    %237 = vector.broadcast %235 : f32 to vector<8x8xf32>
    %238 = arith.mulf %237, %236 : vector<8x8xf32>
    %239 = arith.addf %234, %238 : vector<8x8xf32>
    %c228 = arith.constant 228 : index
    %240 = memref.load %arg3[%c228] : memref<288xf32, #tpu.memory_space<smem>>
    %241 = vector.extract_strided_slice %1 {offsets = [2, 1], sizes = [8, 8], strides = [1, 1]} : vector<10x10xf32> to vector<8x8xf32>
    %242 = vector.broadcast %240 : f32 to vector<8x8xf32>
    %243 = arith.mulf %242, %241 : vector<8x8xf32>
    %244 = arith.addf %239, %243 : vector<8x8xf32>
    %c260 = arith.constant 260 : index
    %245 = memref.load %arg3[%c260] : memref<288xf32, #tpu.memory_space<smem>>
    %246 = vector.extract_strided_slice %1 {offsets = [2, 2], sizes = [8, 8], strides = [1, 1]} : vector<10x10xf32> to vector<8x8xf32>
    %247 = vector.broadcast %245 : f32 to vector<8x8xf32>
    %248 = arith.mulf %247, %246 : vector<8x8xf32>
    %249 = arith.addf %244, %248 : vector<8x8xf32>
    %c4_15 = arith.constant 4 : index
    %250 = memref.load %arg4[%c4_15] : memref<32xf32, #tpu.memory_space<smem>>
    %251 = vector.broadcast %250 : f32 to vector<8x8xf32>
    %252 = arith.addf %249, %251 : vector<8x8xf32>
    %cst_16 = arith.constant 0.000000e+00 : f32
    %253 = vector.broadcast %cst_16 : f32 to vector<8x8xf32>
    %254 = arith.maximumf %252, %253 : vector<8x8xf32>
    %255 = vector.shape_cast %254 : vector<8x8xf32> to vector<4x2x8xf32>
    %cst_17 = arith.constant dense<0xFF800000> : vector<4x8xf32>
    %256 = vector.multi_reduction <maximumf>, %255, %cst_17 [1] : vector<4x2x8xf32> to vector<4x8xf32>
    %c5 = arith.constant 5 : index
    %257 = memref.load %arg3[%c5] : memref<288xf32, #tpu.memory_space<smem>>
    %258 = vector.extract_strided_slice %1 {offsets = [0, 0], sizes = [8, 8], strides = [1, 1]} : vector<10x10xf32> to vector<8x8xf32>
    %259 = vector.broadcast %257 : f32 to vector<8x8xf32>
    %260 = arith.mulf %259, %258 : vector<8x8xf32>
    %c37 = arith.constant 37 : index
    %261 = memref.load %arg3[%c37] : memref<288xf32, #tpu.memory_space<smem>>
    %262 = vector.extract_strided_slice %1 {offsets = [0, 1], sizes = [8, 8], strides = [1, 1]} : vector<10x10xf32> to vector<8x8xf32>
    %263 = vector.broadcast %261 : f32 to vector<8x8xf32>
    %264 = arith.mulf %263, %262 : vector<8x8xf32>
    %265 = arith.addf %260, %264 : vector<8x8xf32>
    %c69 = arith.constant 69 : index
    %266 = memref.load %arg3[%c69] : memref<288xf32, #tpu.memory_space<smem>>
    %267 = vector.extract_strided_slice %1 {offsets = [0, 2], sizes = [8, 8], strides = [1, 1]} : vector<10x10xf32> to vector<8x8xf32>
    %268 = vector.broadcast %266 : f32 to vector<8x8xf32>
    %269 = arith.mulf %268, %267 : vector<8x8xf32>
    %270 = arith.addf %265, %269 : vector<8x8xf32>
    %c101 = arith.constant 101 : index
    %271 = memref.load %arg3[%c101] : memref<288xf32, #tpu.memory_space<smem>>
    %272 = vector.extract_strided_slice %1 {offsets = [1, 0], sizes = [8, 8], strides = [1, 1]} : vector<10x10xf32> to vector<8x8xf32>
    %273 = vector.broadcast %271 : f32 to vector<8x8xf32>
    %274 = arith.mulf %273, %272 : vector<8x8xf32>
    %275 = arith.addf %270, %274 : vector<8x8xf32>
    %c133 = arith.constant 133 : index
    %276 = memref.load %arg3[%c133] : memref<288xf32, #tpu.memory_space<smem>>
    %277 = vector.extract_strided_slice %1 {offsets = [1, 1], sizes = [8, 8], strides = [1, 1]} : vector<10x10xf32> to vector<8x8xf32>
    %278 = vector.broadcast %276 : f32 to vector<8x8xf32>
    %279 = arith.mulf %278, %277 : vector<8x8xf32>
    %280 = arith.addf %275, %279 : vector<8x8xf32>
    %c165 = arith.constant 165 : index
    %281 = memref.load %arg3[%c165] : memref<288xf32, #tpu.memory_space<smem>>
    %282 = vector.extract_strided_slice %1 {offsets = [1, 2], sizes = [8, 8], strides = [1, 1]} : vector<10x10xf32> to vector<8x8xf32>
    %283 = vector.broadcast %281 : f32 to vector<8x8xf32>
    %284 = arith.mulf %283, %282 : vector<8x8xf32>
    %285 = arith.addf %280, %284 : vector<8x8xf32>
    %c197 = arith.constant 197 : index
    %286 = memref.load %arg3[%c197] : memref<288xf32, #tpu.memory_space<smem>>
    %287 = vector.extract_strided_slice %1 {offsets = [2, 0], sizes = [8, 8], strides = [1, 1]} : vector<10x10xf32> to vector<8x8xf32>
    %288 = vector.broadcast %286 : f32 to vector<8x8xf32>
    %289 = arith.mulf %288, %287 : vector<8x8xf32>
    %290 = arith.addf %285, %289 : vector<8x8xf32>
    %c229 = arith.constant 229 : index
    %291 = memref.load %arg3[%c229] : memref<288xf32, #tpu.memory_space<smem>>
    %292 = vector.extract_strided_slice %1 {offsets = [2, 1], sizes = [8, 8], strides = [1, 1]} : vector<10x10xf32> to vector<8x8xf32>
    %293 = vector.broadcast %291 : f32 to vector<8x8xf32>
    %294 = arith.mulf %293, %292 : vector<8x8xf32>
    %295 = arith.addf %290, %294 : vector<8x8xf32>
    %c261 = arith.constant 261 : index
    %296 = memref.load %arg3[%c261] : memref<288xf32, #tpu.memory_space<smem>>
    %297 = vector.extract_strided_slice %1 {offsets = [2, 2], sizes = [8, 8], strides = [1, 1]} : vector<10x10xf32> to vector<8x8xf32>
    %298 = vector.broadcast %296 : f32 to vector<8x8xf32>
    %299 = arith.mulf %298, %297 : vector<8x8xf32>
    %300 = arith.addf %295, %299 : vector<8x8xf32>
    %c5_18 = arith.constant 5 : index
    %301 = memref.load %arg4[%c5_18] : memref<32xf32, #tpu.memory_space<smem>>
    %302 = vector.broadcast %301 : f32 to vector<8x8xf32>
    %303 = arith.addf %300, %302 : vector<8x8xf32>
    %cst_19 = arith.constant 0.000000e+00 : f32
    %304 = vector.broadcast %cst_19 : f32 to vector<8x8xf32>
    %305 = arith.maximumf %303, %304 : vector<8x8xf32>
    %306 = vector.shape_cast %305 : vector<8x8xf32> to vector<4x2x8xf32>
    %cst_20 = arith.constant dense<0xFF800000> : vector<4x8xf32>
    %307 = vector.multi_reduction <maximumf>, %306, %cst_20 [1] : vector<4x2x8xf32> to vector<4x8xf32>
    %c6 = arith.constant 6 : index
    %308 = memref.load %arg3[%c6] : memref<288xf32, #tpu.memory_space<smem>>
    %309 = vector.extract_strided_slice %1 {offsets = [0, 0], sizes = [8, 8], strides = [1, 1]} : vector<10x10xf32> to vector<8x8xf32>
    %310 = vector.broadcast %308 : f32 to vector<8x8xf32>
    %311 = arith.mulf %310, %309 : vector<8x8xf32>
    %c38 = arith.constant 38 : index
    %312 = memref.load %arg3[%c38] : memref<288xf32, #tpu.memory_space<smem>>
    %313 = vector.extract_strided_slice %1 {offsets = [0, 1], sizes = [8, 8], strides = [1, 1]} : vector<10x10xf32> to vector<8x8xf32>
    %314 = vector.broadcast %312 : f32 to vector<8x8xf32>
    %315 = arith.mulf %314, %313 : vector<8x8xf32>
    %316 = arith.addf %311, %315 : vector<8x8xf32>
    %c70 = arith.constant 70 : index
    %317 = memref.load %arg3[%c70] : memref<288xf32, #tpu.memory_space<smem>>
    %318 = vector.extract_strided_slice %1 {offsets = [0, 2], sizes = [8, 8], strides = [1, 1]} : vector<10x10xf32> to vector<8x8xf32>
    %319 = vector.broadcast %317 : f32 to vector<8x8xf32>
    %320 = arith.mulf %319, %318 : vector<8x8xf32>
    %321 = arith.addf %316, %320 : vector<8x8xf32>
    %c102 = arith.constant 102 : index
    %322 = memref.load %arg3[%c102] : memref<288xf32, #tpu.memory_space<smem>>
    %323 = vector.extract_strided_slice %1 {offsets = [1, 0], sizes = [8, 8], strides = [1, 1]} : vector<10x10xf32> to vector<8x8xf32>
    %324 = vector.broadcast %322 : f32 to vector<8x8xf32>
    %325 = arith.mulf %324, %323 : vector<8x8xf32>
    %326 = arith.addf %321, %325 : vector<8x8xf32>
    %c134 = arith.constant 134 : index
    %327 = memref.load %arg3[%c134] : memref<288xf32, #tpu.memory_space<smem>>
    %328 = vector.extract_strided_slice %1 {offsets = [1, 1], sizes = [8, 8], strides = [1, 1]} : vector<10x10xf32> to vector<8x8xf32>
    %329 = vector.broadcast %327 : f32 to vector<8x8xf32>
    %330 = arith.mulf %329, %328 : vector<8x8xf32>
    %331 = arith.addf %326, %330 : vector<8x8xf32>
    %c166 = arith.constant 166 : index
    %332 = memref.load %arg3[%c166] : memref<288xf32, #tpu.memory_space<smem>>
    %333 = vector.extract_strided_slice %1 {offsets = [1, 2], sizes = [8, 8], strides = [1, 1]} : vector<10x10xf32> to vector<8x8xf32>
    %334 = vector.broadcast %332 : f32 to vector<8x8xf32>
    %335 = arith.mulf %334, %333 : vector<8x8xf32>
    %336 = arith.addf %331, %335 : vector<8x8xf32>
    %c198 = arith.constant 198 : index
    %337 = memref.load %arg3[%c198] : memref<288xf32, #tpu.memory_space<smem>>
    %338 = vector.extract_strided_slice %1 {offsets = [2, 0], sizes = [8, 8], strides = [1, 1]} : vector<10x10xf32> to vector<8x8xf32>
    %339 = vector.broadcast %337 : f32 to vector<8x8xf32>
    %340 = arith.mulf %339, %338 : vector<8x8xf32>
    %341 = arith.addf %336, %340 : vector<8x8xf32>
    %c230 = arith.constant 230 : index
    %342 = memref.load %arg3[%c230] : memref<288xf32, #tpu.memory_space<smem>>
    %343 = vector.extract_strided_slice %1 {offsets = [2, 1], sizes = [8, 8], strides = [1, 1]} : vector<10x10xf32> to vector<8x8xf32>
    %344 = vector.broadcast %342 : f32 to vector<8x8xf32>
    %345 = arith.mulf %344, %343 : vector<8x8xf32>
    %346 = arith.addf %341, %345 : vector<8x8xf32>
    %c262 = arith.constant 262 : index
    %347 = memref.load %arg3[%c262] : memref<288xf32, #tpu.memory_space<smem>>
    %348 = vector.extract_strided_slice %1 {offsets = [2, 2], sizes = [8, 8], strides = [1, 1]} : vector<10x10xf32> to vector<8x8xf32>
    %349 = vector.broadcast %347 : f32 to vector<8x8xf32>
    %350 = arith.mulf %349, %348 : vector<8x8xf32>
    %351 = arith.addf %346, %350 : vector<8x8xf32>
    %c6_21 = arith.constant 6 : index
    %352 = memref.load %arg4[%c6_21] : memref<32xf32, #tpu.memory_space<smem>>
    %353 = vector.broadcast %352 : f32 to vector<8x8xf32>
    %354 = arith.addf %351, %353 : vector<8x8xf32>
    %cst_22 = arith.constant 0.000000e+00 : f32
    %355 = vector.broadcast %cst_22 : f32 to vector<8x8xf32>
    %356 = arith.maximumf %354, %355 : vector<8x8xf32>
    %357 = vector.shape_cast %356 : vector<8x8xf32> to vector<4x2x8xf32>
    %cst_23 = arith.constant dense<0xFF800000> : vector<4x8xf32>
    %358 = vector.multi_reduction <maximumf>, %357, %cst_23 [1] : vector<4x2x8xf32> to vector<4x8xf32>
    %c7 = arith.constant 7 : index
    %359 = memref.load %arg3[%c7] : memref<288xf32, #tpu.memory_space<smem>>
    %360 = vector.extract_strided_slice %1 {offsets = [0, 0], sizes = [8, 8], strides = [1, 1]} : vector<10x10xf32> to vector<8x8xf32>
    %361 = vector.broadcast %359 : f32 to vector<8x8xf32>
    %362 = arith.mulf %361, %360 : vector<8x8xf32>
    %c39 = arith.constant 39 : index
    %363 = memref.load %arg3[%c39] : memref<288xf32, #tpu.memory_space<smem>>
    %364 = vector.extract_strided_slice %1 {offsets = [0, 1], sizes = [8, 8], strides = [1, 1]} : vector<10x10xf32> to vector<8x8xf32>
    %365 = vector.broadcast %363 : f32 to vector<8x8xf32>
    %366 = arith.mulf %365, %364 : vector<8x8xf32>
    %367 = arith.addf %362, %366 : vector<8x8xf32>
    %c71 = arith.constant 71 : index
    %368 = memref.load %arg3[%c71] : memref<288xf32, #tpu.memory_space<smem>>
    %369 = vector.extract_strided_slice %1 {offsets = [0, 2], sizes = [8, 8], strides = [1, 1]} : vector<10x10xf32> to vector<8x8xf32>
    %370 = vector.broadcast %368 : f32 to vector<8x8xf32>
    %371 = arith.mulf %370, %369 : vector<8x8xf32>
    %372 = arith.addf %367, %371 : vector<8x8xf32>
    %c103 = arith.constant 103 : index
    %373 = memref.load %arg3[%c103] : memref<288xf32, #tpu.memory_space<smem>>
    %374 = vector.extract_strided_slice %1 {offsets = [1, 0], sizes = [8, 8], strides = [1, 1]} : vector<10x10xf32> to vector<8x8xf32>
    %375 = vector.broadcast %373 : f32 to vector<8x8xf32>
    %376 = arith.mulf %375, %374 : vector<8x8xf32>
    %377 = arith.addf %372, %376 : vector<8x8xf32>
    %c135 = arith.constant 135 : index
    %378 = memref.load %arg3[%c135] : memref<288xf32, #tpu.memory_space<smem>>
    %379 = vector.extract_strided_slice %1 {offsets = [1, 1], sizes = [8, 8], strides = [1, 1]} : vector<10x10xf32> to vector<8x8xf32>
    %380 = vector.broadcast %378 : f32 to vector<8x8xf32>
    %381 = arith.mulf %380, %379 : vector<8x8xf32>
    %382 = arith.addf %377, %381 : vector<8x8xf32>
    %c167 = arith.constant 167 : index
    %383 = memref.load %arg3[%c167] : memref<288xf32, #tpu.memory_space<smem>>
    %384 = vector.extract_strided_slice %1 {offsets = [1, 2], sizes = [8, 8], strides = [1, 1]} : vector<10x10xf32> to vector<8x8xf32>
    %385 = vector.broadcast %383 : f32 to vector<8x8xf32>
    %386 = arith.mulf %385, %384 : vector<8x8xf32>
    %387 = arith.addf %382, %386 : vector<8x8xf32>
    %c199 = arith.constant 199 : index
    %388 = memref.load %arg3[%c199] : memref<288xf32, #tpu.memory_space<smem>>
    %389 = vector.extract_strided_slice %1 {offsets = [2, 0], sizes = [8, 8], strides = [1, 1]} : vector<10x10xf32> to vector<8x8xf32>
    %390 = vector.broadcast %388 : f32 to vector<8x8xf32>
    %391 = arith.mulf %390, %389 : vector<8x8xf32>
    %392 = arith.addf %387, %391 : vector<8x8xf32>
    %c231 = arith.constant 231 : index
    %393 = memref.load %arg3[%c231] : memref<288xf32, #tpu.memory_space<smem>>
    %394 = vector.extract_strided_slice %1 {offsets = [2, 1], sizes = [8, 8], strides = [1, 1]} : vector<10x10xf32> to vector<8x8xf32>
    %395 = vector.broadcast %393 : f32 to vector<8x8xf32>
    %396 = arith.mulf %395, %394 : vector<8x8xf32>
    %397 = arith.addf %392, %396 : vector<8x8xf32>
    %c263 = arith.constant 263 : index
    %398 = memref.load %arg3[%c263] : memref<288xf32, #tpu.memory_space<smem>>
    %399 = vector.extract_strided_slice %1 {offsets = [2, 2], sizes = [8, 8], strides = [1, 1]} : vector<10x10xf32> to vector<8x8xf32>
    %400 = vector.broadcast %398 : f32 to vector<8x8xf32>
    %401 = arith.mulf %400, %399 : vector<8x8xf32>
    %402 = arith.addf %397, %401 : vector<8x8xf32>
    %c7_24 = arith.constant 7 : index
    %403 = memref.load %arg4[%c7_24] : memref<32xf32, #tpu.memory_space<smem>>
    %404 = vector.broadcast %403 : f32 to vector<8x8xf32>
    %405 = arith.addf %402, %404 : vector<8x8xf32>
    %cst_25 = arith.constant 0.000000e+00 : f32
    %406 = vector.broadcast %cst_25 : f32 to vector<8x8xf32>
    %407 = arith.maximumf %405, %406 : vector<8x8xf32>
    %408 = vector.shape_cast %407 : vector<8x8xf32> to vector<4x2x8xf32>
    %cst_26 = arith.constant dense<0xFF800000> : vector<4x8xf32>
    %409 = vector.multi_reduction <maximumf>, %408, %cst_26 [1] : vector<4x2x8xf32> to vector<4x8xf32>
    %c8 = arith.constant 8 : index
    %410 = memref.load %arg3[%c8] : memref<288xf32, #tpu.memory_space<smem>>
    %411 = vector.extract_strided_slice %1 {offsets = [0, 0], sizes = [8, 8], strides = [1, 1]} : vector<10x10xf32> to vector<8x8xf32>
    %412 = vector.broadcast %410 : f32 to vector<8x8xf32>
    %413 = arith.mulf %412, %411 : vector<8x8xf32>
    %c40 = arith.constant 40 : index
    %414 = memref.load %arg3[%c40] : memref<288xf32, #tpu.memory_space<smem>>
    %415 = vector.extract_strided_slice %1 {offsets = [0, 1], sizes = [8, 8], strides = [1, 1]} : vector<10x10xf32> to vector<8x8xf32>
    %416 = vector.broadcast %414 : f32 to vector<8x8xf32>
    %417 = arith.mulf %416, %415 : vector<8x8xf32>
    %418 = arith.addf %413, %417 : vector<8x8xf32>
    %c72 = arith.constant 72 : index
    %419 = memref.load %arg3[%c72] : memref<288xf32, #tpu.memory_space<smem>>
    %420 = vector.extract_strided_slice %1 {offsets = [0, 2], sizes = [8, 8], strides = [1, 1]} : vector<10x10xf32> to vector<8x8xf32>
    %421 = vector.broadcast %419 : f32 to vector<8x8xf32>
    %422 = arith.mulf %421, %420 : vector<8x8xf32>
    %423 = arith.addf %418, %422 : vector<8x8xf32>
    %c104 = arith.constant 104 : index
    %424 = memref.load %arg3[%c104] : memref<288xf32, #tpu.memory_space<smem>>
    %425 = vector.extract_strided_slice %1 {offsets = [1, 0], sizes = [8, 8], strides = [1, 1]} : vector<10x10xf32> to vector<8x8xf32>
    %426 = vector.broadcast %424 : f32 to vector<8x8xf32>
    %427 = arith.mulf %426, %425 : vector<8x8xf32>
    %428 = arith.addf %423, %427 : vector<8x8xf32>
    %c136 = arith.constant 136 : index
    %429 = memref.load %arg3[%c136] : memref<288xf32, #tpu.memory_space<smem>>
    %430 = vector.extract_strided_slice %1 {offsets = [1, 1], sizes = [8, 8], strides = [1, 1]} : vector<10x10xf32> to vector<8x8xf32>
    %431 = vector.broadcast %429 : f32 to vector<8x8xf32>
    %432 = arith.mulf %431, %430 : vector<8x8xf32>
    %433 = arith.addf %428, %432 : vector<8x8xf32>
    %c168 = arith.constant 168 : index
    %434 = memref.load %arg3[%c168] : memref<288xf32, #tpu.memory_space<smem>>
    %435 = vector.extract_strided_slice %1 {offsets = [1, 2], sizes = [8, 8], strides = [1, 1]} : vector<10x10xf32> to vector<8x8xf32>
    %436 = vector.broadcast %434 : f32 to vector<8x8xf32>
    %437 = arith.mulf %436, %435 : vector<8x8xf32>
    %438 = arith.addf %433, %437 : vector<8x8xf32>
    %c200 = arith.constant 200 : index
    %439 = memref.load %arg3[%c200] : memref<288xf32, #tpu.memory_space<smem>>
    %440 = vector.extract_strided_slice %1 {offsets = [2, 0], sizes = [8, 8], strides = [1, 1]} : vector<10x10xf32> to vector<8x8xf32>
    %441 = vector.broadcast %439 : f32 to vector<8x8xf32>
    %442 = arith.mulf %441, %440 : vector<8x8xf32>
    %443 = arith.addf %438, %442 : vector<8x8xf32>
    %c232 = arith.constant 232 : index
    %444 = memref.load %arg3[%c232] : memref<288xf32, #tpu.memory_space<smem>>
    %445 = vector.extract_strided_slice %1 {offsets = [2, 1], sizes = [8, 8], strides = [1, 1]} : vector<10x10xf32> to vector<8x8xf32>
    %446 = vector.broadcast %444 : f32 to vector<8x8xf32>
    %447 = arith.mulf %446, %445 : vector<8x8xf32>
    %448 = arith.addf %443, %447 : vector<8x8xf32>
    %c264 = arith.constant 264 : index
    %449 = memref.load %arg3[%c264] : memref<288xf32, #tpu.memory_space<smem>>
    %450 = vector.extract_strided_slice %1 {offsets = [2, 2], sizes = [8, 8], strides = [1, 1]} : vector<10x10xf32> to vector<8x8xf32>
    %451 = vector.broadcast %449 : f32 to vector<8x8xf32>
    %452 = arith.mulf %451, %450 : vector<8x8xf32>
    %453 = arith.addf %448, %452 : vector<8x8xf32>
    %c8_27 = arith.constant 8 : index
    %454 = memref.load %arg4[%c8_27] : memref<32xf32, #tpu.memory_space<smem>>
    %455 = vector.broadcast %454 : f32 to vector<8x8xf32>
    %456 = arith.addf %453, %455 : vector<8x8xf32>
    %cst_28 = arith.constant 0.000000e+00 : f32
    %457 = vector.broadcast %cst_28 : f32 to vector<8x8xf32>
    %458 = arith.maximumf %456, %457 : vector<8x8xf32>
    %459 = vector.shape_cast %458 : vector<8x8xf32> to vector<4x2x8xf32>
    %cst_29 = arith.constant dense<0xFF800000> : vector<4x8xf32>
    %460 = vector.multi_reduction <maximumf>, %459, %cst_29 [1] : vector<4x2x8xf32> to vector<4x8xf32>
    %c9 = arith.constant 9 : index
    %461 = memref.load %arg3[%c9] : memref<288xf32, #tpu.memory_space<smem>>
    %462 = vector.extract_strided_slice %1 {offsets = [0, 0], sizes = [8, 8], strides = [1, 1]} : vector<10x10xf32> to vector<8x8xf32>
    %463 = vector.broadcast %461 : f32 to vector<8x8xf32>
    %464 = arith.mulf %463, %462 : vector<8x8xf32>
    %c41 = arith.constant 41 : index
    %465 = memref.load %arg3[%c41] : memref<288xf32, #tpu.memory_space<smem>>
    %466 = vector.extract_strided_slice %1 {offsets = [0, 1], sizes = [8, 8], strides = [1, 1]} : vector<10x10xf32> to vector<8x8xf32>
    %467 = vector.broadcast %465 : f32 to vector<8x8xf32>
    %468 = arith.mulf %467, %466 : vector<8x8xf32>
    %469 = arith.addf %464, %468 : vector<8x8xf32>
    %c73 = arith.constant 73 : index
    %470 = memref.load %arg3[%c73] : memref<288xf32, #tpu.memory_space<smem>>
    %471 = vector.extract_strided_slice %1 {offsets = [0, 2], sizes = [8, 8], strides = [1, 1]} : vector<10x10xf32> to vector<8x8xf32>
    %472 = vector.broadcast %470 : f32 to vector<8x8xf32>
    %473 = arith.mulf %472, %471 : vector<8x8xf32>
    %474 = arith.addf %469, %473 : vector<8x8xf32>
    %c105 = arith.constant 105 : index
    %475 = memref.load %arg3[%c105] : memref<288xf32, #tpu.memory_space<smem>>
    %476 = vector.extract_strided_slice %1 {offsets = [1, 0], sizes = [8, 8], strides = [1, 1]} : vector<10x10xf32> to vector<8x8xf32>
    %477 = vector.broadcast %475 : f32 to vector<8x8xf32>
    %478 = arith.mulf %477, %476 : vector<8x8xf32>
    %479 = arith.addf %474, %478 : vector<8x8xf32>
    %c137 = arith.constant 137 : index
    %480 = memref.load %arg3[%c137] : memref<288xf32, #tpu.memory_space<smem>>
    %481 = vector.extract_strided_slice %1 {offsets = [1, 1], sizes = [8, 8], strides = [1, 1]} : vector<10x10xf32> to vector<8x8xf32>
    %482 = vector.broadcast %480 : f32 to vector<8x8xf32>
    %483 = arith.mulf %482, %481 : vector<8x8xf32>
    %484 = arith.addf %479, %483 : vector<8x8xf32>
    %c169 = arith.constant 169 : index
    %485 = memref.load %arg3[%c169] : memref<288xf32, #tpu.memory_space<smem>>
    %486 = vector.extract_strided_slice %1 {offsets = [1, 2], sizes = [8, 8], strides = [1, 1]} : vector<10x10xf32> to vector<8x8xf32>
    %487 = vector.broadcast %485 : f32 to vector<8x8xf32>
    %488 = arith.mulf %487, %486 : vector<8x8xf32>
    %489 = arith.addf %484, %488 : vector<8x8xf32>
    %c201 = arith.constant 201 : index
    %490 = memref.load %arg3[%c201] : memref<288xf32, #tpu.memory_space<smem>>
    %491 = vector.extract_strided_slice %1 {offsets = [2, 0], sizes = [8, 8], strides = [1, 1]} : vector<10x10xf32> to vector<8x8xf32>
    %492 = vector.broadcast %490 : f32 to vector<8x8xf32>
    %493 = arith.mulf %492, %491 : vector<8x8xf32>
    %494 = arith.addf %489, %493 : vector<8x8xf32>
    %c233 = arith.constant 233 : index
    %495 = memref.load %arg3[%c233] : memref<288xf32, #tpu.memory_space<smem>>
    %496 = vector.extract_strided_slice %1 {offsets = [2, 1], sizes = [8, 8], strides = [1, 1]} : vector<10x10xf32> to vector<8x8xf32>
    %497 = vector.broadcast %495 : f32 to vector<8x8xf32>
    %498 = arith.mulf %497, %496 : vector<8x8xf32>
    %499 = arith.addf %494, %498 : vector<8x8xf32>
    %c265 = arith.constant 265 : index
    %500 = memref.load %arg3[%c265] : memref<288xf32, #tpu.memory_space<smem>>
    %501 = vector.extract_strided_slice %1 {offsets = [2, 2], sizes = [8, 8], strides = [1, 1]} : vector<10x10xf32> to vector<8x8xf32>
    %502 = vector.broadcast %500 : f32 to vector<8x8xf32>
    %503 = arith.mulf %502, %501 : vector<8x8xf32>
    %504 = arith.addf %499, %503 : vector<8x8xf32>
    %c9_30 = arith.constant 9 : index
    %505 = memref.load %arg4[%c9_30] : memref<32xf32, #tpu.memory_space<smem>>
    %506 = vector.broadcast %505 : f32 to vector<8x8xf32>
    %507 = arith.addf %504, %506 : vector<8x8xf32>
    %cst_31 = arith.constant 0.000000e+00 : f32
    %508 = vector.broadcast %cst_31 : f32 to vector<8x8xf32>
    %509 = arith.maximumf %507, %508 : vector<8x8xf32>
    %510 = vector.shape_cast %509 : vector<8x8xf32> to vector<4x2x8xf32>
    %cst_32 = arith.constant dense<0xFF800000> : vector<4x8xf32>
    %511 = vector.multi_reduction <maximumf>, %510, %cst_32 [1] : vector<4x2x8xf32> to vector<4x8xf32>
    %c10 = arith.constant 10 : index
    %512 = memref.load %arg3[%c10] : memref<288xf32, #tpu.memory_space<smem>>
    %513 = vector.extract_strided_slice %1 {offsets = [0, 0], sizes = [8, 8], strides = [1, 1]} : vector<10x10xf32> to vector<8x8xf32>
    %514 = vector.broadcast %512 : f32 to vector<8x8xf32>
    %515 = arith.mulf %514, %513 : vector<8x8xf32>
    %c42 = arith.constant 42 : index
    %516 = memref.load %arg3[%c42] : memref<288xf32, #tpu.memory_space<smem>>
    %517 = vector.extract_strided_slice %1 {offsets = [0, 1], sizes = [8, 8], strides = [1, 1]} : vector<10x10xf32> to vector<8x8xf32>
    %518 = vector.broadcast %516 : f32 to vector<8x8xf32>
    %519 = arith.mulf %518, %517 : vector<8x8xf32>
    %520 = arith.addf %515, %519 : vector<8x8xf32>
    %c74 = arith.constant 74 : index
    %521 = memref.load %arg3[%c74] : memref<288xf32, #tpu.memory_space<smem>>
    %522 = vector.extract_strided_slice %1 {offsets = [0, 2], sizes = [8, 8], strides = [1, 1]} : vector<10x10xf32> to vector<8x8xf32>
    %523 = vector.broadcast %521 : f32 to vector<8x8xf32>
    %524 = arith.mulf %523, %522 : vector<8x8xf32>
    %525 = arith.addf %520, %524 : vector<8x8xf32>
    %c106 = arith.constant 106 : index
    %526 = memref.load %arg3[%c106] : memref<288xf32, #tpu.memory_space<smem>>
    %527 = vector.extract_strided_slice %1 {offsets = [1, 0], sizes = [8, 8], strides = [1, 1]} : vector<10x10xf32> to vector<8x8xf32>
    %528 = vector.broadcast %526 : f32 to vector<8x8xf32>
    %529 = arith.mulf %528, %527 : vector<8x8xf32>
    %530 = arith.addf %525, %529 : vector<8x8xf32>
    %c138 = arith.constant 138 : index
    %531 = memref.load %arg3[%c138] : memref<288xf32, #tpu.memory_space<smem>>
    %532 = vector.extract_strided_slice %1 {offsets = [1, 1], sizes = [8, 8], strides = [1, 1]} : vector<10x10xf32> to vector<8x8xf32>
    %533 = vector.broadcast %531 : f32 to vector<8x8xf32>
    %534 = arith.mulf %533, %532 : vector<8x8xf32>
    %535 = arith.addf %530, %534 : vector<8x8xf32>
    %c170 = arith.constant 170 : index
    %536 = memref.load %arg3[%c170] : memref<288xf32, #tpu.memory_space<smem>>
    %537 = vector.extract_strided_slice %1 {offsets = [1, 2], sizes = [8, 8], strides = [1, 1]} : vector<10x10xf32> to vector<8x8xf32>
    %538 = vector.broadcast %536 : f32 to vector<8x8xf32>
    %539 = arith.mulf %538, %537 : vector<8x8xf32>
    %540 = arith.addf %535, %539 : vector<8x8xf32>
    %c202 = arith.constant 202 : index
    %541 = memref.load %arg3[%c202] : memref<288xf32, #tpu.memory_space<smem>>
    %542 = vector.extract_strided_slice %1 {offsets = [2, 0], sizes = [8, 8], strides = [1, 1]} : vector<10x10xf32> to vector<8x8xf32>
    %543 = vector.broadcast %541 : f32 to vector<8x8xf32>
    %544 = arith.mulf %543, %542 : vector<8x8xf32>
    %545 = arith.addf %540, %544 : vector<8x8xf32>
    %c234 = arith.constant 234 : index
    %546 = memref.load %arg3[%c234] : memref<288xf32, #tpu.memory_space<smem>>
    %547 = vector.extract_strided_slice %1 {offsets = [2, 1], sizes = [8, 8], strides = [1, 1]} : vector<10x10xf32> to vector<8x8xf32>
    %548 = vector.broadcast %546 : f32 to vector<8x8xf32>
    %549 = arith.mulf %548, %547 : vector<8x8xf32>
    %550 = arith.addf %545, %549 : vector<8x8xf32>
    %c266 = arith.constant 266 : index
    %551 = memref.load %arg3[%c266] : memref<288xf32, #tpu.memory_space<smem>>
    %552 = vector.extract_strided_slice %1 {offsets = [2, 2], sizes = [8, 8], strides = [1, 1]} : vector<10x10xf32> to vector<8x8xf32>
    %553 = vector.broadcast %551 : f32 to vector<8x8xf32>
    %554 = arith.mulf %553, %552 : vector<8x8xf32>
    %555 = arith.addf %550, %554 : vector<8x8xf32>
    %c10_33 = arith.constant 10 : index
    %556 = memref.load %arg4[%c10_33] : memref<32xf32, #tpu.memory_space<smem>>
    %557 = vector.broadcast %556 : f32 to vector<8x8xf32>
    %558 = arith.addf %555, %557 : vector<8x8xf32>
    %cst_34 = arith.constant 0.000000e+00 : f32
    %559 = vector.broadcast %cst_34 : f32 to vector<8x8xf32>
    %560 = arith.maximumf %558, %559 : vector<8x8xf32>
    %561 = vector.shape_cast %560 : vector<8x8xf32> to vector<4x2x8xf32>
    %cst_35 = arith.constant dense<0xFF800000> : vector<4x8xf32>
    %562 = vector.multi_reduction <maximumf>, %561, %cst_35 [1] : vector<4x2x8xf32> to vector<4x8xf32>
    %c11 = arith.constant 11 : index
    %563 = memref.load %arg3[%c11] : memref<288xf32, #tpu.memory_space<smem>>
    %564 = vector.extract_strided_slice %1 {offsets = [0, 0], sizes = [8, 8], strides = [1, 1]} : vector<10x10xf32> to vector<8x8xf32>
    %565 = vector.broadcast %563 : f32 to vector<8x8xf32>
    %566 = arith.mulf %565, %564 : vector<8x8xf32>
    %c43 = arith.constant 43 : index
    %567 = memref.load %arg3[%c43] : memref<288xf32, #tpu.memory_space<smem>>
    %568 = vector.extract_strided_slice %1 {offsets = [0, 1], sizes = [8, 8], strides = [1, 1]} : vector<10x10xf32> to vector<8x8xf32>
    %569 = vector.broadcast %567 : f32 to vector<8x8xf32>
    %570 = arith.mulf %569, %568 : vector<8x8xf32>
    %571 = arith.addf %566, %570 : vector<8x8xf32>
    %c75 = arith.constant 75 : index
    %572 = memref.load %arg3[%c75] : memref<288xf32, #tpu.memory_space<smem>>
    %573 = vector.extract_strided_slice %1 {offsets = [0, 2], sizes = [8, 8], strides = [1, 1]} : vector<10x10xf32> to vector<8x8xf32>
    %574 = vector.broadcast %572 : f32 to vector<8x8xf32>
    %575 = arith.mulf %574, %573 : vector<8x8xf32>
    %576 = arith.addf %571, %575 : vector<8x8xf32>
    %c107 = arith.constant 107 : index
    %577 = memref.load %arg3[%c107] : memref<288xf32, #tpu.memory_space<smem>>
    %578 = vector.extract_strided_slice %1 {offsets = [1, 0], sizes = [8, 8], strides = [1, 1]} : vector<10x10xf32> to vector<8x8xf32>
    %579 = vector.broadcast %577 : f32 to vector<8x8xf32>
    %580 = arith.mulf %579, %578 : vector<8x8xf32>
    %581 = arith.addf %576, %580 : vector<8x8xf32>
    %c139 = arith.constant 139 : index
    %582 = memref.load %arg3[%c139] : memref<288xf32, #tpu.memory_space<smem>>
    %583 = vector.extract_strided_slice %1 {offsets = [1, 1], sizes = [8, 8], strides = [1, 1]} : vector<10x10xf32> to vector<8x8xf32>
    %584 = vector.broadcast %582 : f32 to vector<8x8xf32>
    %585 = arith.mulf %584, %583 : vector<8x8xf32>
    %586 = arith.addf %581, %585 : vector<8x8xf32>
    %c171 = arith.constant 171 : index
    %587 = memref.load %arg3[%c171] : memref<288xf32, #tpu.memory_space<smem>>
    %588 = vector.extract_strided_slice %1 {offsets = [1, 2], sizes = [8, 8], strides = [1, 1]} : vector<10x10xf32> to vector<8x8xf32>
    %589 = vector.broadcast %587 : f32 to vector<8x8xf32>
    %590 = arith.mulf %589, %588 : vector<8x8xf32>
    %591 = arith.addf %586, %590 : vector<8x8xf32>
    %c203 = arith.constant 203 : index
    %592 = memref.load %arg3[%c203] : memref<288xf32, #tpu.memory_space<smem>>
    %593 = vector.extract_strided_slice %1 {offsets = [2, 0], sizes = [8, 8], strides = [1, 1]} : vector<10x10xf32> to vector<8x8xf32>
    %594 = vector.broadcast %592 : f32 to vector<8x8xf32>
    %595 = arith.mulf %594, %593 : vector<8x8xf32>
    %596 = arith.addf %591, %595 : vector<8x8xf32>
    %c235 = arith.constant 235 : index
    %597 = memref.load %arg3[%c235] : memref<288xf32, #tpu.memory_space<smem>>
    %598 = vector.extract_strided_slice %1 {offsets = [2, 1], sizes = [8, 8], strides = [1, 1]} : vector<10x10xf32> to vector<8x8xf32>
    %599 = vector.broadcast %597 : f32 to vector<8x8xf32>
    %600 = arith.mulf %599, %598 : vector<8x8xf32>
    %601 = arith.addf %596, %600 : vector<8x8xf32>
    %c267 = arith.constant 267 : index
    %602 = memref.load %arg3[%c267] : memref<288xf32, #tpu.memory_space<smem>>
    %603 = vector.extract_strided_slice %1 {offsets = [2, 2], sizes = [8, 8], strides = [1, 1]} : vector<10x10xf32> to vector<8x8xf32>
    %604 = vector.broadcast %602 : f32 to vector<8x8xf32>
    %605 = arith.mulf %604, %603 : vector<8x8xf32>
    %606 = arith.addf %601, %605 : vector<8x8xf32>
    %c11_36 = arith.constant 11 : index
    %607 = memref.load %arg4[%c11_36] : memref<32xf32, #tpu.memory_space<smem>>
    %608 = vector.broadcast %607 : f32 to vector<8x8xf32>
    %609 = arith.addf %606, %608 : vector<8x8xf32>
    %cst_37 = arith.constant 0.000000e+00 : f32
    %610 = vector.broadcast %cst_37 : f32 to vector<8x8xf32>
    %611 = arith.maximumf %609, %610 : vector<8x8xf32>
    %612 = vector.shape_cast %611 : vector<8x8xf32> to vector<4x2x8xf32>
    %cst_38 = arith.constant dense<0xFF800000> : vector<4x8xf32>
    %613 = vector.multi_reduction <maximumf>, %612, %cst_38 [1] : vector<4x2x8xf32> to vector<4x8xf32>
    %c12 = arith.constant 12 : index
    %614 = memref.load %arg3[%c12] : memref<288xf32, #tpu.memory_space<smem>>
    %615 = vector.extract_strided_slice %1 {offsets = [0, 0], sizes = [8, 8], strides = [1, 1]} : vector<10x10xf32> to vector<8x8xf32>
    %616 = vector.broadcast %614 : f32 to vector<8x8xf32>
    %617 = arith.mulf %616, %615 : vector<8x8xf32>
    %c44 = arith.constant 44 : index
    %618 = memref.load %arg3[%c44] : memref<288xf32, #tpu.memory_space<smem>>
    %619 = vector.extract_strided_slice %1 {offsets = [0, 1], sizes = [8, 8], strides = [1, 1]} : vector<10x10xf32> to vector<8x8xf32>
    %620 = vector.broadcast %618 : f32 to vector<8x8xf32>
    %621 = arith.mulf %620, %619 : vector<8x8xf32>
    %622 = arith.addf %617, %621 : vector<8x8xf32>
    %c76 = arith.constant 76 : index
    %623 = memref.load %arg3[%c76] : memref<288xf32, #tpu.memory_space<smem>>
    %624 = vector.extract_strided_slice %1 {offsets = [0, 2], sizes = [8, 8], strides = [1, 1]} : vector<10x10xf32> to vector<8x8xf32>
    %625 = vector.broadcast %623 : f32 to vector<8x8xf32>
    %626 = arith.mulf %625, %624 : vector<8x8xf32>
    %627 = arith.addf %622, %626 : vector<8x8xf32>
    %c108 = arith.constant 108 : index
    %628 = memref.load %arg3[%c108] : memref<288xf32, #tpu.memory_space<smem>>
    %629 = vector.extract_strided_slice %1 {offsets = [1, 0], sizes = [8, 8], strides = [1, 1]} : vector<10x10xf32> to vector<8x8xf32>
    %630 = vector.broadcast %628 : f32 to vector<8x8xf32>
    %631 = arith.mulf %630, %629 : vector<8x8xf32>
    %632 = arith.addf %627, %631 : vector<8x8xf32>
    %c140 = arith.constant 140 : index
    %633 = memref.load %arg3[%c140] : memref<288xf32, #tpu.memory_space<smem>>
    %634 = vector.extract_strided_slice %1 {offsets = [1, 1], sizes = [8, 8], strides = [1, 1]} : vector<10x10xf32> to vector<8x8xf32>
    %635 = vector.broadcast %633 : f32 to vector<8x8xf32>
    %636 = arith.mulf %635, %634 : vector<8x8xf32>
    %637 = arith.addf %632, %636 : vector<8x8xf32>
    %c172 = arith.constant 172 : index
    %638 = memref.load %arg3[%c172] : memref<288xf32, #tpu.memory_space<smem>>
    %639 = vector.extract_strided_slice %1 {offsets = [1, 2], sizes = [8, 8], strides = [1, 1]} : vector<10x10xf32> to vector<8x8xf32>
    %640 = vector.broadcast %638 : f32 to vector<8x8xf32>
    %641 = arith.mulf %640, %639 : vector<8x8xf32>
    %642 = arith.addf %637, %641 : vector<8x8xf32>
    %c204 = arith.constant 204 : index
    %643 = memref.load %arg3[%c204] : memref<288xf32, #tpu.memory_space<smem>>
    %644 = vector.extract_strided_slice %1 {offsets = [2, 0], sizes = [8, 8], strides = [1, 1]} : vector<10x10xf32> to vector<8x8xf32>
    %645 = vector.broadcast %643 : f32 to vector<8x8xf32>
    %646 = arith.mulf %645, %644 : vector<8x8xf32>
    %647 = arith.addf %642, %646 : vector<8x8xf32>
    %c236 = arith.constant 236 : index
    %648 = memref.load %arg3[%c236] : memref<288xf32, #tpu.memory_space<smem>>
    %649 = vector.extract_strided_slice %1 {offsets = [2, 1], sizes = [8, 8], strides = [1, 1]} : vector<10x10xf32> to vector<8x8xf32>
    %650 = vector.broadcast %648 : f32 to vector<8x8xf32>
    %651 = arith.mulf %650, %649 : vector<8x8xf32>
    %652 = arith.addf %647, %651 : vector<8x8xf32>
    %c268 = arith.constant 268 : index
    %653 = memref.load %arg3[%c268] : memref<288xf32, #tpu.memory_space<smem>>
    %654 = vector.extract_strided_slice %1 {offsets = [2, 2], sizes = [8, 8], strides = [1, 1]} : vector<10x10xf32> to vector<8x8xf32>
    %655 = vector.broadcast %653 : f32 to vector<8x8xf32>
    %656 = arith.mulf %655, %654 : vector<8x8xf32>
    %657 = arith.addf %652, %656 : vector<8x8xf32>
    %c12_39 = arith.constant 12 : index
    %658 = memref.load %arg4[%c12_39] : memref<32xf32, #tpu.memory_space<smem>>
    %659 = vector.broadcast %658 : f32 to vector<8x8xf32>
    %660 = arith.addf %657, %659 : vector<8x8xf32>
    %cst_40 = arith.constant 0.000000e+00 : f32
    %661 = vector.broadcast %cst_40 : f32 to vector<8x8xf32>
    %662 = arith.maximumf %660, %661 : vector<8x8xf32>
    %663 = vector.shape_cast %662 : vector<8x8xf32> to vector<4x2x8xf32>
    %cst_41 = arith.constant dense<0xFF800000> : vector<4x8xf32>
    %664 = vector.multi_reduction <maximumf>, %663, %cst_41 [1] : vector<4x2x8xf32> to vector<4x8xf32>
    %c13 = arith.constant 13 : index
    %665 = memref.load %arg3[%c13] : memref<288xf32, #tpu.memory_space<smem>>
    %666 = vector.extract_strided_slice %1 {offsets = [0, 0], sizes = [8, 8], strides = [1, 1]} : vector<10x10xf32> to vector<8x8xf32>
    %667 = vector.broadcast %665 : f32 to vector<8x8xf32>
    %668 = arith.mulf %667, %666 : vector<8x8xf32>
    %c45 = arith.constant 45 : index
    %669 = memref.load %arg3[%c45] : memref<288xf32, #tpu.memory_space<smem>>
    %670 = vector.extract_strided_slice %1 {offsets = [0, 1], sizes = [8, 8], strides = [1, 1]} : vector<10x10xf32> to vector<8x8xf32>
    %671 = vector.broadcast %669 : f32 to vector<8x8xf32>
    %672 = arith.mulf %671, %670 : vector<8x8xf32>
    %673 = arith.addf %668, %672 : vector<8x8xf32>
    %c77 = arith.constant 77 : index
    %674 = memref.load %arg3[%c77] : memref<288xf32, #tpu.memory_space<smem>>
    %675 = vector.extract_strided_slice %1 {offsets = [0, 2], sizes = [8, 8], strides = [1, 1]} : vector<10x10xf32> to vector<8x8xf32>
    %676 = vector.broadcast %674 : f32 to vector<8x8xf32>
    %677 = arith.mulf %676, %675 : vector<8x8xf32>
    %678 = arith.addf %673, %677 : vector<8x8xf32>
    %c109 = arith.constant 109 : index
    %679 = memref.load %arg3[%c109] : memref<288xf32, #tpu.memory_space<smem>>
    %680 = vector.extract_strided_slice %1 {offsets = [1, 0], sizes = [8, 8], strides = [1, 1]} : vector<10x10xf32> to vector<8x8xf32>
    %681 = vector.broadcast %679 : f32 to vector<8x8xf32>
    %682 = arith.mulf %681, %680 : vector<8x8xf32>
    %683 = arith.addf %678, %682 : vector<8x8xf32>
    %c141 = arith.constant 141 : index
    %684 = memref.load %arg3[%c141] : memref<288xf32, #tpu.memory_space<smem>>
    %685 = vector.extract_strided_slice %1 {offsets = [1, 1], sizes = [8, 8], strides = [1, 1]} : vector<10x10xf32> to vector<8x8xf32>
    %686 = vector.broadcast %684 : f32 to vector<8x8xf32>
    %687 = arith.mulf %686, %685 : vector<8x8xf32>
    %688 = arith.addf %683, %687 : vector<8x8xf32>
    %c173 = arith.constant 173 : index
    %689 = memref.load %arg3[%c173] : memref<288xf32, #tpu.memory_space<smem>>
    %690 = vector.extract_strided_slice %1 {offsets = [1, 2], sizes = [8, 8], strides = [1, 1]} : vector<10x10xf32> to vector<8x8xf32>
    %691 = vector.broadcast %689 : f32 to vector<8x8xf32>
    %692 = arith.mulf %691, %690 : vector<8x8xf32>
    %693 = arith.addf %688, %692 : vector<8x8xf32>
    %c205 = arith.constant 205 : index
    %694 = memref.load %arg3[%c205] : memref<288xf32, #tpu.memory_space<smem>>
    %695 = vector.extract_strided_slice %1 {offsets = [2, 0], sizes = [8, 8], strides = [1, 1]} : vector<10x10xf32> to vector<8x8xf32>
    %696 = vector.broadcast %694 : f32 to vector<8x8xf32>
    %697 = arith.mulf %696, %695 : vector<8x8xf32>
    %698 = arith.addf %693, %697 : vector<8x8xf32>
    %c237 = arith.constant 237 : index
    %699 = memref.load %arg3[%c237] : memref<288xf32, #tpu.memory_space<smem>>
    %700 = vector.extract_strided_slice %1 {offsets = [2, 1], sizes = [8, 8], strides = [1, 1]} : vector<10x10xf32> to vector<8x8xf32>
    %701 = vector.broadcast %699 : f32 to vector<8x8xf32>
    %702 = arith.mulf %701, %700 : vector<8x8xf32>
    %703 = arith.addf %698, %702 : vector<8x8xf32>
    %c269 = arith.constant 269 : index
    %704 = memref.load %arg3[%c269] : memref<288xf32, #tpu.memory_space<smem>>
    %705 = vector.extract_strided_slice %1 {offsets = [2, 2], sizes = [8, 8], strides = [1, 1]} : vector<10x10xf32> to vector<8x8xf32>
    %706 = vector.broadcast %704 : f32 to vector<8x8xf32>
    %707 = arith.mulf %706, %705 : vector<8x8xf32>
    %708 = arith.addf %703, %707 : vector<8x8xf32>
    %c13_42 = arith.constant 13 : index
    %709 = memref.load %arg4[%c13_42] : memref<32xf32, #tpu.memory_space<smem>>
    %710 = vector.broadcast %709 : f32 to vector<8x8xf32>
    %711 = arith.addf %708, %710 : vector<8x8xf32>
    %cst_43 = arith.constant 0.000000e+00 : f32
    %712 = vector.broadcast %cst_43 : f32 to vector<8x8xf32>
    %713 = arith.maximumf %711, %712 : vector<8x8xf32>
    %714 = vector.shape_cast %713 : vector<8x8xf32> to vector<4x2x8xf32>
    %cst_44 = arith.constant dense<0xFF800000> : vector<4x8xf32>
    %715 = vector.multi_reduction <maximumf>, %714, %cst_44 [1] : vector<4x2x8xf32> to vector<4x8xf32>
    %c14 = arith.constant 14 : index
    %716 = memref.load %arg3[%c14] : memref<288xf32, #tpu.memory_space<smem>>
    %717 = vector.extract_strided_slice %1 {offsets = [0, 0], sizes = [8, 8], strides = [1, 1]} : vector<10x10xf32> to vector<8x8xf32>
    %718 = vector.broadcast %716 : f32 to vector<8x8xf32>
    %719 = arith.mulf %718, %717 : vector<8x8xf32>
    %c46 = arith.constant 46 : index
    %720 = memref.load %arg3[%c46] : memref<288xf32, #tpu.memory_space<smem>>
    %721 = vector.extract_strided_slice %1 {offsets = [0, 1], sizes = [8, 8], strides = [1, 1]} : vector<10x10xf32> to vector<8x8xf32>
    %722 = vector.broadcast %720 : f32 to vector<8x8xf32>
    %723 = arith.mulf %722, %721 : vector<8x8xf32>
    %724 = arith.addf %719, %723 : vector<8x8xf32>
    %c78 = arith.constant 78 : index
    %725 = memref.load %arg3[%c78] : memref<288xf32, #tpu.memory_space<smem>>
    %726 = vector.extract_strided_slice %1 {offsets = [0, 2], sizes = [8, 8], strides = [1, 1]} : vector<10x10xf32> to vector<8x8xf32>
    %727 = vector.broadcast %725 : f32 to vector<8x8xf32>
    %728 = arith.mulf %727, %726 : vector<8x8xf32>
    %729 = arith.addf %724, %728 : vector<8x8xf32>
    %c110 = arith.constant 110 : index
    %730 = memref.load %arg3[%c110] : memref<288xf32, #tpu.memory_space<smem>>
    %731 = vector.extract_strided_slice %1 {offsets = [1, 0], sizes = [8, 8], strides = [1, 1]} : vector<10x10xf32> to vector<8x8xf32>
    %732 = vector.broadcast %730 : f32 to vector<8x8xf32>
    %733 = arith.mulf %732, %731 : vector<8x8xf32>
    %734 = arith.addf %729, %733 : vector<8x8xf32>
    %c142 = arith.constant 142 : index
    %735 = memref.load %arg3[%c142] : memref<288xf32, #tpu.memory_space<smem>>
    %736 = vector.extract_strided_slice %1 {offsets = [1, 1], sizes = [8, 8], strides = [1, 1]} : vector<10x10xf32> to vector<8x8xf32>
    %737 = vector.broadcast %735 : f32 to vector<8x8xf32>
    %738 = arith.mulf %737, %736 : vector<8x8xf32>
    %739 = arith.addf %734, %738 : vector<8x8xf32>
    %c174 = arith.constant 174 : index
    %740 = memref.load %arg3[%c174] : memref<288xf32, #tpu.memory_space<smem>>
    %741 = vector.extract_strided_slice %1 {offsets = [1, 2], sizes = [8, 8], strides = [1, 1]} : vector<10x10xf32> to vector<8x8xf32>
    %742 = vector.broadcast %740 : f32 to vector<8x8xf32>
    %743 = arith.mulf %742, %741 : vector<8x8xf32>
    %744 = arith.addf %739, %743 : vector<8x8xf32>
    %c206 = arith.constant 206 : index
    %745 = memref.load %arg3[%c206] : memref<288xf32, #tpu.memory_space<smem>>
    %746 = vector.extract_strided_slice %1 {offsets = [2, 0], sizes = [8, 8], strides = [1, 1]} : vector<10x10xf32> to vector<8x8xf32>
    %747 = vector.broadcast %745 : f32 to vector<8x8xf32>
    %748 = arith.mulf %747, %746 : vector<8x8xf32>
    %749 = arith.addf %744, %748 : vector<8x8xf32>
    %c238 = arith.constant 238 : index
    %750 = memref.load %arg3[%c238] : memref<288xf32, #tpu.memory_space<smem>>
    %751 = vector.extract_strided_slice %1 {offsets = [2, 1], sizes = [8, 8], strides = [1, 1]} : vector<10x10xf32> to vector<8x8xf32>
    %752 = vector.broadcast %750 : f32 to vector<8x8xf32>
    %753 = arith.mulf %752, %751 : vector<8x8xf32>
    %754 = arith.addf %749, %753 : vector<8x8xf32>
    %c270 = arith.constant 270 : index
    %755 = memref.load %arg3[%c270] : memref<288xf32, #tpu.memory_space<smem>>
    %756 = vector.extract_strided_slice %1 {offsets = [2, 2], sizes = [8, 8], strides = [1, 1]} : vector<10x10xf32> to vector<8x8xf32>
    %757 = vector.broadcast %755 : f32 to vector<8x8xf32>
    %758 = arith.mulf %757, %756 : vector<8x8xf32>
    %759 = arith.addf %754, %758 : vector<8x8xf32>
    %c14_45 = arith.constant 14 : index
    %760 = memref.load %arg4[%c14_45] : memref<32xf32, #tpu.memory_space<smem>>
    %761 = vector.broadcast %760 : f32 to vector<8x8xf32>
    %762 = arith.addf %759, %761 : vector<8x8xf32>
    %cst_46 = arith.constant 0.000000e+00 : f32
    %763 = vector.broadcast %cst_46 : f32 to vector<8x8xf32>
    %764 = arith.maximumf %762, %763 : vector<8x8xf32>
    %765 = vector.shape_cast %764 : vector<8x8xf32> to vector<4x2x8xf32>
    %cst_47 = arith.constant dense<0xFF800000> : vector<4x8xf32>
    %766 = vector.multi_reduction <maximumf>, %765, %cst_47 [1] : vector<4x2x8xf32> to vector<4x8xf32>
    %c15 = arith.constant 15 : index
    %767 = memref.load %arg3[%c15] : memref<288xf32, #tpu.memory_space<smem>>
    %768 = vector.extract_strided_slice %1 {offsets = [0, 0], sizes = [8, 8], strides = [1, 1]} : vector<10x10xf32> to vector<8x8xf32>
    %769 = vector.broadcast %767 : f32 to vector<8x8xf32>
    %770 = arith.mulf %769, %768 : vector<8x8xf32>
    %c47 = arith.constant 47 : index
    %771 = memref.load %arg3[%c47] : memref<288xf32, #tpu.memory_space<smem>>
    %772 = vector.extract_strided_slice %1 {offsets = [0, 1], sizes = [8, 8], strides = [1, 1]} : vector<10x10xf32> to vector<8x8xf32>
    %773 = vector.broadcast %771 : f32 to vector<8x8xf32>
    %774 = arith.mulf %773, %772 : vector<8x8xf32>
    %775 = arith.addf %770, %774 : vector<8x8xf32>
    %c79 = arith.constant 79 : index
    %776 = memref.load %arg3[%c79] : memref<288xf32, #tpu.memory_space<smem>>
    %777 = vector.extract_strided_slice %1 {offsets = [0, 2], sizes = [8, 8], strides = [1, 1]} : vector<10x10xf32> to vector<8x8xf32>
    %778 = vector.broadcast %776 : f32 to vector<8x8xf32>
    %779 = arith.mulf %778, %777 : vector<8x8xf32>
    %780 = arith.addf %775, %779 : vector<8x8xf32>
    %c111 = arith.constant 111 : index
    %781 = memref.load %arg3[%c111] : memref<288xf32, #tpu.memory_space<smem>>
    %782 = vector.extract_strided_slice %1 {offsets = [1, 0], sizes = [8, 8], strides = [1, 1]} : vector<10x10xf32> to vector<8x8xf32>
    %783 = vector.broadcast %781 : f32 to vector<8x8xf32>
    %784 = arith.mulf %783, %782 : vector<8x8xf32>
    %785 = arith.addf %780, %784 : vector<8x8xf32>
    %c143 = arith.constant 143 : index
    %786 = memref.load %arg3[%c143] : memref<288xf32, #tpu.memory_space<smem>>
    %787 = vector.extract_strided_slice %1 {offsets = [1, 1], sizes = [8, 8], strides = [1, 1]} : vector<10x10xf32> to vector<8x8xf32>
    %788 = vector.broadcast %786 : f32 to vector<8x8xf32>
    %789 = arith.mulf %788, %787 : vector<8x8xf32>
    %790 = arith.addf %785, %789 : vector<8x8xf32>
    %c175 = arith.constant 175 : index
    %791 = memref.load %arg3[%c175] : memref<288xf32, #tpu.memory_space<smem>>
    %792 = vector.extract_strided_slice %1 {offsets = [1, 2], sizes = [8, 8], strides = [1, 1]} : vector<10x10xf32> to vector<8x8xf32>
    %793 = vector.broadcast %791 : f32 to vector<8x8xf32>
    %794 = arith.mulf %793, %792 : vector<8x8xf32>
    %795 = arith.addf %790, %794 : vector<8x8xf32>
    %c207 = arith.constant 207 : index
    %796 = memref.load %arg3[%c207] : memref<288xf32, #tpu.memory_space<smem>>
    %797 = vector.extract_strided_slice %1 {offsets = [2, 0], sizes = [8, 8], strides = [1, 1]} : vector<10x10xf32> to vector<8x8xf32>
    %798 = vector.broadcast %796 : f32 to vector<8x8xf32>
    %799 = arith.mulf %798, %797 : vector<8x8xf32>
    %800 = arith.addf %795, %799 : vector<8x8xf32>
    %c239 = arith.constant 239 : index
    %801 = memref.load %arg3[%c239] : memref<288xf32, #tpu.memory_space<smem>>
    %802 = vector.extract_strided_slice %1 {offsets = [2, 1], sizes = [8, 8], strides = [1, 1]} : vector<10x10xf32> to vector<8x8xf32>
    %803 = vector.broadcast %801 : f32 to vector<8x8xf32>
    %804 = arith.mulf %803, %802 : vector<8x8xf32>
    %805 = arith.addf %800, %804 : vector<8x8xf32>
    %c271 = arith.constant 271 : index
    %806 = memref.load %arg3[%c271] : memref<288xf32, #tpu.memory_space<smem>>
    %807 = vector.extract_strided_slice %1 {offsets = [2, 2], sizes = [8, 8], strides = [1, 1]} : vector<10x10xf32> to vector<8x8xf32>
    %808 = vector.broadcast %806 : f32 to vector<8x8xf32>
    %809 = arith.mulf %808, %807 : vector<8x8xf32>
    %810 = arith.addf %805, %809 : vector<8x8xf32>
    %c15_48 = arith.constant 15 : index
    %811 = memref.load %arg4[%c15_48] : memref<32xf32, #tpu.memory_space<smem>>
    %812 = vector.broadcast %811 : f32 to vector<8x8xf32>
    %813 = arith.addf %810, %812 : vector<8x8xf32>
    %cst_49 = arith.constant 0.000000e+00 : f32
    %814 = vector.broadcast %cst_49 : f32 to vector<8x8xf32>
    %815 = arith.maximumf %813, %814 : vector<8x8xf32>
    %816 = vector.shape_cast %815 : vector<8x8xf32> to vector<4x2x8xf32>
    %cst_50 = arith.constant dense<0xFF800000> : vector<4x8xf32>
    %817 = vector.multi_reduction <maximumf>, %816, %cst_50 [1] : vector<4x2x8xf32> to vector<4x8xf32>
    %c16 = arith.constant 16 : index
    %818 = memref.load %arg3[%c16] : memref<288xf32, #tpu.memory_space<smem>>
    %819 = vector.extract_strided_slice %1 {offsets = [0, 0], sizes = [8, 8], strides = [1, 1]} : vector<10x10xf32> to vector<8x8xf32>
    %820 = vector.broadcast %818 : f32 to vector<8x8xf32>
    %821 = arith.mulf %820, %819 : vector<8x8xf32>
    %c48 = arith.constant 48 : index
    %822 = memref.load %arg3[%c48] : memref<288xf32, #tpu.memory_space<smem>>
    %823 = vector.extract_strided_slice %1 {offsets = [0, 1], sizes = [8, 8], strides = [1, 1]} : vector<10x10xf32> to vector<8x8xf32>
    %824 = vector.broadcast %822 : f32 to vector<8x8xf32>
    %825 = arith.mulf %824, %823 : vector<8x8xf32>
    %826 = arith.addf %821, %825 : vector<8x8xf32>
    %c80 = arith.constant 80 : index
    %827 = memref.load %arg3[%c80] : memref<288xf32, #tpu.memory_space<smem>>
    %828 = vector.extract_strided_slice %1 {offsets = [0, 2], sizes = [8, 8], strides = [1, 1]} : vector<10x10xf32> to vector<8x8xf32>
    %829 = vector.broadcast %827 : f32 to vector<8x8xf32>
    %830 = arith.mulf %829, %828 : vector<8x8xf32>
    %831 = arith.addf %826, %830 : vector<8x8xf32>
    %c112 = arith.constant 112 : index
    %832 = memref.load %arg3[%c112] : memref<288xf32, #tpu.memory_space<smem>>
    %833 = vector.extract_strided_slice %1 {offsets = [1, 0], sizes = [8, 8], strides = [1, 1]} : vector<10x10xf32> to vector<8x8xf32>
    %834 = vector.broadcast %832 : f32 to vector<8x8xf32>
    %835 = arith.mulf %834, %833 : vector<8x8xf32>
    %836 = arith.addf %831, %835 : vector<8x8xf32>
    %c144 = arith.constant 144 : index
    %837 = memref.load %arg3[%c144] : memref<288xf32, #tpu.memory_space<smem>>
    %838 = vector.extract_strided_slice %1 {offsets = [1, 1], sizes = [8, 8], strides = [1, 1]} : vector<10x10xf32> to vector<8x8xf32>
    %839 = vector.broadcast %837 : f32 to vector<8x8xf32>
    %840 = arith.mulf %839, %838 : vector<8x8xf32>
    %841 = arith.addf %836, %840 : vector<8x8xf32>
    %c176 = arith.constant 176 : index
    %842 = memref.load %arg3[%c176] : memref<288xf32, #tpu.memory_space<smem>>
    %843 = vector.extract_strided_slice %1 {offsets = [1, 2], sizes = [8, 8], strides = [1, 1]} : vector<10x10xf32> to vector<8x8xf32>
    %844 = vector.broadcast %842 : f32 to vector<8x8xf32>
    %845 = arith.mulf %844, %843 : vector<8x8xf32>
    %846 = arith.addf %841, %845 : vector<8x8xf32>
    %c208 = arith.constant 208 : index
    %847 = memref.load %arg3[%c208] : memref<288xf32, #tpu.memory_space<smem>>
    %848 = vector.extract_strided_slice %1 {offsets = [2, 0], sizes = [8, 8], strides = [1, 1]} : vector<10x10xf32> to vector<8x8xf32>
    %849 = vector.broadcast %847 : f32 to vector<8x8xf32>
    %850 = arith.mulf %849, %848 : vector<8x8xf32>
    %851 = arith.addf %846, %850 : vector<8x8xf32>
    %c240 = arith.constant 240 : index
    %852 = memref.load %arg3[%c240] : memref<288xf32, #tpu.memory_space<smem>>
    %853 = vector.extract_strided_slice %1 {offsets = [2, 1], sizes = [8, 8], strides = [1, 1]} : vector<10x10xf32> to vector<8x8xf32>
    %854 = vector.broadcast %852 : f32 to vector<8x8xf32>
    %855 = arith.mulf %854, %853 : vector<8x8xf32>
    %856 = arith.addf %851, %855 : vector<8x8xf32>
    %c272 = arith.constant 272 : index
    %857 = memref.load %arg3[%c272] : memref<288xf32, #tpu.memory_space<smem>>
    %858 = vector.extract_strided_slice %1 {offsets = [2, 2], sizes = [8, 8], strides = [1, 1]} : vector<10x10xf32> to vector<8x8xf32>
    %859 = vector.broadcast %857 : f32 to vector<8x8xf32>
    %860 = arith.mulf %859, %858 : vector<8x8xf32>
    %861 = arith.addf %856, %860 : vector<8x8xf32>
    %c16_51 = arith.constant 16 : index
    %862 = memref.load %arg4[%c16_51] : memref<32xf32, #tpu.memory_space<smem>>
    %863 = vector.broadcast %862 : f32 to vector<8x8xf32>
    %864 = arith.addf %861, %863 : vector<8x8xf32>
    %cst_52 = arith.constant 0.000000e+00 : f32
    %865 = vector.broadcast %cst_52 : f32 to vector<8x8xf32>
    %866 = arith.maximumf %864, %865 : vector<8x8xf32>
    %867 = vector.shape_cast %866 : vector<8x8xf32> to vector<4x2x8xf32>
    %cst_53 = arith.constant dense<0xFF800000> : vector<4x8xf32>
    %868 = vector.multi_reduction <maximumf>, %867, %cst_53 [1] : vector<4x2x8xf32> to vector<4x8xf32>
    %c17 = arith.constant 17 : index
    %869 = memref.load %arg3[%c17] : memref<288xf32, #tpu.memory_space<smem>>
    %870 = vector.extract_strided_slice %1 {offsets = [0, 0], sizes = [8, 8], strides = [1, 1]} : vector<10x10xf32> to vector<8x8xf32>
    %871 = vector.broadcast %869 : f32 to vector<8x8xf32>
    %872 = arith.mulf %871, %870 : vector<8x8xf32>
    %c49 = arith.constant 49 : index
    %873 = memref.load %arg3[%c49] : memref<288xf32, #tpu.memory_space<smem>>
    %874 = vector.extract_strided_slice %1 {offsets = [0, 1], sizes = [8, 8], strides = [1, 1]} : vector<10x10xf32> to vector<8x8xf32>
    %875 = vector.broadcast %873 : f32 to vector<8x8xf32>
    %876 = arith.mulf %875, %874 : vector<8x8xf32>
    %877 = arith.addf %872, %876 : vector<8x8xf32>
    %c81 = arith.constant 81 : index
    %878 = memref.load %arg3[%c81] : memref<288xf32, #tpu.memory_space<smem>>
    %879 = vector.extract_strided_slice %1 {offsets = [0, 2], sizes = [8, 8], strides = [1, 1]} : vector<10x10xf32> to vector<8x8xf32>
    %880 = vector.broadcast %878 : f32 to vector<8x8xf32>
    %881 = arith.mulf %880, %879 : vector<8x8xf32>
    %882 = arith.addf %877, %881 : vector<8x8xf32>
    %c113 = arith.constant 113 : index
    %883 = memref.load %arg3[%c113] : memref<288xf32, #tpu.memory_space<smem>>
    %884 = vector.extract_strided_slice %1 {offsets = [1, 0], sizes = [8, 8], strides = [1, 1]} : vector<10x10xf32> to vector<8x8xf32>
    %885 = vector.broadcast %883 : f32 to vector<8x8xf32>
    %886 = arith.mulf %885, %884 : vector<8x8xf32>
    %887 = arith.addf %882, %886 : vector<8x8xf32>
    %c145 = arith.constant 145 : index
    %888 = memref.load %arg3[%c145] : memref<288xf32, #tpu.memory_space<smem>>
    %889 = vector.extract_strided_slice %1 {offsets = [1, 1], sizes = [8, 8], strides = [1, 1]} : vector<10x10xf32> to vector<8x8xf32>
    %890 = vector.broadcast %888 : f32 to vector<8x8xf32>
    %891 = arith.mulf %890, %889 : vector<8x8xf32>
    %892 = arith.addf %887, %891 : vector<8x8xf32>
    %c177 = arith.constant 177 : index
    %893 = memref.load %arg3[%c177] : memref<288xf32, #tpu.memory_space<smem>>
    %894 = vector.extract_strided_slice %1 {offsets = [1, 2], sizes = [8, 8], strides = [1, 1]} : vector<10x10xf32> to vector<8x8xf32>
    %895 = vector.broadcast %893 : f32 to vector<8x8xf32>
    %896 = arith.mulf %895, %894 : vector<8x8xf32>
    %897 = arith.addf %892, %896 : vector<8x8xf32>
    %c209 = arith.constant 209 : index
    %898 = memref.load %arg3[%c209] : memref<288xf32, #tpu.memory_space<smem>>
    %899 = vector.extract_strided_slice %1 {offsets = [2, 0], sizes = [8, 8], strides = [1, 1]} : vector<10x10xf32> to vector<8x8xf32>
    %900 = vector.broadcast %898 : f32 to vector<8x8xf32>
    %901 = arith.mulf %900, %899 : vector<8x8xf32>
    %902 = arith.addf %897, %901 : vector<8x8xf32>
    %c241 = arith.constant 241 : index
    %903 = memref.load %arg3[%c241] : memref<288xf32, #tpu.memory_space<smem>>
    %904 = vector.extract_strided_slice %1 {offsets = [2, 1], sizes = [8, 8], strides = [1, 1]} : vector<10x10xf32> to vector<8x8xf32>
    %905 = vector.broadcast %903 : f32 to vector<8x8xf32>
    %906 = arith.mulf %905, %904 : vector<8x8xf32>
    %907 = arith.addf %902, %906 : vector<8x8xf32>
    %c273 = arith.constant 273 : index
    %908 = memref.load %arg3[%c273] : memref<288xf32, #tpu.memory_space<smem>>
    %909 = vector.extract_strided_slice %1 {offsets = [2, 2], sizes = [8, 8], strides = [1, 1]} : vector<10x10xf32> to vector<8x8xf32>
    %910 = vector.broadcast %908 : f32 to vector<8x8xf32>
    %911 = arith.mulf %910, %909 : vector<8x8xf32>
    %912 = arith.addf %907, %911 : vector<8x8xf32>
    %c17_54 = arith.constant 17 : index
    %913 = memref.load %arg4[%c17_54] : memref<32xf32, #tpu.memory_space<smem>>
    %914 = vector.broadcast %913 : f32 to vector<8x8xf32>
    %915 = arith.addf %912, %914 : vector<8x8xf32>
    %cst_55 = arith.constant 0.000000e+00 : f32
    %916 = vector.broadcast %cst_55 : f32 to vector<8x8xf32>
    %917 = arith.maximumf %915, %916 : vector<8x8xf32>
    %918 = vector.shape_cast %917 : vector<8x8xf32> to vector<4x2x8xf32>
    %cst_56 = arith.constant dense<0xFF800000> : vector<4x8xf32>
    %919 = vector.multi_reduction <maximumf>, %918, %cst_56 [1] : vector<4x2x8xf32> to vector<4x8xf32>
    %c18 = arith.constant 18 : index
    %920 = memref.load %arg3[%c18] : memref<288xf32, #tpu.memory_space<smem>>
    %921 = vector.extract_strided_slice %1 {offsets = [0, 0], sizes = [8, 8], strides = [1, 1]} : vector<10x10xf32> to vector<8x8xf32>
    %922 = vector.broadcast %920 : f32 to vector<8x8xf32>
    %923 = arith.mulf %922, %921 : vector<8x8xf32>
    %c50 = arith.constant 50 : index
    %924 = memref.load %arg3[%c50] : memref<288xf32, #tpu.memory_space<smem>>
    %925 = vector.extract_strided_slice %1 {offsets = [0, 1], sizes = [8, 8], strides = [1, 1]} : vector<10x10xf32> to vector<8x8xf32>
    %926 = vector.broadcast %924 : f32 to vector<8x8xf32>
    %927 = arith.mulf %926, %925 : vector<8x8xf32>
    %928 = arith.addf %923, %927 : vector<8x8xf32>
    %c82 = arith.constant 82 : index
    %929 = memref.load %arg3[%c82] : memref<288xf32, #tpu.memory_space<smem>>
    %930 = vector.extract_strided_slice %1 {offsets = [0, 2], sizes = [8, 8], strides = [1, 1]} : vector<10x10xf32> to vector<8x8xf32>
    %931 = vector.broadcast %929 : f32 to vector<8x8xf32>
    %932 = arith.mulf %931, %930 : vector<8x8xf32>
    %933 = arith.addf %928, %932 : vector<8x8xf32>
    %c114 = arith.constant 114 : index
    %934 = memref.load %arg3[%c114] : memref<288xf32, #tpu.memory_space<smem>>
    %935 = vector.extract_strided_slice %1 {offsets = [1, 0], sizes = [8, 8], strides = [1, 1]} : vector<10x10xf32> to vector<8x8xf32>
    %936 = vector.broadcast %934 : f32 to vector<8x8xf32>
    %937 = arith.mulf %936, %935 : vector<8x8xf32>
    %938 = arith.addf %933, %937 : vector<8x8xf32>
    %c146 = arith.constant 146 : index
    %939 = memref.load %arg3[%c146] : memref<288xf32, #tpu.memory_space<smem>>
    %940 = vector.extract_strided_slice %1 {offsets = [1, 1], sizes = [8, 8], strides = [1, 1]} : vector<10x10xf32> to vector<8x8xf32>
    %941 = vector.broadcast %939 : f32 to vector<8x8xf32>
    %942 = arith.mulf %941, %940 : vector<8x8xf32>
    %943 = arith.addf %938, %942 : vector<8x8xf32>
    %c178 = arith.constant 178 : index
    %944 = memref.load %arg3[%c178] : memref<288xf32, #tpu.memory_space<smem>>
    %945 = vector.extract_strided_slice %1 {offsets = [1, 2], sizes = [8, 8], strides = [1, 1]} : vector<10x10xf32> to vector<8x8xf32>
    %946 = vector.broadcast %944 : f32 to vector<8x8xf32>
    %947 = arith.mulf %946, %945 : vector<8x8xf32>
    %948 = arith.addf %943, %947 : vector<8x8xf32>
    %c210 = arith.constant 210 : index
    %949 = memref.load %arg3[%c210] : memref<288xf32, #tpu.memory_space<smem>>
    %950 = vector.extract_strided_slice %1 {offsets = [2, 0], sizes = [8, 8], strides = [1, 1]} : vector<10x10xf32> to vector<8x8xf32>
    %951 = vector.broadcast %949 : f32 to vector<8x8xf32>
    %952 = arith.mulf %951, %950 : vector<8x8xf32>
    %953 = arith.addf %948, %952 : vector<8x8xf32>
    %c242 = arith.constant 242 : index
    %954 = memref.load %arg3[%c242] : memref<288xf32, #tpu.memory_space<smem>>
    %955 = vector.extract_strided_slice %1 {offsets = [2, 1], sizes = [8, 8], strides = [1, 1]} : vector<10x10xf32> to vector<8x8xf32>
    %956 = vector.broadcast %954 : f32 to vector<8x8xf32>
    %957 = arith.mulf %956, %955 : vector<8x8xf32>
    %958 = arith.addf %953, %957 : vector<8x8xf32>
    %c274 = arith.constant 274 : index
    %959 = memref.load %arg3[%c274] : memref<288xf32, #tpu.memory_space<smem>>
    %960 = vector.extract_strided_slice %1 {offsets = [2, 2], sizes = [8, 8], strides = [1, 1]} : vector<10x10xf32> to vector<8x8xf32>
    %961 = vector.broadcast %959 : f32 to vector<8x8xf32>
    %962 = arith.mulf %961, %960 : vector<8x8xf32>
    %963 = arith.addf %958, %962 : vector<8x8xf32>
    %c18_57 = arith.constant 18 : index
    %964 = memref.load %arg4[%c18_57] : memref<32xf32, #tpu.memory_space<smem>>
    %965 = vector.broadcast %964 : f32 to vector<8x8xf32>
    %966 = arith.addf %963, %965 : vector<8x8xf32>
    %cst_58 = arith.constant 0.000000e+00 : f32
    %967 = vector.broadcast %cst_58 : f32 to vector<8x8xf32>
    %968 = arith.maximumf %966, %967 : vector<8x8xf32>
    %969 = vector.shape_cast %968 : vector<8x8xf32> to vector<4x2x8xf32>
    %cst_59 = arith.constant dense<0xFF800000> : vector<4x8xf32>
    %970 = vector.multi_reduction <maximumf>, %969, %cst_59 [1] : vector<4x2x8xf32> to vector<4x8xf32>
    %c19 = arith.constant 19 : index
    %971 = memref.load %arg3[%c19] : memref<288xf32, #tpu.memory_space<smem>>
    %972 = vector.extract_strided_slice %1 {offsets = [0, 0], sizes = [8, 8], strides = [1, 1]} : vector<10x10xf32> to vector<8x8xf32>
    %973 = vector.broadcast %971 : f32 to vector<8x8xf32>
    %974 = arith.mulf %973, %972 : vector<8x8xf32>
    %c51 = arith.constant 51 : index
    %975 = memref.load %arg3[%c51] : memref<288xf32, #tpu.memory_space<smem>>
    %976 = vector.extract_strided_slice %1 {offsets = [0, 1], sizes = [8, 8], strides = [1, 1]} : vector<10x10xf32> to vector<8x8xf32>
    %977 = vector.broadcast %975 : f32 to vector<8x8xf32>
    %978 = arith.mulf %977, %976 : vector<8x8xf32>
    %979 = arith.addf %974, %978 : vector<8x8xf32>
    %c83 = arith.constant 83 : index
    %980 = memref.load %arg3[%c83] : memref<288xf32, #tpu.memory_space<smem>>
    %981 = vector.extract_strided_slice %1 {offsets = [0, 2], sizes = [8, 8], strides = [1, 1]} : vector<10x10xf32> to vector<8x8xf32>
    %982 = vector.broadcast %980 : f32 to vector<8x8xf32>
    %983 = arith.mulf %982, %981 : vector<8x8xf32>
    %984 = arith.addf %979, %983 : vector<8x8xf32>
    %c115 = arith.constant 115 : index
    %985 = memref.load %arg3[%c115] : memref<288xf32, #tpu.memory_space<smem>>
    %986 = vector.extract_strided_slice %1 {offsets = [1, 0], sizes = [8, 8], strides = [1, 1]} : vector<10x10xf32> to vector<8x8xf32>
    %987 = vector.broadcast %985 : f32 to vector<8x8xf32>
    %988 = arith.mulf %987, %986 : vector<8x8xf32>
    %989 = arith.addf %984, %988 : vector<8x8xf32>
    %c147 = arith.constant 147 : index
    %990 = memref.load %arg3[%c147] : memref<288xf32, #tpu.memory_space<smem>>
    %991 = vector.extract_strided_slice %1 {offsets = [1, 1], sizes = [8, 8], strides = [1, 1]} : vector<10x10xf32> to vector<8x8xf32>
    %992 = vector.broadcast %990 : f32 to vector<8x8xf32>
    %993 = arith.mulf %992, %991 : vector<8x8xf32>
    %994 = arith.addf %989, %993 : vector<8x8xf32>
    %c179 = arith.constant 179 : index
    %995 = memref.load %arg3[%c179] : memref<288xf32, #tpu.memory_space<smem>>
    %996 = vector.extract_strided_slice %1 {offsets = [1, 2], sizes = [8, 8], strides = [1, 1]} : vector<10x10xf32> to vector<8x8xf32>
    %997 = vector.broadcast %995 : f32 to vector<8x8xf32>
    %998 = arith.mulf %997, %996 : vector<8x8xf32>
    %999 = arith.addf %994, %998 : vector<8x8xf32>
    %c211 = arith.constant 211 : index
    %1000 = memref.load %arg3[%c211] : memref<288xf32, #tpu.memory_space<smem>>
    %1001 = vector.extract_strided_slice %1 {offsets = [2, 0], sizes = [8, 8], strides = [1, 1]} : vector<10x10xf32> to vector<8x8xf32>
    %1002 = vector.broadcast %1000 : f32 to vector<8x8xf32>
    %1003 = arith.mulf %1002, %1001 : vector<8x8xf32>
    %1004 = arith.addf %999, %1003 : vector<8x8xf32>
    %c243 = arith.constant 243 : index
    %1005 = memref.load %arg3[%c243] : memref<288xf32, #tpu.memory_space<smem>>
    %1006 = vector.extract_strided_slice %1 {offsets = [2, 1], sizes = [8, 8], strides = [1, 1]} : vector<10x10xf32> to vector<8x8xf32>
    %1007 = vector.broadcast %1005 : f32 to vector<8x8xf32>
    %1008 = arith.mulf %1007, %1006 : vector<8x8xf32>
    %1009 = arith.addf %1004, %1008 : vector<8x8xf32>
    %c275 = arith.constant 275 : index
    %1010 = memref.load %arg3[%c275] : memref<288xf32, #tpu.memory_space<smem>>
    %1011 = vector.extract_strided_slice %1 {offsets = [2, 2], sizes = [8, 8], strides = [1, 1]} : vector<10x10xf32> to vector<8x8xf32>
    %1012 = vector.broadcast %1010 : f32 to vector<8x8xf32>
    %1013 = arith.mulf %1012, %1011 : vector<8x8xf32>
    %1014 = arith.addf %1009, %1013 : vector<8x8xf32>
    %c19_60 = arith.constant 19 : index
    %1015 = memref.load %arg4[%c19_60] : memref<32xf32, #tpu.memory_space<smem>>
    %1016 = vector.broadcast %1015 : f32 to vector<8x8xf32>
    %1017 = arith.addf %1014, %1016 : vector<8x8xf32>
    %cst_61 = arith.constant 0.000000e+00 : f32
    %1018 = vector.broadcast %cst_61 : f32 to vector<8x8xf32>
    %1019 = arith.maximumf %1017, %1018 : vector<8x8xf32>
    %1020 = vector.shape_cast %1019 : vector<8x8xf32> to vector<4x2x8xf32>
    %cst_62 = arith.constant dense<0xFF800000> : vector<4x8xf32>
    %1021 = vector.multi_reduction <maximumf>, %1020, %cst_62 [1] : vector<4x2x8xf32> to vector<4x8xf32>
    %c20 = arith.constant 20 : index
    %1022 = memref.load %arg3[%c20] : memref<288xf32, #tpu.memory_space<smem>>
    %1023 = vector.extract_strided_slice %1 {offsets = [0, 0], sizes = [8, 8], strides = [1, 1]} : vector<10x10xf32> to vector<8x8xf32>
    %1024 = vector.broadcast %1022 : f32 to vector<8x8xf32>
    %1025 = arith.mulf %1024, %1023 : vector<8x8xf32>
    %c52 = arith.constant 52 : index
    %1026 = memref.load %arg3[%c52] : memref<288xf32, #tpu.memory_space<smem>>
    %1027 = vector.extract_strided_slice %1 {offsets = [0, 1], sizes = [8, 8], strides = [1, 1]} : vector<10x10xf32> to vector<8x8xf32>
    %1028 = vector.broadcast %1026 : f32 to vector<8x8xf32>
    %1029 = arith.mulf %1028, %1027 : vector<8x8xf32>
    %1030 = arith.addf %1025, %1029 : vector<8x8xf32>
    %c84 = arith.constant 84 : index
    %1031 = memref.load %arg3[%c84] : memref<288xf32, #tpu.memory_space<smem>>
    %1032 = vector.extract_strided_slice %1 {offsets = [0, 2], sizes = [8, 8], strides = [1, 1]} : vector<10x10xf32> to vector<8x8xf32>
    %1033 = vector.broadcast %1031 : f32 to vector<8x8xf32>
    %1034 = arith.mulf %1033, %1032 : vector<8x8xf32>
    %1035 = arith.addf %1030, %1034 : vector<8x8xf32>
    %c116 = arith.constant 116 : index
    %1036 = memref.load %arg3[%c116] : memref<288xf32, #tpu.memory_space<smem>>
    %1037 = vector.extract_strided_slice %1 {offsets = [1, 0], sizes = [8, 8], strides = [1, 1]} : vector<10x10xf32> to vector<8x8xf32>
    %1038 = vector.broadcast %1036 : f32 to vector<8x8xf32>
    %1039 = arith.mulf %1038, %1037 : vector<8x8xf32>
    %1040 = arith.addf %1035, %1039 : vector<8x8xf32>
    %c148 = arith.constant 148 : index
    %1041 = memref.load %arg3[%c148] : memref<288xf32, #tpu.memory_space<smem>>
    %1042 = vector.extract_strided_slice %1 {offsets = [1, 1], sizes = [8, 8], strides = [1, 1]} : vector<10x10xf32> to vector<8x8xf32>
    %1043 = vector.broadcast %1041 : f32 to vector<8x8xf32>
    %1044 = arith.mulf %1043, %1042 : vector<8x8xf32>
    %1045 = arith.addf %1040, %1044 : vector<8x8xf32>
    %c180 = arith.constant 180 : index
    %1046 = memref.load %arg3[%c180] : memref<288xf32, #tpu.memory_space<smem>>
    %1047 = vector.extract_strided_slice %1 {offsets = [1, 2], sizes = [8, 8], strides = [1, 1]} : vector<10x10xf32> to vector<8x8xf32>
    %1048 = vector.broadcast %1046 : f32 to vector<8x8xf32>
    %1049 = arith.mulf %1048, %1047 : vector<8x8xf32>
    %1050 = arith.addf %1045, %1049 : vector<8x8xf32>
    %c212 = arith.constant 212 : index
    %1051 = memref.load %arg3[%c212] : memref<288xf32, #tpu.memory_space<smem>>
    %1052 = vector.extract_strided_slice %1 {offsets = [2, 0], sizes = [8, 8], strides = [1, 1]} : vector<10x10xf32> to vector<8x8xf32>
    %1053 = vector.broadcast %1051 : f32 to vector<8x8xf32>
    %1054 = arith.mulf %1053, %1052 : vector<8x8xf32>
    %1055 = arith.addf %1050, %1054 : vector<8x8xf32>
    %c244 = arith.constant 244 : index
    %1056 = memref.load %arg3[%c244] : memref<288xf32, #tpu.memory_space<smem>>
    %1057 = vector.extract_strided_slice %1 {offsets = [2, 1], sizes = [8, 8], strides = [1, 1]} : vector<10x10xf32> to vector<8x8xf32>
    %1058 = vector.broadcast %1056 : f32 to vector<8x8xf32>
    %1059 = arith.mulf %1058, %1057 : vector<8x8xf32>
    %1060 = arith.addf %1055, %1059 : vector<8x8xf32>
    %c276 = arith.constant 276 : index
    %1061 = memref.load %arg3[%c276] : memref<288xf32, #tpu.memory_space<smem>>
    %1062 = vector.extract_strided_slice %1 {offsets = [2, 2], sizes = [8, 8], strides = [1, 1]} : vector<10x10xf32> to vector<8x8xf32>
    %1063 = vector.broadcast %1061 : f32 to vector<8x8xf32>
    %1064 = arith.mulf %1063, %1062 : vector<8x8xf32>
    %1065 = arith.addf %1060, %1064 : vector<8x8xf32>
    %c20_63 = arith.constant 20 : index
    %1066 = memref.load %arg4[%c20_63] : memref<32xf32, #tpu.memory_space<smem>>
    %1067 = vector.broadcast %1066 : f32 to vector<8x8xf32>
    %1068 = arith.addf %1065, %1067 : vector<8x8xf32>
    %cst_64 = arith.constant 0.000000e+00 : f32
    %1069 = vector.broadcast %cst_64 : f32 to vector<8x8xf32>
    %1070 = arith.maximumf %1068, %1069 : vector<8x8xf32>
    %1071 = vector.shape_cast %1070 : vector<8x8xf32> to vector<4x2x8xf32>
    %cst_65 = arith.constant dense<0xFF800000> : vector<4x8xf32>
    %1072 = vector.multi_reduction <maximumf>, %1071, %cst_65 [1] : vector<4x2x8xf32> to vector<4x8xf32>
    %c21 = arith.constant 21 : index
    %1073 = memref.load %arg3[%c21] : memref<288xf32, #tpu.memory_space<smem>>
    %1074 = vector.extract_strided_slice %1 {offsets = [0, 0], sizes = [8, 8], strides = [1, 1]} : vector<10x10xf32> to vector<8x8xf32>
    %1075 = vector.broadcast %1073 : f32 to vector<8x8xf32>
    %1076 = arith.mulf %1075, %1074 : vector<8x8xf32>
    %c53 = arith.constant 53 : index
    %1077 = memref.load %arg3[%c53] : memref<288xf32, #tpu.memory_space<smem>>
    %1078 = vector.extract_strided_slice %1 {offsets = [0, 1], sizes = [8, 8], strides = [1, 1]} : vector<10x10xf32> to vector<8x8xf32>
    %1079 = vector.broadcast %1077 : f32 to vector<8x8xf32>
    %1080 = arith.mulf %1079, %1078 : vector<8x8xf32>
    %1081 = arith.addf %1076, %1080 : vector<8x8xf32>
    %c85 = arith.constant 85 : index
    %1082 = memref.load %arg3[%c85] : memref<288xf32, #tpu.memory_space<smem>>
    %1083 = vector.extract_strided_slice %1 {offsets = [0, 2], sizes = [8, 8], strides = [1, 1]} : vector<10x10xf32> to vector<8x8xf32>
    %1084 = vector.broadcast %1082 : f32 to vector<8x8xf32>
    %1085 = arith.mulf %1084, %1083 : vector<8x8xf32>
    %1086 = arith.addf %1081, %1085 : vector<8x8xf32>
    %c117 = arith.constant 117 : index
    %1087 = memref.load %arg3[%c117] : memref<288xf32, #tpu.memory_space<smem>>
    %1088 = vector.extract_strided_slice %1 {offsets = [1, 0], sizes = [8, 8], strides = [1, 1]} : vector<10x10xf32> to vector<8x8xf32>
    %1089 = vector.broadcast %1087 : f32 to vector<8x8xf32>
    %1090 = arith.mulf %1089, %1088 : vector<8x8xf32>
    %1091 = arith.addf %1086, %1090 : vector<8x8xf32>
    %c149 = arith.constant 149 : index
    %1092 = memref.load %arg3[%c149] : memref<288xf32, #tpu.memory_space<smem>>
    %1093 = vector.extract_strided_slice %1 {offsets = [1, 1], sizes = [8, 8], strides = [1, 1]} : vector<10x10xf32> to vector<8x8xf32>
    %1094 = vector.broadcast %1092 : f32 to vector<8x8xf32>
    %1095 = arith.mulf %1094, %1093 : vector<8x8xf32>
    %1096 = arith.addf %1091, %1095 : vector<8x8xf32>
    %c181 = arith.constant 181 : index
    %1097 = memref.load %arg3[%c181] : memref<288xf32, #tpu.memory_space<smem>>
    %1098 = vector.extract_strided_slice %1 {offsets = [1, 2], sizes = [8, 8], strides = [1, 1]} : vector<10x10xf32> to vector<8x8xf32>
    %1099 = vector.broadcast %1097 : f32 to vector<8x8xf32>
    %1100 = arith.mulf %1099, %1098 : vector<8x8xf32>
    %1101 = arith.addf %1096, %1100 : vector<8x8xf32>
    %c213 = arith.constant 213 : index
    %1102 = memref.load %arg3[%c213] : memref<288xf32, #tpu.memory_space<smem>>
    %1103 = vector.extract_strided_slice %1 {offsets = [2, 0], sizes = [8, 8], strides = [1, 1]} : vector<10x10xf32> to vector<8x8xf32>
    %1104 = vector.broadcast %1102 : f32 to vector<8x8xf32>
    %1105 = arith.mulf %1104, %1103 : vector<8x8xf32>
    %1106 = arith.addf %1101, %1105 : vector<8x8xf32>
    %c245 = arith.constant 245 : index
    %1107 = memref.load %arg3[%c245] : memref<288xf32, #tpu.memory_space<smem>>
    %1108 = vector.extract_strided_slice %1 {offsets = [2, 1], sizes = [8, 8], strides = [1, 1]} : vector<10x10xf32> to vector<8x8xf32>
    %1109 = vector.broadcast %1107 : f32 to vector<8x8xf32>
    %1110 = arith.mulf %1109, %1108 : vector<8x8xf32>
    %1111 = arith.addf %1106, %1110 : vector<8x8xf32>
    %c277 = arith.constant 277 : index
    %1112 = memref.load %arg3[%c277] : memref<288xf32, #tpu.memory_space<smem>>
    %1113 = vector.extract_strided_slice %1 {offsets = [2, 2], sizes = [8, 8], strides = [1, 1]} : vector<10x10xf32> to vector<8x8xf32>
    %1114 = vector.broadcast %1112 : f32 to vector<8x8xf32>
    %1115 = arith.mulf %1114, %1113 : vector<8x8xf32>
    %1116 = arith.addf %1111, %1115 : vector<8x8xf32>
    %c21_66 = arith.constant 21 : index
    %1117 = memref.load %arg4[%c21_66] : memref<32xf32, #tpu.memory_space<smem>>
    %1118 = vector.broadcast %1117 : f32 to vector<8x8xf32>
    %1119 = arith.addf %1116, %1118 : vector<8x8xf32>
    %cst_67 = arith.constant 0.000000e+00 : f32
    %1120 = vector.broadcast %cst_67 : f32 to vector<8x8xf32>
    %1121 = arith.maximumf %1119, %1120 : vector<8x8xf32>
    %1122 = vector.shape_cast %1121 : vector<8x8xf32> to vector<4x2x8xf32>
    %cst_68 = arith.constant dense<0xFF800000> : vector<4x8xf32>
    %1123 = vector.multi_reduction <maximumf>, %1122, %cst_68 [1] : vector<4x2x8xf32> to vector<4x8xf32>
    %c22 = arith.constant 22 : index
    %1124 = memref.load %arg3[%c22] : memref<288xf32, #tpu.memory_space<smem>>
    %1125 = vector.extract_strided_slice %1 {offsets = [0, 0], sizes = [8, 8], strides = [1, 1]} : vector<10x10xf32> to vector<8x8xf32>
    %1126 = vector.broadcast %1124 : f32 to vector<8x8xf32>
    %1127 = arith.mulf %1126, %1125 : vector<8x8xf32>
    %c54 = arith.constant 54 : index
    %1128 = memref.load %arg3[%c54] : memref<288xf32, #tpu.memory_space<smem>>
    %1129 = vector.extract_strided_slice %1 {offsets = [0, 1], sizes = [8, 8], strides = [1, 1]} : vector<10x10xf32> to vector<8x8xf32>
    %1130 = vector.broadcast %1128 : f32 to vector<8x8xf32>
    %1131 = arith.mulf %1130, %1129 : vector<8x8xf32>
    %1132 = arith.addf %1127, %1131 : vector<8x8xf32>
    %c86 = arith.constant 86 : index
    %1133 = memref.load %arg3[%c86] : memref<288xf32, #tpu.memory_space<smem>>
    %1134 = vector.extract_strided_slice %1 {offsets = [0, 2], sizes = [8, 8], strides = [1, 1]} : vector<10x10xf32> to vector<8x8xf32>
    %1135 = vector.broadcast %1133 : f32 to vector<8x8xf32>
    %1136 = arith.mulf %1135, %1134 : vector<8x8xf32>
    %1137 = arith.addf %1132, %1136 : vector<8x8xf32>
    %c118 = arith.constant 118 : index
    %1138 = memref.load %arg3[%c118] : memref<288xf32, #tpu.memory_space<smem>>
    %1139 = vector.extract_strided_slice %1 {offsets = [1, 0], sizes = [8, 8], strides = [1, 1]} : vector<10x10xf32> to vector<8x8xf32>
    %1140 = vector.broadcast %1138 : f32 to vector<8x8xf32>
    %1141 = arith.mulf %1140, %1139 : vector<8x8xf32>
    %1142 = arith.addf %1137, %1141 : vector<8x8xf32>
    %c150 = arith.constant 150 : index
    %1143 = memref.load %arg3[%c150] : memref<288xf32, #tpu.memory_space<smem>>
    %1144 = vector.extract_strided_slice %1 {offsets = [1, 1], sizes = [8, 8], strides = [1, 1]} : vector<10x10xf32> to vector<8x8xf32>
    %1145 = vector.broadcast %1143 : f32 to vector<8x8xf32>
    %1146 = arith.mulf %1145, %1144 : vector<8x8xf32>
    %1147 = arith.addf %1142, %1146 : vector<8x8xf32>
    %c182 = arith.constant 182 : index
    %1148 = memref.load %arg3[%c182] : memref<288xf32, #tpu.memory_space<smem>>
    %1149 = vector.extract_strided_slice %1 {offsets = [1, 2], sizes = [8, 8], strides = [1, 1]} : vector<10x10xf32> to vector<8x8xf32>
    %1150 = vector.broadcast %1148 : f32 to vector<8x8xf32>
    %1151 = arith.mulf %1150, %1149 : vector<8x8xf32>
    %1152 = arith.addf %1147, %1151 : vector<8x8xf32>
    %c214 = arith.constant 214 : index
    %1153 = memref.load %arg3[%c214] : memref<288xf32, #tpu.memory_space<smem>>
    %1154 = vector.extract_strided_slice %1 {offsets = [2, 0], sizes = [8, 8], strides = [1, 1]} : vector<10x10xf32> to vector<8x8xf32>
    %1155 = vector.broadcast %1153 : f32 to vector<8x8xf32>
    %1156 = arith.mulf %1155, %1154 : vector<8x8xf32>
    %1157 = arith.addf %1152, %1156 : vector<8x8xf32>
    %c246 = arith.constant 246 : index
    %1158 = memref.load %arg3[%c246] : memref<288xf32, #tpu.memory_space<smem>>
    %1159 = vector.extract_strided_slice %1 {offsets = [2, 1], sizes = [8, 8], strides = [1, 1]} : vector<10x10xf32> to vector<8x8xf32>
    %1160 = vector.broadcast %1158 : f32 to vector<8x8xf32>
    %1161 = arith.mulf %1160, %1159 : vector<8x8xf32>
    %1162 = arith.addf %1157, %1161 : vector<8x8xf32>
    %c278 = arith.constant 278 : index
    %1163 = memref.load %arg3[%c278] : memref<288xf32, #tpu.memory_space<smem>>
    %1164 = vector.extract_strided_slice %1 {offsets = [2, 2], sizes = [8, 8], strides = [1, 1]} : vector<10x10xf32> to vector<8x8xf32>
    %1165 = vector.broadcast %1163 : f32 to vector<8x8xf32>
    %1166 = arith.mulf %1165, %1164 : vector<8x8xf32>
    %1167 = arith.addf %1162, %1166 : vector<8x8xf32>
    %c22_69 = arith.constant 22 : index
    %1168 = memref.load %arg4[%c22_69] : memref<32xf32, #tpu.memory_space<smem>>
    %1169 = vector.broadcast %1168 : f32 to vector<8x8xf32>
    %1170 = arith.addf %1167, %1169 : vector<8x8xf32>
    %cst_70 = arith.constant 0.000000e+00 : f32
    %1171 = vector.broadcast %cst_70 : f32 to vector<8x8xf32>
    %1172 = arith.maximumf %1170, %1171 : vector<8x8xf32>
    %1173 = vector.shape_cast %1172 : vector<8x8xf32> to vector<4x2x8xf32>
    %cst_71 = arith.constant dense<0xFF800000> : vector<4x8xf32>
    %1174 = vector.multi_reduction <maximumf>, %1173, %cst_71 [1] : vector<4x2x8xf32> to vector<4x8xf32>
    %c23 = arith.constant 23 : index
    %1175 = memref.load %arg3[%c23] : memref<288xf32, #tpu.memory_space<smem>>
    %1176 = vector.extract_strided_slice %1 {offsets = [0, 0], sizes = [8, 8], strides = [1, 1]} : vector<10x10xf32> to vector<8x8xf32>
    %1177 = vector.broadcast %1175 : f32 to vector<8x8xf32>
    %1178 = arith.mulf %1177, %1176 : vector<8x8xf32>
    %c55 = arith.constant 55 : index
    %1179 = memref.load %arg3[%c55] : memref<288xf32, #tpu.memory_space<smem>>
    %1180 = vector.extract_strided_slice %1 {offsets = [0, 1], sizes = [8, 8], strides = [1, 1]} : vector<10x10xf32> to vector<8x8xf32>
    %1181 = vector.broadcast %1179 : f32 to vector<8x8xf32>
    %1182 = arith.mulf %1181, %1180 : vector<8x8xf32>
    %1183 = arith.addf %1178, %1182 : vector<8x8xf32>
    %c87 = arith.constant 87 : index
    %1184 = memref.load %arg3[%c87] : memref<288xf32, #tpu.memory_space<smem>>
    %1185 = vector.extract_strided_slice %1 {offsets = [0, 2], sizes = [8, 8], strides = [1, 1]} : vector<10x10xf32> to vector<8x8xf32>
    %1186 = vector.broadcast %1184 : f32 to vector<8x8xf32>
    %1187 = arith.mulf %1186, %1185 : vector<8x8xf32>
    %1188 = arith.addf %1183, %1187 : vector<8x8xf32>
    %c119 = arith.constant 119 : index
    %1189 = memref.load %arg3[%c119] : memref<288xf32, #tpu.memory_space<smem>>
    %1190 = vector.extract_strided_slice %1 {offsets = [1, 0], sizes = [8, 8], strides = [1, 1]} : vector<10x10xf32> to vector<8x8xf32>
    %1191 = vector.broadcast %1189 : f32 to vector<8x8xf32>
    %1192 = arith.mulf %1191, %1190 : vector<8x8xf32>
    %1193 = arith.addf %1188, %1192 : vector<8x8xf32>
    %c151 = arith.constant 151 : index
    %1194 = memref.load %arg3[%c151] : memref<288xf32, #tpu.memory_space<smem>>
    %1195 = vector.extract_strided_slice %1 {offsets = [1, 1], sizes = [8, 8], strides = [1, 1]} : vector<10x10xf32> to vector<8x8xf32>
    %1196 = vector.broadcast %1194 : f32 to vector<8x8xf32>
    %1197 = arith.mulf %1196, %1195 : vector<8x8xf32>
    %1198 = arith.addf %1193, %1197 : vector<8x8xf32>
    %c183 = arith.constant 183 : index
    %1199 = memref.load %arg3[%c183] : memref<288xf32, #tpu.memory_space<smem>>
    %1200 = vector.extract_strided_slice %1 {offsets = [1, 2], sizes = [8, 8], strides = [1, 1]} : vector<10x10xf32> to vector<8x8xf32>
    %1201 = vector.broadcast %1199 : f32 to vector<8x8xf32>
    %1202 = arith.mulf %1201, %1200 : vector<8x8xf32>
    %1203 = arith.addf %1198, %1202 : vector<8x8xf32>
    %c215 = arith.constant 215 : index
    %1204 = memref.load %arg3[%c215] : memref<288xf32, #tpu.memory_space<smem>>
    %1205 = vector.extract_strided_slice %1 {offsets = [2, 0], sizes = [8, 8], strides = [1, 1]} : vector<10x10xf32> to vector<8x8xf32>
    %1206 = vector.broadcast %1204 : f32 to vector<8x8xf32>
    %1207 = arith.mulf %1206, %1205 : vector<8x8xf32>
    %1208 = arith.addf %1203, %1207 : vector<8x8xf32>
    %c247 = arith.constant 247 : index
    %1209 = memref.load %arg3[%c247] : memref<288xf32, #tpu.memory_space<smem>>
    %1210 = vector.extract_strided_slice %1 {offsets = [2, 1], sizes = [8, 8], strides = [1, 1]} : vector<10x10xf32> to vector<8x8xf32>
    %1211 = vector.broadcast %1209 : f32 to vector<8x8xf32>
    %1212 = arith.mulf %1211, %1210 : vector<8x8xf32>
    %1213 = arith.addf %1208, %1212 : vector<8x8xf32>
    %c279 = arith.constant 279 : index
    %1214 = memref.load %arg3[%c279] : memref<288xf32, #tpu.memory_space<smem>>
    %1215 = vector.extract_strided_slice %1 {offsets = [2, 2], sizes = [8, 8], strides = [1, 1]} : vector<10x10xf32> to vector<8x8xf32>
    %1216 = vector.broadcast %1214 : f32 to vector<8x8xf32>
    %1217 = arith.mulf %1216, %1215 : vector<8x8xf32>
    %1218 = arith.addf %1213, %1217 : vector<8x8xf32>
    %c23_72 = arith.constant 23 : index
    %1219 = memref.load %arg4[%c23_72] : memref<32xf32, #tpu.memory_space<smem>>
    %1220 = vector.broadcast %1219 : f32 to vector<8x8xf32>
    %1221 = arith.addf %1218, %1220 : vector<8x8xf32>
    %cst_73 = arith.constant 0.000000e+00 : f32
    %1222 = vector.broadcast %cst_73 : f32 to vector<8x8xf32>
    %1223 = arith.maximumf %1221, %1222 : vector<8x8xf32>
    %1224 = vector.shape_cast %1223 : vector<8x8xf32> to vector<4x2x8xf32>
    %cst_74 = arith.constant dense<0xFF800000> : vector<4x8xf32>
    %1225 = vector.multi_reduction <maximumf>, %1224, %cst_74 [1] : vector<4x2x8xf32> to vector<4x8xf32>
    %c24 = arith.constant 24 : index
    %1226 = memref.load %arg3[%c24] : memref<288xf32, #tpu.memory_space<smem>>
    %1227 = vector.extract_strided_slice %1 {offsets = [0, 0], sizes = [8, 8], strides = [1, 1]} : vector<10x10xf32> to vector<8x8xf32>
    %1228 = vector.broadcast %1226 : f32 to vector<8x8xf32>
    %1229 = arith.mulf %1228, %1227 : vector<8x8xf32>
    %c56 = arith.constant 56 : index
    %1230 = memref.load %arg3[%c56] : memref<288xf32, #tpu.memory_space<smem>>
    %1231 = vector.extract_strided_slice %1 {offsets = [0, 1], sizes = [8, 8], strides = [1, 1]} : vector<10x10xf32> to vector<8x8xf32>
    %1232 = vector.broadcast %1230 : f32 to vector<8x8xf32>
    %1233 = arith.mulf %1232, %1231 : vector<8x8xf32>
    %1234 = arith.addf %1229, %1233 : vector<8x8xf32>
    %c88 = arith.constant 88 : index
    %1235 = memref.load %arg3[%c88] : memref<288xf32, #tpu.memory_space<smem>>
    %1236 = vector.extract_strided_slice %1 {offsets = [0, 2], sizes = [8, 8], strides = [1, 1]} : vector<10x10xf32> to vector<8x8xf32>
    %1237 = vector.broadcast %1235 : f32 to vector<8x8xf32>
    %1238 = arith.mulf %1237, %1236 : vector<8x8xf32>
    %1239 = arith.addf %1234, %1238 : vector<8x8xf32>
    %c120 = arith.constant 120 : index
    %1240 = memref.load %arg3[%c120] : memref<288xf32, #tpu.memory_space<smem>>
    %1241 = vector.extract_strided_slice %1 {offsets = [1, 0], sizes = [8, 8], strides = [1, 1]} : vector<10x10xf32> to vector<8x8xf32>
    %1242 = vector.broadcast %1240 : f32 to vector<8x8xf32>
    %1243 = arith.mulf %1242, %1241 : vector<8x8xf32>
    %1244 = arith.addf %1239, %1243 : vector<8x8xf32>
    %c152 = arith.constant 152 : index
    %1245 = memref.load %arg3[%c152] : memref<288xf32, #tpu.memory_space<smem>>
    %1246 = vector.extract_strided_slice %1 {offsets = [1, 1], sizes = [8, 8], strides = [1, 1]} : vector<10x10xf32> to vector<8x8xf32>
    %1247 = vector.broadcast %1245 : f32 to vector<8x8xf32>
    %1248 = arith.mulf %1247, %1246 : vector<8x8xf32>
    %1249 = arith.addf %1244, %1248 : vector<8x8xf32>
    %c184 = arith.constant 184 : index
    %1250 = memref.load %arg3[%c184] : memref<288xf32, #tpu.memory_space<smem>>
    %1251 = vector.extract_strided_slice %1 {offsets = [1, 2], sizes = [8, 8], strides = [1, 1]} : vector<10x10xf32> to vector<8x8xf32>
    %1252 = vector.broadcast %1250 : f32 to vector<8x8xf32>
    %1253 = arith.mulf %1252, %1251 : vector<8x8xf32>
    %1254 = arith.addf %1249, %1253 : vector<8x8xf32>
    %c216 = arith.constant 216 : index
    %1255 = memref.load %arg3[%c216] : memref<288xf32, #tpu.memory_space<smem>>
    %1256 = vector.extract_strided_slice %1 {offsets = [2, 0], sizes = [8, 8], strides = [1, 1]} : vector<10x10xf32> to vector<8x8xf32>
    %1257 = vector.broadcast %1255 : f32 to vector<8x8xf32>
    %1258 = arith.mulf %1257, %1256 : vector<8x8xf32>
    %1259 = arith.addf %1254, %1258 : vector<8x8xf32>
    %c248 = arith.constant 248 : index
    %1260 = memref.load %arg3[%c248] : memref<288xf32, #tpu.memory_space<smem>>
    %1261 = vector.extract_strided_slice %1 {offsets = [2, 1], sizes = [8, 8], strides = [1, 1]} : vector<10x10xf32> to vector<8x8xf32>
    %1262 = vector.broadcast %1260 : f32 to vector<8x8xf32>
    %1263 = arith.mulf %1262, %1261 : vector<8x8xf32>
    %1264 = arith.addf %1259, %1263 : vector<8x8xf32>
    %c280 = arith.constant 280 : index
    %1265 = memref.load %arg3[%c280] : memref<288xf32, #tpu.memory_space<smem>>
    %1266 = vector.extract_strided_slice %1 {offsets = [2, 2], sizes = [8, 8], strides = [1, 1]} : vector<10x10xf32> to vector<8x8xf32>
    %1267 = vector.broadcast %1265 : f32 to vector<8x8xf32>
    %1268 = arith.mulf %1267, %1266 : vector<8x8xf32>
    %1269 = arith.addf %1264, %1268 : vector<8x8xf32>
    %c24_75 = arith.constant 24 : index
    %1270 = memref.load %arg4[%c24_75] : memref<32xf32, #tpu.memory_space<smem>>
    %1271 = vector.broadcast %1270 : f32 to vector<8x8xf32>
    %1272 = arith.addf %1269, %1271 : vector<8x8xf32>
    %cst_76 = arith.constant 0.000000e+00 : f32
    %1273 = vector.broadcast %cst_76 : f32 to vector<8x8xf32>
    %1274 = arith.maximumf %1272, %1273 : vector<8x8xf32>
    %1275 = vector.shape_cast %1274 : vector<8x8xf32> to vector<4x2x8xf32>
    %cst_77 = arith.constant dense<0xFF800000> : vector<4x8xf32>
    %1276 = vector.multi_reduction <maximumf>, %1275, %cst_77 [1] : vector<4x2x8xf32> to vector<4x8xf32>
    %c25 = arith.constant 25 : index
    %1277 = memref.load %arg3[%c25] : memref<288xf32, #tpu.memory_space<smem>>
    %1278 = vector.extract_strided_slice %1 {offsets = [0, 0], sizes = [8, 8], strides = [1, 1]} : vector<10x10xf32> to vector<8x8xf32>
    %1279 = vector.broadcast %1277 : f32 to vector<8x8xf32>
    %1280 = arith.mulf %1279, %1278 : vector<8x8xf32>
    %c57 = arith.constant 57 : index
    %1281 = memref.load %arg3[%c57] : memref<288xf32, #tpu.memory_space<smem>>
    %1282 = vector.extract_strided_slice %1 {offsets = [0, 1], sizes = [8, 8], strides = [1, 1]} : vector<10x10xf32> to vector<8x8xf32>
    %1283 = vector.broadcast %1281 : f32 to vector<8x8xf32>
    %1284 = arith.mulf %1283, %1282 : vector<8x8xf32>
    %1285 = arith.addf %1280, %1284 : vector<8x8xf32>
    %c89 = arith.constant 89 : index
    %1286 = memref.load %arg3[%c89] : memref<288xf32, #tpu.memory_space<smem>>
    %1287 = vector.extract_strided_slice %1 {offsets = [0, 2], sizes = [8, 8], strides = [1, 1]} : vector<10x10xf32> to vector<8x8xf32>
    %1288 = vector.broadcast %1286 : f32 to vector<8x8xf32>
    %1289 = arith.mulf %1288, %1287 : vector<8x8xf32>
    %1290 = arith.addf %1285, %1289 : vector<8x8xf32>
    %c121 = arith.constant 121 : index
    %1291 = memref.load %arg3[%c121] : memref<288xf32, #tpu.memory_space<smem>>
    %1292 = vector.extract_strided_slice %1 {offsets = [1, 0], sizes = [8, 8], strides = [1, 1]} : vector<10x10xf32> to vector<8x8xf32>
    %1293 = vector.broadcast %1291 : f32 to vector<8x8xf32>
    %1294 = arith.mulf %1293, %1292 : vector<8x8xf32>
    %1295 = arith.addf %1290, %1294 : vector<8x8xf32>
    %c153 = arith.constant 153 : index
    %1296 = memref.load %arg3[%c153] : memref<288xf32, #tpu.memory_space<smem>>
    %1297 = vector.extract_strided_slice %1 {offsets = [1, 1], sizes = [8, 8], strides = [1, 1]} : vector<10x10xf32> to vector<8x8xf32>
    %1298 = vector.broadcast %1296 : f32 to vector<8x8xf32>
    %1299 = arith.mulf %1298, %1297 : vector<8x8xf32>
    %1300 = arith.addf %1295, %1299 : vector<8x8xf32>
    %c185 = arith.constant 185 : index
    %1301 = memref.load %arg3[%c185] : memref<288xf32, #tpu.memory_space<smem>>
    %1302 = vector.extract_strided_slice %1 {offsets = [1, 2], sizes = [8, 8], strides = [1, 1]} : vector<10x10xf32> to vector<8x8xf32>
    %1303 = vector.broadcast %1301 : f32 to vector<8x8xf32>
    %1304 = arith.mulf %1303, %1302 : vector<8x8xf32>
    %1305 = arith.addf %1300, %1304 : vector<8x8xf32>
    %c217 = arith.constant 217 : index
    %1306 = memref.load %arg3[%c217] : memref<288xf32, #tpu.memory_space<smem>>
    %1307 = vector.extract_strided_slice %1 {offsets = [2, 0], sizes = [8, 8], strides = [1, 1]} : vector<10x10xf32> to vector<8x8xf32>
    %1308 = vector.broadcast %1306 : f32 to vector<8x8xf32>
    %1309 = arith.mulf %1308, %1307 : vector<8x8xf32>
    %1310 = arith.addf %1305, %1309 : vector<8x8xf32>
    %c249 = arith.constant 249 : index
    %1311 = memref.load %arg3[%c249] : memref<288xf32, #tpu.memory_space<smem>>
    %1312 = vector.extract_strided_slice %1 {offsets = [2, 1], sizes = [8, 8], strides = [1, 1]} : vector<10x10xf32> to vector<8x8xf32>
    %1313 = vector.broadcast %1311 : f32 to vector<8x8xf32>
    %1314 = arith.mulf %1313, %1312 : vector<8x8xf32>
    %1315 = arith.addf %1310, %1314 : vector<8x8xf32>
    %c281 = arith.constant 281 : index
    %1316 = memref.load %arg3[%c281] : memref<288xf32, #tpu.memory_space<smem>>
    %1317 = vector.extract_strided_slice %1 {offsets = [2, 2], sizes = [8, 8], strides = [1, 1]} : vector<10x10xf32> to vector<8x8xf32>
    %1318 = vector.broadcast %1316 : f32 to vector<8x8xf32>
    %1319 = arith.mulf %1318, %1317 : vector<8x8xf32>
    %1320 = arith.addf %1315, %1319 : vector<8x8xf32>
    %c25_78 = arith.constant 25 : index
    %1321 = memref.load %arg4[%c25_78] : memref<32xf32, #tpu.memory_space<smem>>
    %1322 = vector.broadcast %1321 : f32 to vector<8x8xf32>
    %1323 = arith.addf %1320, %1322 : vector<8x8xf32>
    %cst_79 = arith.constant 0.000000e+00 : f32
    %1324 = vector.broadcast %cst_79 : f32 to vector<8x8xf32>
    %1325 = arith.maximumf %1323, %1324 : vector<8x8xf32>
    %1326 = vector.shape_cast %1325 : vector<8x8xf32> to vector<4x2x8xf32>
    %cst_80 = arith.constant dense<0xFF800000> : vector<4x8xf32>
    %1327 = vector.multi_reduction <maximumf>, %1326, %cst_80 [1] : vector<4x2x8xf32> to vector<4x8xf32>
    %c26 = arith.constant 26 : index
    %1328 = memref.load %arg3[%c26] : memref<288xf32, #tpu.memory_space<smem>>
    %1329 = vector.extract_strided_slice %1 {offsets = [0, 0], sizes = [8, 8], strides = [1, 1]} : vector<10x10xf32> to vector<8x8xf32>
    %1330 = vector.broadcast %1328 : f32 to vector<8x8xf32>
    %1331 = arith.mulf %1330, %1329 : vector<8x8xf32>
    %c58 = arith.constant 58 : index
    %1332 = memref.load %arg3[%c58] : memref<288xf32, #tpu.memory_space<smem>>
    %1333 = vector.extract_strided_slice %1 {offsets = [0, 1], sizes = [8, 8], strides = [1, 1]} : vector<10x10xf32> to vector<8x8xf32>
    %1334 = vector.broadcast %1332 : f32 to vector<8x8xf32>
    %1335 = arith.mulf %1334, %1333 : vector<8x8xf32>
    %1336 = arith.addf %1331, %1335 : vector<8x8xf32>
    %c90 = arith.constant 90 : index
    %1337 = memref.load %arg3[%c90] : memref<288xf32, #tpu.memory_space<smem>>
    %1338 = vector.extract_strided_slice %1 {offsets = [0, 2], sizes = [8, 8], strides = [1, 1]} : vector<10x10xf32> to vector<8x8xf32>
    %1339 = vector.broadcast %1337 : f32 to vector<8x8xf32>
    %1340 = arith.mulf %1339, %1338 : vector<8x8xf32>
    %1341 = arith.addf %1336, %1340 : vector<8x8xf32>
    %c122 = arith.constant 122 : index
    %1342 = memref.load %arg3[%c122] : memref<288xf32, #tpu.memory_space<smem>>
    %1343 = vector.extract_strided_slice %1 {offsets = [1, 0], sizes = [8, 8], strides = [1, 1]} : vector<10x10xf32> to vector<8x8xf32>
    %1344 = vector.broadcast %1342 : f32 to vector<8x8xf32>
    %1345 = arith.mulf %1344, %1343 : vector<8x8xf32>
    %1346 = arith.addf %1341, %1345 : vector<8x8xf32>
    %c154 = arith.constant 154 : index
    %1347 = memref.load %arg3[%c154] : memref<288xf32, #tpu.memory_space<smem>>
    %1348 = vector.extract_strided_slice %1 {offsets = [1, 1], sizes = [8, 8], strides = [1, 1]} : vector<10x10xf32> to vector<8x8xf32>
    %1349 = vector.broadcast %1347 : f32 to vector<8x8xf32>
    %1350 = arith.mulf %1349, %1348 : vector<8x8xf32>
    %1351 = arith.addf %1346, %1350 : vector<8x8xf32>
    %c186 = arith.constant 186 : index
    %1352 = memref.load %arg3[%c186] : memref<288xf32, #tpu.memory_space<smem>>
    %1353 = vector.extract_strided_slice %1 {offsets = [1, 2], sizes = [8, 8], strides = [1, 1]} : vector<10x10xf32> to vector<8x8xf32>
    %1354 = vector.broadcast %1352 : f32 to vector<8x8xf32>
    %1355 = arith.mulf %1354, %1353 : vector<8x8xf32>
    %1356 = arith.addf %1351, %1355 : vector<8x8xf32>
    %c218 = arith.constant 218 : index
    %1357 = memref.load %arg3[%c218] : memref<288xf32, #tpu.memory_space<smem>>
    %1358 = vector.extract_strided_slice %1 {offsets = [2, 0], sizes = [8, 8], strides = [1, 1]} : vector<10x10xf32> to vector<8x8xf32>
    %1359 = vector.broadcast %1357 : f32 to vector<8x8xf32>
    %1360 = arith.mulf %1359, %1358 : vector<8x8xf32>
    %1361 = arith.addf %1356, %1360 : vector<8x8xf32>
    %c250 = arith.constant 250 : index
    %1362 = memref.load %arg3[%c250] : memref<288xf32, #tpu.memory_space<smem>>
    %1363 = vector.extract_strided_slice %1 {offsets = [2, 1], sizes = [8, 8], strides = [1, 1]} : vector<10x10xf32> to vector<8x8xf32>
    %1364 = vector.broadcast %1362 : f32 to vector<8x8xf32>
    %1365 = arith.mulf %1364, %1363 : vector<8x8xf32>
    %1366 = arith.addf %1361, %1365 : vector<8x8xf32>
    %c282 = arith.constant 282 : index
    %1367 = memref.load %arg3[%c282] : memref<288xf32, #tpu.memory_space<smem>>
    %1368 = vector.extract_strided_slice %1 {offsets = [2, 2], sizes = [8, 8], strides = [1, 1]} : vector<10x10xf32> to vector<8x8xf32>
    %1369 = vector.broadcast %1367 : f32 to vector<8x8xf32>
    %1370 = arith.mulf %1369, %1368 : vector<8x8xf32>
    %1371 = arith.addf %1366, %1370 : vector<8x8xf32>
    %c26_81 = arith.constant 26 : index
    %1372 = memref.load %arg4[%c26_81] : memref<32xf32, #tpu.memory_space<smem>>
    %1373 = vector.broadcast %1372 : f32 to vector<8x8xf32>
    %1374 = arith.addf %1371, %1373 : vector<8x8xf32>
    %cst_82 = arith.constant 0.000000e+00 : f32
    %1375 = vector.broadcast %cst_82 : f32 to vector<8x8xf32>
    %1376 = arith.maximumf %1374, %1375 : vector<8x8xf32>
    %1377 = vector.shape_cast %1376 : vector<8x8xf32> to vector<4x2x8xf32>
    %cst_83 = arith.constant dense<0xFF800000> : vector<4x8xf32>
    %1378 = vector.multi_reduction <maximumf>, %1377, %cst_83 [1] : vector<4x2x8xf32> to vector<4x8xf32>
    %c27 = arith.constant 27 : index
    %1379 = memref.load %arg3[%c27] : memref<288xf32, #tpu.memory_space<smem>>
    %1380 = vector.extract_strided_slice %1 {offsets = [0, 0], sizes = [8, 8], strides = [1, 1]} : vector<10x10xf32> to vector<8x8xf32>
    %1381 = vector.broadcast %1379 : f32 to vector<8x8xf32>
    %1382 = arith.mulf %1381, %1380 : vector<8x8xf32>
    %c59 = arith.constant 59 : index
    %1383 = memref.load %arg3[%c59] : memref<288xf32, #tpu.memory_space<smem>>
    %1384 = vector.extract_strided_slice %1 {offsets = [0, 1], sizes = [8, 8], strides = [1, 1]} : vector<10x10xf32> to vector<8x8xf32>
    %1385 = vector.broadcast %1383 : f32 to vector<8x8xf32>
    %1386 = arith.mulf %1385, %1384 : vector<8x8xf32>
    %1387 = arith.addf %1382, %1386 : vector<8x8xf32>
    %c91 = arith.constant 91 : index
    %1388 = memref.load %arg3[%c91] : memref<288xf32, #tpu.memory_space<smem>>
    %1389 = vector.extract_strided_slice %1 {offsets = [0, 2], sizes = [8, 8], strides = [1, 1]} : vector<10x10xf32> to vector<8x8xf32>
    %1390 = vector.broadcast %1388 : f32 to vector<8x8xf32>
    %1391 = arith.mulf %1390, %1389 : vector<8x8xf32>
    %1392 = arith.addf %1387, %1391 : vector<8x8xf32>
    %c123 = arith.constant 123 : index
    %1393 = memref.load %arg3[%c123] : memref<288xf32, #tpu.memory_space<smem>>
    %1394 = vector.extract_strided_slice %1 {offsets = [1, 0], sizes = [8, 8], strides = [1, 1]} : vector<10x10xf32> to vector<8x8xf32>
    %1395 = vector.broadcast %1393 : f32 to vector<8x8xf32>
    %1396 = arith.mulf %1395, %1394 : vector<8x8xf32>
    %1397 = arith.addf %1392, %1396 : vector<8x8xf32>
    %c155 = arith.constant 155 : index
    %1398 = memref.load %arg3[%c155] : memref<288xf32, #tpu.memory_space<smem>>
    %1399 = vector.extract_strided_slice %1 {offsets = [1, 1], sizes = [8, 8], strides = [1, 1]} : vector<10x10xf32> to vector<8x8xf32>
    %1400 = vector.broadcast %1398 : f32 to vector<8x8xf32>
    %1401 = arith.mulf %1400, %1399 : vector<8x8xf32>
    %1402 = arith.addf %1397, %1401 : vector<8x8xf32>
    %c187 = arith.constant 187 : index
    %1403 = memref.load %arg3[%c187] : memref<288xf32, #tpu.memory_space<smem>>
    %1404 = vector.extract_strided_slice %1 {offsets = [1, 2], sizes = [8, 8], strides = [1, 1]} : vector<10x10xf32> to vector<8x8xf32>
    %1405 = vector.broadcast %1403 : f32 to vector<8x8xf32>
    %1406 = arith.mulf %1405, %1404 : vector<8x8xf32>
    %1407 = arith.addf %1402, %1406 : vector<8x8xf32>
    %c219 = arith.constant 219 : index
    %1408 = memref.load %arg3[%c219] : memref<288xf32, #tpu.memory_space<smem>>
    %1409 = vector.extract_strided_slice %1 {offsets = [2, 0], sizes = [8, 8], strides = [1, 1]} : vector<10x10xf32> to vector<8x8xf32>
    %1410 = vector.broadcast %1408 : f32 to vector<8x8xf32>
    %1411 = arith.mulf %1410, %1409 : vector<8x8xf32>
    %1412 = arith.addf %1407, %1411 : vector<8x8xf32>
    %c251 = arith.constant 251 : index
    %1413 = memref.load %arg3[%c251] : memref<288xf32, #tpu.memory_space<smem>>
    %1414 = vector.extract_strided_slice %1 {offsets = [2, 1], sizes = [8, 8], strides = [1, 1]} : vector<10x10xf32> to vector<8x8xf32>
    %1415 = vector.broadcast %1413 : f32 to vector<8x8xf32>
    %1416 = arith.mulf %1415, %1414 : vector<8x8xf32>
    %1417 = arith.addf %1412, %1416 : vector<8x8xf32>
    %c283 = arith.constant 283 : index
    %1418 = memref.load %arg3[%c283] : memref<288xf32, #tpu.memory_space<smem>>
    %1419 = vector.extract_strided_slice %1 {offsets = [2, 2], sizes = [8, 8], strides = [1, 1]} : vector<10x10xf32> to vector<8x8xf32>
    %1420 = vector.broadcast %1418 : f32 to vector<8x8xf32>
    %1421 = arith.mulf %1420, %1419 : vector<8x8xf32>
    %1422 = arith.addf %1417, %1421 : vector<8x8xf32>
    %c27_84 = arith.constant 27 : index
    %1423 = memref.load %arg4[%c27_84] : memref<32xf32, #tpu.memory_space<smem>>
    %1424 = vector.broadcast %1423 : f32 to vector<8x8xf32>
    %1425 = arith.addf %1422, %1424 : vector<8x8xf32>
    %cst_85 = arith.constant 0.000000e+00 : f32
    %1426 = vector.broadcast %cst_85 : f32 to vector<8x8xf32>
    %1427 = arith.maximumf %1425, %1426 : vector<8x8xf32>
    %1428 = vector.shape_cast %1427 : vector<8x8xf32> to vector<4x2x8xf32>
    %cst_86 = arith.constant dense<0xFF800000> : vector<4x8xf32>
    %1429 = vector.multi_reduction <maximumf>, %1428, %cst_86 [1] : vector<4x2x8xf32> to vector<4x8xf32>
    %c28 = arith.constant 28 : index
    %1430 = memref.load %arg3[%c28] : memref<288xf32, #tpu.memory_space<smem>>
    %1431 = vector.extract_strided_slice %1 {offsets = [0, 0], sizes = [8, 8], strides = [1, 1]} : vector<10x10xf32> to vector<8x8xf32>
    %1432 = vector.broadcast %1430 : f32 to vector<8x8xf32>
    %1433 = arith.mulf %1432, %1431 : vector<8x8xf32>
    %c60 = arith.constant 60 : index
    %1434 = memref.load %arg3[%c60] : memref<288xf32, #tpu.memory_space<smem>>
    %1435 = vector.extract_strided_slice %1 {offsets = [0, 1], sizes = [8, 8], strides = [1, 1]} : vector<10x10xf32> to vector<8x8xf32>
    %1436 = vector.broadcast %1434 : f32 to vector<8x8xf32>
    %1437 = arith.mulf %1436, %1435 : vector<8x8xf32>
    %1438 = arith.addf %1433, %1437 : vector<8x8xf32>
    %c92 = arith.constant 92 : index
    %1439 = memref.load %arg3[%c92] : memref<288xf32, #tpu.memory_space<smem>>
    %1440 = vector.extract_strided_slice %1 {offsets = [0, 2], sizes = [8, 8], strides = [1, 1]} : vector<10x10xf32> to vector<8x8xf32>
    %1441 = vector.broadcast %1439 : f32 to vector<8x8xf32>
    %1442 = arith.mulf %1441, %1440 : vector<8x8xf32>
    %1443 = arith.addf %1438, %1442 : vector<8x8xf32>
    %c124 = arith.constant 124 : index
    %1444 = memref.load %arg3[%c124] : memref<288xf32, #tpu.memory_space<smem>>
    %1445 = vector.extract_strided_slice %1 {offsets = [1, 0], sizes = [8, 8], strides = [1, 1]} : vector<10x10xf32> to vector<8x8xf32>
    %1446 = vector.broadcast %1444 : f32 to vector<8x8xf32>
    %1447 = arith.mulf %1446, %1445 : vector<8x8xf32>
    %1448 = arith.addf %1443, %1447 : vector<8x8xf32>
    %c156 = arith.constant 156 : index
    %1449 = memref.load %arg3[%c156] : memref<288xf32, #tpu.memory_space<smem>>
    %1450 = vector.extract_strided_slice %1 {offsets = [1, 1], sizes = [8, 8], strides = [1, 1]} : vector<10x10xf32> to vector<8x8xf32>
    %1451 = vector.broadcast %1449 : f32 to vector<8x8xf32>
    %1452 = arith.mulf %1451, %1450 : vector<8x8xf32>
    %1453 = arith.addf %1448, %1452 : vector<8x8xf32>
    %c188 = arith.constant 188 : index
    %1454 = memref.load %arg3[%c188] : memref<288xf32, #tpu.memory_space<smem>>
    %1455 = vector.extract_strided_slice %1 {offsets = [1, 2], sizes = [8, 8], strides = [1, 1]} : vector<10x10xf32> to vector<8x8xf32>
    %1456 = vector.broadcast %1454 : f32 to vector<8x8xf32>
    %1457 = arith.mulf %1456, %1455 : vector<8x8xf32>
    %1458 = arith.addf %1453, %1457 : vector<8x8xf32>
    %c220 = arith.constant 220 : index
    %1459 = memref.load %arg3[%c220] : memref<288xf32, #tpu.memory_space<smem>>
    %1460 = vector.extract_strided_slice %1 {offsets = [2, 0], sizes = [8, 8], strides = [1, 1]} : vector<10x10xf32> to vector<8x8xf32>
    %1461 = vector.broadcast %1459 : f32 to vector<8x8xf32>
    %1462 = arith.mulf %1461, %1460 : vector<8x8xf32>
    %1463 = arith.addf %1458, %1462 : vector<8x8xf32>
    %c252 = arith.constant 252 : index
    %1464 = memref.load %arg3[%c252] : memref<288xf32, #tpu.memory_space<smem>>
    %1465 = vector.extract_strided_slice %1 {offsets = [2, 1], sizes = [8, 8], strides = [1, 1]} : vector<10x10xf32> to vector<8x8xf32>
    %1466 = vector.broadcast %1464 : f32 to vector<8x8xf32>
    %1467 = arith.mulf %1466, %1465 : vector<8x8xf32>
    %1468 = arith.addf %1463, %1467 : vector<8x8xf32>
    %c284 = arith.constant 284 : index
    %1469 = memref.load %arg3[%c284] : memref<288xf32, #tpu.memory_space<smem>>
    %1470 = vector.extract_strided_slice %1 {offsets = [2, 2], sizes = [8, 8], strides = [1, 1]} : vector<10x10xf32> to vector<8x8xf32>
    %1471 = vector.broadcast %1469 : f32 to vector<8x8xf32>
    %1472 = arith.mulf %1471, %1470 : vector<8x8xf32>
    %1473 = arith.addf %1468, %1472 : vector<8x8xf32>
    %c28_87 = arith.constant 28 : index
    %1474 = memref.load %arg4[%c28_87] : memref<32xf32, #tpu.memory_space<smem>>
    %1475 = vector.broadcast %1474 : f32 to vector<8x8xf32>
    %1476 = arith.addf %1473, %1475 : vector<8x8xf32>
    %cst_88 = arith.constant 0.000000e+00 : f32
    %1477 = vector.broadcast %cst_88 : f32 to vector<8x8xf32>
    %1478 = arith.maximumf %1476, %1477 : vector<8x8xf32>
    %1479 = vector.shape_cast %1478 : vector<8x8xf32> to vector<4x2x8xf32>
    %cst_89 = arith.constant dense<0xFF800000> : vector<4x8xf32>
    %1480 = vector.multi_reduction <maximumf>, %1479, %cst_89 [1] : vector<4x2x8xf32> to vector<4x8xf32>
    %c29 = arith.constant 29 : index
    %1481 = memref.load %arg3[%c29] : memref<288xf32, #tpu.memory_space<smem>>
    %1482 = vector.extract_strided_slice %1 {offsets = [0, 0], sizes = [8, 8], strides = [1, 1]} : vector<10x10xf32> to vector<8x8xf32>
    %1483 = vector.broadcast %1481 : f32 to vector<8x8xf32>
    %1484 = arith.mulf %1483, %1482 : vector<8x8xf32>
    %c61 = arith.constant 61 : index
    %1485 = memref.load %arg3[%c61] : memref<288xf32, #tpu.memory_space<smem>>
    %1486 = vector.extract_strided_slice %1 {offsets = [0, 1], sizes = [8, 8], strides = [1, 1]} : vector<10x10xf32> to vector<8x8xf32>
    %1487 = vector.broadcast %1485 : f32 to vector<8x8xf32>
    %1488 = arith.mulf %1487, %1486 : vector<8x8xf32>
    %1489 = arith.addf %1484, %1488 : vector<8x8xf32>
    %c93 = arith.constant 93 : index
    %1490 = memref.load %arg3[%c93] : memref<288xf32, #tpu.memory_space<smem>>
    %1491 = vector.extract_strided_slice %1 {offsets = [0, 2], sizes = [8, 8], strides = [1, 1]} : vector<10x10xf32> to vector<8x8xf32>
    %1492 = vector.broadcast %1490 : f32 to vector<8x8xf32>
    %1493 = arith.mulf %1492, %1491 : vector<8x8xf32>
    %1494 = arith.addf %1489, %1493 : vector<8x8xf32>
    %c125 = arith.constant 125 : index
    %1495 = memref.load %arg3[%c125] : memref<288xf32, #tpu.memory_space<smem>>
    %1496 = vector.extract_strided_slice %1 {offsets = [1, 0], sizes = [8, 8], strides = [1, 1]} : vector<10x10xf32> to vector<8x8xf32>
    %1497 = vector.broadcast %1495 : f32 to vector<8x8xf32>
    %1498 = arith.mulf %1497, %1496 : vector<8x8xf32>
    %1499 = arith.addf %1494, %1498 : vector<8x8xf32>
    %c157 = arith.constant 157 : index
    %1500 = memref.load %arg3[%c157] : memref<288xf32, #tpu.memory_space<smem>>
    %1501 = vector.extract_strided_slice %1 {offsets = [1, 1], sizes = [8, 8], strides = [1, 1]} : vector<10x10xf32> to vector<8x8xf32>
    %1502 = vector.broadcast %1500 : f32 to vector<8x8xf32>
    %1503 = arith.mulf %1502, %1501 : vector<8x8xf32>
    %1504 = arith.addf %1499, %1503 : vector<8x8xf32>
    %c189 = arith.constant 189 : index
    %1505 = memref.load %arg3[%c189] : memref<288xf32, #tpu.memory_space<smem>>
    %1506 = vector.extract_strided_slice %1 {offsets = [1, 2], sizes = [8, 8], strides = [1, 1]} : vector<10x10xf32> to vector<8x8xf32>
    %1507 = vector.broadcast %1505 : f32 to vector<8x8xf32>
    %1508 = arith.mulf %1507, %1506 : vector<8x8xf32>
    %1509 = arith.addf %1504, %1508 : vector<8x8xf32>
    %c221 = arith.constant 221 : index
    %1510 = memref.load %arg3[%c221] : memref<288xf32, #tpu.memory_space<smem>>
    %1511 = vector.extract_strided_slice %1 {offsets = [2, 0], sizes = [8, 8], strides = [1, 1]} : vector<10x10xf32> to vector<8x8xf32>
    %1512 = vector.broadcast %1510 : f32 to vector<8x8xf32>
    %1513 = arith.mulf %1512, %1511 : vector<8x8xf32>
    %1514 = arith.addf %1509, %1513 : vector<8x8xf32>
    %c253 = arith.constant 253 : index
    %1515 = memref.load %arg3[%c253] : memref<288xf32, #tpu.memory_space<smem>>
    %1516 = vector.extract_strided_slice %1 {offsets = [2, 1], sizes = [8, 8], strides = [1, 1]} : vector<10x10xf32> to vector<8x8xf32>
    %1517 = vector.broadcast %1515 : f32 to vector<8x8xf32>
    %1518 = arith.mulf %1517, %1516 : vector<8x8xf32>
    %1519 = arith.addf %1514, %1518 : vector<8x8xf32>
    %c285 = arith.constant 285 : index
    %1520 = memref.load %arg3[%c285] : memref<288xf32, #tpu.memory_space<smem>>
    %1521 = vector.extract_strided_slice %1 {offsets = [2, 2], sizes = [8, 8], strides = [1, 1]} : vector<10x10xf32> to vector<8x8xf32>
    %1522 = vector.broadcast %1520 : f32 to vector<8x8xf32>
    %1523 = arith.mulf %1522, %1521 : vector<8x8xf32>
    %1524 = arith.addf %1519, %1523 : vector<8x8xf32>
    %c29_90 = arith.constant 29 : index
    %1525 = memref.load %arg4[%c29_90] : memref<32xf32, #tpu.memory_space<smem>>
    %1526 = vector.broadcast %1525 : f32 to vector<8x8xf32>
    %1527 = arith.addf %1524, %1526 : vector<8x8xf32>
    %cst_91 = arith.constant 0.000000e+00 : f32
    %1528 = vector.broadcast %cst_91 : f32 to vector<8x8xf32>
    %1529 = arith.maximumf %1527, %1528 : vector<8x8xf32>
    %1530 = vector.shape_cast %1529 : vector<8x8xf32> to vector<4x2x8xf32>
    %cst_92 = arith.constant dense<0xFF800000> : vector<4x8xf32>
    %1531 = vector.multi_reduction <maximumf>, %1530, %cst_92 [1] : vector<4x2x8xf32> to vector<4x8xf32>
    %c30 = arith.constant 30 : index
    %1532 = memref.load %arg3[%c30] : memref<288xf32, #tpu.memory_space<smem>>
    %1533 = vector.extract_strided_slice %1 {offsets = [0, 0], sizes = [8, 8], strides = [1, 1]} : vector<10x10xf32> to vector<8x8xf32>
    %1534 = vector.broadcast %1532 : f32 to vector<8x8xf32>
    %1535 = arith.mulf %1534, %1533 : vector<8x8xf32>
    %c62 = arith.constant 62 : index
    %1536 = memref.load %arg3[%c62] : memref<288xf32, #tpu.memory_space<smem>>
    %1537 = vector.extract_strided_slice %1 {offsets = [0, 1], sizes = [8, 8], strides = [1, 1]} : vector<10x10xf32> to vector<8x8xf32>
    %1538 = vector.broadcast %1536 : f32 to vector<8x8xf32>
    %1539 = arith.mulf %1538, %1537 : vector<8x8xf32>
    %1540 = arith.addf %1535, %1539 : vector<8x8xf32>
    %c94 = arith.constant 94 : index
    %1541 = memref.load %arg3[%c94] : memref<288xf32, #tpu.memory_space<smem>>
    %1542 = vector.extract_strided_slice %1 {offsets = [0, 2], sizes = [8, 8], strides = [1, 1]} : vector<10x10xf32> to vector<8x8xf32>
    %1543 = vector.broadcast %1541 : f32 to vector<8x8xf32>
    %1544 = arith.mulf %1543, %1542 : vector<8x8xf32>
    %1545 = arith.addf %1540, %1544 : vector<8x8xf32>
    %c126 = arith.constant 126 : index
    %1546 = memref.load %arg3[%c126] : memref<288xf32, #tpu.memory_space<smem>>
    %1547 = vector.extract_strided_slice %1 {offsets = [1, 0], sizes = [8, 8], strides = [1, 1]} : vector<10x10xf32> to vector<8x8xf32>
    %1548 = vector.broadcast %1546 : f32 to vector<8x8xf32>
    %1549 = arith.mulf %1548, %1547 : vector<8x8xf32>
    %1550 = arith.addf %1545, %1549 : vector<8x8xf32>
    %c158 = arith.constant 158 : index
    %1551 = memref.load %arg3[%c158] : memref<288xf32, #tpu.memory_space<smem>>
    %1552 = vector.extract_strided_slice %1 {offsets = [1, 1], sizes = [8, 8], strides = [1, 1]} : vector<10x10xf32> to vector<8x8xf32>
    %1553 = vector.broadcast %1551 : f32 to vector<8x8xf32>
    %1554 = arith.mulf %1553, %1552 : vector<8x8xf32>
    %1555 = arith.addf %1550, %1554 : vector<8x8xf32>
    %c190 = arith.constant 190 : index
    %1556 = memref.load %arg3[%c190] : memref<288xf32, #tpu.memory_space<smem>>
    %1557 = vector.extract_strided_slice %1 {offsets = [1, 2], sizes = [8, 8], strides = [1, 1]} : vector<10x10xf32> to vector<8x8xf32>
    %1558 = vector.broadcast %1556 : f32 to vector<8x8xf32>
    %1559 = arith.mulf %1558, %1557 : vector<8x8xf32>
    %1560 = arith.addf %1555, %1559 : vector<8x8xf32>
    %c222 = arith.constant 222 : index
    %1561 = memref.load %arg3[%c222] : memref<288xf32, #tpu.memory_space<smem>>
    %1562 = vector.extract_strided_slice %1 {offsets = [2, 0], sizes = [8, 8], strides = [1, 1]} : vector<10x10xf32> to vector<8x8xf32>
    %1563 = vector.broadcast %1561 : f32 to vector<8x8xf32>
    %1564 = arith.mulf %1563, %1562 : vector<8x8xf32>
    %1565 = arith.addf %1560, %1564 : vector<8x8xf32>
    %c254 = arith.constant 254 : index
    %1566 = memref.load %arg3[%c254] : memref<288xf32, #tpu.memory_space<smem>>
    %1567 = vector.extract_strided_slice %1 {offsets = [2, 1], sizes = [8, 8], strides = [1, 1]} : vector<10x10xf32> to vector<8x8xf32>
    %1568 = vector.broadcast %1566 : f32 to vector<8x8xf32>
    %1569 = arith.mulf %1568, %1567 : vector<8x8xf32>
    %1570 = arith.addf %1565, %1569 : vector<8x8xf32>
    %c286 = arith.constant 286 : index
    %1571 = memref.load %arg3[%c286] : memref<288xf32, #tpu.memory_space<smem>>
    %1572 = vector.extract_strided_slice %1 {offsets = [2, 2], sizes = [8, 8], strides = [1, 1]} : vector<10x10xf32> to vector<8x8xf32>
    %1573 = vector.broadcast %1571 : f32 to vector<8x8xf32>
    %1574 = arith.mulf %1573, %1572 : vector<8x8xf32>
    %1575 = arith.addf %1570, %1574 : vector<8x8xf32>
    %c30_93 = arith.constant 30 : index
    %1576 = memref.load %arg4[%c30_93] : memref<32xf32, #tpu.memory_space<smem>>
    %1577 = vector.broadcast %1576 : f32 to vector<8x8xf32>
    %1578 = arith.addf %1575, %1577 : vector<8x8xf32>
    %cst_94 = arith.constant 0.000000e+00 : f32
    %1579 = vector.broadcast %cst_94 : f32 to vector<8x8xf32>
    %1580 = arith.maximumf %1578, %1579 : vector<8x8xf32>
    %1581 = vector.shape_cast %1580 : vector<8x8xf32> to vector<4x2x8xf32>
    %cst_95 = arith.constant dense<0xFF800000> : vector<4x8xf32>
    %1582 = vector.multi_reduction <maximumf>, %1581, %cst_95 [1] : vector<4x2x8xf32> to vector<4x8xf32>
    %c31 = arith.constant 31 : index
    %1583 = memref.load %arg3[%c31] : memref<288xf32, #tpu.memory_space<smem>>
    %1584 = vector.extract_strided_slice %1 {offsets = [0, 0], sizes = [8, 8], strides = [1, 1]} : vector<10x10xf32> to vector<8x8xf32>
    %1585 = vector.broadcast %1583 : f32 to vector<8x8xf32>
    %1586 = arith.mulf %1585, %1584 : vector<8x8xf32>
    %c63 = arith.constant 63 : index
    %1587 = memref.load %arg3[%c63] : memref<288xf32, #tpu.memory_space<smem>>
    %1588 = vector.extract_strided_slice %1 {offsets = [0, 1], sizes = [8, 8], strides = [1, 1]} : vector<10x10xf32> to vector<8x8xf32>
    %1589 = vector.broadcast %1587 : f32 to vector<8x8xf32>
    %1590 = arith.mulf %1589, %1588 : vector<8x8xf32>
    %1591 = arith.addf %1586, %1590 : vector<8x8xf32>
    %c95 = arith.constant 95 : index
    %1592 = memref.load %arg3[%c95] : memref<288xf32, #tpu.memory_space<smem>>
    %1593 = vector.extract_strided_slice %1 {offsets = [0, 2], sizes = [8, 8], strides = [1, 1]} : vector<10x10xf32> to vector<8x8xf32>
    %1594 = vector.broadcast %1592 : f32 to vector<8x8xf32>
    %1595 = arith.mulf %1594, %1593 : vector<8x8xf32>
    %1596 = arith.addf %1591, %1595 : vector<8x8xf32>
    %c127 = arith.constant 127 : index
    %1597 = memref.load %arg3[%c127] : memref<288xf32, #tpu.memory_space<smem>>
    %1598 = vector.extract_strided_slice %1 {offsets = [1, 0], sizes = [8, 8], strides = [1, 1]} : vector<10x10xf32> to vector<8x8xf32>
    %1599 = vector.broadcast %1597 : f32 to vector<8x8xf32>
    %1600 = arith.mulf %1599, %1598 : vector<8x8xf32>
    %1601 = arith.addf %1596, %1600 : vector<8x8xf32>
    %c159 = arith.constant 159 : index
    %1602 = memref.load %arg3[%c159] : memref<288xf32, #tpu.memory_space<smem>>
    %1603 = vector.extract_strided_slice %1 {offsets = [1, 1], sizes = [8, 8], strides = [1, 1]} : vector<10x10xf32> to vector<8x8xf32>
    %1604 = vector.broadcast %1602 : f32 to vector<8x8xf32>
    %1605 = arith.mulf %1604, %1603 : vector<8x8xf32>
    %1606 = arith.addf %1601, %1605 : vector<8x8xf32>
    %c191 = arith.constant 191 : index
    %1607 = memref.load %arg3[%c191] : memref<288xf32, #tpu.memory_space<smem>>
    %1608 = vector.extract_strided_slice %1 {offsets = [1, 2], sizes = [8, 8], strides = [1, 1]} : vector<10x10xf32> to vector<8x8xf32>
    %1609 = vector.broadcast %1607 : f32 to vector<8x8xf32>
    %1610 = arith.mulf %1609, %1608 : vector<8x8xf32>
    %1611 = arith.addf %1606, %1610 : vector<8x8xf32>
    %c223 = arith.constant 223 : index
    %1612 = memref.load %arg3[%c223] : memref<288xf32, #tpu.memory_space<smem>>
    %1613 = vector.extract_strided_slice %1 {offsets = [2, 0], sizes = [8, 8], strides = [1, 1]} : vector<10x10xf32> to vector<8x8xf32>
    %1614 = vector.broadcast %1612 : f32 to vector<8x8xf32>
    %1615 = arith.mulf %1614, %1613 : vector<8x8xf32>
    %1616 = arith.addf %1611, %1615 : vector<8x8xf32>
    %c255 = arith.constant 255 : index
    %1617 = memref.load %arg3[%c255] : memref<288xf32, #tpu.memory_space<smem>>
    %1618 = vector.extract_strided_slice %1 {offsets = [2, 1], sizes = [8, 8], strides = [1, 1]} : vector<10x10xf32> to vector<8x8xf32>
    %1619 = vector.broadcast %1617 : f32 to vector<8x8xf32>
    %1620 = arith.mulf %1619, %1618 : vector<8x8xf32>
    %1621 = arith.addf %1616, %1620 : vector<8x8xf32>
    %c287 = arith.constant 287 : index
    %1622 = memref.load %arg3[%c287] : memref<288xf32, #tpu.memory_space<smem>>
    %1623 = vector.extract_strided_slice %1 {offsets = [2, 2], sizes = [8, 8], strides = [1, 1]} : vector<10x10xf32> to vector<8x8xf32>
    %1624 = vector.broadcast %1622 : f32 to vector<8x8xf32>
    %1625 = arith.mulf %1624, %1623 : vector<8x8xf32>
    %1626 = arith.addf %1621, %1625 : vector<8x8xf32>
    %c31_96 = arith.constant 31 : index
    %1627 = memref.load %arg4[%c31_96] : memref<32xf32, #tpu.memory_space<smem>>
    %1628 = vector.broadcast %1627 : f32 to vector<8x8xf32>
    %1629 = arith.addf %1626, %1628 : vector<8x8xf32>
    %cst_97 = arith.constant 0.000000e+00 : f32
    %1630 = vector.broadcast %cst_97 : f32 to vector<8x8xf32>
    %1631 = arith.maximumf %1629, %1630 : vector<8x8xf32>
    %1632 = vector.shape_cast %1631 : vector<8x8xf32> to vector<4x2x8xf32>
    %cst_98 = arith.constant dense<0xFF800000> : vector<4x8xf32>
    %1633 = vector.multi_reduction <maximumf>, %1632, %cst_98 [1] : vector<4x2x8xf32> to vector<4x8xf32>
    %1634 = tpu.concatenate %52, %103, %154, %205, %256, %307, %358, %409, %460, %511, %562, %613, %664, %715, %766, %817 in 0 : vector<4x8xf32>, vector<4x8xf32>, vector<4x8xf32>, vector<4x8xf32>, vector<4x8xf32>, vector<4x8xf32>, vector<4x8xf32>, vector<4x8xf32>, vector<4x8xf32>, vector<4x8xf32>, vector<4x8xf32>, vector<4x8xf32>, vector<4x8xf32>, vector<4x8xf32>, vector<4x8xf32>, vector<4x8xf32> -> vector<64x8xf32>
    %1635 = tpu.concatenate %868, %919, %970, %1021, %1072, %1123, %1174, %1225, %1276, %1327, %1378, %1429, %1480, %1531, %1582, %1633 in 0 : vector<4x8xf32>, vector<4x8xf32>, vector<4x8xf32>, vector<4x8xf32>, vector<4x8xf32>, vector<4x8xf32>, vector<4x8xf32>, vector<4x8xf32>, vector<4x8xf32>, vector<4x8xf32>, vector<4x8xf32>, vector<4x8xf32>, vector<4x8xf32>, vector<4x8xf32>, vector<4x8xf32>, vector<4x8xf32> -> vector<64x8xf32>
    %1636 = tpu.concatenate %1634, %1635 in 0 : vector<64x8xf32>, vector<64x8xf32> -> vector<128x8xf32>
    %1637 = tpu.transpose %1636, [1, 0] : vector<128x8xf32> -> vector<8x128xf32>
    %1638 = arith.truncf %1637 : vector<8x128xf32> to vector<8x128xbf16>
    %c0_99 = arith.constant 0 : index
    %c0_100 = arith.constant 0 : index
    %c0_101 = arith.constant 0 : index
    %1639 = vector.load %arg5[%c0_99, %c0_100, %c0_101] : memref<1x8x128xbf16, #tpu.memory_space<vmem>>, vector<1x8x128xbf16>
    %1640 = vector.shape_cast %1639 : vector<1x8x128xbf16> to vector<8x128xbf16>
    %1641 = vector.shape_cast %1638 : vector<8x128xbf16> to vector<1x8x128xbf16>
    tpu.vector_store %arg5[%c0_99, %c0_100, %c0_101], %1641 {strides = array<i32>} : memref<1x8x128xbf16, #tpu.memory_space<vmem>>, vector<1x8x128xbf16>,
    return
  }
  func.func @transform_0(%arg0: i32, %arg1: i32) -> (i32, i32, i32, i32) {
    %c0_i32 = arith.constant 0 : i32
    %c0_i32_0 = arith.constant 0 : i32
    %c0_i32_1 = arith.constant 0 : i32
    return %arg0, %arg1, %c0_i32, %c0_i32_0 : i32, i32, i32, i32
  }
  func.func @transform_1(%arg0: i32, %arg1: i32) -> i32 {
    %c0_i32 = arith.constant 0 : i32
    %c0_i32_0 = arith.constant 0 : i32
    return %c0_i32 : i32
  }
  func.func @transform_2(%arg0: i32, %arg1: i32) -> i32 {
    %c0_i32 = arith.constant 0 : i32
    %c0_i32_0 = arith.constant 0 : i32
    return %c0_i32 : i32
  }
  func.func @transform_3(%arg0: i32, %arg1: i32) -> (i32, i32, i32) {
    %c0_i32 = arith.constant 0 : i32
    %c0_i32_0 = arith.constant 0 : i32
    return %arg0, %arg1, %c0_i32 : i32, i32, i32
  }
}

module attributes {stable_mosaic.version = 11 : i64} {
  func.func @_classifier_logsoftmax_kernel(%arg0: i32, %arg1: memref<16x32xbf16, #tpu.memory_space<vmem>>, %arg2: memref<16x32xbf16, #tpu.memory_space<vmem>>, %arg3: memref<64x128xbf16, #tpu.memory_space<vmem>>, %arg4: memref<1x128xf32, #tpu.memory_space<vmem>>, %arg5: memref<16x128xf32, #tpu.memory_space<vmem>>) attributes {dimension_semantics = [#tpu.dimension_semantics<parallel>], iteration_bounds = array<i64: 1>, scalar_prefetch = 0 : i64, scratch_operands = 0 : i64, tpu.core_type = #tpu.core_type<tc>, window_params = [{transform_indices = @transform_0, window_bounds = array<i64: 16, 32>}, {transform_indices = @transform_1, window_bounds = array<i64: 16, 32>}, {pipeline_mode = #tpu.pipeline_mode<synchronous>, transform_indices = @transform_2, window_bounds = array<i64: 64, 128>}, {pipeline_mode = #tpu.pipeline_mode<synchronous>, transform_indices = @transform_3, window_bounds = array<i64: 1, 128>}, {transform_indices = @transform_4, window_bounds = array<i64: 16, 128>}]} {
    %c0 = arith.constant 0 : index
    %c0_0 = arith.constant 0 : index
    %0 = vector.load %arg1[%c0, %c0_0] : memref<16x32xbf16, #tpu.memory_space<vmem>>, vector<16x32xbf16>
    %c0_1 = arith.constant 0 : index
    %c0_2 = arith.constant 0 : index
    %1 = vector.load %arg2[%c0_1, %c0_2] : memref<16x32xbf16, #tpu.memory_space<vmem>>, vector<16x32xbf16>
    %2 = tpu.concatenate %0, %1 in 1 : vector<16x32xbf16>, vector<16x32xbf16> -> vector<16x64xbf16>
    %c0_3 = arith.constant 0 : index
    %c0_4 = arith.constant 0 : index
    %3 = vector.load %arg3[%c0_3, %c0_4] : memref<64x128xbf16, #tpu.memory_space<vmem>>, vector<64x128xbf16>
    %cst = arith.constant dense<0.000000e+00> : vector<16x128xf32>
    %4 = tpu.matmul %2, %3, %cst {dimension_numbers = #tpu.dot_dimension_numbers<[1], [0], [0], [1], [0, 0, 1, 1], [], []>} : vector<16x64xbf16>, vector<64x128xbf16>, vector<16x128xf32> -> vector<16x128xf32>
    %c0_5 = arith.constant 0 : index
    %c0_6 = arith.constant 0 : index
    %5 = vector.load %arg4[%c0_5, %c0_6] : memref<1x128xf32, #tpu.memory_space<vmem>>, vector<1x128xf32>
    %6 = vector.broadcast %5 : vector<1x128xf32> to vector<16x128xf32>
    %7 = arith.addf %4, %6 : vector<16x128xf32>
    %8 = tpu.iota {dimensions = array<i32: 1>} : vector<1x128xi32>
    %c16_i32 = arith.constant 16 : i32
    %9 = vector.broadcast %c16_i32 : i32 to vector<1x128xi32>
    %10 = arith.cmpi slt, %8, %9 : vector<1x128xi32>
    %cst_7 = arith.constant -1.000000e+30 : f32
    %11 = vector.shape_cast %10 : vector<1x128xi1> to vector<1x128xi1>
    %12 = vector.broadcast %11 : vector<1x128xi1> to vector<16x128xi1>
    %13 = vector.broadcast %cst_7 : f32 to vector<16x128xf32>
    %14 = arith.select %12, %7, %13 : vector<16x128xi1>, vector<16x128xf32>
    %cst_8 = arith.constant dense<0xFF800000> : vector<16xf32>
    %15 = vector.multi_reduction <maximumf>, %14, %cst_8 [1] : vector<16x128xf32> to vector<16xf32>
    %16 = vector.shape_cast %15 : vector<16xf32> to vector<16x1xf32>
    %17 = vector.broadcast %16 : vector<16x1xf32> to vector<16x128xf32>
    %18 = arith.subf %14, %17 : vector<16x128xf32>
    %19 = math.exp %18 : vector<16x128xf32>
    %cst_9 = arith.constant dense<0.000000e+00> : vector<16xf32>
    %20 = vector.multi_reduction <add>, %19, %cst_9 [1] : vector<16x128xf32> to vector<16xf32>
    %21 = vector.shape_cast %20 : vector<16xf32> to vector<16x1xf32>
    %22 = math.log %21 : vector<16x1xf32>
    %23 = arith.addf %22, %16 : vector<16x1xf32>
    %24 = vector.broadcast %23 : vector<16x1xf32> to vector<16x128xf32>
    %25 = arith.subf %14, %24 : vector<16x128xf32>
    %c0_10 = arith.constant 0 : index
    %c0_11 = arith.constant 0 : index
    %26 = vector.load %arg5[%c0_10, %c0_11] : memref<16x128xf32, #tpu.memory_space<vmem>>, vector<16x128xf32>
    tpu.vector_store %arg5[%c0_10, %c0_11], %25 {strides = array<i32>} : memref<16x128xf32, #tpu.memory_space<vmem>>, vector<16x128xf32>,
    return
  }
  func.func @transform_0(%arg0: i32) -> (i32, i32) {
    %c0_i32 = arith.constant 0 : i32
    %c0_i32_0 = arith.constant 0 : i32
    return %arg0, %c0_i32 : i32, i32
  }
  func.func @transform_1(%arg0: i32) -> (i32, i32) {
    %c0_i32 = arith.constant 0 : i32
    %c0_i32_0 = arith.constant 0 : i32
    return %arg0, %c0_i32 : i32, i32
  }
  func.func @transform_2(%arg0: i32) -> (i32, i32) {
    %c0_i32 = arith.constant 0 : i32
    %c0_i32_0 = arith.constant 0 : i32
    %c0_i32_1 = arith.constant 0 : i32
    return %c0_i32, %c0_i32_0 : i32, i32
  }
  func.func @transform_3(%arg0: i32) -> (i32, i32) {
    %c0_i32 = arith.constant 0 : i32
    %c0_i32_0 = arith.constant 0 : i32
    %c0_i32_1 = arith.constant 0 : i32
    return %c0_i32, %c0_i32_0 : i32, i32
  }
  func.func @transform_4(%arg0: i32) -> (i32, i32) {
    %c0_i32 = arith.constant 0 : i32
    %c0_i32_0 = arith.constant 0 : i32
    return %arg0, %c0_i32 : i32, i32
  }
}

</mosaic_0001>

<llo_original>
// kernel: asr_forward.5
$region0: #{asr_forward.5}
  #allocation0 [shape = 'u32[]', space=smem, size = 0x4, offset = 0x4, fixed_abs, tag = 'smem constant byte address 0x4 - core index']
  #allocation1 [shape = 'u32[144,128]{1,0:T(1,128)}', space=vmem, size = 0x12000, scoped, tag = 'internal scratch']
  %s0 = inlined_call_operand.vmem [shape: bf16[2,8,128], index: 0, kind: input, shape index: {}]
  %s1 = inlined_call_operand.vmem [shape: bf16[128,192], index: 1, kind: input, shape index: {}]
  %s2 = inlined_call_operand.vmem [shape: f32[1,192], index: 2, kind: input, shape index: {}]
  %s3 = inlined_call_operand.vmem [shape: bf16[8,2,96], index: 3, kind: output, shape index: {0}]
  %s4 = inlined_call_operand.vmem [shape: bf16[8,2,96], index: 4, kind: output, shape index: {1}]
  %5 = xla_tuple %s3, %s4
  %s6 = sld [smem:[#allocation0]]
  $region30: #{asr_forward.5} parent=0
    _
  %s8 = ssub.s32 1, %s6
  %s9 = scalar_select 0, %s8, %s6
  // Predicated region
  $region2: #{asr_forward.5} parent=0 // pred_check
    _
  $region3: #{asr_forward.5} parent=0 // pred_check_branch
    %11 = sbr.rel (0) target = $region5
  $region4: #{asr_forward.5} parent=0 // pred_region
    _
  $region5: #{asr_forward.5} parent=0 // pred_fallthru
    _
  // Predicated region
  $region6: #{asr_forward.5} parent=0 // pred_check
    _
  $region7: #{asr_forward.5} parent=0 // pred_check_branch
    %13 = sbr.rel (0) target = $region9
  $region8: #{asr_forward.5} parent=0 // pred_region
    _
  $region9: #{asr_forward.5} parent=0 // pred_fallthru
    _
  // Predicated region
  $region10: #{asr_forward.5} parent=0 // pred_check
    _
  $region11: #{asr_forward.5} parent=0 // pred_check_branch
    %15 = sbr.rel (0) target = $region13
  $region12: #{asr_forward.5} parent=0 // pred_region
    _
  $region13: #{asr_forward.5} parent=0 // pred_fallthru
    _
  %v17 = vld [vmem:[%s0] sm:$0xf]
  %v18 = vld [vmem:[%s0 + $0x4] sm:$0xf]
  %v19 = vld [vmem:[%s1] sm:$0xff]
  %v20 = vld [vmem:[%s1 + $0x8] sm:$0xff]
  %v21 = vld [vmem:[%s1 + $0x10] sm:$0xff]
  %v22 = vld [vmem:[%s1 + $0x18] sm:$0xff]
  %v23 = vld [vmem:[%s1 + $0x20] sm:$0xff]
  %v24 = vld [vmem:[%s1 + $0x28] sm:$0xff]
  %v25 = vld [vmem:[%s1 + $0x30] sm:$0xff]
  %v26 = vld [vmem:[%s1 + $0x38] sm:$0xff]
  %v27 = vld [vmem:[%s1 + $0x40] sm:$0xff]
  %v28 = vld [vmem:[%s1 + $0x48] sm:$0xff]
  %v29 = vld [vmem:[%s1 + $0x50] sm:$0xff]
  %v30 = vld [vmem:[%s1 + $0x58] sm:$0xff]
  %v31 = vld [vmem:[%s1 + $0x60] sm:$0xff]
  %v32 = vld [vmem:[%s1 + $0x68] sm:$0xff]
  %v33 = vld [vmem:[%s1 + $0x70] sm:$0xff]
  %v34 = vld [vmem:[%s1 + $0x78] sm:$0xff]
  %v35 = vld [vmem:[%s2] sm:$0x3]
  %v37 = vlaneseq
  %v38 = vshrl.u32 %v37, 7
  %v39 = vsub.s32 0, %v38
  %v40 = vrot.slane %v35, %v39
  %v41 = vlaneseq
  %v42 = vshrl.u32 %v41, 7
  %v43 = vsub.s32 1, %v42
  %v44 = vrot.slane %v35, %v43
  %v49 = vunpack.c.l.b16 %v17
  %v50 = vunpack.c.l.b16 %v18
  %v51 = vpack.c.b16 %v50, %v49
  %v69 = vunpack.c.l.b16 %v19
  %v70 = vunpack.c.h.b16 %v19
  %v71 = vunpack.c.l.b16 %v20
  %v72 = vunpack.c.h.b16 %v20
  %v73 = vunpack.c.l.b16 %v21
  %v74 = vunpack.c.h.b16 %v21
  %v75 = vunpack.c.l.b16 %v22
  %v76 = vunpack.c.h.b16 %v22
  %v77 = vunpack.c.l.b16 %v23
  %v78 = vunpack.c.h.b16 %v23
  %v79 = vunpack.c.l.b16 %v24
  %v80 = vunpack.c.h.b16 %v24
  %v81 = vunpack.c.l.b16 %v25
  %v82 = vunpack.c.h.b16 %v25
  %v83 = vunpack.c.l.b16 %v26
  %v84 = vunpack.c.h.b16 %v26
  %v85 = vunpack.c.l.b16 %v27
  %v86 = vunpack.c.h.b16 %v27
  %v87 = vunpack.c.l.b16 %v28
  %v88 = vunpack.c.h.b16 %v28
  %v89 = vunpack.c.l.b16 %v29
  %v90 = vunpack.c.h.b16 %v29
  %v91 = vunpack.c.l.b16 %v30
  %v92 = vunpack.c.h.b16 %v30
  %v93 = vunpack.c.l.b16 %v31
  %v94 = vunpack.c.h.b16 %v31
  %v95 = vunpack.c.l.b16 %v32
  %v96 = vunpack.c.h.b16 %v32
  %v97 = vunpack.c.l.b16 %v33
  %v98 = vunpack.c.h.b16 %v33
  %v99 = vunpack.c.l.b16 %v34
  %v100 = vunpack.c.h.b16 %v34
  %v101 = vpack.c.b16 %v71, %v69
  %v102 = vpack.c.b16 %v72, %v70
  %v103 = vpack.c.b16 %v75, %v73
  %v104 = vpack.c.b16 %v76, %v74
  %v105 = vpack.c.b16 %v79, %v77
  %v106 = vpack.c.b16 %v80, %v78
  %v107 = vpack.c.b16 %v83, %v81
  %v108 = vpack.c.b16 %v84, %v82
  %v109 = vpack.c.b16 %v87, %v85
  %v110 = vpack.c.b16 %v88, %v86
  %v111 = vpack.c.b16 %v91, %v89
  %v112 = vpack.c.b16 %v92, %v90
  %v113 = vpack.c.b16 %v95, %v93
  %v114 = vpack.c.b16 %v96, %v94
  %v115 = vpack.c.b16 %v99, %v97
  %v116 = vpack.c.b16 %v100, %v98
  %133 = vmatprep.subr.bf16.mxu0 %v102
  %134 = vmatpush1.bf16.msra.mxu0 %v101
  %135 = vmatprep.subr.bf16.mxu0 %v104
  %136 = vmatpush1.bf16.msra.mxu0 %v103
  %137 = vmatprep.subr.bf16.mxu0 %v106
  %138 = vmatpush1.bf16.msra.mxu0 %v105
  %139 = vmatprep.subr.bf16.mxu0 %v108
  %140 = vmatpush1.bf16.msra.mxu0 %v107
  %141 = vmatprep.subr.bf16.mxu0 %v110
  %142 = vmatpush1.bf16.msra.mxu0 %v109
  %143 = vmatprep.subr.bf16.mxu0 %v112
  %144 = vmatpush1.bf16.msra.mxu0 %v111
  %145 = vmatprep.subr.bf16.mxu0 %v114
  %146 = vmatpush1.bf16.msra.mxu0 %v113
  %147 = vmatprep.subr.bf16.mxu0 %v116
  %148 = vmatpush1.bf16.msra.mxu0 %v115
  %149 = vmatprep.subr.bf16.mxu0 0
  %150 = vmatpush1.bf16.msra.mxu0 0
  %151 = vmatprep.subr.bf16.mxu0 0
  %152 = vmatpush1.bf16.msra.mxu0 0
  %153 = vmatprep.subr.bf16.mxu0 0
  %154 = vmatpush1.bf16.msra.mxu0 0
  %155 = vmatprep.subr.bf16.mxu0 0
  %156 = vmatpush1.bf16.msra.mxu0 0
  %157 = vmatprep.subr.bf16.mxu0 0
  %158 = vmatpush1.bf16.msra.mxu0 0
  %159 = vmatprep.subr.bf16.mxu0 0
  %160 = vmatpush1.bf16.msra.mxu0 0
  %161 = vmatprep.subr.bf16.mxu0 0
  %162 = vmatpush1.bf16.msra.mxu0 0
  %163 = vmatprep.subr.bf16.mxu0 0
  %164 = vmatpush1.bf16.msra.mxu0 0
  %165 = vmatprep.mubr.bf16.mxu0 0
  %166 = vmatmul.mubr.bf16.gmra.mrb[0].mxu0 %v51
  %v167 = vpop.f32.mrb[0].mxu0
  %v168 = vadd.f32 %v40, %v167
  %v169 = vpop.f32.mrb[0].mxu0
  %v170 = vadd.f32 %v44, %v169
  %v171 = vpop.f32.mrb[0].mxu0
  %v172 = vadd.f32 %v40, %v171
  %v173 = vpop.f32.mrb[0].mxu0
  %v174 = vadd.f32 %v44, %v173
  %175 = vdwg.mxu0
  %v176 = vcombine.high %v168, 0.0
  %v178 = vunpack.c.l.s4 1983009808
  %v179 = vunpack.c.0.s8 %v178
  %v180 = vlaneseq
  %v181 = vshrl.u32 %v180, 7
  %v182 = vsub.s32 %v179, %v181
  %v183 = vrot.slane %v168, %v182
  %v185 = vunpack.c.l.s4 1983009808
  %v186 = vunpack.c.0.s8 %v185
  %v187 = vlaneseq
  %v188 = vshrl.u32 %v187, 7
  %v189 = vsub.s32 %v186, %v188
  %v190 = vrot.slane %v176, %v189
  %v191 = vcombine.high %v172, 0.0
  %v193 = vunpack.c.l.s4 1983009808
  %v194 = vunpack.c.0.s8 %v193
  %v195 = vlaneseq
  %v196 = vshrl.u32 %v195, 7
  %v197 = vsub.s32 %v194, %v196
  %v198 = vrot.slane %v172, %v197
  %v200 = vunpack.c.l.s4 1983009808
  %v201 = vunpack.c.0.s8 %v200
  %v202 = vlaneseq
  %v203 = vshrl.u32 %v202, 7
  %v204 = vsub.s32 %v201, %v203
  %v205 = vrot.slane %v191, %v204
  %v206 = vcombine.low %v183, %v198
  %v207 = vcombine.high %v183, %v198
  %v209 = vunpack.c.l.s4 1934713408
  %v210 = vunpack.c.0.s8 %v209
  %v211 = vlaneseq
  %v212 = vshrl.u32 %v211, 7
  %v213 = vsub.s32 %v210, %v212
  %v214 = vrot.slane %v206, %v213
  %v216 = vunpack.c.l.s4 1934713408
  %v217 = vunpack.c.0.s8 %v216
  %v218 = vlaneseq
  %v219 = vshrl.u32 %v218, 7
  %v220 = vsub.s32 %v217, %v219
  %v221 = vrot.slane %v207, %v220
  %v222 = vcombine.low %v190, %v205
  %v223 = vcombine.high %v190, %v205
  %v225 = vunpack.c.l.s4 1934713408
  %v226 = vunpack.c.0.s8 %v225
  %v227 = vlaneseq
  %v228 = vshrl.u32 %v227, 7
  %v229 = vsub.s32 %v226, %v228
  %v230 = vrot.slane %v222, %v229
  %v232 = vunpack.c.l.s4 1934713408
  %v233 = vunpack.c.0.s8 %v232
  %v234 = vlaneseq
  %v235 = vshrl.u32 %v234, 7
  %v236 = vsub.s32 %v233, %v235
  %v237 = vrot.slane %v223, %v236
  %v238 = vcombine.high %v214, 0.0
  %v239 = vcombine.high %v221, 0.0
  %v240 = vcombine.high %v230, 0.0
  %v241 = vcombine.high %v237, 0.0
  %v242 = vcombine.high %v170, 0.0
  %v244 = vunpack.c.l.s4 1983009808
  %v245 = vunpack.c.0.s8 %v244
  %v246 = vlaneseq
  %v247 = vshrl.u32 %v246, 7
  %v248 = vsub.s32 %v245, %v247
  %v249 = vrot.slane %v170, %v248
  %v251 = vunpack.c.l.s4 1983009808
  %v252 = vunpack.c.0.s8 %v251
  %v253 = vlaneseq
  %v254 = vshrl.u32 %v253, 7
  %v255 = vsub.s32 %v252, %v254
  %v256 = vrot.slane %v242, %v255
  %v257 = vcombine.high %v174, 0.0
  %v259 = vunpack.c.l.s4 1983009808
  %v260 = vunpack.c.0.s8 %v259
  %v261 = vlaneseq
  %v262 = vshrl.u32 %v261, 7
  %v263 = vsub.s32 %v260, %v262
  %v264 = vrot.slane %v174, %v263
  %v266 = vunpack.c.l.s4 1983009808
  %v267 = vunpack.c.0.s8 %v266
  %v268 = vlaneseq
  %v269 = vshrl.u32 %v268, 7
  %v270 = vsub.s32 %v267, %v269
  %v271 = vrot.slane %v257, %v270
  %v272 = vcombine.low %v249, %v264
  %v273 = vcombine.high %v249, %v264
  %v275 = vunpack.c.l.s4 1934713408
  %v276 = vunpack.c.0.s8 %v275
  %v277 = vlaneseq
  %v278 = vshrl.u32 %v277, 7
  %v279 = vsub.s32 %v276, %v278
  %v280 = vrot.slane %v272, %v279
  %v282 = vunpack.c.l.s4 1934713408
  %v283 = vunpack.c.0.s8 %v282
  %v284 = vlaneseq
  %v285 = vshrl.u32 %v284, 7
  %v286 = vsub.s32 %v283, %v285
  %v287 = vrot.slane %v273, %v286
  %v288 = vcombine.low %v256, %v271
  %v289 = vcombine.high %v256, %v271
  %v291 = vunpack.c.l.s4 1934713408
  %v292 = vunpack.c.0.s8 %v291
  %v293 = vlaneseq
  %v294 = vshrl.u32 %v293, 7
  %v295 = vsub.s32 %v292, %v294
  %v296 = vrot.slane %v288, %v295
  %v298 = vunpack.c.l.s4 1934713408
  %v299 = vunpack.c.0.s8 %v298
  %v300 = vlaneseq
  %v301 = vshrl.u32 %v300, 7
  %v302 = vsub.s32 %v299, %v301
  %v303 = vrot.slane %v289, %v302
  %v304 = vcombine.high %v280, 0.0
  %v305 = vcombine.high %v287, 0.0
  %v306 = vcombine.high %v296, 0.0
  %v307 = vcombine.high %v303, 0.0
  %v308 = vpack.c.bf16 %v214, %v214
  %v309 = vpack.c.bf16 %v238, %v238
  %v310 = vpack.c.bf16 %v221, %v221
  %v311 = vpack.c.bf16 %v239, %v239
  %v312 = vpack.c.bf16 %v230, %v230
  %v313 = vpack.c.bf16 %v240, %v240
  %v314 = vpack.c.bf16 %v237, %v237
  %v315 = vpack.c.bf16 %v241, %v241
  %vm316 = vcmask 778240
  %317 = vst.msk [vmem:[%s3] sm:$0x1] %vm316, %v308
  %318 = vst.msk [vmem:[%s3 + $0x1] sm:$0x1] %vm316, %v309
  %319 = vst.msk [vmem:[%s3 + $0x2] sm:$0x1] %vm316, %v310
  %320 = vst.msk [vmem:[%s3 + $0x3] sm:$0x1] %vm316, %v311
  %321 = vst.msk [vmem:[%s3 + $0x4] sm:$0x1] %vm316, %v312
  %322 = vst.msk [vmem:[%s3 + $0x5] sm:$0x1] %vm316, %v313
  %323 = vst.msk [vmem:[%s3 + $0x6] sm:$0x1] %vm316, %v314
  %324 = vst.msk [vmem:[%s3 + $0x7] sm:$0x1] %vm316, %v315
  %v325 = vpack.c.bf16 %v280, %v280
  %v326 = vpack.c.bf16 %v304, %v304
  %v327 = vpack.c.bf16 %v287, %v287
  %v328 = vpack.c.bf16 %v305, %v305
  %v329 = vpack.c.bf16 %v296, %v296
  %v330 = vpack.c.bf16 %v306, %v306
  %v331 = vpack.c.bf16 %v303, %v303
  %v332 = vpack.c.bf16 %v307, %v307
  %v349 = vcombine.low %v308, %v325
  %v351 = vunpack.c.l.s4 1966171168
  %v352 = vunpack.c.0.s8 %v351
  %v353 = vlaneseq
  %v354 = vshrl.u32 %v353, 7
  %v355 = vsub.s32 %v352, %v354
  %v356 = vrot.slane %v349, %v355
  %v358 = vunpack.c.l.s4 1966171168
  %v359 = vunpack.c.0.s8 %v358
  %v360 = vlaneseq
  %v361 = vshrl.u32 %v360, 7
  %v362 = vsub.s32 %v359, %v361
  %v363 = vrot.slane %v356, %v362
  %v364 = vcombine.low %v309, %v326
  %v366 = vunpack.c.l.s4 1966171168
  %v367 = vunpack.c.0.s8 %v366
  %v368 = vlaneseq
  %v369 = vshrl.u32 %v368, 7
  %v370 = vsub.s32 %v367, %v369
  %v371 = vrot.slane %v364, %v370
  %v373 = vunpack.c.l.s4 1966171168
  %v374 = vunpack.c.0.s8 %v373
  %v375 = vlaneseq
  %v376 = vshrl.u32 %v375, 7
  %v377 = vsub.s32 %v374, %v376
  %v378 = vrot.slane %v371, %v377
  %v379 = vcombine.low %v310, %v327
  %v381 = vunpack.c.l.s4 1966171168
  %v382 = vunpack.c.0.s8 %v381
  %v383 = vlaneseq
  %v384 = vshrl.u32 %v383, 7
  %v385 = vsub.s32 %v382, %v384
  %v386 = vrot.slane %v379, %v385
  %v388 = vunpack.c.l.s4 1966171168
  %v389 = vunpack.c.0.s8 %v388
  %v390 = vlaneseq
  %v391 = vshrl.u32 %v390, 7
  %v392 = vsub.s32 %v389, %v391
  %v393 = vrot.slane %v386, %v392
  %v394 = vcombine.low %v311, %v328
  %v396 = vunpack.c.l.s4 1966171168
  %v397 = vunpack.c.0.s8 %v396
  %v398 = vlaneseq
  %v399 = vshrl.u32 %v398, 7
  %v400 = vsub.s32 %v397, %v399
  %v401 = vrot.slane %v394, %v400
  %v403 = vunpack.c.l.s4 1966171168
  %v404 = vunpack.c.0.s8 %v403
  %v405 = vlaneseq
  %v406 = vshrl.u32 %v405, 7
  %v407 = vsub.s32 %v404, %v406
  %v408 = vrot.slane %v401, %v407
  %v409 = vcombine.low %v312, %v329
  %v411 = vunpack.c.l.s4 1966171168
  %v412 = vunpack.c.0.s8 %v411
  %v413 = vlaneseq
  %v414 = vshrl.u32 %v413, 7
  %v415 = vsub.s32 %v412, %v414
  %v416 = vrot.slane %v409, %v415
  %v418 = vunpack.c.l.s4 1966171168
  %v419 = vunpack.c.0.s8 %v418
  %v420 = vlaneseq
  %v421 = vshrl.u32 %v420, 7
  %v422 = vsub.s32 %v419, %v421
  %v423 = vrot.slane %v416, %v422
  %v424 = vcombine.low %v313, %v330
  %v426 = vunpack.c.l.s4 1966171168
  %v427 = vunpack.c.0.s8 %v426
  %v428 = vlaneseq
  %v429 = vshrl.u32 %v428, 7
  %v430 = vsub.s32 %v427, %v429
  %v431 = vrot.slane %v424, %v430
  %v433 = vunpack.c.l.s4 1966171168
  %v434 = vunpack.c.0.s8 %v433
  %v435 = vlaneseq
  %v436 = vshrl.u32 %v435, 7
  %v437 = vsub.s32 %v434, %v436
  %v438 = vrot.slane %v431, %v437
  %v439 = vcombine.low %v314, %v331
  %v441 = vunpack.c.l.s4 1966171168
  %v442 = vunpack.c.0.s8 %v441
  %v443 = vlaneseq
  %v444 = vshrl.u32 %v443, 7
  %v445 = vsub.s32 %v442, %v444
  %v446 = vrot.slane %v439, %v445
  %v448 = vunpack.c.l.s4 1966171168
  %v449 = vunpack.c.0.s8 %v448
  %v450 = vlaneseq
  %v451 = vshrl.u32 %v450, 7
  %v452 = vsub.s32 %v449, %v451
  %v453 = vrot.slane %v446, %v452
  %v454 = vcombine.low %v315, %v332
  %v456 = vunpack.c.l.s4 1966171168
  %v457 = vunpack.c.0.s8 %v456
  %v458 = vlaneseq
  %v459 = vshrl.u32 %v458, 7
  %v460 = vsub.s32 %v457, %v459
  %v461 = vrot.slane %v454, %v460
  %v463 = vunpack.c.l.s4 1966171168
  %v464 = vunpack.c.0.s8 %v463
  %v465 = vlaneseq
  %v466 = vshrl.u32 %v465, 7
  %v467 = vsub.s32 %v464, %v466
  %v468 = vrot.slane %v461, %v467
  %469 = vrot.lane.b32.xlu0 %v363, 32
  %v470 = vpop.permute.xlu0 %469
  %471 = vrot.lane.b32.xlu0 %v378, 32
  %v472 = vpop.permute.xlu0 %471
  %473 = vrot.lane.b32.xlu0 %v393, 32
  %v474 = vpop.permute.xlu0 %473
  %475 = vrot.lane.b32.xlu0 %v408, 32
  %v476 = vpop.permute.xlu0 %475
  %477 = vrot.lane.b32.xlu0 %v423, 32
  %v478 = vpop.permute.xlu0 %477
  %479 = vrot.lane.b32.xlu0 %v438, 32
  %v480 = vpop.permute.xlu0 %479
  %481 = vrot.lane.b32.xlu0 %v453, 32
  %v482 = vpop.permute.xlu0 %481
  %483 = vrot.lane.b32.xlu0 %v468, 32
  %v484 = vpop.permute.xlu0 %483
  %v485 = vrot.slane %v470, 1
  %v486 = vrot.slane %v472, 1
  %v487 = vrot.slane %v474, 1
  %v488 = vrot.slane %v476, 1
  %v489 = vrot.slane %v478, 1
  %v490 = vrot.slane %v480, 1
  %v491 = vrot.slane %v482, 1
  %v492 = vrot.slane %v484, 1
  %vm493 = vcmask 261120
  %v494 = vsel %vm493, %v470, %v485
  %v495 = vsel %vm493, %v472, %v486
  %v496 = vsel %vm493, %v474, %v487
  %v497 = vsel %vm493, %v476, %v488
  %v498 = vsel %vm493, %v478, %v489
  %v499 = vsel %vm493, %v480, %v490
  %v500 = vsel %vm493, %v482, %v491
  %v501 = vsel %vm493, %v484, %v492
  %510 = vst.msk [vmem:[%s4] sm:$0x1] %vm316, %v494
  %511 = vst.msk [vmem:[%s4 + $0x1] sm:$0x1] %vm316, %v495
  %512 = vst.msk [vmem:[%s4 + $0x2] sm:$0x1] %vm316, %v496
  %513 = vst.msk [vmem:[%s4 + $0x3] sm:$0x1] %vm316, %v497
  %514 = vst.msk [vmem:[%s4 + $0x4] sm:$0x1] %vm316, %v498
  %515 = vst.msk [vmem:[%s4 + $0x5] sm:$0x1] %vm316, %v499
  %516 = vst.msk [vmem:[%s4 + $0x6] sm:$0x1] %vm316, %v500
  %517 = vst.msk [vmem:[%s4 + $0x7] sm:$0x1] %vm316, %v501
  // Predicated region
  $region14: #{asr_forward.5} parent=0 // pred_check
    _
  $region15: #{asr_forward.5} parent=0 // pred_check_branch
    %519 = sbr.rel (0) target = $region17
  $region16: #{asr_forward.5} parent=0 // pred_region
    _
  $region17: #{asr_forward.5} parent=0 // pred_fallthru
    _
  // Predicated region
  $region18: #{asr_forward.5} parent=0 // pred_check
    _
  $region19: #{asr_forward.5} parent=0 // pred_check_branch
    %521 = sbr.rel (0) target = $region21
  $region20: #{asr_forward.5} parent=0 // pred_region
    _
  $region21: #{asr_forward.5} parent=0 // pred_fallthru
    _
  // Predicated region
  $region22: #{asr_forward.5} parent=0 // pred_check
    _
  $region23: #{asr_forward.5} parent=0 // pred_check_branch
    %523 = sbr.rel (0) target = $region25
  $region24: #{asr_forward.5} parent=0 // pred_region
    _
  $region25: #{asr_forward.5} parent=0 // pred_fallthru
    _
  // Predicated region
  $region26: #{asr_forward.5} parent=0 // pred_check
    _
  $region27: #{asr_forward.5} parent=0 // pred_check_branch
    %525 = sbr.rel (0) target = $region29
  $region28: #{asr_forward.5} parent=0 // pred_region
    _
  $region29: #{asr_forward.5} parent=0 // pred_fallthru
    _

// kernel: asr_forward.6
$region0: #{asr_forward.6}
  #allocation0 [shape = 'u32[]', space=smem, size = 0x4, offset = 0x4, fixed_abs, tag = 'smem constant byte address 0x4 - core index']
  #allocation1 [shape = 'u32[144,128]{1,0:T(1,128)}', space=vmem, size = 0x12000, scoped, tag = 'internal scratch']
  #allocation2 [shape = 'f32[2,64]{1,0:T(2,128)}', space=vmem, size = 0x400, scoped, tag = 'scratch operand']
  %s0 = inlined_call_operand.vmem [shape: bf16[8,2,96], index: 0, kind: input, shape index: {}]
  %s1 = inlined_call_operand.vmem [shape: bf16[8,2,96], index: 1, kind: input, shape index: {}]
  %s2 = inlined_call_operand.vmem [shape: bf16[64,192], index: 2, kind: input, shape index: {}]
  %s3 = inlined_call_operand.vmem [shape: f32[1,192], index: 3, kind: input, shape index: {}]
  %s4 = inlined_call_operand.vmem [shape: bf16[8,2,32], index: 4, kind: output, shape index: {0}]
  %s5 = inlined_call_operand.vmem [shape: bf16[8,2,32], index: 5, kind: output, shape index: {1}]
  %6 = xla_tuple %s4, %s5
  %s7 = sld [smem:[#allocation0]]
  $region45: #{asr_forward.6} parent=0
    _
  %s9 = ssub.s32 1, %s7
  %s10 = scalar_select 0, %s9, %s7
  // Predicated region
  $region2: #{asr_forward.6} parent=0 // pred_check
    _
  $region3: #{asr_forward.6} parent=0 // pred_check_branch
    %12 = sbr.rel (0) target = $region5
  $region4: #{asr_forward.6} parent=0 // pred_region
    _
  $region5: #{asr_forward.6} parent=0 // pred_fallthru
    _
  // Predicated region
  $region6: #{asr_forward.6} parent=0 // pred_check
    _
  $region7: #{asr_forward.6} parent=0 // pred_check_branch
    %14 = sbr.rel (0) target = $region9
  $region8: #{asr_forward.6} parent=0 // pred_region
    %s15 = ssub.s32 0, 0
    %s16 = smul.u32 8, %s15
    %p17 = scmp.lt.s32.totalorder %s16, 7
    %s18 = scalar_select %p17, %s16, 7
    %s19 = scalar_lea.vmem %s1, %s18
    %s20 = ssub.s32 0, 0
    %s21 = smul.u32 8, %s20
  $region9: #{asr_forward.6} parent=0 // pred_fallthru
    _
  // Predicated region
  $region10: #{asr_forward.6} parent=0 // pred_check
    _
  $region11: #{asr_forward.6} parent=0 // pred_check_branch
    %23 = sbr.rel (0) target = $region13
  $region12: #{asr_forward.6} parent=0 // pred_region
    _
  $region13: #{asr_forward.6} parent=0 // pred_fallthru
    _
  // Predicated region
  $region14: #{asr_forward.6} parent=0 // pred_check
    _
  $region15: #{asr_forward.6} parent=0 // pred_check_branch
    %25 = sbr.rel (0) target = $region17
  $region16: #{asr_forward.6} parent=0 // pred_region
    _
  $region17: #{asr_forward.6} parent=0 // pred_fallthru
    _
  %s26 = ssub.s32 0, 0
  %s27 = smul.u32 8, %s26
  %p28 = scmp.lt.s32.totalorder %s27, 7
  %s29 = scalar_select %p28, %s27, 7
  %s30 = scalar_lea.vmem %s1, %s29
  %s31 = ssub.s32 0, 0
  %s32 = smul.u32 8, %s31
  %p33 = scmp.lt.s32.totalorder %s32, 7
  %s34 = scalar_select %p33, %s32, 7
  %s35 = scalar_lea.vmem %s5, %s34
  %s36 = ssub.s32 0, 0
  %s37 = smul.u32 8, %s36
  %p38 = scmp.lt.s32.totalorder %s37, 7
  %s39 = scalar_select %p38, %s37, 7
  %s40 = scalar_lea.vmem %s1, %s39
  %s41 = ssub.s32 0, 0
  %s42 = smul.u32 8, %s41
  %s43 = ssub.s32 0, 0
  %s44 = smul.u32 8, %s43
  %p45 = scmp.lt.s32.totalorder %s44, 7
  %s46 = scalar_select %p45, %s44, 7
  %s47 = scalar_lea.vmem %s5, %s46
  %s48 = ssub.s32 0, 0
  %s49 = smul.u32 8, %s48
  %p51 = scmp.eq.s32.totalorder 0, 0
  // Predicated region
  $region18: #{asr_forward.6} parent=0 // pred_check
    %p52 = pneg %p51
  $region19: #{asr_forward.6} parent=0 // pred_check_branch
    %54 = sbr.rel (%p52) target = $region21
  $region20: #{asr_forward.6} parent=0 // pred_region
    %vm55 = vcmask 517120
    %56 = vst.msk [vmem:[#allocation2] sm:$0x3] %vm55, 0.0
  $region21: #{asr_forward.6} parent=0 // pred_fallthru
    _
  loop: start=0, step=1, limit=8
  $region22: #{asr_forward.6} parent=0 // loop_pre_header
    _
  $region23: #{asr_forward.6} parent=0 // loop_header
    %s58 = sphi 0, %s62
    %p59 = scmp.ge.s32.totalorder %s58, 8
  $region24: #{asr_forward.6} parent=0 // loop_header_branch
    %61 = sbr.rel (%p59) target = $region28
  $region25: #{asr_forward.6} parent=0 // loop_body
    %v63 = vld [vmem:[#allocation2] sm:$0x3]
    %v64 = vpack.c.bf16 %v63, %v63
    %v65 = vld [vmem:[%s2] sm:$0xff]
    %v66 = vld [vmem:[%s2 + $0x8] sm:$0xff]
    %v67 = vld [vmem:[%s2 + $0x10] sm:$0xff]
    %v68 = vld [vmem:[%s2 + $0x18] sm:$0xff]
    %v69 = vld [vmem:[%s2 + $0x20] sm:$0xff]
    %v70 = vld [vmem:[%s2 + $0x28] sm:$0xff]
    %v71 = vld [vmem:[%s2 + $0x30] sm:$0xff]
    %v72 = vld [vmem:[%s2 + $0x38] sm:$0xff]
    %v73 = vld [vmem:[%s3] sm:$0x3]
    %v75 = vlaneseq
    %v76 = vshrl.u32 %v75, 7
    %v77 = vsub.s32 0, %v76
    %v78 = vrot.slane %v73, %v77
    %v79 = vlaneseq
    %v80 = vshrl.u32 %v79, 7
    %v81 = vsub.s32 1, %v80
    %v82 = vrot.slane %v73, %v81
    %v93 = vunpack.c.l.b16 %v65
    %v94 = vunpack.c.h.b16 %v65
    %v95 = vunpack.c.l.b16 %v66
    %v96 = vunpack.c.h.b16 %v66
    %v97 = vunpack.c.l.b16 %v67
    %v98 = vunpack.c.h.b16 %v67
    %v99 = vunpack.c.l.b16 %v68
    %v100 = vunpack.c.h.b16 %v68
    %v101 = vunpack.c.l.b16 %v69
    %v102 = vunpack.c.h.b16 %v69
    %v103 = vunpack.c.l.b16 %v70
    %v104 = vunpack.c.h.b16 %v70
    %v105 = vunpack.c.l.b16 %v71
    %v106 = vunpack.c.h.b16 %v71
    %v107 = vunpack.c.l.b16 %v72
    %v108 = vunpack.c.h.b16 %v72
    %v109 = vpack.c.b16 %v95, %v93
    %v110 = vpack.c.b16 %v96, %v94
    %v111 = vpack.c.b16 %v99, %v97
    %v112 = vpack.c.b16 %v100, %v98
    %v113 = vpack.c.b16 %v103, %v101
    %v114 = vpack.c.b16 %v104, %v102
    %v115 = vpack.c.b16 %v107, %v105
    %v116 = vpack.c.b16 %v108, %v106
    %vm125 = vcmask 523264
    %v127 = vsel %vm125, %v64, 0
    %129 = vmatprep.subr.bf16.mxu0 %v110
    %130 = vmatpush1.bf16.msra.mxu0 %v109
    %131 = vmatprep.subr.bf16.mxu0 %v112
    %132 = vmatpush1.bf16.msra.mxu0 %v111
    %133 = vmatprep.subr.bf16.mxu0 %v114
    %134 = vmatpush1.bf16.msra.mxu0 %v113
    %135 = vmatprep.subr.bf16.mxu0 %v116
    %136 = vmatpush1.bf16.msra.mxu0 %v115
    %137 = vmatprep.subr.bf16.mxu0 0
    %138 = vmatpush1.bf16.msra.mxu0 0
    %139 = vmatprep.subr.bf16.mxu0 0
    %140 = vmatpush1.bf16.msra.mxu0 0
    %141 = vmatprep.subr.bf16.mxu0 0
    %142 = vmatpush1.bf16.msra.mxu0 0
    %143 = vmatprep.subr.bf16.mxu0 0
    %144 = vmatpush1.bf16.msra.mxu0 0
    %145 = vmatprep.subr.bf16.mxu0 0
    %146 = vmatpush1.bf16.msra.mxu0 0
    %147 = vmatprep.subr.bf16.mxu0 0
    %148 = vmatpush1.bf16.msra.mxu0 0
    %149 = vmatprep.subr.bf16.mxu0 0
    %150 = vmatpush1.bf16.msra.mxu0 0
    %151 = vmatprep.subr.bf16.mxu0 0
    %152 = vmatpush1.bf16.msra.mxu0 0
    %153 = vmatprep.subr.bf16.mxu0 0
    %154 = vmatpush1.bf16.msra.mxu0 0
    %155 = vmatprep.subr.bf16.mxu0 0
    %156 = vmatpush1.bf16.msra.mxu0 0
    %157 = vmatprep.subr.bf16.mxu0 0
    %158 = vmatpush1.bf16.msra.mxu0 0
    %159 = vmatprep.subr.bf16.mxu0 0
    %160 = vmatpush1.bf16.msra.mxu0 0
    %161 = vmatprep.mubr.bf16.mxu0 0
    %162 = vmatmul.mubr.bf16.gmra.mrb[0].mxu0 %v127
    %v163 = vpop.f32.mrb[0].mxu0
    %v164 = vadd.f32 %v78, %v163
    %v165 = vpop.f32.mrb[0].mxu0
    %v166 = vadd.f32 %v82, %v165
    %v167 = vpop.f32.mrb[0].mxu0
    %v168 = vpop.f32.mrb[0].mxu0
    %169 = vdwg.mxu0
    %s170 = ssub.s32 7, %s58
    %s171 = scalar_lea.vmem %s0, %s58
    %v172 = vld [vmem:[%s171] sm:$0x1]
    %v173 = vunpack.c.l.bf16 %v172
    %s174 = scalar_lea.vmem %s40, %s170
    %v175 = vld [vmem:[%s174] sm:$0x1]
    %v176 = vunpack.c.l.bf16 %v175
    %v177 = vadd.f32 %v173, %v164
    %v178 = vxor.u32 %v177, 2147483648
    %v179 = vmul.f32 %v178, 1.442695
    %v180 = vpow.pop %v179
    %v181 = vadd.f32 %v180, 1.0
    %v182 = vrcp.pop %v181
    %v183 = vmul.f32 1.0, %v182
    %v186 = vunpack.c.l.s4 1983009808
    %v187 = vunpack.c.0.s8 %v186
    %v188 = vlaneseq
    %v189 = vshrl.u32 %v188, 7
    %v190 = vsub.s32 %v187, %v189
    %v191 = vrot.slane %v164, %v190
    %192 = vrot.lane.b32.xlu0 %v191, 64
    %v193 = vpop.permute.xlu0 %192
    %v195 = vmul.f32 %v183, %v193
    %197 = vrot.lane.b32.xlu0 %v195, 64
    %v198 = vpop.permute.xlu0 %197
    %v200 = vadd.f32 %v173, %v198
    %v201 = vtanh.pop %v200
    %v202 = vsub.f32 1.0, %v183
    %204 = vrot.lane.b32.xlu0 %v201, 96
    %v205 = vpop.permute.xlu0 %204
    %v207 = vmul.f32 %v202, %v205
    %v210 = vunpack.c.l.s4 1983009808
    %v211 = vunpack.c.0.s8 %v210
    %v212 = vlaneseq
    %v213 = vshrl.u32 %v212, 7
    %v214 = vsub.s32 %v211, %v213
    %v215 = vrot.slane %v63, %v214
    %216 = vrot.lane.b32.xlu0 %v215, 32
    %v217 = vpop.permute.xlu0 %216
    %v219 = vmul.f32 %v183, %v217
    %v220 = vadd.f32 %v207, %v219
    %221 = vrot.lane.b32.xlu0 %v191, 32
    %v222 = vpop.permute.xlu0 %221
    %v224 = vadd.f32 %v176, %v222
    %v225 = vxor.u32 %v224, 2147483648
    %v226 = vmul.f32 %v225, 1.442695
    %v227 = vpow.pop %v226
    %v228 = vadd.f32 %v227, 1.0
    %v229 = vrcp.pop %v228
    %v230 = vmul.f32 1.0, %v229
    %v233 = vunpack.c.l.s4 1983009808
    %v234 = vunpack.c.0.s8 %v233
    %v235 = vlaneseq
    %v236 = vshrl.u32 %v235, 7
    %v237 = vsub.s32 %v234, %v236
    %v238 = vrot.slane %v166, %v237
    %239 = vrot.lane.b32.xlu0 %v238, 32
    %v240 = vpop.permute.xlu0 %239
    %v242 = vadd.f32 %v176, %v240
    %v243 = vxor.u32 %v242, 2147483648
    %v244 = vmul.f32 %v243, 1.442695
    %v245 = vpow.pop %v244
    %v246 = vadd.f32 %v245, 1.0
    %v247 = vrcp.pop %v246
    %v248 = vmul.f32 1.0, %v247
    %249 = vrot.lane.b32.xlu0 %v238, 96
    %v250 = vpop.permute.xlu0 %249
    %v252 = vmul.f32 %v230, %v250
    %254 = vrot.lane.b32.xlu0 %v252, 64
    %v255 = vpop.permute.xlu0 %254
    %v257 = vadd.f32 %v176, %v255
    %v258 = vtanh.pop %v257
    %v259 = vsub.f32 1.0, %v248
    %261 = vrot.lane.b32.xlu0 %v258, 96
    %v262 = vpop.permute.xlu0 %261
    %v264 = vmul.f32 %v259, %v262
    %v265 = vmul.f32 %v248, %v63
    %v266 = vadd.f32 %v264, %v265
    %v269 = vunpack.c.l.s4 1983009808
    %v270 = vunpack.c.0.s8 %v269
    %v271 = vlaneseq
    %v272 = vshrl.u32 %v271, 7
    %v273 = vsub.s32 %v270, %v272
    %v274 = vrot.slane %v220, %v273
    %275 = vrot.lane.b32.xlu0 %v274, 96
    %v276 = vpop.permute.xlu0 %275
    %vm278 = vcmask 261120
    %v279 = vsel %vm278, %v276, %v266
    %vm280 = vcmask 517120
    %281 = vst.msk [vmem:[#allocation2] sm:$0x3] %vm280, %v279
    %v282 = vpack.c.bf16 %v220, %v220
    %v285 = vunpack.c.l.s4 1966171168
    %v286 = vunpack.c.0.s8 %v285
    %v287 = vlaneseq
    %v288 = vshrl.u32 %v287, 7
    %v289 = vsub.s32 %v286, %v288
    %v290 = vrot.slane %v282, %v289
    %v292 = vunpack.c.l.s4 1966171168
    %v293 = vunpack.c.0.s8 %v292
    %v294 = vlaneseq
    %v295 = vshrl.u32 %v294, 7
    %v296 = vsub.s32 %v293, %v295
    %v297 = vrot.slane %v290, %v296
    %298 = vrot.lane.b32.xlu0 %v297, 96
    %v299 = vpop.permute.xlu0 %298
    %s301 = scalar_lea.vmem %s4, %s58
    %vm302 = vcmask 253952
    %303 = vst.msk [vmem:[%s301] sm:$0x1] %vm302, %v299
    %v304 = vpack.c.bf16 %v266, %v266
    %v307 = vunpack.c.l.s4 1966171168
    %v308 = vunpack.c.0.s8 %v307
    %v309 = vlaneseq
    %v310 = vshrl.u32 %v309, 7
    %v311 = vsub.s32 %v308, %v310
    %v312 = vrot.slane %v304, %v311
    %v314 = vunpack.c.l.s4 1966171168
    %v315 = vunpack.c.0.s8 %v314
    %v316 = vlaneseq
    %v317 = vshrl.u32 %v316, 7
    %v318 = vsub.s32 %v315, %v317
    %v319 = vrot.slane %v312, %v318
    %320 = vrot.lane.b32.xlu0 %v319, 96
    %v321 = vpop.permute.xlu0 %320
    %s323 = scalar_lea.vmem %s47, %s170
    %324 = vst.msk [vmem:[%s323] sm:$0x1] %vm302, %v321
  $region26: #{asr_forward.6} parent=0 // loop_footer
    %s62 = sadd.s32 1, %s58
  $region27: #{asr_forward.6} parent=0 // loop_footer_branch
    %57 = sbr.rel target = $region23
  $region28: #{asr_forward.6} parent=0 // loop_exit
    _
  %s325 = ssub.s32 0, 0
  %s326 = smul.u32 8, %s325
  %p327 = scmp.lt.s32.totalorder %s326, 7
  %s328 = scalar_select %p327, %s326, 7
  %s329 = scalar_lea.vmem %s5, %s328
  // Predicated region
  $region29: #{asr_forward.6} parent=0 // pred_check
    _
  $region30: #{asr_forward.6} parent=0 // pred_check_branch
    %331 = sbr.rel (0) target = $region32
  $region31: #{asr_forward.6} parent=0 // pred_region
    _
  $region32: #{asr_forward.6} parent=0 // pred_fallthru
    _
  // Predicated region
  $region33: #{asr_forward.6} parent=0 // pred_check
    _
  $region34: #{asr_forward.6} parent=0 // pred_check_branch
    %333 = sbr.rel (0) target = $region36
  $region35: #{asr_forward.6} parent=0 // pred_region
    %s334 = ssub.s32 0, 0
    %s335 = smul.u32 8, %s334
  $region36: #{asr_forward.6} parent=0 // pred_fallthru
    _
  // Predicated region
  $region37: #{asr_forward.6} parent=0 // pred_check
    _
  $region38: #{asr_forward.6} parent=0 // pred_check_branch
    %337 = sbr.rel (0) target = $region40
  $region39: #{asr_forward.6} parent=0 // pred_region
    _
  $region40: #{asr_forward.6} parent=0 // pred_fallthru
    _
  // Predicated region
  $region41: #{asr_forward.6} parent=0 // pred_check
    _
  $region42: #{asr_forward.6} parent=0 // pred_check_branch
    %339 = sbr.rel (0) target = $region44
  $region43: #{asr_forward.6} parent=0 // pred_region
    %s340 = ssub.s32 0, 0
    %s341 = smul.u32 8, %s340
    %p342 = scmp.lt.s32.totalorder %s341, 7
    %s343 = scalar_select %p342, %s341, 7
    %s344 = scalar_lea.vmem %s5, %s343
  $region44: #{asr_forward.6} parent=0 // pred_fallthru
    _

// kernel: asr_forward.7
$region0: #{asr_forward.7}
  #allocation0 [shape = 'u32[]', space=smem, size = 0x4, offset = 0x4, fixed_abs, tag = 'smem constant byte address 0x4 - core index']
  #allocation1 [shape = 'u32[144,128]{1,0:T(1,128)}', space=vmem, size = 0x12000, scoped, tag = 'internal scratch']
  %s0 = inlined_call_operand.vmem [shape: bf16[16,32], index: 0, kind: input, shape index: {}]
  %s1 = inlined_call_operand.vmem [shape: bf16[16,32], index: 1, kind: input, shape index: {}]
  %s2 = inlined_call_operand.vmem [shape: bf16[64,128], index: 2, kind: input, shape index: {}]
  %s3 = inlined_call_operand.vmem [shape: f32[1,128], index: 3, kind: input, shape index: {}]
  %s4 = inlined_call_operand.vmem [shape: f32[16,128], index: 4, kind: output, shape index: {}]
  %s5 = sld [smem:[#allocation0]]
  $region26: #{asr_forward.7} parent=0
    _
  %s7 = ssub.s32 1, %s5
  %s8 = scalar_select 0, %s7, %s5
  // Predicated region
  $region2: #{asr_forward.7} parent=0 // pred_check
    _
  $region3: #{asr_forward.7} parent=0 // pred_check_branch
    %10 = sbr.rel (0) target = $region5
  $region4: #{asr_forward.7} parent=0 // pred_region
    _
  $region5: #{asr_forward.7} parent=0 // pred_fallthru
    _
  // Predicated region
  $region6: #{asr_forward.7} parent=0 // pred_check
    _
  $region7: #{asr_forward.7} parent=0 // pred_check_branch
    %12 = sbr.rel (0) target = $region9
  $region8: #{asr_forward.7} parent=0 // pred_region
    _
  $region9: #{asr_forward.7} parent=0 // pred_fallthru
    _
  // Predicated region
  $region10: #{asr_forward.7} parent=0 // pred_check
    _
  $region11: #{asr_forward.7} parent=0 // pred_check_branch
    %14 = sbr.rel (0) target = $region13
  $region12: #{asr_forward.7} parent=0 // pred_region
    _
  $region13: #{asr_forward.7} parent=0 // pred_fallthru
    _
  // Predicated region
  $region14: #{asr_forward.7} parent=0 // pred_check
    _
  $region15: #{asr_forward.7} parent=0 // pred_check_branch
    %16 = sbr.rel (0) target = $region17
  $region16: #{asr_forward.7} parent=0 // pred_region
    _
  $region17: #{asr_forward.7} parent=0 // pred_fallthru
    _
  %v18 = vld [vmem:[%s0] sm:$0xf]
  %v19 = vld [vmem:[%s0 + $0x4] sm:$0xf]
  %v20 = vld [vmem:[%s1] sm:$0xf]
  %v21 = vld [vmem:[%s1 + $0x4] sm:$0xf]
  %v24 = vunpack.c.l.b16 %v18
  %v25 = vunpack.c.l.b16 %v19
  %v26 = vpack.c.b16 %v25, %v24
  %v29 = vunpack.c.l.b16 %v20
  %v30 = vunpack.c.l.b16 %v21
  %v31 = vpack.c.b16 %v30, %v29
  %32 = vrot.lane.b32.xlu0 %v31, 32
  %v33 = vpop.permute.xlu0 %32
  %vm34 = vcmask 261120
  %v37 = vsel %vm34, %v26, %v33
  %v38 = vld [vmem:[%s2] sm:$0xf]
  %v39 = vld [vmem:[%s2 + $0x4] sm:$0xf]
  %v40 = vld [vmem:[%s2 + $0x8] sm:$0xf]
  %v41 = vld [vmem:[%s2 + $0xc] sm:$0xf]
  %v42 = vld [vmem:[%s2 + $0x10] sm:$0xf]
  %v43 = vld [vmem:[%s2 + $0x14] sm:$0xf]
  %v44 = vld [vmem:[%s2 + $0x18] sm:$0xf]
  %v45 = vld [vmem:[%s2 + $0x1c] sm:$0xf]
  %v46 = vld [vmem:[%s3] sm:$0x1]
  %v48 = vlaneseq
  %v49 = vshrl.u32 %v48, 7
  %v50 = vsub.s32 0, %v49
  %v51 = vrot.slane %v46, %v50
  %v61 = vunpack.c.l.b16 %v38
  %v62 = vunpack.c.l.b16 %v39
  %v63 = vunpack.c.l.b16 %v40
  %v64 = vunpack.c.l.b16 %v41
  %v65 = vunpack.c.l.b16 %v42
  %v66 = vunpack.c.l.b16 %v43
  %v67 = vunpack.c.l.b16 %v44
  %v68 = vunpack.c.l.b16 %v45
  %v69 = vpack.c.b16 %v62, %v61
  %v70 = vpack.c.b16 %v64, %v63
  %v71 = vpack.c.b16 %v66, %v65
  %v72 = vpack.c.b16 %v68, %v67
  %vm77 = vcmask 523264
  %v78 = vsel %vm77, %v37, 0
  %80 = vmatprep.subr.bf16.mxu0 0
  %81 = vmatpush1.bf16.msra.mxu0 %v69
  %82 = vmatprep.subr.bf16.mxu0 0
  %83 = vmatpush1.bf16.msra.mxu0 %v70
  %84 = vmatprep.subr.bf16.mxu0 0
  %85 = vmatpush1.bf16.msra.mxu0 %v71
  %86 = vmatprep.subr.bf16.mxu0 0
  %87 = vmatpush1.bf16.msra.mxu0 %v72
  %88 = vmatprep.subr.bf16.mxu0 0
  %89 = vmatpush1.bf16.msra.mxu0 0
  %90 = vmatprep.subr.bf16.mxu0 0
  %91 = vmatpush1.bf16.msra.mxu0 0
  %92 = vmatprep.subr.bf16.mxu0 0
  %93 = vmatpush1.bf16.msra.mxu0 0
  %94 = vmatprep.subr.bf16.mxu0 0
  %95 = vmatpush1.bf16.msra.mxu0 0
  %96 = vmatprep.subr.bf16.mxu0 0
  %97 = vmatpush1.bf16.msra.mxu0 0
  %98 = vmatprep.subr.bf16.mxu0 0
  %99 = vmatpush1.bf16.msra.mxu0 0
  %100 = vmatprep.subr.bf16.mxu0 0
  %101 = vmatpush1.bf16.msra.mxu0 0
  %102 = vmatprep.subr.bf16.mxu0 0
  %103 = vmatpush1.bf16.msra.mxu0 0
  %104 = vmatprep.subr.bf16.mxu0 0
  %105 = vmatpush1.bf16.msra.mxu0 0
  %106 = vmatprep.subr.bf16.mxu0 0
  %107 = vmatpush1.bf16.msra.mxu0 0
  %108 = vmatprep.subr.bf16.mxu0 0
  %109 = vmatpush1.bf16.msra.mxu0 0
  %110 = vmatprep.subr.bf16.mxu0 0
  %111 = vmatpush1.bf16.msra.mxu0 0
  %112 = vmatprep.mubr.bf16.mxu0 0
  %113 = vmatmul.mubr.bf16.gmra.mrb[0].mxu0 %v78
  %v114 = vpop.f32.mrb[0].mxu0
  %v115 = vadd.f32 %v51, %v114
  %v116 = vpop.f32.mrb[0].mxu0
  %v117 = vpop.f32.mrb[0].mxu0
  %v118 = vadd.f32 %v51, %v117
  %v119 = vpop.f32.mrb[0].mxu0
  %120 = vdwg.mxu0
  %v121 = vlaneseq
  %v122 = vand.u32 %v121, 127
  %vm123 = vcmp.lt.s32.totalorder %v122, 16
  %v124 = vsel %vm123, 1, 0
  %vm125 = vcmp.eq.s32.totalorder %v124, 1
  %v126 = vsel %vm125, %v115, -1e+30
  %v127 = vsel %vm125, %v118, -1e+30
  %128 = vmax.xlane.f32.xlu0 %v126
  %v129 = vpop.xlane.xlu0 %128
  %130 = vmax.xlane.f32.xlu0 %v127
  %v131 = vpop.xlane.xlu0 %130
  %v132 = vsub.f32 %v126, %v129
  %v133 = vsub.f32 %v127, %v131
  %v134 = vmul.f32 %v132, 1.442695
  %v135 = vpow.pop %v134
  %v136 = vmul.f32 %v133, 1.442695
  %v137 = vpow.pop %v136
  %138 = vadd.xlane.f32.xlu0 %v135
  %v139 = vpop.xlane.xlu0 %138
  %140 = vadd.xlane.f32.xlu0 %v137
  %v141 = vpop.xlane.xlu0 %140
  %v142 = vlog2.pop %v139
  %v143 = vmul.f32 %v142, 0.6931472
  %v144 = vlog2.pop %v141
  %v145 = vmul.f32 %v144, 0.6931472
  %v146 = vadd.f32 %v143, %v129
  %v147 = vadd.f32 %v145, %v131
  %v148 = vsub.f32 %v126, %v146
  %v149 = vsub.f32 %v127, %v147
  %150 = vst [vmem:[%s4] sm:$0xff] %v148
  %151 = vst [vmem:[%s4 + $0x8] sm:$0xff] %v149
  // Predicated region
  $region18: #{asr_forward.7} parent=0 // pred_check
    _
  $region19: #{asr_forward.7} parent=0 // pred_check_branch
    %153 = sbr.rel (0) target = $region21
  $region20: #{asr_forward.7} parent=0 // pred_region
    _
  $region21: #{asr_forward.7} parent=0 // pred_fallthru
    _
  // Predicated region
  $region22: #{asr_forward.7} parent=0 // pred_check
    _
  $region23: #{asr_forward.7} parent=0 // pred_check_branch
    %155 = sbr.rel (0) target = $region25
  $region24: #{asr_forward.7} parent=0 // pred_region
    _
  $region25: #{asr_forward.7} parent=0 // pred_fallthru
    _

// kernel: asr_forward.4
$region0: #{asr_forward.4}
  #allocation0 [shape = 'u32[]', space=smem, size = 0x4, offset = 0x4, fixed_abs, tag = 'smem constant byte address 0x4 - core index']
  #allocation1 [shape = 'u32[144,128]{1,0:T(1,128)}', space=vmem, size = 0x12000, scoped, tag = 'internal scratch']
  %s0 = inlined_call_operand.vmem [shape: f32[2,1,10,10], index: 0, kind: input, shape index: {}]
  %s1 = inlined_call_operand.hbm [shape: f32[288], index: 1, kind: input, shape index: {}]
  %s2 = inlined_call_operand.hbm [shape: f32[32], index: 2, kind: input, shape index: {}]
  %s3 = inlined_call_operand.vmem [shape: bf16[2,8,128], index: 3, kind: output, shape index: {}]
  %s4 = sld [smem:[#allocation0]]
  $region53: #{asr_forward.4} parent=0
    _
  %s6 = ssub.s32 1, %s4
  %s7 = scalar_select 0, %s6, %s4
  $region1: #{asr_forward.4} parent=0
    #allocation2 [shape = 'u8[1536]{0}', space=smem, size = 0x600, scoped, tag = 'input window, operand 1, single buffered']
    #allocation3 [shape = 's32[2]{0}', space=sflag, size = 0x8, scoped, tag = 'scoped memory for asr_forward.4']
    #allocation4 [shape = 'u8[512]{0}', space=smem, size = 0x200, scoped, tag = 'input window, operand 2, single buffered']
    #allocation5 [shape = 's32[1]{0}', space=sflag, size = 0x4, scoped, tag = 'scoped memory for asr_forward.4']
    %8 = vsyncpa [#allocation3], 0
    %9 = vsyncpa [#allocation5], 0
    loop: start=0, step=1, limit=4
    $region2: #{asr_forward.4} parent=1 // loop_pre_header
      _
    $region3: #{asr_forward.4} parent=1 // loop_header
      %s11 = sphi 0, %s15
      %p12 = scmp.ge.s32.totalorder %s11, 4
      %s18 = sphi 0, %s30
      %s19 = sphi 0, %s26
      %s20 = sphi 0, %s18
      %s21 = sphi 0, %s19
      %s22 = sphi 0, %s20
      %s23 = sphi 0, %s21
      %s35 = sphi 0, %s37
      %s38 = sphi 0, %s35
      %s39 = sphi 0, %s38
      %s55 = sphi 0, %s39
      %s59 = sphi 0, %s59
      %s61 = sphi 0, %s59
      %s62 = sphi 0, %s61
      %s76 = sphi 0, %s62
      %s80 = sphi 0, %s80
      %s82 = sphi 0, %s80
      %s83 = sphi 0, %s82
      %s97 = sphi 0, %s83
      %s105 = sphi 0, %s107
      %s108 = sphi 0, %s105
      %s109 = sphi 0, %s108
      %s125 = sphi 0, %s109
    $region4: #{asr_forward.4} parent=1 // loop_header_branch
      %14 = sbr.rel (%p12) target = $region8
    $region5: #{asr_forward.4} parent=1 // loop_body
      %s16 = ssub.s32 %s11, 1
      %s17 = ssub.s32 %s11, 2
      %s24 = sadd.s32 1, %s19
      %p25 = scmp.ge.s32.totalorder %s24, 1
      %s26 = scalar_select %p25, 0, %s24
      %s27 = sadd.s32 1, %s18
      %s28 = scalar_select %p25, %s27, %s18
      %p29 = scmp.ge.s32.totalorder %s28, 2
      %s30 = scalar_select %p29, 0, %s28
      %s31 = ssub.s32 %s18, %s30
      %s32 = ssub.s32 %s19, %s26
      %s33 = sor.u32 %s31, %s32
      %p34 = scmp.eq.s32.totalorder %s33, 0
      %s36 = sadd.s32 %s35, 1
      %s37 = scalar_select %p34, %s35, %s36
      %p40 = pneg %p34
      %p41 = scmp.eq.s32.totalorder %s11, 1
      %p42 = por %p40, %p41
      %p43 = scmp.ne.s32.totalorder %s35, %s38
      %p44 = scmp.eq.s32.totalorder %s11, 0
      %p45 = por %p43, %p44
      %p46 = scmp.ne.s32.totalorder %s35, %s38
      %p47 = scmp.eq.s32.totalorder %s16, 1
      %p48 = por %p46, %p47
      %p49 = scmp.ne.s32.totalorder %s38, %s39
      %p50 = scmp.eq.s32.totalorder %s16, 0
      %p51 = por %p49, %p50
      %p52 = scmp.ne.s32.totalorder %s38, %s39
      %p53 = scmp.eq.s32.totalorder %s17, 1
      %p54 = por %p52, %p53
      %p56 = scmp.ne.s32.totalorder %s39, %s55
      %p57 = scmp.eq.s32.totalorder %s17, 0
      %p58 = por %p56, %p57
      %s60 = sadd.s32 %s59, 1
      %p63 = scmp.eq.s32.totalorder %s11, 1
      %p64 = scmp.ne.s32.totalorder %s59, %s61
      %p65 = scmp.eq.s32.totalorder %s11, 0
      %p66 = por %p64, %p65
      %p67 = scmp.ne.s32.totalorder %s59, %s61
      %p68 = scmp.eq.s32.totalorder %s16, 1
      %p69 = por %p67, %p68
      %p70 = scmp.ne.s32.totalorder %s61, %s62
      %p71 = scmp.eq.s32.totalorder %s16, 0
      %p72 = por %p70, %p71
      %p73 = scmp.ne.s32.totalorder %s61, %s62
      %p74 = scmp.eq.s32.totalorder %s17, 1
      %p75 = por %p73, %p74
      %p77 = scmp.ne.s32.totalorder %s62, %s76
      %p78 = scmp.eq.s32.totalorder %s17, 0
      %p79 = por %p77, %p78
      %s81 = sadd.s32 %s80, 1
      %p84 = scmp.eq.s32.totalorder %s11, 1
      %p85 = scmp.ne.s32.totalorder %s80, %s82
      %p86 = scmp.eq.s32.totalorder %s11, 0
      %p87 = por %p85, %p86
      %p88 = scmp.ne.s32.totalorder %s80, %s82
      %p89 = scmp.eq.s32.totalorder %s16, 1
      %p90 = por %p88, %p89
      %p91 = scmp.ne.s32.totalorder %s82, %s83
      %p92 = scmp.eq.s32.totalorder %s16, 0
      %p93 = por %p91, %p92
      %p94 = scmp.ne.s32.totalorder %s82, %s83
      %p95 = scmp.eq.s32.totalorder %s17, 1
      %p96 = por %p94, %p95
      %p98 = scmp.ne.s32.totalorder %s83, %s97
      %p99 = scmp.eq.s32.totalorder %s17, 0
      %p100 = por %p98, %p99
      %s101 = ssub.s32 %s18, %s30
      %s102 = ssub.s32 %s19, %s26
      %s103 = sor.u32 %s101, %s102
      %p104 = scmp.eq.s32.totalorder %s103, 0
      %s106 = sadd.s32 %s105, 1
      %s107 = scalar_select %p104, %s105, %s106
      %p110 = pneg %p104
      %p111 = scmp.eq.s32.totalorder %s11, 1
      %p112 = por %p110, %p111
      %p113 = scmp.ne.s32.totalorder %s105, %s108
      %p114 = scmp.eq.s32.totalorder %s11, 0
      %p115 = por %p113, %p114
      %p116 = scmp.ne.s32.totalorder %s105, %s108
      %p117 = scmp.eq.s32.totalorder %s16, 1
      %p118 = por %p116, %p117
      %p119 = scmp.ne.s32.totalorder %s108, %s109
      %p120 = scmp.eq.s32.totalorder %s16, 0
      %p121 = por %p119, %p120
      %p122 = scmp.ne.s32.totalorder %s108, %s109
      %p123 = scmp.eq.s32.totalorder %s17, 1
      %p124 = por %p122, %p123
      %p126 = scmp.ne.s32.totalorder %s109, %s125
      %p127 = scmp.eq.s32.totalorder %s17, 0
      %p128 = por %p126, %p127
      %p129 = scmp.le.s32.totalorder 1, %s11
      %p130 = scmp.lt.s32.totalorder %s11, 3
      %p131 = pnand %p129, %p130
      %p132 = pneg %p131
      // Predicated region
      $region9: #{asr_forward.4} parent=5 // pred_check
        _
      $region10: #{asr_forward.4} parent=5 // pred_check_branch
        %134 = sbr.rel (%p131) target = $region12
      $region11: #{asr_forward.4} parent=5 // pred_region
        %s135 = ssub.s32 %s11, 1
        // Predicated region
        $region13: #{asr_forward.4} parent=11 // pred_check
          %p136 = pneg %p72
        $region14: #{asr_forward.4} parent=11 // pred_check_branch
          %138 = sbr.rel (%p136) target = $region16
        $region15: #{asr_forward.4} parent=11 // pred_region
          %s140 = ssub.s32 48, 48
          %141 = vsyncadd [#allocation3], %s140
          %144 = dma.hbm_to_smem %s1, 48, [#allocation2], [#allocation3]
        $region16: #{asr_forward.4} parent=11 // pred_fallthru
          _
        // Predicated region
        $region17: #{asr_forward.4} parent=11 // pred_check
          %p145 = pneg %p93
        $region18: #{asr_forward.4} parent=11 // pred_check_branch
          %147 = sbr.rel (%p145) target = $region20
        $region19: #{asr_forward.4} parent=11 // pred_region
          %s149 = ssub.s32 16, 16
          %150 = vsyncadd [#allocation5], %s149
          %153 = dma.hbm_to_smem %s2, 16, [#allocation4], [#allocation5]
        $region20: #{asr_forward.4} parent=11 // pred_fallthru
          _
      $region12: #{asr_forward.4} parent=5 // pred_fallthru
        _
      %p154 = scmp.lt.s32.totalorder %s11, 2
      // Predicated region
      $region21: #{asr_forward.4} parent=5 // pred_check
        %p155 = pneg %p154
      $region22: #{asr_forward.4} parent=5 // pred_check_branch
        %157 = sbr.rel (%p155) target = $region24
      $region23: #{asr_forward.4} parent=5 // pred_region
        // Predicated region
        $region25: #{asr_forward.4} parent=23 // pred_check
          %p158 = pneg %p45
        $region26: #{asr_forward.4} parent=23 // pred_check_branch
          %160 = sbr.rel (%p158) target = $region28
        $region27: #{asr_forward.4} parent=23 // pred_region
          %p161 = scmp.lt.s32.totalorder %s18, 1
          %s162 = scalar_select %p161, %s18, 1
          %p163 = scmp.lt.s32.totalorder %s19, 0
          %s164 = scalar_select %p163, %s19, 0
          %s165 = smul.addr %s164, 2
          %s166 = smul.addr %s162, 2
          %s167 = sadd.s32 %s165, %s166
          %s168 = smul.addr %s167, 8
          %s169 = scalar_lea.vmem %s0, %s168
        $region28: #{asr_forward.4} parent=23 // pred_fallthru
          _
      $region24: #{asr_forward.4} parent=5 // pred_fallthru
        _
      %p170 = scmp.le.s32.totalorder 1, %s11
      %p171 = scmp.lt.s32.totalorder %s11, 3
      %p172 = pnand %p170, %p171
      %p173 = pneg %p172
      // Predicated region
      $region29: #{asr_forward.4} parent=5 // pred_check
        _
      $region30: #{asr_forward.4} parent=5 // pred_check_branch
        %175 = sbr.rel (%p172) target = $region32
      $region31: #{asr_forward.4} parent=5 // pred_region
        %s176 = ssub.s32 %s11, 1
        // Predicated region
        $region33: #{asr_forward.4} parent=31 // pred_check
          %p177 = pneg %p72
        $region34: #{asr_forward.4} parent=31 // pred_check_branch
          %179 = sbr.rel (%p177) target = $region36
        $region35: #{asr_forward.4} parent=31 // pred_region
          %180 = dma.done [#allocation3], 48
        $region36: #{asr_forward.4} parent=31 // pred_fallthru
          _
        // Predicated region
        $region37: #{asr_forward.4} parent=31 // pred_check
          %p181 = pneg %p93
        $region38: #{asr_forward.4} parent=31 // pred_check_branch
          %183 = sbr.rel (%p181) target = $region40
        $region39: #{asr_forward.4} parent=31 // pred_region
          %184 = dma.done [#allocation5], 16
        $region40: #{asr_forward.4} parent=31 // pred_fallthru
          _
        %185 = sfence
        %p186 = scmp.lt.s32.totalorder %s20, 1
        %s187 = scalar_select %p186, %s20, 1
        %p188 = scmp.lt.s32.totalorder %s21, 0
        %s189 = scalar_select %p188, %s21, 0
        %s190 = smul.addr %s189, 2
        %s191 = smul.addr %s187, 2
        %s192 = sadd.s32 %s190, %s191
        %s193 = smul.addr %s192, 8
        %s194 = scalar_lea.vmem %s0, %s193
        %p195 = pneg %p51
        %p196 = pneg %p48
        %p197 = pneg %p72
        %p198 = pneg %p69
        %p199 = pneg %p93
        %p200 = pneg %p90
        %p201 = pneg %p121
        %p202 = pneg %p118
        %p203 = scmp.lt.s32.totalorder %s20, 1
        %s204 = scalar_select %p203, %s20, 1
        %p205 = scmp.lt.s32.totalorder %s21, 0
        %s206 = scalar_select %p205, %s21, 0
        %s207 = sadd.s32 %s206, %s204
        %s208 = smul.addr %s207, 4
        %s209 = scalar_lea.vmem %s3, %s208
        %p210 = scmp.lt.s32.totalorder %s20, 1
        %s211 = scalar_select %p210, %s20, 1
        %p212 = scmp.lt.s32.totalorder %s21, 0
        %s213 = scalar_select %p212, %s21, 0
        %s214 = smul.addr %s213, 2
        %s215 = smul.addr %s211, 2
        %s216 = sadd.s32 %s214, %s215
        %s217 = smul.addr %s216, 8
        %s218 = scalar_lea.vmem %s0, %s217
        %p219 = scmp.lt.s32.totalorder %s20, 1
        %s220 = scalar_select %p219, %s20, 1
        %p221 = scmp.lt.s32.totalorder %s21, 0
        %s222 = scalar_select %p221, %s21, 0
        %s223 = sadd.s32 %s222, %s220
        %s224 = smul.addr %s223, 4
        %s225 = scalar_lea.vmem %s3, %s224
        %v226 = vld [vmem:[%s218] sm:$0xff]
        %v227 = vld [vmem:[%s218 + $0x8] sm:$0x3]
        %s228 = sld [smem:[#allocation2]]
        %v229 = vstv %s228
        %v230 = vmul.f32 %v229, %v226
        %s231 = sld [smem:[#allocation2 + $0x20]]
        %v232 = vstv %s231
        %v233 = vmul.f32 %v232, %v226
        %235 = vrot.lane.b32.xlu0 %v233, 127
        %v236 = vpop.permute.xlu0 %235
        %v238 = vadd.f32 %v230, %v236
        %s239 = sld [smem:[#allocation2 + $0x40]]
        %v240 = vstv %s239
        %v241 = vmul.f32 %v240, %v226
        %243 = vrot.lane.b32.xlu0 %v241, 126
        %v244 = vpop.permute.xlu0 %243
        %v246 = vadd.f32 %v238, %v244
        %s247 = sld [smem:[#allocation2 + $0x60]]
        %v248 = vstv %s247
        %v249 = vmul.f32 %v248, %v226
        %v250 = vmul.f32 %v248, %v227
        %vm253 = vcmask 1046528
        %v254 = vrot.slane %v249, 1
        %v255 = vrot.slane %v250, 1
        %v256 = vsel %vm253, %v254, %v255
        %v258 = vadd.f32 %v246, %v256
        %s259 = sld [smem:[#allocation2 + $0x80]]
        %v260 = vstv %s259
        %v261 = vmul.f32 %v260, %v226
        %v262 = vmul.f32 %v260, %v227
        %v265 = vrot.slane %v261, 1
        %v266 = vrot.slane %v262, 1
        %v267 = vsel %vm253, %v265, %v266
        %268 = vrot.lane.b32.xlu0 %v267, 127
        %v269 = vpop.permute.xlu0 %268
        %v271 = vadd.f32 %v258, %v269
        %s272 = sld [smem:[#allocation2 + $0xa0]]
        %v273 = vstv %s272
        %v274 = vmul.f32 %v273, %v226
        %v275 = vmul.f32 %v273, %v227
        %v278 = vrot.slane %v274, 1
        %v279 = vrot.slane %v275, 1
        %v280 = vsel %vm253, %v278, %v279
        %281 = vrot.lane.b32.xlu0 %v280, 126
        %v282 = vpop.permute.xlu0 %281
        %v284 = vadd.f32 %v271, %v282
        %s285 = sld [smem:[#allocation2 + $0xc0]]
        %v286 = vstv %s285
        %v287 = vmul.f32 %v286, %v226
        %v288 = vmul.f32 %v286, %v227
        %vm291 = vcmask 1045504
        %v292 = vrot.slane %v287, 2
        %v293 = vrot.slane %v288, 2
        %v294 = vsel %vm291, %v292, %v293
        %v296 = vadd.f32 %v284, %v294
        %s297 = sld [smem:[#allocation2 + $0xe0]]
        %v298 = vstv %s297
        %v299 = vmul.f32 %v298, %v226
        %v300 = vmul.f32 %v298, %v227
        %v303 = vrot.slane %v299, 2
        %v304 = vrot.slane %v300, 2
        %v305 = vsel %vm291, %v303, %v304
        %306 = vrot.lane.b32.xlu0 %v305, 127
        %v307 = vpop.permute.xlu0 %306
        %v309 = vadd.f32 %v296, %v307
        %s310 = sld [smem:[#allocation2 + $0x100]]
        %v311 = vstv %s310
        %v312 = vmul.f32 %v311, %v226
        %v313 = vmul.f32 %v311, %v227
        %v316 = vrot.slane %v312, 2
        %v317 = vrot.slane %v313, 2
        %v318 = vsel %vm291, %v316, %v317
        %319 = vrot.lane.b32.xlu0 %v318, 126
        %v320 = vpop.permute.xlu0 %319
        %v322 = vadd.f32 %v309, %v320
        %s323 = sld [smem:[#allocation4]]
        %v324 = vstv %s323
        %v325 = vadd.f32 %v322, %v324
        %v326 = vmax.f32 %v325, 0.0
        %v328 = vcombine.high %v326, %v326
        %v330 = vunpack.c.l.s4 1983009808
        %v331 = vunpack.c.0.s8 %v330
        %v332 = vlaneseq
        %v333 = vshrl.u32 %v332, 7
        %v334 = vsub.s32 %v331, %v333
        %v335 = vrot.slane %v326, %v334
        %v337 = vunpack.c.l.s4 1983009808
        %v338 = vunpack.c.0.s8 %v337
        %v339 = vlaneseq
        %v340 = vshrl.u32 %v339, 7
        %v341 = vsub.s32 %v338, %v340
        %v342 = vrot.slane %v328, %v341
        %v343 = vcombine.high %v335, %v335
        %v344 = vcombine.high %v342, %v342
        %vm349 = vcmask 58368
        %v350 = vsel %vm349, %v335, -inf
        %v351 = vrot.slane %v350, 4
        %v352 = vmax.f32 %v350, %v351
        %v353 = vrot.slane %v352, 2
        %v354 = vmax.f32 %v352, %v353
        %v355 = vrot.slane %v354, 1
        %v356 = vmax.f32 %v354, %v355
        %v357 = vsel %vm349, %v343, -inf
        %v358 = vrot.slane %v357, 4
        %v359 = vmax.f32 %v357, %v358
        %v360 = vrot.slane %v359, 2
        %v361 = vmax.f32 %v359, %v360
        %v362 = vrot.slane %v361, 1
        %v363 = vmax.f32 %v361, %v362
        %v364 = vsel %vm349, %v342, -inf
        %v365 = vrot.slane %v364, 4
        %v366 = vmax.f32 %v364, %v365
        %v367 = vrot.slane %v366, 2
        %v368 = vmax.f32 %v366, %v367
        %v369 = vrot.slane %v368, 1
        %v370 = vmax.f32 %v368, %v369
        %v371 = vsel %vm349, %v344, -inf
        %v372 = vrot.slane %v371, 4
        %v373 = vmax.f32 %v371, %v372
        %v374 = vrot.slane %v373, 2
        %v375 = vmax.f32 %v373, %v374
        %v376 = vrot.slane %v375, 1
        %v377 = vmax.f32 %v375, %v376
        %s378 = sld [smem:[#allocation2 + $0x1]]
        %v379 = vstv %s378
        %v380 = vmul.f32 %v379, %v226
        %s381 = sld [smem:[#allocation2 + $0x21]]
        %v382 = vstv %s381
        %v383 = vmul.f32 %v382, %v226
        %385 = vrot.lane.b32.xlu0 %v383, 127
        %v386 = vpop.permute.xlu0 %385
        %v388 = vadd.f32 %v380, %v386
        %s389 = sld [smem:[#allocation2 + $0x41]]
        %v390 = vstv %s389
        %v391 = vmul.f32 %v390, %v226
        %393 = vrot.lane.b32.xlu0 %v391, 126
        %v394 = vpop.permute.xlu0 %393
        %v396 = vadd.f32 %v388, %v394
        %s397 = sld [smem:[#allocation2 + $0x61]]
        %v398 = vstv %s397
        %v399 = vmul.f32 %v398, %v226
        %v400 = vmul.f32 %v398, %v227
        %v403 = vrot.slane %v399, 1
        %v404 = vrot.slane %v400, 1
        %v405 = vsel %vm253, %v403, %v404
        %v407 = vadd.f32 %v396, %v405
        %s408 = sld [smem:[#allocation2 + $0x81]]
        %v409 = vstv %s408
        %v410 = vmul.f32 %v409, %v226
        %v411 = vmul.f32 %v409, %v227
        %v414 = vrot.slane %v410, 1
        %v415 = vrot.slane %v411, 1
        %v416 = vsel %vm253, %v414, %v415
        %417 = vrot.lane.b32.xlu0 %v416, 127
        %v418 = vpop.permute.xlu0 %417
        %v420 = vadd.f32 %v407, %v418
        %s421 = sld [smem:[#allocation2 + $0xa1]]
        %v422 = vstv %s421
        %v423 = vmul.f32 %v422, %v226
        %v424 = vmul.f32 %v422, %v227
        %v427 = vrot.slane %v423, 1
        %v428 = vrot.slane %v424, 1
        %v429 = vsel %vm253, %v427, %v428
        %430 = vrot.lane.b32.xlu0 %v429, 126
        %v431 = vpop.permute.xlu0 %430
        %v433 = vadd.f32 %v420, %v431
        %s434 = sld [smem:[#allocation2 + $0xc1]]
        %v435 = vstv %s434
        %v436 = vmul.f32 %v435, %v226
        %v437 = vmul.f32 %v435, %v227
        %v440 = vrot.slane %v436, 2
        %v441 = vrot.slane %v437, 2
        %v442 = vsel %vm291, %v440, %v441
        %v444 = vadd.f32 %v433, %v442
        %s445 = sld [smem:[#allocation2 + $0xe1]]
        %v446 = vstv %s445
        %v447 = vmul.f32 %v446, %v226
        %v448 = vmul.f32 %v446, %v227
        %v451 = vrot.slane %v447, 2
        %v452 = vrot.slane %v448, 2
        %v453 = vsel %vm291, %v451, %v452
        %454 = vrot.lane.b32.xlu0 %v453, 127
        %v455 = vpop.permute.xlu0 %454
        %v457 = vadd.f32 %v444, %v455
        %s458 = sld [smem:[#allocation2 + $0x101]]
        %v459 = vstv %s458
        %v460 = vmul.f32 %v459, %v226
        %v461 = vmul.f32 %v459, %v227
        %v464 = vrot.slane %v460, 2
        %v465 = vrot.slane %v461, 2
        %v466 = vsel %vm291, %v464, %v465
        %467 = vrot.lane.b32.xlu0 %v466, 126
        %v468 = vpop.permute.xlu0 %467
        %v470 = vadd.f32 %v457, %v468
        %s471 = sld [smem:[#allocation4 + $0x1]]
        %v472 = vstv %s471
        %v473 = vadd.f32 %v470, %v472
        %v474 = vmax.f32 %v473, 0.0
        %v476 = vcombine.high %v474, %v474
        %v478 = vunpack.c.l.s4 1983009808
        %v479 = vunpack.c.0.s8 %v478
        %v480 = vlaneseq
        %v481 = vshrl.u32 %v480, 7
        %v482 = vsub.s32 %v479, %v481
        %v483 = vrot.slane %v474, %v482
        %v485 = vunpack.c.l.s4 1983009808
        %v486 = vunpack.c.0.s8 %v485
        %v487 = vlaneseq
        %v488 = vshrl.u32 %v487, 7
        %v489 = vsub.s32 %v486, %v488
        %v490 = vrot.slane %v476, %v489
        %v491 = vcombine.high %v483, %v483
        %v492 = vcombine.high %v490, %v490
        %v497 = vsel %vm349, %v483, -inf
        %v498 = vrot.slane %v497, 4
        %v499 = vmax.f32 %v497, %v498
        %v500 = vrot.slane %v499, 2
        %v501 = vmax.f32 %v499, %v500
        %v502 = vrot.slane %v501, 1
        %v503 = vmax.f32 %v501, %v502
        %v504 = vsel %vm349, %v491, -inf
        %v505 = vrot.slane %v504, 4
        %v506 = vmax.f32 %v504, %v505
        %v507 = vrot.slane %v506, 2
        %v508 = vmax.f32 %v506, %v507
        %v509 = vrot.slane %v508, 1
        %v510 = vmax.f32 %v508, %v509
        %v511 = vsel %vm349, %v490, -inf
        %v512 = vrot.slane %v511, 4
        %v513 = vmax.f32 %v511, %v512
        %v514 = vrot.slane %v513, 2
        %v515 = vmax.f32 %v513, %v514
        %v516 = vrot.slane %v515, 1
        %v517 = vmax.f32 %v515, %v516
        %v518 = vsel %vm349, %v492, -inf
        %v519 = vrot.slane %v518, 4
        %v520 = vmax.f32 %v518, %v519
        %v521 = vrot.slane %v520, 2
        %v522 = vmax.f32 %v520, %v521
        %v523 = vrot.slane %v522, 1
        %v524 = vmax.f32 %v522, %v523
        %s525 = sld [smem:[#allocation2 + $0x2]]
        %v526 = vstv %s525
        %v527 = vmul.f32 %v526, %v226
        %s528 = sld [smem:[#allocation2 + $0x22]]
        %v529 = vstv %s528
        %v530 = vmul.f32 %v529, %v226
        %532 = vrot.lane.b32.xlu0 %v530, 127
        %v533 = vpop.permute.xlu0 %532
        %v535 = vadd.f32 %v527, %v533
        %s536 = sld [smem:[#allocation2 + $0x42]]
        %v537 = vstv %s536
        %v538 = vmul.f32 %v537, %v226
        %540 = vrot.lane.b32.xlu0 %v538, 126
        %v541 = vpop.permute.xlu0 %540
        %v543 = vadd.f32 %v535, %v541
        %s544 = sld [smem:[#allocation2 + $0x62]]
        %v545 = vstv %s544
        %v546 = vmul.f32 %v545, %v226
        %v547 = vmul.f32 %v545, %v227
        %v550 = vrot.slane %v546, 1
        %v551 = vrot.slane %v547, 1
        %v552 = vsel %vm253, %v550, %v551
        %v554 = vadd.f32 %v543, %v552
        %s555 = sld [smem:[#allocation2 + $0x82]]
        %v556 = vstv %s555
        %v557 = vmul.f32 %v556, %v226
        %v558 = vmul.f32 %v556, %v227
        %v561 = vrot.slane %v557, 1
        %v562 = vrot.slane %v558, 1
        %v563 = vsel %vm253, %v561, %v562
        %564 = vrot.lane.b32.xlu0 %v563, 127
        %v565 = vpop.permute.xlu0 %564
        %v567 = vadd.f32 %v554, %v565
        %s568 = sld [smem:[#allocation2 + $0xa2]]
        %v569 = vstv %s568
        %v570 = vmul.f32 %v569, %v226
        %v571 = vmul.f32 %v569, %v227
        %v574 = vrot.slane %v570, 1
        %v575 = vrot.slane %v571, 1
        %v576 = vsel %vm253, %v574, %v575
        %577 = vrot.lane.b32.xlu0 %v576, 126
        %v578 = vpop.permute.xlu0 %577
        %v580 = vadd.f32 %v567, %v578
        %s581 = sld [smem:[#allocation2 + $0xc2]]
        %v582 = vstv %s581
        %v583 = vmul.f32 %v582, %v226
        %v584 = vmul.f32 %v582, %v227
        %v587 = vrot.slane %v583, 2
        %v588 = vrot.slane %v584, 2
        %v589 = vsel %vm291, %v587, %v588
        %v591 = vadd.f32 %v580, %v589
        %s592 = sld [smem:[#allocation2 + $0xe2]]
        %v593 = vstv %s592
        %v594 = vmul.f32 %v593, %v226
        %v595 = vmul.f32 %v593, %v227
        %v598 = vrot.slane %v594, 2
        %v599 = vrot.slane %v595, 2
        %v600 = vsel %vm291, %v598, %v599
        %601 = vrot.lane.b32.xlu0 %v600, 127
        %v602 = vpop.permute.xlu0 %601
        %v604 = vadd.f32 %v591, %v602
        %s605 = sld [smem:[#allocation2 + $0x102]]
        %v606 = vstv %s605
        %v607 = vmul.f32 %v606, %v226
        %v608 = vmul.f32 %v606, %v227
        %v611 = vrot.slane %v607, 2
        %v612 = vrot.slane %v608, 2
        %v613 = vsel %vm291, %v611, %v612
        %614 = vrot.lane.b32.xlu0 %v613, 126
        %v615 = vpop.permute.xlu0 %614
        %v617 = vadd.f32 %v604, %v615
        %s618 = sld [smem:[#allocation4 + $0x2]]
        %v619 = vstv %s618
        %v620 = vadd.f32 %v617, %v619
        %v621 = vmax.f32 %v620, 0.0
        %v623 = vcombine.high %v621, %v621
        %v625 = vunpack.c.l.s4 1983009808
        %v626 = vunpack.c.0.s8 %v625
        %v627 = vlaneseq
        %v628 = vshrl.u32 %v627, 7
        %v629 = vsub.s32 %v626, %v628
        %v630 = vrot.slane %v621, %v629
        %v632 = vunpack.c.l.s4 1983009808
        %v633 = vunpack.c.0.s8 %v632
        %v634 = vlaneseq
        %v635 = vshrl.u32 %v634, 7
        %v636 = vsub.s32 %v633, %v635
        %v637 = vrot.slane %v623, %v636
        %v638 = vcombine.high %v630, %v630
        %v639 = vcombine.high %v637, %v637
        %v644 = vsel %vm349, %v630, -inf
        %v645 = vrot.slane %v644, 4
        %v646 = vmax.f32 %v644, %v645
        %v647 = vrot.slane %v646, 2
        %v648 = vmax.f32 %v646, %v647
        %v649 = vrot.slane %v648, 1
        %v650 = vmax.f32 %v648, %v649
        %v651 = vsel %vm349, %v638, -inf
        %v652 = vrot.slane %v651, 4
        %v653 = vmax.f32 %v651, %v652
        %v654 = vrot.slane %v653, 2
        %v655 = vmax.f32 %v653, %v654
        %v656 = vrot.slane %v655, 1
        %v657 = vmax.f32 %v655, %v656
        %v658 = vsel %vm349, %v637, -inf
        %v659 = vrot.slane %v658, 4
        %v660 = vmax.f32 %v658, %v659
        %v661 = vrot.slane %v660, 2
        %v662 = vmax.f32 %v660, %v661
        %v663 = vrot.slane %v662, 1
        %v664 = vmax.f32 %v662, %v663
        %v665 = vsel %vm349, %v639, -inf
        %v666 = vrot.slane %v665, 4
        %v667 = vmax.f32 %v665, %v666
        %v668 = vrot.slane %v667, 2
        %v669 = vmax.f32 %v667, %v668
        %v670 = vrot.slane %v669, 1
        %v671 = vmax.f32 %v669, %v670
        %s672 = sld [smem:[#allocation2 + $0x3]]
        %v673 = vstv %s672
        %v674 = vmul.f32 %v673, %v226
        %s675 = sld [smem:[#allocation2 + $0x23]]
        %v676 = vstv %s675
        %v677 = vmul.f32 %v676, %v226
        %679 = vrot.lane.b32.xlu0 %v677, 127
        %v680 = vpop.permute.xlu0 %679
        %v682 = vadd.f32 %v674, %v680
        %s683 = sld [smem:[#allocation2 + $0x43]]
        %v684 = vstv %s683
        %v685 = vmul.f32 %v684, %v226
        %687 = vrot.lane.b32.xlu0 %v685, 126
        %v688 = vpop.permute.xlu0 %687
        %v690 = vadd.f32 %v682, %v688
        %s691 = sld [smem:[#allocation2 + $0x63]]
        %v692 = vstv %s691
        %v693 = vmul.f32 %v692, %v226
        %v694 = vmul.f32 %v692, %v227
        %v697 = vrot.slane %v693, 1
        %v698 = vrot.slane %v694, 1
        %v699 = vsel %vm253, %v697, %v698
        %v701 = vadd.f32 %v690, %v699
        %s702 = sld [smem:[#allocation2 + $0x83]]
        %v703 = vstv %s702
        %v704 = vmul.f32 %v703, %v226
        %v705 = vmul.f32 %v703, %v227
        %v708 = vrot.slane %v704, 1
        %v709 = vrot.slane %v705, 1
        %v710 = vsel %vm253, %v708, %v709
        %711 = vrot.lane.b32.xlu0 %v710, 127
        %v712 = vpop.permute.xlu0 %711
        %v714 = vadd.f32 %v701, %v712
        %s715 = sld [smem:[#allocation2 + $0xa3]]
        %v716 = vstv %s715
        %v717 = vmul.f32 %v716, %v226
        %v718 = vmul.f32 %v716, %v227
        %v721 = vrot.slane %v717, 1
        %v722 = vrot.slane %v718, 1
        %v723 = vsel %vm253, %v721, %v722
        %724 = vrot.lane.b32.xlu0 %v723, 126
        %v725 = vpop.permute.xlu0 %724
        %v727 = vadd.f32 %v714, %v725
        %s728 = sld [smem:[#allocation2 + $0xc3]]
        %v729 = vstv %s728
        %v730 = vmul.f32 %v729, %v226
        %v731 = vmul.f32 %v729, %v227
        %v734 = vrot.slane %v730, 2
        %v735 = vrot.slane %v731, 2
        %v736 = vsel %vm291, %v734, %v735
        %v738 = vadd.f32 %v727, %v736
        %s739 = sld [smem:[#allocation2 + $0xe3]]
        %v740 = vstv %s739
        %v741 = vmul.f32 %v740, %v226
        %v742 = vmul.f32 %v740, %v227
        %v745 = vrot.slane %v741, 2
        %v746 = vrot.slane %v742, 2
        %v747 = vsel %vm291, %v745, %v746
        %748 = vrot.lane.b32.xlu0 %v747, 127
        %v749 = vpop.permute.xlu0 %748
        %v751 = vadd.f32 %v738, %v749
        %s752 = sld [smem:[#allocation2 + $0x103]]
        %v753 = vstv %s752
        %v754 = vmul.f32 %v753, %v226
        %v755 = vmul.f32 %v753, %v227
        %v758 = vrot.slane %v754, 2
        %v759 = vrot.slane %v755, 2
        %v760 = vsel %vm291, %v758, %v759
        %761 = vrot.lane.b32.xlu0 %v760, 126
        %v762 = vpop.permute.xlu0 %761
        %v764 = vadd.f32 %v751, %v762
        %s765 = sld [smem:[#allocation4 + $0x3]]
        %v766 = vstv %s765
        %v767 = vadd.f32 %v764, %v766
        %v768 = vmax.f32 %v767, 0.0
        %v770 = vcombine.high %v768, %v768
        %v772 = vunpack.c.l.s4 1983009808
        %v773 = vunpack.c.0.s8 %v772
        %v774 = vlaneseq
        %v775 = vshrl.u32 %v774, 7
        %v776 = vsub.s32 %v773, %v775
        %v777 = vrot.slane %v768, %v776
        %v779 = vunpack.c.l.s4 1983009808
        %v780 = vunpack.c.0.s8 %v779
        %v781 = vlaneseq
        %v782 = vshrl.u32 %v781, 7
        %v783 = vsub.s32 %v780, %v782
        %v784 = vrot.slane %v770, %v783
        %v785 = vcombine.high %v777, %v777
        %v786 = vcombine.high %v784, %v784
        %v791 = vsel %vm349, %v777, -inf
        %v792 = vrot.slane %v791, 4
        %v793 = vmax.f32 %v791, %v792
        %v794 = vrot.slane %v793, 2
        %v795 = vmax.f32 %v793, %v794
        %v796 = vrot.slane %v795, 1
        %v797 = vmax.f32 %v795, %v796
        %v798 = vsel %vm349, %v785, -inf
        %v799 = vrot.slane %v798, 4
        %v800 = vmax.f32 %v798, %v799
        %v801 = vrot.slane %v800, 2
        %v802 = vmax.f32 %v800, %v801
        %v803 = vrot.slane %v802, 1
        %v804 = vmax.f32 %v802, %v803
        %v805 = vsel %vm349, %v784, -inf
        %v806 = vrot.slane %v805, 4
        %v807 = vmax.f32 %v805, %v806
        %v808 = vrot.slane %v807, 2
        %v809 = vmax.f32 %v807, %v808
        %v810 = vrot.slane %v809, 1
        %v811 = vmax.f32 %v809, %v810
        %v812 = vsel %vm349, %v786, -inf
        %v813 = vrot.slane %v812, 4
        %v814 = vmax.f32 %v812, %v813
        %v815 = vrot.slane %v814, 2
        %v816 = vmax.f32 %v814, %v815
        %v817 = vrot.slane %v816, 1
        %v818 = vmax.f32 %v816, %v817
        %s819 = sld [smem:[#allocation2 + $0x4]]
        %v820 = vstv %s819
        %v821 = vmul.f32 %v820, %v226
        %s822 = sld [smem:[#allocation2 + $0x24]]
        %v823 = vstv %s822
        %v824 = vmul.f32 %v823, %v226
        %826 = vrot.lane.b32.xlu0 %v824, 127
        %v827 = vpop.permute.xlu0 %826
        %v829 = vadd.f32 %v821, %v827
        %s830 = sld [smem:[#allocation2 + $0x44]]
        %v831 = vstv %s830
        %v832 = vmul.f32 %v831, %v226
        %834 = vrot.lane.b32.xlu0 %v832, 126
        %v835 = vpop.permute.xlu0 %834
        %v837 = vadd.f32 %v829, %v835
        %s838 = sld [smem:[#allocation2 + $0x64]]
        %v839 = vstv %s838
        %v840 = vmul.f32 %v839, %v226
        %v841 = vmul.f32 %v839, %v227
        %v844 = vrot.slane %v840, 1
        %v845 = vrot.slane %v841, 1
        %v846 = vsel %vm253, %v844, %v845
        %v848 = vadd.f32 %v837, %v846
        %s849 = sld [smem:[#allocation2 + $0x84]]
        %v850 = vstv %s849
        %v851 = vmul.f32 %v850, %v226
        %v852 = vmul.f32 %v850, %v227
        %v855 = vrot.slane %v851, 1
        %v856 = vrot.slane %v852, 1
        %v857 = vsel %vm253, %v855, %v856
        %858 = vrot.lane.b32.xlu0 %v857, 127
        %v859 = vpop.permute.xlu0 %858
        %v861 = vadd.f32 %v848, %v859
        %s862 = sld [smem:[#allocation2 + $0xa4]]
        %v863 = vstv %s862
        %v864 = vmul.f32 %v863, %v226
        %v865 = vmul.f32 %v863, %v227
        %v868 = vrot.slane %v864, 1
        %v869 = vrot.slane %v865, 1
        %v870 = vsel %vm253, %v868, %v869
        %871 = vrot.lane.b32.xlu0 %v870, 126
        %v872 = vpop.permute.xlu0 %871
        %v874 = vadd.f32 %v861, %v872
        %s875 = sld [smem:[#allocation2 + $0xc4]]
        %v876 = vstv %s875
        %v877 = vmul.f32 %v876, %v226
        %v878 = vmul.f32 %v876, %v227
        %v881 = vrot.slane %v877, 2
        %v882 = vrot.slane %v878, 2
        %v883 = vsel %vm291, %v881, %v882
        %v885 = vadd.f32 %v874, %v883
        %s886 = sld [smem:[#allocation2 + $0xe4]]
        %v887 = vstv %s886
        %v888 = vmul.f32 %v887, %v226
        %v889 = vmul.f32 %v887, %v227
        %v892 = vrot.slane %v888, 2
        %v893 = vrot.slane %v889, 2
        %v894 = vsel %vm291, %v892, %v893
        %895 = vrot.lane.b32.xlu0 %v894, 127
        %v896 = vpop.permute.xlu0 %895
        %v898 = vadd.f32 %v885, %v896
        %s899 = sld [smem:[#allocation2 + $0x104]]
        %v900 = vstv %s899
        %v901 = vmul.f32 %v900, %v226
        %v902 = vmul.f32 %v900, %v227
        %v905 = vrot.slane %v901, 2
        %v906 = vrot.slane %v902, 2
        %v907 = vsel %vm291, %v905, %v906
        %908 = vrot.lane.b32.xlu0 %v907, 126
        %v909 = vpop.permute.xlu0 %908
        %v911 = vadd.f32 %v898, %v909
        %s912 = sld [smem:[#allocation4 + $0x4]]
        %v913 = vstv %s912
        %v914 = vadd.f32 %v911, %v913
        %v915 = vmax.f32 %v914, 0.0
        %v917 = vcombine.high %v915, %v915
        %v919 = vunpack.c.l.s4 1983009808
        %v920 = vunpack.c.0.s8 %v919
        %v921 = vlaneseq
        %v922 = vshrl.u32 %v921, 7
        %v923 = vsub.s32 %v920, %v922
        %v924 = vrot.slane %v915, %v923
        %v926 = vunpack.c.l.s4 1983009808
        %v927 = vunpack.c.0.s8 %v926
        %v928 = vlaneseq
        %v929 = vshrl.u32 %v928, 7
        %v930 = vsub.s32 %v927, %v929
        %v931 = vrot.slane %v917, %v930
        %v932 = vcombine.high %v924, %v924
        %v933 = vcombine.high %v931, %v931
        %v938 = vsel %vm349, %v924, -inf
        %v939 = vrot.slane %v938, 4
        %v940 = vmax.f32 %v938, %v939
        %v941 = vrot.slane %v940, 2
        %v942 = vmax.f32 %v940, %v941
        %v943 = vrot.slane %v942, 1
        %v944 = vmax.f32 %v942, %v943
        %v945 = vsel %vm349, %v932, -inf
        %v946 = vrot.slane %v945, 4
        %v947 = vmax.f32 %v945, %v946
        %v948 = vrot.slane %v947, 2
        %v949 = vmax.f32 %v947, %v948
        %v950 = vrot.slane %v949, 1
        %v951 = vmax.f32 %v949, %v950
        %v952 = vsel %vm349, %v931, -inf
        %v953 = vrot.slane %v952, 4
        %v954 = vmax.f32 %v952, %v953
        %v955 = vrot.slane %v954, 2
        %v956 = vmax.f32 %v954, %v955
        %v957 = vrot.slane %v956, 1
        %v958 = vmax.f32 %v956, %v957
        %v959 = vsel %vm349, %v933, -inf
        %v960 = vrot.slane %v959, 4
        %v961 = vmax.f32 %v959, %v960
        %v962 = vrot.slane %v961, 2
        %v963 = vmax.f32 %v961, %v962
        %v964 = vrot.slane %v963, 1
        %v965 = vmax.f32 %v963, %v964
        %s966 = sld [smem:[#allocation2 + $0x5]]
        %v967 = vstv %s966
        %v968 = vmul.f32 %v967, %v226
        %s969 = sld [smem:[#allocation2 + $0x25]]
        %v970 = vstv %s969
        %v971 = vmul.f32 %v970, %v226
        %973 = vrot.lane.b32.xlu0 %v971, 127
        %v974 = vpop.permute.xlu0 %973
        %v976 = vadd.f32 %v968, %v974
        %s977 = sld [smem:[#allocation2 + $0x45]]
        %v978 = vstv %s977
        %v979 = vmul.f32 %v978, %v226
        %981 = vrot.lane.b32.xlu0 %v979, 126
        %v982 = vpop.permute.xlu0 %981
        %v984 = vadd.f32 %v976, %v982
        %s985 = sld [smem:[#allocation2 + $0x65]]
        %v986 = vstv %s985
        %v987 = vmul.f32 %v986, %v226
        %v988 = vmul.f32 %v986, %v227
        %v991 = vrot.slane %v987, 1
        %v992 = vrot.slane %v988, 1
        %v993 = vsel %vm253, %v991, %v992
        %v995 = vadd.f32 %v984, %v993
        %s996 = sld [smem:[#allocation2 + $0x85]]
        %v997 = vstv %s996
        %v998 = vmul.f32 %v997, %v226
        %v999 = vmul.f32 %v997, %v227
        %v1002 = vrot.slane %v998, 1
        %v1003 = vrot.slane %v999, 1
        %v1004 = vsel %vm253, %v1002, %v1003
        %1005 = vrot.lane.b32.xlu0 %v1004, 127
        %v1006 = vpop.permute.xlu0 %1005
        %v1008 = vadd.f32 %v995, %v1006
        %s1009 = sld [smem:[#allocation2 + $0xa5]]
        %v1010 = vstv %s1009
        %v1011 = vmul.f32 %v1010, %v226
        %v1012 = vmul.f32 %v1010, %v227
        %v1015 = vrot.slane %v1011, 1
        %v1016 = vrot.slane %v1012, 1
        %v1017 = vsel %vm253, %v1015, %v1016
        %1018 = vrot.lane.b32.xlu0 %v1017, 126
        %v1019 = vpop.permute.xlu0 %1018
        %v1021 = vadd.f32 %v1008, %v1019
        %s1022 = sld [smem:[#allocation2 + $0xc5]]
        %v1023 = vstv %s1022
        %v1024 = vmul.f32 %v1023, %v226
        %v1025 = vmul.f32 %v1023, %v227
        %v1028 = vrot.slane %v1024, 2
        %v1029 = vrot.slane %v1025, 2
        %v1030 = vsel %vm291, %v1028, %v1029
        %v1032 = vadd.f32 %v1021, %v1030
        %s1033 = sld [smem:[#allocation2 + $0xe5]]
        %v1034 = vstv %s1033
        %v1035 = vmul.f32 %v1034, %v226
        %v1036 = vmul.f32 %v1034, %v227
        %v1039 = vrot.slane %v1035, 2
        %v1040 = vrot.slane %v1036, 2
        %v1041 = vsel %vm291, %v1039, %v1040
        %1042 = vrot.lane.b32.xlu0 %v1041, 127
        %v1043 = vpop.permute.xlu0 %1042
        %v1045 = vadd.f32 %v1032, %v1043
        %s1046 = sld [smem:[#allocation2 + $0x105]]
        %v1047 = vstv %s1046
        %v1048 = vmul.f32 %v1047, %v226
        %v1049 = vmul.f32 %v1047, %v227
        %v1052 = vrot.slane %v1048, 2
        %v1053 = vrot.slane %v1049, 2
        %v1054 = vsel %vm291, %v1052, %v1053
        %1055 = vrot.lane.b32.xlu0 %v1054, 126
        %v1056 = vpop.permute.xlu0 %1055
        %v1058 = vadd.f32 %v1045, %v1056
        %s1059 = sld [smem:[#allocation4 + $0x5]]
        %v1060 = vstv %s1059
        %v1061 = vadd.f32 %v1058, %v1060
        %v1062 = vmax.f32 %v1061, 0.0
        %v1064 = vcombine.high %v1062, %v1062
        %v1066 = vunpack.c.l.s4 1983009808
        %v1067 = vunpack.c.0.s8 %v1066
        %v1068 = vlaneseq
        %v1069 = vshrl.u32 %v1068, 7
        %v1070 = vsub.s32 %v1067, %v1069
        %v1071 = vrot.slane %v1062, %v1070
        %v1073 = vunpack.c.l.s4 1983009808
        %v1074 = vunpack.c.0.s8 %v1073
        %v1075 = vlaneseq
        %v1076 = vshrl.u32 %v1075, 7
        %v1077 = vsub.s32 %v1074, %v1076
        %v1078 = vrot.slane %v1064, %v1077
        %v1079 = vcombine.high %v1071, %v1071
        %v1080 = vcombine.high %v1078, %v1078
        %v1085 = vsel %vm349, %v1071, -inf
        %v1086 = vrot.slane %v1085, 4
        %v1087 = vmax.f32 %v1085, %v1086
        %v1088 = vrot.slane %v1087, 2
        %v1089 = vmax.f32 %v1087, %v1088
        %v1090 = vrot.slane %v1089, 1
        %v1091 = vmax.f32 %v1089, %v1090
        %v1092 = vsel %vm349, %v1079, -inf
        %v1093 = vrot.slane %v1092, 4
        %v1094 = vmax.f32 %v1092, %v1093
        %v1095 = vrot.slane %v1094, 2
        %v1096 = vmax.f32 %v1094, %v1095
        %v1097 = vrot.slane %v1096, 1
        %v1098 = vmax.f32 %v1096, %v1097
        %v1099 = vsel %vm349, %v1078, -inf
        %v1100 = vrot.slane %v1099, 4
        %v1101 = vmax.f32 %v1099, %v1100
        %v1102 = vrot.slane %v1101, 2
        %v1103 = vmax.f32 %v1101, %v1102
        %v1104 = vrot.slane %v1103, 1
        %v1105 = vmax.f32 %v1103, %v1104
        %v1106 = vsel %vm349, %v1080, -inf
        %v1107 = vrot.slane %v1106, 4
        %v1108 = vmax.f32 %v1106, %v1107
        %v1109 = vrot.slane %v1108, 2
        %v1110 = vmax.f32 %v1108, %v1109
        %v1111 = vrot.slane %v1110, 1
        %v1112 = vmax.f32 %v1110, %v1111
        %s1113 = sld [smem:[#allocation2 + $0x6]]
        %v1114 = vstv %s1113
        %v1115 = vmul.f32 %v1114, %v226
        %s1116 = sld [smem:[#allocation2 + $0x26]]
        %v1117 = vstv %s1116
        %v1118 = vmul.f32 %v1117, %v226
        %1120 = vrot.lane.b32.xlu0 %v1118, 127
        %v1121 = vpop.permute.xlu0 %1120
        %v1123 = vadd.f32 %v1115, %v1121
        %s1124 = sld [smem:[#allocation2 + $0x46]]
        %v1125 = vstv %s1124
        %v1126 = vmul.f32 %v1125, %v226
        %1128 = vrot.lane.b32.xlu0 %v1126, 126
        %v1129 = vpop.permute.xlu0 %1128
        %v1131 = vadd.f32 %v1123, %v1129
        %s1132 = sld [smem:[#allocation2 + $0x66]]
        %v1133 = vstv %s1132
        %v1134 = vmul.f32 %v1133, %v226
        %v1135 = vmul.f32 %v1133, %v227
        %v1138 = vrot.slane %v1134, 1
        %v1139 = vrot.slane %v1135, 1
        %v1140 = vsel %vm253, %v1138, %v1139
        %v1142 = vadd.f32 %v1131, %v1140
        %s1143 = sld [smem:[#allocation2 + $0x86]]
        %v1144 = vstv %s1143
        %v1145 = vmul.f32 %v1144, %v226
        %v1146 = vmul.f32 %v1144, %v227
        %v1149 = vrot.slane %v1145, 1
        %v1150 = vrot.slane %v1146, 1
        %v1151 = vsel %vm253, %v1149, %v1150
        %1152 = vrot.lane.b32.xlu0 %v1151, 127
        %v1153 = vpop.permute.xlu0 %1152
        %v1155 = vadd.f32 %v1142, %v1153
        %s1156 = sld [smem:[#allocation2 + $0xa6]]
        %v1157 = vstv %s1156
        %v1158 = vmul.f32 %v1157, %v226
        %v1159 = vmul.f32 %v1157, %v227
        %v1162 = vrot.slane %v1158, 1
        %v1163 = vrot.slane %v1159, 1
        %v1164 = vsel %vm253, %v1162, %v1163
        %1165 = vrot.lane.b32.xlu0 %v1164, 126
        %v1166 = vpop.permute.xlu0 %1165
        %v1168 = vadd.f32 %v1155, %v1166
        %s1169 = sld [smem:[#allocation2 + $0xc6]]
        %v1170 = vstv %s1169
        %v1171 = vmul.f32 %v1170, %v226
        %v1172 = vmul.f32 %v1170, %v227
        %v1175 = vrot.slane %v1171, 2
        %v1176 = vrot.slane %v1172, 2
        %v1177 = vsel %vm291, %v1175, %v1176
        %v1179 = vadd.f32 %v1168, %v1177
        %s1180 = sld [smem:[#allocation2 + $0xe6]]
        %v1181 = vstv %s1180
        %v1182 = vmul.f32 %v1181, %v226
        %v1183 = vmul.f32 %v1181, %v227
        %v1186 = vrot.slane %v1182, 2
        %v1187 = vrot.slane %v1183, 2
        %v1188 = vsel %vm291, %v1186, %v1187
        %1189 = vrot.lane.b32.xlu0 %v1188, 127
        %v1190 = vpop.permute.xlu0 %1189
        %v1192 = vadd.f32 %v1179, %v1190
        %s1193 = sld [smem:[#allocation2 + $0x106]]
        %v1194 = vstv %s1193
        %v1195 = vmul.f32 %v1194, %v226
        %v1196 = vmul.f32 %v1194, %v227
        %v1199 = vrot.slane %v1195, 2
        %v1200 = vrot.slane %v1196, 2
        %v1201 = vsel %vm291, %v1199, %v1200
        %1202 = vrot.lane.b32.xlu0 %v1201, 126
        %v1203 = vpop.permute.xlu0 %1202
        %v1205 = vadd.f32 %v1192, %v1203
        %s1206 = sld [smem:[#allocation4 + $0x6]]
        %v1207 = vstv %s1206
        %v1208 = vadd.f32 %v1205, %v1207
        %v1209 = vmax.f32 %v1208, 0.0
        %v1211 = vcombine.high %v1209, %v1209
        %v1213 = vunpack.c.l.s4 1983009808
        %v1214 = vunpack.c.0.s8 %v1213
        %v1215 = vlaneseq
        %v1216 = vshrl.u32 %v1215, 7
        %v1217 = vsub.s32 %v1214, %v1216
        %v1218 = vrot.slane %v1209, %v1217
        %v1220 = vunpack.c.l.s4 1983009808
        %v1221 = vunpack.c.0.s8 %v1220
        %v1222 = vlaneseq
        %v1223 = vshrl.u32 %v1222, 7
        %v1224 = vsub.s32 %v1221, %v1223
        %v1225 = vrot.slane %v1211, %v1224
        %v1226 = vcombine.high %v1218, %v1218
        %v1227 = vcombine.high %v1225, %v1225
        %v1232 = vsel %vm349, %v1218, -inf
        %v1233 = vrot.slane %v1232, 4
        %v1234 = vmax.f32 %v1232, %v1233
        %v1235 = vrot.slane %v1234, 2
        %v1236 = vmax.f32 %v1234, %v1235
        %v1237 = vrot.slane %v1236, 1
        %v1238 = vmax.f32 %v1236, %v1237
        %v1239 = vsel %vm349, %v1226, -inf
        %v1240 = vrot.slane %v1239, 4
        %v1241 = vmax.f32 %v1239, %v1240
        %v1242 = vrot.slane %v1241, 2
        %v1243 = vmax.f32 %v1241, %v1242
        %v1244 = vrot.slane %v1243, 1
        %v1245 = vmax.f32 %v1243, %v1244
        %v1246 = vsel %vm349, %v1225, -inf
        %v1247 = vrot.slane %v1246, 4
        %v1248 = vmax.f32 %v1246, %v1247
        %v1249 = vrot.slane %v1248, 2
        %v1250 = vmax.f32 %v1248, %v1249
        %v1251 = vrot.slane %v1250, 1
        %v1252 = vmax.f32 %v1250, %v1251
        %v1253 = vsel %vm349, %v1227, -inf
        %v1254 = vrot.slane %v1253, 4
        %v1255 = vmax.f32 %v1253, %v1254
        %v1256 = vrot.slane %v1255, 2
        %v1257 = vmax.f32 %v1255, %v1256
        %v1258 = vrot.slane %v1257, 1
        %v1259 = vmax.f32 %v1257, %v1258
        %s1260 = sld [smem:[#allocation2 + $0x7]]
        %v1261 = vstv %s1260
        %v1262 = vmul.f32 %v1261, %v226
        %s1263 = sld [smem:[#allocation2 + $0x27]]
        %v1264 = vstv %s1263
        %v1265 = vmul.f32 %v1264, %v226
        %1267 = vrot.lane.b32.xlu0 %v1265, 127
        %v1268 = vpop.permute.xlu0 %1267
        %v1270 = vadd.f32 %v1262, %v1268
        %s1271 = sld [smem:[#allocation2 + $0x47]]
        %v1272 = vstv %s1271
        %v1273 = vmul.f32 %v1272, %v226
        %1275 = vrot.lane.b32.xlu0 %v1273, 126
        %v1276 = vpop.permute.xlu0 %1275
        %v1278 = vadd.f32 %v1270, %v1276
        %s1279 = sld [smem:[#allocation2 + $0x67]]
        %v1280 = vstv %s1279
        %v1281 = vmul.f32 %v1280, %v226
        %v1282 = vmul.f32 %v1280, %v227
        %v1285 = vrot.slane %v1281, 1
        %v1286 = vrot.slane %v1282, 1
        %v1287 = vsel %vm253, %v1285, %v1286
        %v1289 = vadd.f32 %v1278, %v1287
        %s1290 = sld [smem:[#allocation2 + $0x87]]
        %v1291 = vstv %s1290
        %v1292 = vmul.f32 %v1291, %v226
        %v1293 = vmul.f32 %v1291, %v227
        %v1296 = vrot.slane %v1292, 1
        %v1297 = vrot.slane %v1293, 1
        %v1298 = vsel %vm253, %v1296, %v1297
        %1299 = vrot.lane.b32.xlu0 %v1298, 127
        %v1300 = vpop.permute.xlu0 %1299
        %v1302 = vadd.f32 %v1289, %v1300
        %s1303 = sld [smem:[#allocation2 + $0xa7]]
        %v1304 = vstv %s1303
        %v1305 = vmul.f32 %v1304, %v226
        %v1306 = vmul.f32 %v1304, %v227
        %v1309 = vrot.slane %v1305, 1
        %v1310 = vrot.slane %v1306, 1
        %v1311 = vsel %vm253, %v1309, %v1310
        %1312 = vrot.lane.b32.xlu0 %v1311, 126
        %v1313 = vpop.permute.xlu0 %1312
        %v1315 = vadd.f32 %v1302, %v1313
        %s1316 = sld [smem:[#allocation2 + $0xc7]]
        %v1317 = vstv %s1316
        %v1318 = vmul.f32 %v1317, %v226
        %v1319 = vmul.f32 %v1317, %v227
        %v1322 = vrot.slane %v1318, 2
        %v1323 = vrot.slane %v1319, 2
        %v1324 = vsel %vm291, %v1322, %v1323
        %v1326 = vadd.f32 %v1315, %v1324
        %s1327 = sld [smem:[#allocation2 + $0xe7]]
        %v1328 = vstv %s1327
        %v1329 = vmul.f32 %v1328, %v226
        %v1330 = vmul.f32 %v1328, %v227
        %v1333 = vrot.slane %v1329, 2
        %v1334 = vrot.slane %v1330, 2
        %v1335 = vsel %vm291, %v1333, %v1334
        %1336 = vrot.lane.b32.xlu0 %v1335, 127
        %v1337 = vpop.permute.xlu0 %1336
        %v1339 = vadd.f32 %v1326, %v1337
        %s1340 = sld [smem:[#allocation2 + $0x107]]
        %v1341 = vstv %s1340
        %v1342 = vmul.f32 %v1341, %v226
        %v1343 = vmul.f32 %v1341, %v227
        %v1346 = vrot.slane %v1342, 2
        %v1347 = vrot.slane %v1343, 2
        %v1348 = vsel %vm291, %v1346, %v1347
        %1349 = vrot.lane.b32.xlu0 %v1348, 126
        %v1350 = vpop.permute.xlu0 %1349
        %v1352 = vadd.f32 %v1339, %v1350
        %s1353 = sld [smem:[#allocation4 + $0x7]]
        %v1354 = vstv %s1353
        %v1355 = vadd.f32 %v1352, %v1354
        %v1356 = vmax.f32 %v1355, 0.0
        %v1358 = vcombine.high %v1356, %v1356
        %v1360 = vunpack.c.l.s4 1983009808
        %v1361 = vunpack.c.0.s8 %v1360
        %v1362 = vlaneseq
        %v1363 = vshrl.u32 %v1362, 7
        %v1364 = vsub.s32 %v1361, %v1363
        %v1365 = vrot.slane %v1356, %v1364
        %v1367 = vunpack.c.l.s4 1983009808
        %v1368 = vunpack.c.0.s8 %v1367
        %v1369 = vlaneseq
        %v1370 = vshrl.u32 %v1369, 7
        %v1371 = vsub.s32 %v1368, %v1370
        %v1372 = vrot.slane %v1358, %v1371
        %v1373 = vcombine.high %v1365, %v1365
        %v1374 = vcombine.high %v1372, %v1372
        %v1379 = vsel %vm349, %v1365, -inf
        %v1380 = vrot.slane %v1379, 4
        %v1381 = vmax.f32 %v1379, %v1380
        %v1382 = vrot.slane %v1381, 2
        %v1383 = vmax.f32 %v1381, %v1382
        %v1384 = vrot.slane %v1383, 1
        %v1385 = vmax.f32 %v1383, %v1384
        %v1386 = vsel %vm349, %v1373, -inf
        %v1387 = vrot.slane %v1386, 4
        %v1388 = vmax.f32 %v1386, %v1387
        %v1389 = vrot.slane %v1388, 2
        %v1390 = vmax.f32 %v1388, %v1389
        %v1391 = vrot.slane %v1390, 1
        %v1392 = vmax.f32 %v1390, %v1391
        %v1393 = vsel %vm349, %v1372, -inf
        %v1394 = vrot.slane %v1393, 4
        %v1395 = vmax.f32 %v1393, %v1394
        %v1396 = vrot.slane %v1395, 2
        %v1397 = vmax.f32 %v1395, %v1396
        %v1398 = vrot.slane %v1397, 1
        %v1399 = vmax.f32 %v1397, %v1398
        %v1400 = vsel %vm349, %v1374, -inf
        %v1401 = vrot.slane %v1400, 4
        %v1402 = vmax.f32 %v1400, %v1401
        %v1403 = vrot.slane %v1402, 2
        %v1404 = vmax.f32 %v1402, %v1403
        %v1405 = vrot.slane %v1404, 1
        %v1406 = vmax.f32 %v1404, %v1405
        %s1407 = sld [smem:[#allocation2 + $0x8]]
        %v1408 = vstv %s1407
        %v1409 = vmul.f32 %v1408, %v226
        %s1410 = sld [smem:[#allocation2 + $0x28]]
        %v1411 = vstv %s1410
        %v1412 = vmul.f32 %v1411, %v226
        %1414 = vrot.lane.b32.xlu0 %v1412, 127
        %v1415 = vpop.permute.xlu0 %1414
        %v1417 = vadd.f32 %v1409, %v1415
        %s1418 = sld [smem:[#allocation2 + $0x48]]
        %v1419 = vstv %s1418
        %v1420 = vmul.f32 %v1419, %v226
        %1422 = vrot.lane.b32.xlu0 %v1420, 126
        %v1423 = vpop.permute.xlu0 %1422
        %v1425 = vadd.f32 %v1417, %v1423
        %s1426 = sld [smem:[#allocation2 + $0x68]]
        %v1427 = vstv %s1426
        %v1428 = vmul.f32 %v1427, %v226
        %v1429 = vmul.f32 %v1427, %v227
        %v1432 = vrot.slane %v1428, 1
        %v1433 = vrot.slane %v1429, 1
        %v1434 = vsel %vm253, %v1432, %v1433
        %v1436 = vadd.f32 %v1425, %v1434
        %s1437 = sld [smem:[#allocation2 + $0x88]]
        %v1438 = vstv %s1437
        %v1439 = vmul.f32 %v1438, %v226
        %v1440 = vmul.f32 %v1438, %v227
        %v1443 = vrot.slane %v1439, 1
        %v1444 = vrot.slane %v1440, 1
        %v1445 = vsel %vm253, %v1443, %v1444
        %1446 = vrot.lane.b32.xlu0 %v1445, 127
        %v1447 = vpop.permute.xlu0 %1446
        %v1449 = vadd.f32 %v1436, %v1447
        %s1450 = sld [smem:[#allocation2 + $0xa8]]
        %v1451 = vstv %s1450
        %v1452 = vmul.f32 %v1451, %v226
        %v1453 = vmul.f32 %v1451, %v227
        %v1456 = vrot.slane %v1452, 1
        %v1457 = vrot.slane %v1453, 1
        %v1458 = vsel %vm253, %v1456, %v1457
        %1459 = vrot.lane.b32.xlu0 %v1458, 126
        %v1460 = vpop.permute.xlu0 %1459
        %v1462 = vadd.f32 %v1449, %v1460
        %s1463 = sld [smem:[#allocation2 + $0xc8]]
        %v1464 = vstv %s1463
        %v1465 = vmul.f32 %v1464, %v226
        %v1466 = vmul.f32 %v1464, %v227
        %v1469 = vrot.slane %v1465, 2
        %v1470 = vrot.slane %v1466, 2
        %v1471 = vsel %vm291, %v1469, %v1470
        %v1473 = vadd.f32 %v1462, %v1471
        %s1474 = sld [smem:[#allocation2 + $0xe8]]
        %v1475 = vstv %s1474
        %v1476 = vmul.f32 %v1475, %v226
        %v1477 = vmul.f32 %v1475, %v227
        %v1480 = vrot.slane %v1476, 2
        %v1481 = vrot.slane %v1477, 2
        %v1482 = vsel %vm291, %v1480, %v1481
        %1483 = vrot.lane.b32.xlu0 %v1482, 127
        %v1484 = vpop.permute.xlu0 %1483
        %v1486 = vadd.f32 %v1473, %v1484
        %s1487 = sld [smem:[#allocation2 + $0x108]]
        %v1488 = vstv %s1487
        %v1489 = vmul.f32 %v1488, %v226
        %v1490 = vmul.f32 %v1488, %v227
        %v1493 = vrot.slane %v1489, 2
        %v1494 = vrot.slane %v1490, 2
        %v1495 = vsel %vm291, %v1493, %v1494
        %1496 = vrot.lane.b32.xlu0 %v1495, 126
        %v1497 = vpop.permute.xlu0 %1496
        %v1499 = vadd.f32 %v1486, %v1497
        %s1500 = sld [smem:[#allocation4 + $0x8]]
        %v1501 = vstv %s1500
        %v1502 = vadd.f32 %v1499, %v1501
        %v1503 = vmax.f32 %v1502, 0.0
        %v1505 = vcombine.high %v1503, %v1503
        %v1507 = vunpack.c.l.s4 1983009808
        %v1508 = vunpack.c.0.s8 %v1507
        %v1509 = vlaneseq
        %v1510 = vshrl.u32 %v1509, 7
        %v1511 = vsub.s32 %v1508, %v1510
        %v1512 = vrot.slane %v1503, %v1511
        %v1514 = vunpack.c.l.s4 1983009808
        %v1515 = vunpack.c.0.s8 %v1514
        %v1516 = vlaneseq
        %v1517 = vshrl.u32 %v1516, 7
        %v1518 = vsub.s32 %v1515, %v1517
        %v1519 = vrot.slane %v1505, %v1518
        %v1520 = vcombine.high %v1512, %v1512
        %v1521 = vcombine.high %v1519, %v1519
        %v1526 = vsel %vm349, %v1512, -inf
        %v1527 = vrot.slane %v1526, 4
        %v1528 = vmax.f32 %v1526, %v1527
        %v1529 = vrot.slane %v1528, 2
        %v1530 = vmax.f32 %v1528, %v1529
        %v1531 = vrot.slane %v1530, 1
        %v1532 = vmax.f32 %v1530, %v1531
        %v1533 = vsel %vm349, %v1520, -inf
        %v1534 = vrot.slane %v1533, 4
        %v1535 = vmax.f32 %v1533, %v1534
        %v1536 = vrot.slane %v1535, 2
        %v1537 = vmax.f32 %v1535, %v1536
        %v1538 = vrot.slane %v1537, 1
        %v1539 = vmax.f32 %v1537, %v1538
        %v1540 = vsel %vm349, %v1519, -inf
        %v1541 = vrot.slane %v1540, 4
        %v1542 = vmax.f32 %v1540, %v1541
        %v1543 = vrot.slane %v1542, 2
        %v1544 = vmax.f32 %v1542, %v1543
        %v1545 = vrot.slane %v1544, 1
        %v1546 = vmax.f32 %v1544, %v1545
        %v1547 = vsel %vm349, %v1521, -inf
        %v1548 = vrot.slane %v1547, 4
        %v1549 = vmax.f32 %v1547, %v1548
        %v1550 = vrot.slane %v1549, 2
        %v1551 = vmax.f32 %v1549, %v1550
        %v1552 = vrot.slane %v1551, 1
        %v1553 = vmax.f32 %v1551, %v1552
        %s1554 = sld [smem:[#allocation2 + $0x9]]
        %v1555 = vstv %s1554
        %v1556 = vmul.f32 %v1555, %v226
        %s1557 = sld [smem:[#allocation2 + $0x29]]
        %v1558 = vstv %s1557
        %v1559 = vmul.f32 %v1558, %v226
        %1561 = vrot.lane.b32.xlu0 %v1559, 127
        %v1562 = vpop.permute.xlu0 %1561
        %v1564 = vadd.f32 %v1556, %v1562
        %s1565 = sld [smem:[#allocation2 + $0x49]]
        %v1566 = vstv %s1565
        %v1567 = vmul.f32 %v1566, %v226
        %1569 = vrot.lane.b32.xlu0 %v1567, 126
        %v1570 = vpop.permute.xlu0 %1569
        %v1572 = vadd.f32 %v1564, %v1570
        %s1573 = sld [smem:[#allocation2 + $0x69]]
        %v1574 = vstv %s1573
        %v1575 = vmul.f32 %v1574, %v226
        %v1576 = vmul.f32 %v1574, %v227
        %v1579 = vrot.slane %v1575, 1
        %v1580 = vrot.slane %v1576, 1
        %v1581 = vsel %vm253, %v1579, %v1580
        %v1583 = vadd.f32 %v1572, %v1581
        %s1584 = sld [smem:[#allocation2 + $0x89]]
        %v1585 = vstv %s1584
        %v1586 = vmul.f32 %v1585, %v226
        %v1587 = vmul.f32 %v1585, %v227
        %v1590 = vrot.slane %v1586, 1
        %v1591 = vrot.slane %v1587, 1
        %v1592 = vsel %vm253, %v1590, %v1591
        %1593 = vrot.lane.b32.xlu0 %v1592, 127
        %v1594 = vpop.permute.xlu0 %1593
        %v1596 = vadd.f32 %v1583, %v1594
        %s1597 = sld [smem:[#allocation2 + $0xa9]]
        %v1598 = vstv %s1597
        %v1599 = vmul.f32 %v1598, %v226
        %v1600 = vmul.f32 %v1598, %v227
        %v1603 = vrot.slane %v1599, 1
        %v1604 = vrot.slane %v1600, 1
        %v1605 = vsel %vm253, %v1603, %v1604
        %1606 = vrot.lane.b32.xlu0 %v1605, 126
        %v1607 = vpop.permute.xlu0 %1606
        %v1609 = vadd.f32 %v1596, %v1607
        %s1610 = sld [smem:[#allocation2 + $0xc9]]
        %v1611 = vstv %s1610
        %v1612 = vmul.f32 %v1611, %v226
        %v1613 = vmul.f32 %v1611, %v227
        %v1616 = vrot.slane %v1612, 2
        %v1617 = vrot.slane %v1613, 2
        %v1618 = vsel %vm291, %v1616, %v1617
        %v1620 = vadd.f32 %v1609, %v1618
        %s1621 = sld [smem:[#allocation2 + $0xe9]]
        %v1622 = vstv %s1621
        %v1623 = vmul.f32 %v1622, %v226
        %v1624 = vmul.f32 %v1622, %v227
        %v1627 = vrot.slane %v1623, 2
        %v1628 = vrot.slane %v1624, 2
        %v1629 = vsel %vm291, %v1627, %v1628
        %1630 = vrot.lane.b32.xlu0 %v1629, 127
        %v1631 = vpop.permute.xlu0 %1630
        %v1633 = vadd.f32 %v1620, %v1631
        %s1634 = sld [smem:[#allocation2 + $0x109]]
        %v1635 = vstv %s1634
        %v1636 = vmul.f32 %v1635, %v226
        %v1637 = vmul.f32 %v1635, %v227
        %v1640 = vrot.slane %v1636, 2
        %v1641 = vrot.slane %v1637, 2
        %v1642 = vsel %vm291, %v1640, %v1641
        %1643 = vrot.lane.b32.xlu0 %v1642, 126
        %v1644 = vpop.permute.xlu0 %1643
        %v1646 = vadd.f32 %v1633, %v1644
        %s1647 = sld [smem:[#allocation4 + $0x9]]
        %v1648 = vstv %s1647
        %v1649 = vadd.f32 %v1646, %v1648
        %v1650 = vmax.f32 %v1649, 0.0
        %v1652 = vcombine.high %v1650, %v1650
        %v1654 = vunpack.c.l.s4 1983009808
        %v1655 = vunpack.c.0.s8 %v1654
        %v1656 = vlaneseq
        %v1657 = vshrl.u32 %v1656, 7
        %v1658 = vsub.s32 %v1655, %v1657
        %v1659 = vrot.slane %v1650, %v1658
        %v1661 = vunpack.c.l.s4 1983009808
        %v1662 = vunpack.c.0.s8 %v1661
        %v1663 = vlaneseq
        %v1664 = vshrl.u32 %v1663, 7
        %v1665 = vsub.s32 %v1662, %v1664
        %v1666 = vrot.slane %v1652, %v1665
        %v1667 = vcombine.high %v1659, %v1659
        %v1668 = vcombine.high %v1666, %v1666
        %v1673 = vsel %vm349, %v1659, -inf
        %v1674 = vrot.slane %v1673, 4
        %v1675 = vmax.f32 %v1673, %v1674
        %v1676 = vrot.slane %v1675, 2
        %v1677 = vmax.f32 %v1675, %v1676
        %v1678 = vrot.slane %v1677, 1
        %v1679 = vmax.f32 %v1677, %v1678
        %v1680 = vsel %vm349, %v1667, -inf
        %v1681 = vrot.slane %v1680, 4
        %v1682 = vmax.f32 %v1680, %v1681
        %v1683 = vrot.slane %v1682, 2
        %v1684 = vmax.f32 %v1682, %v1683
        %v1685 = vrot.slane %v1684, 1
        %v1686 = vmax.f32 %v1684, %v1685
        %v1687 = vsel %vm349, %v1666, -inf
        %v1688 = vrot.slane %v1687, 4
        %v1689 = vmax.f32 %v1687, %v1688
        %v1690 = vrot.slane %v1689, 2
        %v1691 = vmax.f32 %v1689, %v1690
        %v1692 = vrot.slane %v1691, 1
        %v1693 = vmax.f32 %v1691, %v1692
        %v1694 = vsel %vm349, %v1668, -inf
        %v1695 = vrot.slane %v1694, 4
        %v1696 = vmax.f32 %v1694, %v1695
        %v1697 = vrot.slane %v1696, 2
        %v1698 = vmax.f32 %v1696, %v1697
        %v1699 = vrot.slane %v1698, 1
        %v1700 = vmax.f32 %v1698, %v1699
        %s1701 = sld [smem:[#allocation2 + $0xa]]
        %v1702 = vstv %s1701
        %v1703 = vmul.f32 %v1702, %v226
        %s1704 = sld [smem:[#allocation2 + $0x2a]]
        %v1705 = vstv %s1704
        %v1706 = vmul.f32 %v1705, %v226
        %1708 = vrot.lane.b32.xlu0 %v1706, 127
        %v1709 = vpop.permute.xlu0 %1708
        %v1711 = vadd.f32 %v1703, %v1709
        %s1712 = sld [smem:[#allocation2 + $0x4a]]
        %v1713 = vstv %s1712
        %v1714 = vmul.f32 %v1713, %v226
        %1716 = vrot.lane.b32.xlu0 %v1714, 126
        %v1717 = vpop.permute.xlu0 %1716
        %v1719 = vadd.f32 %v1711, %v1717
        %s1720 = sld [smem:[#allocation2 + $0x6a]]
        %v1721 = vstv %s1720
        %v1722 = vmul.f32 %v1721, %v226
        %v1723 = vmul.f32 %v1721, %v227
        %v1726 = vrot.slane %v1722, 1
        %v1727 = vrot.slane %v1723, 1
        %v1728 = vsel %vm253, %v1726, %v1727
        %v1730 = vadd.f32 %v1719, %v1728
        %s1731 = sld [smem:[#allocation2 + $0x8a]]
        %v1732 = vstv %s1731
        %v1733 = vmul.f32 %v1732, %v226
        %v1734 = vmul.f32 %v1732, %v227
        %v1737 = vrot.slane %v1733, 1
        %v1738 = vrot.slane %v1734, 1
        %v1739 = vsel %vm253, %v1737, %v1738
        %1740 = vrot.lane.b32.xlu0 %v1739, 127
        %v1741 = vpop.permute.xlu0 %1740
        %v1743 = vadd.f32 %v1730, %v1741
        %s1744 = sld [smem:[#allocation2 + $0xaa]]
        %v1745 = vstv %s1744
        %v1746 = vmul.f32 %v1745, %v226
        %v1747 = vmul.f32 %v1745, %v227
        %v1750 = vrot.slane %v1746, 1
        %v1751 = vrot.slane %v1747, 1
        %v1752 = vsel %vm253, %v1750, %v1751
        %1753 = vrot.lane.b32.xlu0 %v1752, 126
        %v1754 = vpop.permute.xlu0 %1753
        %v1756 = vadd.f32 %v1743, %v1754
        %s1757 = sld [smem:[#allocation2 + $0xca]]
        %v1758 = vstv %s1757
        %v1759 = vmul.f32 %v1758, %v226
        %v1760 = vmul.f32 %v1758, %v227
        %v1763 = vrot.slane %v1759, 2
        %v1764 = vrot.slane %v1760, 2
        %v1765 = vsel %vm291, %v1763, %v1764
        %v1767 = vadd.f32 %v1756, %v1765
        %s1768 = sld [smem:[#allocation2 + $0xea]]
        %v1769 = vstv %s1768
        %v1770 = vmul.f32 %v1769, %v226
        %v1771 = vmul.f32 %v1769, %v227
        %v1774 = vrot.slane %v1770, 2
        %v1775 = vrot.slane %v1771, 2
        %v1776 = vsel %vm291, %v1774, %v1775
        %1777 = vrot.lane.b32.xlu0 %v1776, 127
        %v1778 = vpop.permute.xlu0 %1777
        %v1780 = vadd.f32 %v1767, %v1778
        %s1781 = sld [smem:[#allocation2 + $0x10a]]
        %v1782 = vstv %s1781
        %v1783 = vmul.f32 %v1782, %v226
        %v1784 = vmul.f32 %v1782, %v227
        %v1787 = vrot.slane %v1783, 2
        %v1788 = vrot.slane %v1784, 2
        %v1789 = vsel %vm291, %v1787, %v1788
        %1790 = vrot.lane.b32.xlu0 %v1789, 126
        %v1791 = vpop.permute.xlu0 %1790
        %v1793 = vadd.f32 %v1780, %v1791
        %s1794 = sld [smem:[#allocation4 + $0xa]]
        %v1795 = vstv %s1794
        %v1796 = vadd.f32 %v1793, %v1795
        %v1797 = vmax.f32 %v1796, 0.0
        %v1799 = vcombine.high %v1797, %v1797
        %v1801 = vunpack.c.l.s4 1983009808
        %v1802 = vunpack.c.0.s8 %v1801
        %v1803 = vlaneseq
        %v1804 = vshrl.u32 %v1803, 7
        %v1805 = vsub.s32 %v1802, %v1804
        %v1806 = vrot.slane %v1797, %v1805
        %v1808 = vunpack.c.l.s4 1983009808
        %v1809 = vunpack.c.0.s8 %v1808
        %v1810 = vlaneseq
        %v1811 = vshrl.u32 %v1810, 7
        %v1812 = vsub.s32 %v1809, %v1811
        %v1813 = vrot.slane %v1799, %v1812
        %v1814 = vcombine.high %v1806, %v1806
        %v1815 = vcombine.high %v1813, %v1813
        %v1820 = vsel %vm349, %v1806, -inf
        %v1821 = vrot.slane %v1820, 4
        %v1822 = vmax.f32 %v1820, %v1821
        %v1823 = vrot.slane %v1822, 2
        %v1824 = vmax.f32 %v1822, %v1823
        %v1825 = vrot.slane %v1824, 1
        %v1826 = vmax.f32 %v1824, %v1825
        %v1827 = vsel %vm349, %v1814, -inf
        %v1828 = vrot.slane %v1827, 4
        %v1829 = vmax.f32 %v1827, %v1828
        %v1830 = vrot.slane %v1829, 2
        %v1831 = vmax.f32 %v1829, %v1830
        %v1832 = vrot.slane %v1831, 1
        %v1833 = vmax.f32 %v1831, %v1832
        %v1834 = vsel %vm349, %v1813, -inf
        %v1835 = vrot.slane %v1834, 4
        %v1836 = vmax.f32 %v1834, %v1835
        %v1837 = vrot.slane %v1836, 2
        %v1838 = vmax.f32 %v1836, %v1837
        %v1839 = vrot.slane %v1838, 1
        %v1840 = vmax.f32 %v1838, %v1839
        %v1841 = vsel %vm349, %v1815, -inf
        %v1842 = vrot.slane %v1841, 4
        %v1843 = vmax.f32 %v1841, %v1842
        %v1844 = vrot.slane %v1843, 2
        %v1845 = vmax.f32 %v1843, %v1844
        %v1846 = vrot.slane %v1845, 1
        %v1847 = vmax.f32 %v1845, %v1846
        %s1848 = sld [smem:[#allocation2 + $0xb]]
        %v1849 = vstv %s1848
        %v1850 = vmul.f32 %v1849, %v226
        %s1851 = sld [smem:[#allocation2 + $0x2b]]
        %v1852 = vstv %s1851
        %v1853 = vmul.f32 %v1852, %v226
        %1855 = vrot.lane.b32.xlu0 %v1853, 127
        %v1856 = vpop.permute.xlu0 %1855
        %v1858 = vadd.f32 %v1850, %v1856
        %s1859 = sld [smem:[#allocation2 + $0x4b]]
        %v1860 = vstv %s1859
        %v1861 = vmul.f32 %v1860, %v226
        %1863 = vrot.lane.b32.xlu0 %v1861, 126
        %v1864 = vpop.permute.xlu0 %1863
        %v1866 = vadd.f32 %v1858, %v1864
        %s1867 = sld [smem:[#allocation2 + $0x6b]]
        %v1868 = vstv %s1867
        %v1869 = vmul.f32 %v1868, %v226
        %v1870 = vmul.f32 %v1868, %v227
        %v1873 = vrot.slane %v1869, 1
        %v1874 = vrot.slane %v1870, 1
        %v1875 = vsel %vm253, %v1873, %v1874
        %v1877 = vadd.f32 %v1866, %v1875
        %s1878 = sld [smem:[#allocation2 + $0x8b]]
        %v1879 = vstv %s1878
        %v1880 = vmul.f32 %v1879, %v226
        %v1881 = vmul.f32 %v1879, %v227
        %v1884 = vrot.slane %v1880, 1
        %v1885 = vrot.slane %v1881, 1
        %v1886 = vsel %vm253, %v1884, %v1885
        %1887 = vrot.lane.b32.xlu0 %v1886, 127
        %v1888 = vpop.permute.xlu0 %1887
        %v1890 = vadd.f32 %v1877, %v1888
        %s1891 = sld [smem:[#allocation2 + $0xab]]
        %v1892 = vstv %s1891
        %v1893 = vmul.f32 %v1892, %v226
        %v1894 = vmul.f32 %v1892, %v227
        %v1897 = vrot.slane %v1893, 1
        %v1898 = vrot.slane %v1894, 1
        %v1899 = vsel %vm253, %v1897, %v1898
        %1900 = vrot.lane.b32.xlu0 %v1899, 126
        %v1901 = vpop.permute.xlu0 %1900
        %v1903 = vadd.f32 %v1890, %v1901
        %s1904 = sld [smem:[#allocation2 + $0xcb]]
        %v1905 = vstv %s1904
        %v1906 = vmul.f32 %v1905, %v226
        %v1907 = vmul.f32 %v1905, %v227
        %v1910 = vrot.slane %v1906, 2
        %v1911 = vrot.slane %v1907, 2
        %v1912 = vsel %vm291, %v1910, %v1911
        %v1914 = vadd.f32 %v1903, %v1912
        %s1915 = sld [smem:[#allocation2 + $0xeb]]
        %v1916 = vstv %s1915
        %v1917 = vmul.f32 %v1916, %v226
        %v1918 = vmul.f32 %v1916, %v227
        %v1921 = vrot.slane %v1917, 2
        %v1922 = vrot.slane %v1918, 2
        %v1923 = vsel %vm291, %v1921, %v1922
        %1924 = vrot.lane.b32.xlu0 %v1923, 127
        %v1925 = vpop.permute.xlu0 %1924
        %v1927 = vadd.f32 %v1914, %v1925
        %s1928 = sld [smem:[#allocation2 + $0x10b]]
        %v1929 = vstv %s1928
        %v1930 = vmul.f32 %v1929, %v226
        %v1931 = vmul.f32 %v1929, %v227
        %v1934 = vrot.slane %v1930, 2
        %v1935 = vrot.slane %v1931, 2
        %v1936 = vsel %vm291, %v1934, %v1935
        %1937 = vrot.lane.b32.xlu0 %v1936, 126
        %v1938 = vpop.permute.xlu0 %1937
        %v1940 = vadd.f32 %v1927, %v1938
        %s1941 = sld [smem:[#allocation4 + $0xb]]
        %v1942 = vstv %s1941
        %v1943 = vadd.f32 %v1940, %v1942
        %v1944 = vmax.f32 %v1943, 0.0
        %v1946 = vcombine.high %v1944, %v1944
        %v1948 = vunpack.c.l.s4 1983009808
        %v1949 = vunpack.c.0.s8 %v1948
        %v1950 = vlaneseq
        %v1951 = vshrl.u32 %v1950, 7
        %v1952 = vsub.s32 %v1949, %v1951
        %v1953 = vrot.slane %v1944, %v1952
        %v1955 = vunpack.c.l.s4 1983009808
        %v1956 = vunpack.c.0.s8 %v1955
        %v1957 = vlaneseq
        %v1958 = vshrl.u32 %v1957, 7
        %v1959 = vsub.s32 %v1956, %v1958
        %v1960 = vrot.slane %v1946, %v1959
        %v1961 = vcombine.high %v1953, %v1953
        %v1962 = vcombine.high %v1960, %v1960
        %v1967 = vsel %vm349, %v1953, -inf
        %v1968 = vrot.slane %v1967, 4
        %v1969 = vmax.f32 %v1967, %v1968
        %v1970 = vrot.slane %v1969, 2
        %v1971 = vmax.f32 %v1969, %v1970
        %v1972 = vrot.slane %v1971, 1
        %v1973 = vmax.f32 %v1971, %v1972
        %v1974 = vsel %vm349, %v1961, -inf
        %v1975 = vrot.slane %v1974, 4
        %v1976 = vmax.f32 %v1974, %v1975
        %v1977 = vrot.slane %v1976, 2
        %v1978 = vmax.f32 %v1976, %v1977
        %v1979 = vrot.slane %v1978, 1
        %v1980 = vmax.f32 %v1978, %v1979
        %v1981 = vsel %vm349, %v1960, -inf
        %v1982 = vrot.slane %v1981, 4
        %v1983 = vmax.f32 %v1981, %v1982
        %v1984 = vrot.slane %v1983, 2
        %v1985 = vmax.f32 %v1983, %v1984
        %v1986 = vrot.slane %v1985, 1
        %v1987 = vmax.f32 %v1985, %v1986
        %v1988 = vsel %vm349, %v1962, -inf
        %v1989 = vrot.slane %v1988, 4
        %v1990 = vmax.f32 %v1988, %v1989
        %v1991 = vrot.slane %v1990, 2
        %v1992 = vmax.f32 %v1990, %v1991
        %v1993 = vrot.slane %v1992, 1
        %v1994 = vmax.f32 %v1992, %v1993
        %s1995 = sld [smem:[#allocation2 + $0xc]]
        %v1996 = vstv %s1995
        %v1997 = vmul.f32 %v1996, %v226
        %s1998 = sld [smem:[#allocation2 + $0x2c]]
        %v1999 = vstv %s1998
        %v2000 = vmul.f32 %v1999, %v226
        %2002 = vrot.lane.b32.xlu0 %v2000, 127
        %v2003 = vpop.permute.xlu0 %2002
        %v2005 = vadd.f32 %v1997, %v2003
        %s2006 = sld [smem:[#allocation2 + $0x4c]]
        %v2007 = vstv %s2006
        %v2008 = vmul.f32 %v2007, %v226
        %2010 = vrot.lane.b32.xlu0 %v2008, 126
        %v2011 = vpop.permute.xlu0 %2010
        %v2013 = vadd.f32 %v2005, %v2011
        %s2014 = sld [smem:[#allocation2 + $0x6c]]
        %v2015 = vstv %s2014
        %v2016 = vmul.f32 %v2015, %v226
        %v2017 = vmul.f32 %v2015, %v227
        %v2020 = vrot.slane %v2016, 1
        %v2021 = vrot.slane %v2017, 1
        %v2022 = vsel %vm253, %v2020, %v2021
        %v2024 = vadd.f32 %v2013, %v2022
        %s2025 = sld [smem:[#allocation2 + $0x8c]]
        %v2026 = vstv %s2025
        %v2027 = vmul.f32 %v2026, %v226
        %v2028 = vmul.f32 %v2026, %v227
        %v2031 = vrot.slane %v2027, 1
        %v2032 = vrot.slane %v2028, 1
        %v2033 = vsel %vm253, %v2031, %v2032
        %2034 = vrot.lane.b32.xlu0 %v2033, 127
        %v2035 = vpop.permute.xlu0 %2034
        %v2037 = vadd.f32 %v2024, %v2035
        %s2038 = sld [smem:[#allocation2 + $0xac]]
        %v2039 = vstv %s2038
        %v2040 = vmul.f32 %v2039, %v226
        %v2041 = vmul.f32 %v2039, %v227
        %v2044 = vrot.slane %v2040, 1
        %v2045 = vrot.slane %v2041, 1
        %v2046 = vsel %vm253, %v2044, %v2045
        %2047 = vrot.lane.b32.xlu0 %v2046, 126
        %v2048 = vpop.permute.xlu0 %2047
        %v2050 = vadd.f32 %v2037, %v2048
        %s2051 = sld [smem:[#allocation2 + $0xcc]]
        %v2052 = vstv %s2051
        %v2053 = vmul.f32 %v2052, %v226
        %v2054 = vmul.f32 %v2052, %v227
        %v2057 = vrot.slane %v2053, 2
        %v2058 = vrot.slane %v2054, 2
        %v2059 = vsel %vm291, %v2057, %v2058
        %v2061 = vadd.f32 %v2050, %v2059
        %s2062 = sld [smem:[#allocation2 + $0xec]]
        %v2063 = vstv %s2062
        %v2064 = vmul.f32 %v2063, %v226
        %v2065 = vmul.f32 %v2063, %v227
        %v2068 = vrot.slane %v2064, 2
        %v2069 = vrot.slane %v2065, 2
        %v2070 = vsel %vm291, %v2068, %v2069
        %2071 = vrot.lane.b32.xlu0 %v2070, 127
        %v2072 = vpop.permute.xlu0 %2071
        %v2074 = vadd.f32 %v2061, %v2072
        %s2075 = sld [smem:[#allocation2 + $0x10c]]
        %v2076 = vstv %s2075
        %v2077 = vmul.f32 %v2076, %v226
        %v2078 = vmul.f32 %v2076, %v227
        %v2081 = vrot.slane %v2077, 2
        %v2082 = vrot.slane %v2078, 2
        %v2083 = vsel %vm291, %v2081, %v2082
        %2084 = vrot.lane.b32.xlu0 %v2083, 126
        %v2085 = vpop.permute.xlu0 %2084
        %v2087 = vadd.f32 %v2074, %v2085
        %s2088 = sld [smem:[#allocation4 + $0xc]]
        %v2089 = vstv %s2088
        %v2090 = vadd.f32 %v2087, %v2089
        %v2091 = vmax.f32 %v2090, 0.0
        %v2093 = vcombine.high %v2091, %v2091
        %v2095 = vunpack.c.l.s4 1983009808
        %v2096 = vunpack.c.0.s8 %v2095
        %v2097 = vlaneseq
        %v2098 = vshrl.u32 %v2097, 7
        %v2099 = vsub.s32 %v2096, %v2098
        %v2100 = vrot.slane %v2091, %v2099
        %v2102 = vunpack.c.l.s4 1983009808
        %v2103 = vunpack.c.0.s8 %v2102
        %v2104 = vlaneseq
        %v2105 = vshrl.u32 %v2104, 7
        %v2106 = vsub.s32 %v2103, %v2105
        %v2107 = vrot.slane %v2093, %v2106
        %v2108 = vcombine.high %v2100, %v2100
        %v2109 = vcombine.high %v2107, %v2107
        %v2114 = vsel %vm349, %v2100, -inf
        %v2115 = vrot.slane %v2114, 4
        %v2116 = vmax.f32 %v2114, %v2115
        %v2117 = vrot.slane %v2116, 2
        %v2118 = vmax.f32 %v2116, %v2117
        %v2119 = vrot.slane %v2118, 1
        %v2120 = vmax.f32 %v2118, %v2119
        %v2121 = vsel %vm349, %v2108, -inf
        %v2122 = vrot.slane %v2121, 4
        %v2123 = vmax.f32 %v2121, %v2122
        %v2124 = vrot.slane %v2123, 2
        %v2125 = vmax.f32 %v2123, %v2124
        %v2126 = vrot.slane %v2125, 1
        %v2127 = vmax.f32 %v2125, %v2126
        %v2128 = vsel %vm349, %v2107, -inf
        %v2129 = vrot.slane %v2128, 4
        %v2130 = vmax.f32 %v2128, %v2129
        %v2131 = vrot.slane %v2130, 2
        %v2132 = vmax.f32 %v2130, %v2131
        %v2133 = vrot.slane %v2132, 1
        %v2134 = vmax.f32 %v2132, %v2133
        %v2135 = vsel %vm349, %v2109, -inf
        %v2136 = vrot.slane %v2135, 4
        %v2137 = vmax.f32 %v2135, %v2136
        %v2138 = vrot.slane %v2137, 2
        %v2139 = vmax.f32 %v2137, %v2138
        %v2140 = vrot.slane %v2139, 1
        %v2141 = vmax.f32 %v2139, %v2140
        %s2142 = sld [smem:[#allocation2 + $0xd]]
        %v2143 = vstv %s2142
        %v2144 = vmul.f32 %v2143, %v226
        %s2145 = sld [smem:[#allocation2 + $0x2d]]
        %v2146 = vstv %s2145
        %v2147 = vmul.f32 %v2146, %v226
        %2149 = vrot.lane.b32.xlu0 %v2147, 127
        %v2150 = vpop.permute.xlu0 %2149
        %v2152 = vadd.f32 %v2144, %v2150
        %s2153 = sld [smem:[#allocation2 + $0x4d]]
        %v2154 = vstv %s2153
        %v2155 = vmul.f32 %v2154, %v226
        %2157 = vrot.lane.b32.xlu0 %v2155, 126
        %v2158 = vpop.permute.xlu0 %2157
        %v2160 = vadd.f32 %v2152, %v2158
        %s2161 = sld [smem:[#allocation2 + $0x6d]]
        %v2162 = vstv %s2161
        %v2163 = vmul.f32 %v2162, %v226
        %v2164 = vmul.f32 %v2162, %v227
        %v2167 = vrot.slane %v2163, 1
        %v2168 = vrot.slane %v2164, 1
        %v2169 = vsel %vm253, %v2167, %v2168
        %v2171 = vadd.f32 %v2160, %v2169
        %s2172 = sld [smem:[#allocation2 + $0x8d]]
        %v2173 = vstv %s2172
        %v2174 = vmul.f32 %v2173, %v226
        %v2175 = vmul.f32 %v2173, %v227
        %v2178 = vrot.slane %v2174, 1
        %v2179 = vrot.slane %v2175, 1
        %v2180 = vsel %vm253, %v2178, %v2179
        %2181 = vrot.lane.b32.xlu0 %v2180, 127
        %v2182 = vpop.permute.xlu0 %2181
        %v2184 = vadd.f32 %v2171, %v2182
        %s2185 = sld [smem:[#allocation2 + $0xad]]
        %v2186 = vstv %s2185
        %v2187 = vmul.f32 %v2186, %v226
        %v2188 = vmul.f32 %v2186, %v227
        %v2191 = vrot.slane %v2187, 1
        %v2192 = vrot.slane %v2188, 1
        %v2193 = vsel %vm253, %v2191, %v2192
        %2194 = vrot.lane.b32.xlu0 %v2193, 126
        %v2195 = vpop.permute.xlu0 %2194
        %v2197 = vadd.f32 %v2184, %v2195
        %s2198 = sld [smem:[#allocation2 + $0xcd]]
        %v2199 = vstv %s2198
        %v2200 = vmul.f32 %v2199, %v226
        %v2201 = vmul.f32 %v2199, %v227
        %v2204 = vrot.slane %v2200, 2
        %v2205 = vrot.slane %v2201, 2
        %v2206 = vsel %vm291, %v2204, %v2205
        %v2208 = vadd.f32 %v2197, %v2206
        %s2209 = sld [smem:[#allocation2 + $0xed]]
        %v2210 = vstv %s2209
        %v2211 = vmul.f32 %v2210, %v226
        %v2212 = vmul.f32 %v2210, %v227
        %v2215 = vrot.slane %v2211, 2
        %v2216 = vrot.slane %v2212, 2
        %v2217 = vsel %vm291, %v2215, %v2216
        %2218 = vrot.lane.b32.xlu0 %v2217, 127
        %v2219 = vpop.permute.xlu0 %2218
        %v2221 = vadd.f32 %v2208, %v2219
        %s2222 = sld [smem:[#allocation2 + $0x10d]]
        %v2223 = vstv %s2222
        %v2224 = vmul.f32 %v2223, %v226
        %v2225 = vmul.f32 %v2223, %v227
        %v2228 = vrot.slane %v2224, 2
        %v2229 = vrot.slane %v2225, 2
        %v2230 = vsel %vm291, %v2228, %v2229
        %2231 = vrot.lane.b32.xlu0 %v2230, 126
        %v2232 = vpop.permute.xlu0 %2231
        %v2234 = vadd.f32 %v2221, %v2232
        %s2235 = sld [smem:[#allocation4 + $0xd]]
        %v2236 = vstv %s2235
        %v2237 = vadd.f32 %v2234, %v2236
        %v2238 = vmax.f32 %v2237, 0.0
        %v2240 = vcombine.high %v2238, %v2238
        %v2242 = vunpack.c.l.s4 1983009808
        %v2243 = vunpack.c.0.s8 %v2242
        %v2244 = vlaneseq
        %v2245 = vshrl.u32 %v2244, 7
        %v2246 = vsub.s32 %v2243, %v2245
        %v2247 = vrot.slane %v2238, %v2246
        %v2249 = vunpack.c.l.s4 1983009808
        %v2250 = vunpack.c.0.s8 %v2249
        %v2251 = vlaneseq
        %v2252 = vshrl.u32 %v2251, 7
        %v2253 = vsub.s32 %v2250, %v2252
        %v2254 = vrot.slane %v2240, %v2253
        %v2255 = vcombine.high %v2247, %v2247
        %v2256 = vcombine.high %v2254, %v2254
        %v2261 = vsel %vm349, %v2247, -inf
        %v2262 = vrot.slane %v2261, 4
        %v2263 = vmax.f32 %v2261, %v2262
        %v2264 = vrot.slane %v2263, 2
        %v2265 = vmax.f32 %v2263, %v2264
        %v2266 = vrot.slane %v2265, 1
        %v2267 = vmax.f32 %v2265, %v2266
        %v2268 = vsel %vm349, %v2255, -inf
        %v2269 = vrot.slane %v2268, 4
        %v2270 = vmax.f32 %v2268, %v2269
        %v2271 = vrot.slane %v2270, 2
        %v2272 = vmax.f32 %v2270, %v2271
        %v2273 = vrot.slane %v2272, 1
        %v2274 = vmax.f32 %v2272, %v2273
        %v2275 = vsel %vm349, %v2254, -inf
        %v2276 = vrot.slane %v2275, 4
        %v2277 = vmax.f32 %v2275, %v2276
        %v2278 = vrot.slane %v2277, 2
        %v2279 = vmax.f32 %v2277, %v2278
        %v2280 = vrot.slane %v2279, 1
        %v2281 = vmax.f32 %v2279, %v2280
        %v2282 = vsel %vm349, %v2256, -inf
        %v2283 = vrot.slane %v2282, 4
        %v2284 = vmax.f32 %v2282, %v2283
        %v2285 = vrot.slane %v2284, 2
        %v2286 = vmax.f32 %v2284, %v2285
        %v2287 = vrot.slane %v2286, 1
        %v2288 = vmax.f32 %v2286, %v2287
        %s2289 = sld [smem:[#allocation2 + $0xe]]
        %v2290 = vstv %s2289
        %v2291 = vmul.f32 %v2290, %v226
        %s2292 = sld [smem:[#allocation2 + $0x2e]]
        %v2293 = vstv %s2292
        %v2294 = vmul.f32 %v2293, %v226
        %2296 = vrot.lane.b32.xlu0 %v2294, 127
        %v2297 = vpop.permute.xlu0 %2296
        %v2299 = vadd.f32 %v2291, %v2297
        %s2300 = sld [smem:[#allocation2 + $0x4e]]
        %v2301 = vstv %s2300
        %v2302 = vmul.f32 %v2301, %v226
        %2304 = vrot.lane.b32.xlu0 %v2302, 126
        %v2305 = vpop.permute.xlu0 %2304
        %v2307 = vadd.f32 %v2299, %v2305
        %s2308 = sld [smem:[#allocation2 + $0x6e]]
        %v2309 = vstv %s2308
        %v2310 = vmul.f32 %v2309, %v226
        %v2311 = vmul.f32 %v2309, %v227
        %v2314 = vrot.slane %v2310, 1
        %v2315 = vrot.slane %v2311, 1
        %v2316 = vsel %vm253, %v2314, %v2315
        %v2318 = vadd.f32 %v2307, %v2316
        %s2319 = sld [smem:[#allocation2 + $0x8e]]
        %v2320 = vstv %s2319
        %v2321 = vmul.f32 %v2320, %v226
        %v2322 = vmul.f32 %v2320, %v227
        %v2325 = vrot.slane %v2321, 1
        %v2326 = vrot.slane %v2322, 1
        %v2327 = vsel %vm253, %v2325, %v2326
        %2328 = vrot.lane.b32.xlu0 %v2327, 127
        %v2329 = vpop.permute.xlu0 %2328
        %v2331 = vadd.f32 %v2318, %v2329
        %s2332 = sld [smem:[#allocation2 + $0xae]]
        %v2333 = vstv %s2332
        %v2334 = vmul.f32 %v2333, %v226
        %v2335 = vmul.f32 %v2333, %v227
        %v2338 = vrot.slane %v2334, 1
        %v2339 = vrot.slane %v2335, 1
        %v2340 = vsel %vm253, %v2338, %v2339
        %2341 = vrot.lane.b32.xlu0 %v2340, 126
        %v2342 = vpop.permute.xlu0 %2341
        %v2344 = vadd.f32 %v2331, %v2342
        %s2345 = sld [smem:[#allocation2 + $0xce]]
        %v2346 = vstv %s2345
        %v2347 = vmul.f32 %v2346, %v226
        %v2348 = vmul.f32 %v2346, %v227
        %v2351 = vrot.slane %v2347, 2
        %v2352 = vrot.slane %v2348, 2
        %v2353 = vsel %vm291, %v2351, %v2352
        %v2355 = vadd.f32 %v2344, %v2353
        %s2356 = sld [smem:[#allocation2 + $0xee]]
        %v2357 = vstv %s2356
        %v2358 = vmul.f32 %v2357, %v226
        %v2359 = vmul.f32 %v2357, %v227
        %v2362 = vrot.slane %v2358, 2
        %v2363 = vrot.slane %v2359, 2
        %v2364 = vsel %vm291, %v2362, %v2363
        %2365 = vrot.lane.b32.xlu0 %v2364, 127
        %v2366 = vpop.permute.xlu0 %2365
        %v2368 = vadd.f32 %v2355, %v2366
        %s2369 = sld [smem:[#allocation2 + $0x10e]]
        %v2370 = vstv %s2369
        %v2371 = vmul.f32 %v2370, %v226
        %v2372 = vmul.f32 %v2370, %v227
        %v2375 = vrot.slane %v2371, 2
        %v2376 = vrot.slane %v2372, 2
        %v2377 = vsel %vm291, %v2375, %v2376
        %2378 = vrot.lane.b32.xlu0 %v2377, 126
        %v2379 = vpop.permute.xlu0 %2378
        %v2381 = vadd.f32 %v2368, %v2379
        %s2382 = sld [smem:[#allocation4 + $0xe]]
        %v2383 = vstv %s2382
        %v2384 = vadd.f32 %v2381, %v2383
        %v2385 = vmax.f32 %v2384, 0.0
        %v2387 = vcombine.high %v2385, %v2385
        %v2389 = vunpack.c.l.s4 1983009808
        %v2390 = vunpack.c.0.s8 %v2389
        %v2391 = vlaneseq
        %v2392 = vshrl.u32 %v2391, 7
        %v2393 = vsub.s32 %v2390, %v2392
        %v2394 = vrot.slane %v2385, %v2393
        %v2396 = vunpack.c.l.s4 1983009808
        %v2397 = vunpack.c.0.s8 %v2396
        %v2398 = vlaneseq
        %v2399 = vshrl.u32 %v2398, 7
        %v2400 = vsub.s32 %v2397, %v2399
        %v2401 = vrot.slane %v2387, %v2400
        %v2402 = vcombine.high %v2394, %v2394
        %v2403 = vcombine.high %v2401, %v2401
        %v2408 = vsel %vm349, %v2394, -inf
        %v2409 = vrot.slane %v2408, 4
        %v2410 = vmax.f32 %v2408, %v2409
        %v2411 = vrot.slane %v2410, 2
        %v2412 = vmax.f32 %v2410, %v2411
        %v2413 = vrot.slane %v2412, 1
        %v2414 = vmax.f32 %v2412, %v2413
        %v2415 = vsel %vm349, %v2402, -inf
        %v2416 = vrot.slane %v2415, 4
        %v2417 = vmax.f32 %v2415, %v2416
        %v2418 = vrot.slane %v2417, 2
        %v2419 = vmax.f32 %v2417, %v2418
        %v2420 = vrot.slane %v2419, 1
        %v2421 = vmax.f32 %v2419, %v2420
        %v2422 = vsel %vm349, %v2401, -inf
        %v2423 = vrot.slane %v2422, 4
        %v2424 = vmax.f32 %v2422, %v2423
        %v2425 = vrot.slane %v2424, 2
        %v2426 = vmax.f32 %v2424, %v2425
        %v2427 = vrot.slane %v2426, 1
        %v2428 = vmax.f32 %v2426, %v2427
        %v2429 = vsel %vm349, %v2403, -inf
        %v2430 = vrot.slane %v2429, 4
        %v2431 = vmax.f32 %v2429, %v2430
        %v2432 = vrot.slane %v2431, 2
        %v2433 = vmax.f32 %v2431, %v2432
        %v2434 = vrot.slane %v2433, 1
        %v2435 = vmax.f32 %v2433, %v2434
        %s2436 = sld [smem:[#allocation2 + $0xf]]
        %v2437 = vstv %s2436
        %v2438 = vmul.f32 %v2437, %v226
        %s2439 = sld [smem:[#allocation2 + $0x2f]]
        %v2440 = vstv %s2439
        %v2441 = vmul.f32 %v2440, %v226
        %2443 = vrot.lane.b32.xlu0 %v2441, 127
        %v2444 = vpop.permute.xlu0 %2443
        %v2446 = vadd.f32 %v2438, %v2444
        %s2447 = sld [smem:[#allocation2 + $0x4f]]
        %v2448 = vstv %s2447
        %v2449 = vmul.f32 %v2448, %v226
        %2451 = vrot.lane.b32.xlu0 %v2449, 126
        %v2452 = vpop.permute.xlu0 %2451
        %v2454 = vadd.f32 %v2446, %v2452
        %s2455 = sld [smem:[#allocation2 + $0x6f]]
        %v2456 = vstv %s2455
        %v2457 = vmul.f32 %v2456, %v226
        %v2458 = vmul.f32 %v2456, %v227
        %v2461 = vrot.slane %v2457, 1
        %v2462 = vrot.slane %v2458, 1
        %v2463 = vsel %vm253, %v2461, %v2462
        %v2465 = vadd.f32 %v2454, %v2463
        %s2466 = sld [smem:[#allocation2 + $0x8f]]
        %v2467 = vstv %s2466
        %v2468 = vmul.f32 %v2467, %v226
        %v2469 = vmul.f32 %v2467, %v227
        %v2472 = vrot.slane %v2468, 1
        %v2473 = vrot.slane %v2469, 1
        %v2474 = vsel %vm253, %v2472, %v2473
        %2475 = vrot.lane.b32.xlu0 %v2474, 127
        %v2476 = vpop.permute.xlu0 %2475
        %v2478 = vadd.f32 %v2465, %v2476
        %s2479 = sld [smem:[#allocation2 + $0xaf]]
        %v2480 = vstv %s2479
        %v2481 = vmul.f32 %v2480, %v226
        %v2482 = vmul.f32 %v2480, %v227
        %v2485 = vrot.slane %v2481, 1
        %v2486 = vrot.slane %v2482, 1
        %v2487 = vsel %vm253, %v2485, %v2486
        %2488 = vrot.lane.b32.xlu0 %v2487, 126
        %v2489 = vpop.permute.xlu0 %2488
        %v2491 = vadd.f32 %v2478, %v2489
        %s2492 = sld [smem:[#allocation2 + $0xcf]]
        %v2493 = vstv %s2492
        %v2494 = vmul.f32 %v2493, %v226
        %v2495 = vmul.f32 %v2493, %v227
        %v2498 = vrot.slane %v2494, 2
        %v2499 = vrot.slane %v2495, 2
        %v2500 = vsel %vm291, %v2498, %v2499
        %v2502 = vadd.f32 %v2491, %v2500
        %s2503 = sld [smem:[#allocation2 + $0xef]]
        %v2504 = vstv %s2503
        %v2505 = vmul.f32 %v2504, %v226
        %v2506 = vmul.f32 %v2504, %v227
        %v2509 = vrot.slane %v2505, 2
        %v2510 = vrot.slane %v2506, 2
        %v2511 = vsel %vm291, %v2509, %v2510
        %2512 = vrot.lane.b32.xlu0 %v2511, 127
        %v2513 = vpop.permute.xlu0 %2512
        %v2515 = vadd.f32 %v2502, %v2513
        %s2516 = sld [smem:[#allocation2 + $0x10f]]
        %v2517 = vstv %s2516
        %v2518 = vmul.f32 %v2517, %v226
        %v2519 = vmul.f32 %v2517, %v227
        %v2522 = vrot.slane %v2518, 2
        %v2523 = vrot.slane %v2519, 2
        %v2524 = vsel %vm291, %v2522, %v2523
        %2525 = vrot.lane.b32.xlu0 %v2524, 126
        %v2526 = vpop.permute.xlu0 %2525
        %v2528 = vadd.f32 %v2515, %v2526
        %s2529 = sld [smem:[#allocation4 + $0xf]]
        %v2530 = vstv %s2529
        %v2531 = vadd.f32 %v2528, %v2530
        %v2532 = vmax.f32 %v2531, 0.0
        %v2534 = vcombine.high %v2532, %v2532
        %v2536 = vunpack.c.l.s4 1983009808
        %v2537 = vunpack.c.0.s8 %v2536
        %v2538 = vlaneseq
        %v2539 = vshrl.u32 %v2538, 7
        %v2540 = vsub.s32 %v2537, %v2539
        %v2541 = vrot.slane %v2532, %v2540
        %v2543 = vunpack.c.l.s4 1983009808
        %v2544 = vunpack.c.0.s8 %v2543
        %v2545 = vlaneseq
        %v2546 = vshrl.u32 %v2545, 7
        %v2547 = vsub.s32 %v2544, %v2546
        %v2548 = vrot.slane %v2534, %v2547
        %v2549 = vcombine.high %v2541, %v2541
        %v2550 = vcombine.high %v2548, %v2548
        %v2555 = vsel %vm349, %v2541, -inf
        %v2556 = vrot.slane %v2555, 4
        %v2557 = vmax.f32 %v2555, %v2556
        %v2558 = vrot.slane %v2557, 2
        %v2559 = vmax.f32 %v2557, %v2558
        %v2560 = vrot.slane %v2559, 1
        %v2561 = vmax.f32 %v2559, %v2560
        %v2562 = vsel %vm349, %v2549, -inf
        %v2563 = vrot.slane %v2562, 4
        %v2564 = vmax.f32 %v2562, %v2563
        %v2565 = vrot.slane %v2564, 2
        %v2566 = vmax.f32 %v2564, %v2565
        %v2567 = vrot.slane %v2566, 1
        %v2568 = vmax.f32 %v2566, %v2567
        %v2569 = vsel %vm349, %v2548, -inf
        %v2570 = vrot.slane %v2569, 4
        %v2571 = vmax.f32 %v2569, %v2570
        %v2572 = vrot.slane %v2571, 2
        %v2573 = vmax.f32 %v2571, %v2572
        %v2574 = vrot.slane %v2573, 1
        %v2575 = vmax.f32 %v2573, %v2574
        %v2576 = vsel %vm349, %v2550, -inf
        %v2577 = vrot.slane %v2576, 4
        %v2578 = vmax.f32 %v2576, %v2577
        %v2579 = vrot.slane %v2578, 2
        %v2580 = vmax.f32 %v2578, %v2579
        %v2581 = vrot.slane %v2580, 1
        %v2582 = vmax.f32 %v2580, %v2581
        %s2583 = sld [smem:[#allocation2 + $0x10]]
        %v2584 = vstv %s2583
        %v2585 = vmul.f32 %v2584, %v226
        %s2586 = sld [smem:[#allocation2 + $0x30]]
        %v2587 = vstv %s2586
        %v2588 = vmul.f32 %v2587, %v226
        %2590 = vrot.lane.b32.xlu0 %v2588, 127
        %v2591 = vpop.permute.xlu0 %2590
        %v2593 = vadd.f32 %v2585, %v2591
        %s2594 = sld [smem:[#allocation2 + $0x50]]
        %v2595 = vstv %s2594
        %v2596 = vmul.f32 %v2595, %v226
        %2598 = vrot.lane.b32.xlu0 %v2596, 126
        %v2599 = vpop.permute.xlu0 %2598
        %v2601 = vadd.f32 %v2593, %v2599
        %s2602 = sld [smem:[#allocation2 + $0x70]]
        %v2603 = vstv %s2602
        %v2604 = vmul.f32 %v2603, %v226
        %v2605 = vmul.f32 %v2603, %v227
        %v2608 = vrot.slane %v2604, 1
        %v2609 = vrot.slane %v2605, 1
        %v2610 = vsel %vm253, %v2608, %v2609
        %v2612 = vadd.f32 %v2601, %v2610
        %s2613 = sld [smem:[#allocation2 + $0x90]]
        %v2614 = vstv %s2613
        %v2615 = vmul.f32 %v2614, %v226
        %v2616 = vmul.f32 %v2614, %v227
        %v2619 = vrot.slane %v2615, 1
        %v2620 = vrot.slane %v2616, 1
        %v2621 = vsel %vm253, %v2619, %v2620
        %2622 = vrot.lane.b32.xlu0 %v2621, 127
        %v2623 = vpop.permute.xlu0 %2622
        %v2625 = vadd.f32 %v2612, %v2623
        %s2626 = sld [smem:[#allocation2 + $0xb0]]
        %v2627 = vstv %s2626
        %v2628 = vmul.f32 %v2627, %v226
        %v2629 = vmul.f32 %v2627, %v227
        %v2632 = vrot.slane %v2628, 1
        %v2633 = vrot.slane %v2629, 1
        %v2634 = vsel %vm253, %v2632, %v2633
        %2635 = vrot.lane.b32.xlu0 %v2634, 126
        %v2636 = vpop.permute.xlu0 %2635
        %v2638 = vadd.f32 %v2625, %v2636
        %s2639 = sld [smem:[#allocation2 + $0xd0]]
        %v2640 = vstv %s2639
        %v2641 = vmul.f32 %v2640, %v226
        %v2642 = vmul.f32 %v2640, %v227
        %v2645 = vrot.slane %v2641, 2
        %v2646 = vrot.slane %v2642, 2
        %v2647 = vsel %vm291, %v2645, %v2646
        %v2649 = vadd.f32 %v2638, %v2647
        %s2650 = sld [smem:[#allocation2 + $0xf0]]
        %v2651 = vstv %s2650
        %v2652 = vmul.f32 %v2651, %v226
        %v2653 = vmul.f32 %v2651, %v227
        %v2656 = vrot.slane %v2652, 2
        %v2657 = vrot.slane %v2653, 2
        %v2658 = vsel %vm291, %v2656, %v2657
        %2659 = vrot.lane.b32.xlu0 %v2658, 127
        %v2660 = vpop.permute.xlu0 %2659
        %v2662 = vadd.f32 %v2649, %v2660
        %s2663 = sld [smem:[#allocation2 + $0x110]]
        %v2664 = vstv %s2663
        %v2665 = vmul.f32 %v2664, %v226
        %v2666 = vmul.f32 %v2664, %v227
        %v2669 = vrot.slane %v2665, 2
        %v2670 = vrot.slane %v2666, 2
        %v2671 = vsel %vm291, %v2669, %v2670
        %2672 = vrot.lane.b32.xlu0 %v2671, 126
        %v2673 = vpop.permute.xlu0 %2672
        %v2675 = vadd.f32 %v2662, %v2673
        %s2676 = sld [smem:[#allocation4 + $0x10]]
        %v2677 = vstv %s2676
        %v2678 = vadd.f32 %v2675, %v2677
        %v2679 = vmax.f32 %v2678, 0.0
        %v2681 = vcombine.high %v2679, %v2679
        %v2683 = vunpack.c.l.s4 1983009808
        %v2684 = vunpack.c.0.s8 %v2683
        %v2685 = vlaneseq
        %v2686 = vshrl.u32 %v2685, 7
        %v2687 = vsub.s32 %v2684, %v2686
        %v2688 = vrot.slane %v2679, %v2687
        %v2690 = vunpack.c.l.s4 1983009808
        %v2691 = vunpack.c.0.s8 %v2690
        %v2692 = vlaneseq
        %v2693 = vshrl.u32 %v2692, 7
        %v2694 = vsub.s32 %v2691, %v2693
        %v2695 = vrot.slane %v2681, %v2694
        %v2696 = vcombine.high %v2688, %v2688
        %v2697 = vcombine.high %v2695, %v2695
        %v2702 = vsel %vm349, %v2688, -inf
        %v2703 = vrot.slane %v2702, 4
        %v2704 = vmax.f32 %v2702, %v2703
        %v2705 = vrot.slane %v2704, 2
        %v2706 = vmax.f32 %v2704, %v2705
        %v2707 = vrot.slane %v2706, 1
        %v2708 = vmax.f32 %v2706, %v2707
        %v2709 = vsel %vm349, %v2696, -inf
        %v2710 = vrot.slane %v2709, 4
        %v2711 = vmax.f32 %v2709, %v2710
        %v2712 = vrot.slane %v2711, 2
        %v2713 = vmax.f32 %v2711, %v2712
        %v2714 = vrot.slane %v2713, 1
        %v2715 = vmax.f32 %v2713, %v2714
        %v2716 = vsel %vm349, %v2695, -inf
        %v2717 = vrot.slane %v2716, 4
        %v2718 = vmax.f32 %v2716, %v2717
        %v2719 = vrot.slane %v2718, 2
        %v2720 = vmax.f32 %v2718, %v2719
        %v2721 = vrot.slane %v2720, 1
        %v2722 = vmax.f32 %v2720, %v2721
        %v2723 = vsel %vm349, %v2697, -inf
        %v2724 = vrot.slane %v2723, 4
        %v2725 = vmax.f32 %v2723, %v2724
        %v2726 = vrot.slane %v2725, 2
        %v2727 = vmax.f32 %v2725, %v2726
        %v2728 = vrot.slane %v2727, 1
        %v2729 = vmax.f32 %v2727, %v2728
        %s2730 = sld [smem:[#allocation2 + $0x11]]
        %v2731 = vstv %s2730
        %v2732 = vmul.f32 %v2731, %v226
        %s2733 = sld [smem:[#allocation2 + $0x31]]
        %v2734 = vstv %s2733
        %v2735 = vmul.f32 %v2734, %v226
        %2737 = vrot.lane.b32.xlu0 %v2735, 127
        %v2738 = vpop.permute.xlu0 %2737
        %v2740 = vadd.f32 %v2732, %v2738
        %s2741 = sld [smem:[#allocation2 + $0x51]]
        %v2742 = vstv %s2741
        %v2743 = vmul.f32 %v2742, %v226
        %2745 = vrot.lane.b32.xlu0 %v2743, 126
        %v2746 = vpop.permute.xlu0 %2745
        %v2748 = vadd.f32 %v2740, %v2746
        %s2749 = sld [smem:[#allocation2 + $0x71]]
        %v2750 = vstv %s2749
        %v2751 = vmul.f32 %v2750, %v226
        %v2752 = vmul.f32 %v2750, %v227
        %v2755 = vrot.slane %v2751, 1
        %v2756 = vrot.slane %v2752, 1
        %v2757 = vsel %vm253, %v2755, %v2756
        %v2759 = vadd.f32 %v2748, %v2757
        %s2760 = sld [smem:[#allocation2 + $0x91]]
        %v2761 = vstv %s2760
        %v2762 = vmul.f32 %v2761, %v226
        %v2763 = vmul.f32 %v2761, %v227
        %v2766 = vrot.slane %v2762, 1
        %v2767 = vrot.slane %v2763, 1
        %v2768 = vsel %vm253, %v2766, %v2767
        %2769 = vrot.lane.b32.xlu0 %v2768, 127
        %v2770 = vpop.permute.xlu0 %2769
        %v2772 = vadd.f32 %v2759, %v2770
        %s2773 = sld [smem:[#allocation2 + $0xb1]]
        %v2774 = vstv %s2773
        %v2775 = vmul.f32 %v2774, %v226
        %v2776 = vmul.f32 %v2774, %v227
        %v2779 = vrot.slane %v2775, 1
        %v2780 = vrot.slane %v2776, 1
        %v2781 = vsel %vm253, %v2779, %v2780
        %2782 = vrot.lane.b32.xlu0 %v2781, 126
        %v2783 = vpop.permute.xlu0 %2782
        %v2785 = vadd.f32 %v2772, %v2783
        %s2786 = sld [smem:[#allocation2 + $0xd1]]
        %v2787 = vstv %s2786
        %v2788 = vmul.f32 %v2787, %v226
        %v2789 = vmul.f32 %v2787, %v227
        %v2792 = vrot.slane %v2788, 2
        %v2793 = vrot.slane %v2789, 2
        %v2794 = vsel %vm291, %v2792, %v2793
        %v2796 = vadd.f32 %v2785, %v2794
        %s2797 = sld [smem:[#allocation2 + $0xf1]]
        %v2798 = vstv %s2797
        %v2799 = vmul.f32 %v2798, %v226
        %v2800 = vmul.f32 %v2798, %v227
        %v2803 = vrot.slane %v2799, 2
        %v2804 = vrot.slane %v2800, 2
        %v2805 = vsel %vm291, %v2803, %v2804
        %2806 = vrot.lane.b32.xlu0 %v2805, 127
        %v2807 = vpop.permute.xlu0 %2806
        %v2809 = vadd.f32 %v2796, %v2807
        %s2810 = sld [smem:[#allocation2 + $0x111]]
        %v2811 = vstv %s2810
        %v2812 = vmul.f32 %v2811, %v226
        %v2813 = vmul.f32 %v2811, %v227
        %v2816 = vrot.slane %v2812, 2
        %v2817 = vrot.slane %v2813, 2
        %v2818 = vsel %vm291, %v2816, %v2817
        %2819 = vrot.lane.b32.xlu0 %v2818, 126
        %v2820 = vpop.permute.xlu0 %2819
        %v2822 = vadd.f32 %v2809, %v2820
        %s2823 = sld [smem:[#allocation4 + $0x11]]
        %v2824 = vstv %s2823
        %v2825 = vadd.f32 %v2822, %v2824
        %v2826 = vmax.f32 %v2825, 0.0
        %v2828 = vcombine.high %v2826, %v2826
        %v2830 = vunpack.c.l.s4 1983009808
        %v2831 = vunpack.c.0.s8 %v2830
        %v2832 = vlaneseq
        %v2833 = vshrl.u32 %v2832, 7
        %v2834 = vsub.s32 %v2831, %v2833
        %v2835 = vrot.slane %v2826, %v2834
        %v2837 = vunpack.c.l.s4 1983009808
        %v2838 = vunpack.c.0.s8 %v2837
        %v2839 = vlaneseq
        %v2840 = vshrl.u32 %v2839, 7
        %v2841 = vsub.s32 %v2838, %v2840
        %v2842 = vrot.slane %v2828, %v2841
        %v2843 = vcombine.high %v2835, %v2835
        %v2844 = vcombine.high %v2842, %v2842
        %v2849 = vsel %vm349, %v2835, -inf
        %v2850 = vrot.slane %v2849, 4
        %v2851 = vmax.f32 %v2849, %v2850
        %v2852 = vrot.slane %v2851, 2
        %v2853 = vmax.f32 %v2851, %v2852
        %v2854 = vrot.slane %v2853, 1
        %v2855 = vmax.f32 %v2853, %v2854
        %v2856 = vsel %vm349, %v2843, -inf
        %v2857 = vrot.slane %v2856, 4
        %v2858 = vmax.f32 %v2856, %v2857
        %v2859 = vrot.slane %v2858, 2
        %v2860 = vmax.f32 %v2858, %v2859
        %v2861 = vrot.slane %v2860, 1
        %v2862 = vmax.f32 %v2860, %v2861
        %v2863 = vsel %vm349, %v2842, -inf
        %v2864 = vrot.slane %v2863, 4
        %v2865 = vmax.f32 %v2863, %v2864
        %v2866 = vrot.slane %v2865, 2
        %v2867 = vmax.f32 %v2865, %v2866
        %v2868 = vrot.slane %v2867, 1
        %v2869 = vmax.f32 %v2867, %v2868
        %v2870 = vsel %vm349, %v2844, -inf
        %v2871 = vrot.slane %v2870, 4
        %v2872 = vmax.f32 %v2870, %v2871
        %v2873 = vrot.slane %v2872, 2
        %v2874 = vmax.f32 %v2872, %v2873
        %v2875 = vrot.slane %v2874, 1
        %v2876 = vmax.f32 %v2874, %v2875
        %s2877 = sld [smem:[#allocation2 + $0x12]]
        %v2878 = vstv %s2877
        %v2879 = vmul.f32 %v2878, %v226
        %s2880 = sld [smem:[#allocation2 + $0x32]]
        %v2881 = vstv %s2880
        %v2882 = vmul.f32 %v2881, %v226
        %2884 = vrot.lane.b32.xlu0 %v2882, 127
        %v2885 = vpop.permute.xlu0 %2884
        %v2887 = vadd.f32 %v2879, %v2885
        %s2888 = sld [smem:[#allocation2 + $0x52]]
        %v2889 = vstv %s2888
        %v2890 = vmul.f32 %v2889, %v226
        %2892 = vrot.lane.b32.xlu0 %v2890, 126
        %v2893 = vpop.permute.xlu0 %2892
        %v2895 = vadd.f32 %v2887, %v2893
        %s2896 = sld [smem:[#allocation2 + $0x72]]
        %v2897 = vstv %s2896
        %v2898 = vmul.f32 %v2897, %v226
        %v2899 = vmul.f32 %v2897, %v227
        %v2902 = vrot.slane %v2898, 1
        %v2903 = vrot.slane %v2899, 1
        %v2904 = vsel %vm253, %v2902, %v2903
        %v2906 = vadd.f32 %v2895, %v2904
        %s2907 = sld [smem:[#allocation2 + $0x92]]
        %v2908 = vstv %s2907
        %v2909 = vmul.f32 %v2908, %v226
        %v2910 = vmul.f32 %v2908, %v227
        %v2913 = vrot.slane %v2909, 1
        %v2914 = vrot.slane %v2910, 1
        %v2915 = vsel %vm253, %v2913, %v2914
        %2916 = vrot.lane.b32.xlu0 %v2915, 127
        %v2917 = vpop.permute.xlu0 %2916
        %v2919 = vadd.f32 %v2906, %v2917
        %s2920 = sld [smem:[#allocation2 + $0xb2]]
        %v2921 = vstv %s2920
        %v2922 = vmul.f32 %v2921, %v226
        %v2923 = vmul.f32 %v2921, %v227
        %v2926 = vrot.slane %v2922, 1
        %v2927 = vrot.slane %v2923, 1
        %v2928 = vsel %vm253, %v2926, %v2927
        %2929 = vrot.lane.b32.xlu0 %v2928, 126
        %v2930 = vpop.permute.xlu0 %2929
        %v2932 = vadd.f32 %v2919, %v2930
        %s2933 = sld [smem:[#allocation2 + $0xd2]]
        %v2934 = vstv %s2933
        %v2935 = vmul.f32 %v2934, %v226
        %v2936 = vmul.f32 %v2934, %v227
        %v2939 = vrot.slane %v2935, 2
        %v2940 = vrot.slane %v2936, 2
        %v2941 = vsel %vm291, %v2939, %v2940
        %v2943 = vadd.f32 %v2932, %v2941
        %s2944 = sld [smem:[#allocation2 + $0xf2]]
        %v2945 = vstv %s2944
        %v2946 = vmul.f32 %v2945, %v226
        %v2947 = vmul.f32 %v2945, %v227
        %v2950 = vrot.slane %v2946, 2
        %v2951 = vrot.slane %v2947, 2
        %v2952 = vsel %vm291, %v2950, %v2951
        %2953 = vrot.lane.b32.xlu0 %v2952, 127
        %v2954 = vpop.permute.xlu0 %2953
        %v2956 = vadd.f32 %v2943, %v2954
        %s2957 = sld [smem:[#allocation2 + $0x112]]
        %v2958 = vstv %s2957
        %v2959 = vmul.f32 %v2958, %v226
        %v2960 = vmul.f32 %v2958, %v227
        %v2963 = vrot.slane %v2959, 2
        %v2964 = vrot.slane %v2960, 2
        %v2965 = vsel %vm291, %v2963, %v2964
        %2966 = vrot.lane.b32.xlu0 %v2965, 126
        %v2967 = vpop.permute.xlu0 %2966
        %v2969 = vadd.f32 %v2956, %v2967
        %s2970 = sld [smem:[#allocation4 + $0x12]]
        %v2971 = vstv %s2970
        %v2972 = vadd.f32 %v2969, %v2971
        %v2973 = vmax.f32 %v2972, 0.0
        %v2975 = vcombine.high %v2973, %v2973
        %v2977 = vunpack.c.l.s4 1983009808
        %v2978 = vunpack.c.0.s8 %v2977
        %v2979 = vlaneseq
        %v2980 = vshrl.u32 %v2979, 7
        %v2981 = vsub.s32 %v2978, %v2980
        %v2982 = vrot.slane %v2973, %v2981
        %v2984 = vunpack.c.l.s4 1983009808
        %v2985 = vunpack.c.0.s8 %v2984
        %v2986 = vlaneseq
        %v2987 = vshrl.u32 %v2986, 7
        %v2988 = vsub.s32 %v2985, %v2987
        %v2989 = vrot.slane %v2975, %v2988
        %v2990 = vcombine.high %v2982, %v2982
        %v2991 = vcombine.high %v2989, %v2989
        %v2996 = vsel %vm349, %v2982, -inf
        %v2997 = vrot.slane %v2996, 4
        %v2998 = vmax.f32 %v2996, %v2997
        %v2999 = vrot.slane %v2998, 2
        %v3000 = vmax.f32 %v2998, %v2999
        %v3001 = vrot.slane %v3000, 1
        %v3002 = vmax.f32 %v3000, %v3001
        %v3003 = vsel %vm349, %v2990, -inf
        %v3004 = vrot.slane %v3003, 4
        %v3005 = vmax.f32 %v3003, %v3004
        %v3006 = vrot.slane %v3005, 2
        %v3007 = vmax.f32 %v3005, %v3006
        %v3008 = vrot.slane %v3007, 1
        %v3009 = vmax.f32 %v3007, %v3008
        %v3010 = vsel %vm349, %v2989, -inf
        %v3011 = vrot.slane %v3010, 4
        %v3012 = vmax.f32 %v3010, %v3011
        %v3013 = vrot.slane %v3012, 2
        %v3014 = vmax.f32 %v3012, %v3013
        %v3015 = vrot.slane %v3014, 1
        %v3016 = vmax.f32 %v3014, %v3015
        %v3017 = vsel %vm349, %v2991, -inf
        %v3018 = vrot.slane %v3017, 4
        %v3019 = vmax.f32 %v3017, %v3018
        %v3020 = vrot.slane %v3019, 2
        %v3021 = vmax.f32 %v3019, %v3020
        %v3022 = vrot.slane %v3021, 1
        %v3023 = vmax.f32 %v3021, %v3022
        %s3024 = sld [smem:[#allocation2 + $0x13]]
        %v3025 = vstv %s3024
        %v3026 = vmul.f32 %v3025, %v226
        %s3027 = sld [smem:[#allocation2 + $0x33]]
        %v3028 = vstv %s3027
        %v3029 = vmul.f32 %v3028, %v226
        %3031 = vrot.lane.b32.xlu0 %v3029, 127
        %v3032 = vpop.permute.xlu0 %3031
        %v3034 = vadd.f32 %v3026, %v3032
        %s3035 = sld [smem:[#allocation2 + $0x53]]
        %v3036 = vstv %s3035
        %v3037 = vmul.f32 %v3036, %v226
        %3039 = vrot.lane.b32.xlu0 %v3037, 126
        %v3040 = vpop.permute.xlu0 %3039
        %v3042 = vadd.f32 %v3034, %v3040
        %s3043 = sld [smem:[#allocation2 + $0x73]]
        %v3044 = vstv %s3043
        %v3045 = vmul.f32 %v3044, %v226
        %v3046 = vmul.f32 %v3044, %v227
        %v3049 = vrot.slane %v3045, 1
        %v3050 = vrot.slane %v3046, 1
        %v3051 = vsel %vm253, %v3049, %v3050
        %v3053 = vadd.f32 %v3042, %v3051
        %s3054 = sld [smem:[#allocation2 + $0x93]]
        %v3055 = vstv %s3054
        %v3056 = vmul.f32 %v3055, %v226
        %v3057 = vmul.f32 %v3055, %v227
        %v3060 = vrot.slane %v3056, 1
        %v3061 = vrot.slane %v3057, 1
        %v3062 = vsel %vm253, %v3060, %v3061
        %3063 = vrot.lane.b32.xlu0 %v3062, 127
        %v3064 = vpop.permute.xlu0 %3063
        %v3066 = vadd.f32 %v3053, %v3064
        %s3067 = sld [smem:[#allocation2 + $0xb3]]
        %v3068 = vstv %s3067
        %v3069 = vmul.f32 %v3068, %v226
        %v3070 = vmul.f32 %v3068, %v227
        %v3073 = vrot.slane %v3069, 1
        %v3074 = vrot.slane %v3070, 1
        %v3075 = vsel %vm253, %v3073, %v3074
        %3076 = vrot.lane.b32.xlu0 %v3075, 126
        %v3077 = vpop.permute.xlu0 %3076
        %v3079 = vadd.f32 %v3066, %v3077
        %s3080 = sld [smem:[#allocation2 + $0xd3]]
        %v3081 = vstv %s3080
        %v3082 = vmul.f32 %v3081, %v226
        %v3083 = vmul.f32 %v3081, %v227
        %v3086 = vrot.slane %v3082, 2
        %v3087 = vrot.slane %v3083, 2
        %v3088 = vsel %vm291, %v3086, %v3087
        %v3090 = vadd.f32 %v3079, %v3088
        %s3091 = sld [smem:[#allocation2 + $0xf3]]
        %v3092 = vstv %s3091
        %v3093 = vmul.f32 %v3092, %v226
        %v3094 = vmul.f32 %v3092, %v227
        %v3097 = vrot.slane %v3093, 2
        %v3098 = vrot.slane %v3094, 2
        %v3099 = vsel %vm291, %v3097, %v3098
        %3100 = vrot.lane.b32.xlu0 %v3099, 127
        %v3101 = vpop.permute.xlu0 %3100
        %v3103 = vadd.f32 %v3090, %v3101
        %s3104 = sld [smem:[#allocation2 + $0x113]]
        %v3105 = vstv %s3104
        %v3106 = vmul.f32 %v3105, %v226
        %v3107 = vmul.f32 %v3105, %v227
        %v3110 = vrot.slane %v3106, 2
        %v3111 = vrot.slane %v3107, 2
        %v3112 = vsel %vm291, %v3110, %v3111
        %3113 = vrot.lane.b32.xlu0 %v3112, 126
        %v3114 = vpop.permute.xlu0 %3113
        %v3116 = vadd.f32 %v3103, %v3114
        %s3117 = sld [smem:[#allocation4 + $0x13]]
        %v3118 = vstv %s3117
        %v3119 = vadd.f32 %v3116, %v3118
        %v3120 = vmax.f32 %v3119, 0.0
        %v3122 = vcombine.high %v3120, %v3120
        %v3124 = vunpack.c.l.s4 1983009808
        %v3125 = vunpack.c.0.s8 %v3124
        %v3126 = vlaneseq
        %v3127 = vshrl.u32 %v3126, 7
        %v3128 = vsub.s32 %v3125, %v3127
        %v3129 = vrot.slane %v3120, %v3128
        %v3131 = vunpack.c.l.s4 1983009808
        %v3132 = vunpack.c.0.s8 %v3131
        %v3133 = vlaneseq
        %v3134 = vshrl.u32 %v3133, 7
        %v3135 = vsub.s32 %v3132, %v3134
        %v3136 = vrot.slane %v3122, %v3135
        %v3137 = vcombine.high %v3129, %v3129
        %v3138 = vcombine.high %v3136, %v3136
        %v3143 = vsel %vm349, %v3129, -inf
        %v3144 = vrot.slane %v3143, 4
        %v3145 = vmax.f32 %v3143, %v3144
        %v3146 = vrot.slane %v3145, 2
        %v3147 = vmax.f32 %v3145, %v3146
        %v3148 = vrot.slane %v3147, 1
        %v3149 = vmax.f32 %v3147, %v3148
        %v3150 = vsel %vm349, %v3137, -inf
        %v3151 = vrot.slane %v3150, 4
        %v3152 = vmax.f32 %v3150, %v3151
        %v3153 = vrot.slane %v3152, 2
        %v3154 = vmax.f32 %v3152, %v3153
        %v3155 = vrot.slane %v3154, 1
        %v3156 = vmax.f32 %v3154, %v3155
        %v3157 = vsel %vm349, %v3136, -inf
        %v3158 = vrot.slane %v3157, 4
        %v3159 = vmax.f32 %v3157, %v3158
        %v3160 = vrot.slane %v3159, 2
        %v3161 = vmax.f32 %v3159, %v3160
        %v3162 = vrot.slane %v3161, 1
        %v3163 = vmax.f32 %v3161, %v3162
        %v3164 = vsel %vm349, %v3138, -inf
        %v3165 = vrot.slane %v3164, 4
        %v3166 = vmax.f32 %v3164, %v3165
        %v3167 = vrot.slane %v3166, 2
        %v3168 = vmax.f32 %v3166, %v3167
        %v3169 = vrot.slane %v3168, 1
        %v3170 = vmax.f32 %v3168, %v3169
        %s3171 = sld [smem:[#allocation2 + $0x14]]
        %v3172 = vstv %s3171
        %v3173 = vmul.f32 %v3172, %v226
        %s3174 = sld [smem:[#allocation2 + $0x34]]
        %v3175 = vstv %s3174
        %v3176 = vmul.f32 %v3175, %v226
        %3178 = vrot.lane.b32.xlu0 %v3176, 127
        %v3179 = vpop.permute.xlu0 %3178
        %v3181 = vadd.f32 %v3173, %v3179
        %s3182 = sld [smem:[#allocation2 + $0x54]]
        %v3183 = vstv %s3182
        %v3184 = vmul.f32 %v3183, %v226
        %3186 = vrot.lane.b32.xlu0 %v3184, 126
        %v3187 = vpop.permute.xlu0 %3186
        %v3189 = vadd.f32 %v3181, %v3187
        %s3190 = sld [smem:[#allocation2 + $0x74]]
        %v3191 = vstv %s3190
        %v3192 = vmul.f32 %v3191, %v226
        %v3193 = vmul.f32 %v3191, %v227
        %v3196 = vrot.slane %v3192, 1
        %v3197 = vrot.slane %v3193, 1
        %v3198 = vsel %vm253, %v3196, %v3197
        %v3200 = vadd.f32 %v3189, %v3198
        %s3201 = sld [smem:[#allocation2 + $0x94]]
        %v3202 = vstv %s3201
        %v3203 = vmul.f32 %v3202, %v226
        %v3204 = vmul.f32 %v3202, %v227
        %v3207 = vrot.slane %v3203, 1
        %v3208 = vrot.slane %v3204, 1
        %v3209 = vsel %vm253, %v3207, %v3208
        %3210 = vrot.lane.b32.xlu0 %v3209, 127
        %v3211 = vpop.permute.xlu0 %3210
        %v3213 = vadd.f32 %v3200, %v3211
        %s3214 = sld [smem:[#allocation2 + $0xb4]]
        %v3215 = vstv %s3214
        %v3216 = vmul.f32 %v3215, %v226
        %v3217 = vmul.f32 %v3215, %v227
        %v3220 = vrot.slane %v3216, 1
        %v3221 = vrot.slane %v3217, 1
        %v3222 = vsel %vm253, %v3220, %v3221
        %3223 = vrot.lane.b32.xlu0 %v3222, 126
        %v3224 = vpop.permute.xlu0 %3223
        %v3226 = vadd.f32 %v3213, %v3224
        %s3227 = sld [smem:[#allocation2 + $0xd4]]
        %v3228 = vstv %s3227
        %v3229 = vmul.f32 %v3228, %v226
        %v3230 = vmul.f32 %v3228, %v227
        %v3233 = vrot.slane %v3229, 2
        %v3234 = vrot.slane %v3230, 2
        %v3235 = vsel %vm291, %v3233, %v3234
        %v3237 = vadd.f32 %v3226, %v3235
        %s3238 = sld [smem:[#allocation2 + $0xf4]]
        %v3239 = vstv %s3238
        %v3240 = vmul.f32 %v3239, %v226
        %v3241 = vmul.f32 %v3239, %v227
        %v3244 = vrot.slane %v3240, 2
        %v3245 = vrot.slane %v3241, 2
        %v3246 = vsel %vm291, %v3244, %v3245
        %3247 = vrot.lane.b32.xlu0 %v3246, 127
        %v3248 = vpop.permute.xlu0 %3247
        %v3250 = vadd.f32 %v3237, %v3248
        %s3251 = sld [smem:[#allocation2 + $0x114]]
        %v3252 = vstv %s3251
        %v3253 = vmul.f32 %v3252, %v226
        %v3254 = vmul.f32 %v3252, %v227
        %v3257 = vrot.slane %v3253, 2
        %v3258 = vrot.slane %v3254, 2
        %v3259 = vsel %vm291, %v3257, %v3258
        %3260 = vrot.lane.b32.xlu0 %v3259, 126
        %v3261 = vpop.permute.xlu0 %3260
        %v3263 = vadd.f32 %v3250, %v3261
        %s3264 = sld [smem:[#allocation4 + $0x14]]
        %v3265 = vstv %s3264
        %v3266 = vadd.f32 %v3263, %v3265
        %v3267 = vmax.f32 %v3266, 0.0
        %v3269 = vcombine.high %v3267, %v3267
        %v3271 = vunpack.c.l.s4 1983009808
        %v3272 = vunpack.c.0.s8 %v3271
        %v3273 = vlaneseq
        %v3274 = vshrl.u32 %v3273, 7
        %v3275 = vsub.s32 %v3272, %v3274
        %v3276 = vrot.slane %v3267, %v3275
        %v3278 = vunpack.c.l.s4 1983009808
        %v3279 = vunpack.c.0.s8 %v3278
        %v3280 = vlaneseq
        %v3281 = vshrl.u32 %v3280, 7
        %v3282 = vsub.s32 %v3279, %v3281
        %v3283 = vrot.slane %v3269, %v3282
        %v3284 = vcombine.high %v3276, %v3276
        %v3285 = vcombine.high %v3283, %v3283
        %v3290 = vsel %vm349, %v3276, -inf
        %v3291 = vrot.slane %v3290, 4
        %v3292 = vmax.f32 %v3290, %v3291
        %v3293 = vrot.slane %v3292, 2
        %v3294 = vmax.f32 %v3292, %v3293
        %v3295 = vrot.slane %v3294, 1
        %v3296 = vmax.f32 %v3294, %v3295
        %v3297 = vsel %vm349, %v3284, -inf
        %v3298 = vrot.slane %v3297, 4
        %v3299 = vmax.f32 %v3297, %v3298
        %v3300 = vrot.slane %v3299, 2
        %v3301 = vmax.f32 %v3299, %v3300
        %v3302 = vrot.slane %v3301, 1
        %v3303 = vmax.f32 %v3301, %v3302
        %v3304 = vsel %vm349, %v3283, -inf
        %v3305 = vrot.slane %v3304, 4
        %v3306 = vmax.f32 %v3304, %v3305
        %v3307 = vrot.slane %v3306, 2
        %v3308 = vmax.f32 %v3306, %v3307
        %v3309 = vrot.slane %v3308, 1
        %v3310 = vmax.f32 %v3308, %v3309
        %v3311 = vsel %vm349, %v3285, -inf
        %v3312 = vrot.slane %v3311, 4
        %v3313 = vmax.f32 %v3311, %v3312
        %v3314 = vrot.slane %v3313, 2
        %v3315 = vmax.f32 %v3313, %v3314
        %v3316 = vrot.slane %v3315, 1
        %v3317 = vmax.f32 %v3315, %v3316
        %s3318 = sld [smem:[#allocation2 + $0x15]]
        %v3319 = vstv %s3318
        %v3320 = vmul.f32 %v3319, %v226
        %s3321 = sld [smem:[#allocation2 + $0x35]]
        %v3322 = vstv %s3321
        %v3323 = vmul.f32 %v3322, %v226
        %3325 = vrot.lane.b32.xlu0 %v3323, 127
        %v3326 = vpop.permute.xlu0 %3325
        %v3328 = vadd.f32 %v3320, %v3326
        %s3329 = sld [smem:[#allocation2 + $0x55]]
        %v3330 = vstv %s3329
        %v3331 = vmul.f32 %v3330, %v226
        %3333 = vrot.lane.b32.xlu0 %v3331, 126
        %v3334 = vpop.permute.xlu0 %3333
        %v3336 = vadd.f32 %v3328, %v3334
        %s3337 = sld [smem:[#allocation2 + $0x75]]
        %v3338 = vstv %s3337
        %v3339 = vmul.f32 %v3338, %v226
        %v3340 = vmul.f32 %v3338, %v227
        %v3343 = vrot.slane %v3339, 1
        %v3344 = vrot.slane %v3340, 1
        %v3345 = vsel %vm253, %v3343, %v3344
        %v3347 = vadd.f32 %v3336, %v3345
        %s3348 = sld [smem:[#allocation2 + $0x95]]
        %v3349 = vstv %s3348
        %v3350 = vmul.f32 %v3349, %v226
        %v3351 = vmul.f32 %v3349, %v227
        %v3354 = vrot.slane %v3350, 1
        %v3355 = vrot.slane %v3351, 1
        %v3356 = vsel %vm253, %v3354, %v3355
        %3357 = vrot.lane.b32.xlu0 %v3356, 127
        %v3358 = vpop.permute.xlu0 %3357
        %v3360 = vadd.f32 %v3347, %v3358
        %s3361 = sld [smem:[#allocation2 + $0xb5]]
        %v3362 = vstv %s3361
        %v3363 = vmul.f32 %v3362, %v226
        %v3364 = vmul.f32 %v3362, %v227
        %v3367 = vrot.slane %v3363, 1
        %v3368 = vrot.slane %v3364, 1
        %v3369 = vsel %vm253, %v3367, %v3368
        %3370 = vrot.lane.b32.xlu0 %v3369, 126
        %v3371 = vpop.permute.xlu0 %3370
        %v3373 = vadd.f32 %v3360, %v3371
        %s3374 = sld [smem:[#allocation2 + $0xd5]]
        %v3375 = vstv %s3374
        %v3376 = vmul.f32 %v3375, %v226
        %v3377 = vmul.f32 %v3375, %v227
        %v3380 = vrot.slane %v3376, 2
        %v3381 = vrot.slane %v3377, 2
        %v3382 = vsel %vm291, %v3380, %v3381
        %v3384 = vadd.f32 %v3373, %v3382
        %s3385 = sld [smem:[#allocation2 + $0xf5]]
        %v3386 = vstv %s3385
        %v3387 = vmul.f32 %v3386, %v226
        %v3388 = vmul.f32 %v3386, %v227
        %v3391 = vrot.slane %v3387, 2
        %v3392 = vrot.slane %v3388, 2
        %v3393 = vsel %vm291, %v3391, %v3392
        %3394 = vrot.lane.b32.xlu0 %v3393, 127
        %v3395 = vpop.permute.xlu0 %3394
        %v3397 = vadd.f32 %v3384, %v3395
        %s3398 = sld [smem:[#allocation2 + $0x115]]
        %v3399 = vstv %s3398
        %v3400 = vmul.f32 %v3399, %v226
        %v3401 = vmul.f32 %v3399, %v227
        %v3404 = vrot.slane %v3400, 2
        %v3405 = vrot.slane %v3401, 2
        %v3406 = vsel %vm291, %v3404, %v3405
        %3407 = vrot.lane.b32.xlu0 %v3406, 126
        %v3408 = vpop.permute.xlu0 %3407
        %v3410 = vadd.f32 %v3397, %v3408
        %s3411 = sld [smem:[#allocation4 + $0x15]]
        %v3412 = vstv %s3411
        %v3413 = vadd.f32 %v3410, %v3412
        %v3414 = vmax.f32 %v3413, 0.0
        %v3416 = vcombine.high %v3414, %v3414
        %v3418 = vunpack.c.l.s4 1983009808
        %v3419 = vunpack.c.0.s8 %v3418
        %v3420 = vlaneseq
        %v3421 = vshrl.u32 %v3420, 7
        %v3422 = vsub.s32 %v3419, %v3421
        %v3423 = vrot.slane %v3414, %v3422
        %v3425 = vunpack.c.l.s4 1983009808
        %v3426 = vunpack.c.0.s8 %v3425
        %v3427 = vlaneseq
        %v3428 = vshrl.u32 %v3427, 7
        %v3429 = vsub.s32 %v3426, %v3428
        %v3430 = vrot.slane %v3416, %v3429
        %v3431 = vcombine.high %v3423, %v3423
        %v3432 = vcombine.high %v3430, %v3430
        %v3437 = vsel %vm349, %v3423, -inf
        %v3438 = vrot.slane %v3437, 4
        %v3439 = vmax.f32 %v3437, %v3438
        %v3440 = vrot.slane %v3439, 2
        %v3441 = vmax.f32 %v3439, %v3440
        %v3442 = vrot.slane %v3441, 1
        %v3443 = vmax.f32 %v3441, %v3442
        %v3444 = vsel %vm349, %v3431, -inf
        %v3445 = vrot.slane %v3444, 4
        %v3446 = vmax.f32 %v3444, %v3445
        %v3447 = vrot.slane %v3446, 2
        %v3448 = vmax.f32 %v3446, %v3447
        %v3449 = vrot.slane %v3448, 1
        %v3450 = vmax.f32 %v3448, %v3449
        %v3451 = vsel %vm349, %v3430, -inf
        %v3452 = vrot.slane %v3451, 4
        %v3453 = vmax.f32 %v3451, %v3452
        %v3454 = vrot.slane %v3453, 2
        %v3455 = vmax.f32 %v3453, %v3454
        %v3456 = vrot.slane %v3455, 1
        %v3457 = vmax.f32 %v3455, %v3456
        %v3458 = vsel %vm349, %v3432, -inf
        %v3459 = vrot.slane %v3458, 4
        %v3460 = vmax.f32 %v3458, %v3459
        %v3461 = vrot.slane %v3460, 2
        %v3462 = vmax.f32 %v3460, %v3461
        %v3463 = vrot.slane %v3462, 1
        %v3464 = vmax.f32 %v3462, %v3463
        %s3465 = sld [smem:[#allocation2 + $0x16]]
        %v3466 = vstv %s3465
        %v3467 = vmul.f32 %v3466, %v226
        %s3468 = sld [smem:[#allocation2 + $0x36]]
        %v3469 = vstv %s3468
        %v3470 = vmul.f32 %v3469, %v226
        %3472 = vrot.lane.b32.xlu0 %v3470, 127
        %v3473 = vpop.permute.xlu0 %3472
        %v3475 = vadd.f32 %v3467, %v3473
        %s3476 = sld [smem:[#allocation2 + $0x56]]
        %v3477 = vstv %s3476
        %v3478 = vmul.f32 %v3477, %v226
        %3480 = vrot.lane.b32.xlu0 %v3478, 126
        %v3481 = vpop.permute.xlu0 %3480
        %v3483 = vadd.f32 %v3475, %v3481
        %s3484 = sld [smem:[#allocation2 + $0x76]]
        %v3485 = vstv %s3484
        %v3486 = vmul.f32 %v3485, %v226
        %v3487 = vmul.f32 %v3485, %v227
        %v3490 = vrot.slane %v3486, 1
        %v3491 = vrot.slane %v3487, 1
        %v3492 = vsel %vm253, %v3490, %v3491
        %v3494 = vadd.f32 %v3483, %v3492
        %s3495 = sld [smem:[#allocation2 + $0x96]]
        %v3496 = vstv %s3495
        %v3497 = vmul.f32 %v3496, %v226
        %v3498 = vmul.f32 %v3496, %v227
        %v3501 = vrot.slane %v3497, 1
        %v3502 = vrot.slane %v3498, 1
        %v3503 = vsel %vm253, %v3501, %v3502
        %3504 = vrot.lane.b32.xlu0 %v3503, 127
        %v3505 = vpop.permute.xlu0 %3504
        %v3507 = vadd.f32 %v3494, %v3505
        %s3508 = sld [smem:[#allocation2 + $0xb6]]
        %v3509 = vstv %s3508
        %v3510 = vmul.f32 %v3509, %v226
        %v3511 = vmul.f32 %v3509, %v227
        %v3514 = vrot.slane %v3510, 1
        %v3515 = vrot.slane %v3511, 1
        %v3516 = vsel %vm253, %v3514, %v3515
        %3517 = vrot.lane.b32.xlu0 %v3516, 126
        %v3518 = vpop.permute.xlu0 %3517
        %v3520 = vadd.f32 %v3507, %v3518
        %s3521 = sld [smem:[#allocation2 + $0xd6]]
        %v3522 = vstv %s3521
        %v3523 = vmul.f32 %v3522, %v226
        %v3524 = vmul.f32 %v3522, %v227
        %v3527 = vrot.slane %v3523, 2
        %v3528 = vrot.slane %v3524, 2
        %v3529 = vsel %vm291, %v3527, %v3528
        %v3531 = vadd.f32 %v3520, %v3529
        %s3532 = sld [smem:[#allocation2 + $0xf6]]
        %v3533 = vstv %s3532
        %v3534 = vmul.f32 %v3533, %v226
        %v3535 = vmul.f32 %v3533, %v227
        %v3538 = vrot.slane %v3534, 2
        %v3539 = vrot.slane %v3535, 2
        %v3540 = vsel %vm291, %v3538, %v3539
        %3541 = vrot.lane.b32.xlu0 %v3540, 127
        %v3542 = vpop.permute.xlu0 %3541
        %v3544 = vadd.f32 %v3531, %v3542
        %s3545 = sld [smem:[#allocation2 + $0x116]]
        %v3546 = vstv %s3545
        %v3547 = vmul.f32 %v3546, %v226
        %v3548 = vmul.f32 %v3546, %v227
        %v3551 = vrot.slane %v3547, 2
        %v3552 = vrot.slane %v3548, 2
        %v3553 = vsel %vm291, %v3551, %v3552
        %3554 = vrot.lane.b32.xlu0 %v3553, 126
        %v3555 = vpop.permute.xlu0 %3554
        %v3557 = vadd.f32 %v3544, %v3555
        %s3558 = sld [smem:[#allocation4 + $0x16]]
        %v3559 = vstv %s3558
        %v3560 = vadd.f32 %v3557, %v3559
        %v3561 = vmax.f32 %v3560, 0.0
        %v3563 = vcombine.high %v3561, %v3561
        %v3565 = vunpack.c.l.s4 1983009808
        %v3566 = vunpack.c.0.s8 %v3565
        %v3567 = vlaneseq
        %v3568 = vshrl.u32 %v3567, 7
        %v3569 = vsub.s32 %v3566, %v3568
        %v3570 = vrot.slane %v3561, %v3569
        %v3572 = vunpack.c.l.s4 1983009808
        %v3573 = vunpack.c.0.s8 %v3572
        %v3574 = vlaneseq
        %v3575 = vshrl.u32 %v3574, 7
        %v3576 = vsub.s32 %v3573, %v3575
        %v3577 = vrot.slane %v3563, %v3576
        %v3578 = vcombine.high %v3570, %v3570
        %v3579 = vcombine.high %v3577, %v3577
        %v3584 = vsel %vm349, %v3570, -inf
        %v3585 = vrot.slane %v3584, 4
        %v3586 = vmax.f32 %v3584, %v3585
        %v3587 = vrot.slane %v3586, 2
        %v3588 = vmax.f32 %v3586, %v3587
        %v3589 = vrot.slane %v3588, 1
        %v3590 = vmax.f32 %v3588, %v3589
        %v3591 = vsel %vm349, %v3578, -inf
        %v3592 = vrot.slane %v3591, 4
        %v3593 = vmax.f32 %v3591, %v3592
        %v3594 = vrot.slane %v3593, 2
        %v3595 = vmax.f32 %v3593, %v3594
        %v3596 = vrot.slane %v3595, 1
        %v3597 = vmax.f32 %v3595, %v3596
        %v3598 = vsel %vm349, %v3577, -inf
        %v3599 = vrot.slane %v3598, 4
        %v3600 = vmax.f32 %v3598, %v3599
        %v3601 = vrot.slane %v3600, 2
        %v3602 = vmax.f32 %v3600, %v3601
        %v3603 = vrot.slane %v3602, 1
        %v3604 = vmax.f32 %v3602, %v3603
        %v3605 = vsel %vm349, %v3579, -inf
        %v3606 = vrot.slane %v3605, 4
        %v3607 = vmax.f32 %v3605, %v3606
        %v3608 = vrot.slane %v3607, 2
        %v3609 = vmax.f32 %v3607, %v3608
        %v3610 = vrot.slane %v3609, 1
        %v3611 = vmax.f32 %v3609, %v3610
        %s3612 = sld [smem:[#allocation2 + $0x17]]
        %v3613 = vstv %s3612
        %v3614 = vmul.f32 %v3613, %v226
        %s3615 = sld [smem:[#allocation2 + $0x37]]
        %v3616 = vstv %s3615
        %v3617 = vmul.f32 %v3616, %v226
        %3619 = vrot.lane.b32.xlu0 %v3617, 127
        %v3620 = vpop.permute.xlu0 %3619
        %v3622 = vadd.f32 %v3614, %v3620
        %s3623 = sld [smem:[#allocation2 + $0x57]]
        %v3624 = vstv %s3623
        %v3625 = vmul.f32 %v3624, %v226
        %3627 = vrot.lane.b32.xlu0 %v3625, 126
        %v3628 = vpop.permute.xlu0 %3627
        %v3630 = vadd.f32 %v3622, %v3628
        %s3631 = sld [smem:[#allocation2 + $0x77]]
        %v3632 = vstv %s3631
        %v3633 = vmul.f32 %v3632, %v226
        %v3634 = vmul.f32 %v3632, %v227
        %v3637 = vrot.slane %v3633, 1
        %v3638 = vrot.slane %v3634, 1
        %v3639 = vsel %vm253, %v3637, %v3638
        %v3641 = vadd.f32 %v3630, %v3639
        %s3642 = sld [smem:[#allocation2 + $0x97]]
        %v3643 = vstv %s3642
        %v3644 = vmul.f32 %v3643, %v226
        %v3645 = vmul.f32 %v3643, %v227
        %v3648 = vrot.slane %v3644, 1
        %v3649 = vrot.slane %v3645, 1
        %v3650 = vsel %vm253, %v3648, %v3649
        %3651 = vrot.lane.b32.xlu0 %v3650, 127
        %v3652 = vpop.permute.xlu0 %3651
        %v3654 = vadd.f32 %v3641, %v3652
        %s3655 = sld [smem:[#allocation2 + $0xb7]]
        %v3656 = vstv %s3655
        %v3657 = vmul.f32 %v3656, %v226
        %v3658 = vmul.f32 %v3656, %v227
        %v3661 = vrot.slane %v3657, 1
        %v3662 = vrot.slane %v3658, 1
        %v3663 = vsel %vm253, %v3661, %v3662
        %3664 = vrot.lane.b32.xlu0 %v3663, 126
        %v3665 = vpop.permute.xlu0 %3664
        %v3667 = vadd.f32 %v3654, %v3665
        %s3668 = sld [smem:[#allocation2 + $0xd7]]
        %v3669 = vstv %s3668
        %v3670 = vmul.f32 %v3669, %v226
        %v3671 = vmul.f32 %v3669, %v227
        %v3674 = vrot.slane %v3670, 2
        %v3675 = vrot.slane %v3671, 2
        %v3676 = vsel %vm291, %v3674, %v3675
        %v3678 = vadd.f32 %v3667, %v3676
        %s3679 = sld [smem:[#allocation2 + $0xf7]]
        %v3680 = vstv %s3679
        %v3681 = vmul.f32 %v3680, %v226
        %v3682 = vmul.f32 %v3680, %v227
        %v3685 = vrot.slane %v3681, 2
        %v3686 = vrot.slane %v3682, 2
        %v3687 = vsel %vm291, %v3685, %v3686
        %3688 = vrot.lane.b32.xlu0 %v3687, 127
        %v3689 = vpop.permute.xlu0 %3688
        %v3691 = vadd.f32 %v3678, %v3689
        %s3692 = sld [smem:[#allocation2 + $0x117]]
        %v3693 = vstv %s3692
        %v3694 = vmul.f32 %v3693, %v226
        %v3695 = vmul.f32 %v3693, %v227
        %v3698 = vrot.slane %v3694, 2
        %v3699 = vrot.slane %v3695, 2
        %v3700 = vsel %vm291, %v3698, %v3699
        %3701 = vrot.lane.b32.xlu0 %v3700, 126
        %v3702 = vpop.permute.xlu0 %3701
        %v3704 = vadd.f32 %v3691, %v3702
        %s3705 = sld [smem:[#allocation4 + $0x17]]
        %v3706 = vstv %s3705
        %v3707 = vadd.f32 %v3704, %v3706
        %v3708 = vmax.f32 %v3707, 0.0
        %v3710 = vcombine.high %v3708, %v3708
        %v3712 = vunpack.c.l.s4 1983009808
        %v3713 = vunpack.c.0.s8 %v3712
        %v3714 = vlaneseq
        %v3715 = vshrl.u32 %v3714, 7
        %v3716 = vsub.s32 %v3713, %v3715
        %v3717 = vrot.slane %v3708, %v3716
        %v3719 = vunpack.c.l.s4 1983009808
        %v3720 = vunpack.c.0.s8 %v3719
        %v3721 = vlaneseq
        %v3722 = vshrl.u32 %v3721, 7
        %v3723 = vsub.s32 %v3720, %v3722
        %v3724 = vrot.slane %v3710, %v3723
        %v3725 = vcombine.high %v3717, %v3717
        %v3726 = vcombine.high %v3724, %v3724
        %v3731 = vsel %vm349, %v3717, -inf
        %v3732 = vrot.slane %v3731, 4
        %v3733 = vmax.f32 %v3731, %v3732
        %v3734 = vrot.slane %v3733, 2
        %v3735 = vmax.f32 %v3733, %v3734
        %v3736 = vrot.slane %v3735, 1
        %v3737 = vmax.f32 %v3735, %v3736
        %v3738 = vsel %vm349, %v3725, -inf
        %v3739 = vrot.slane %v3738, 4
        %v3740 = vmax.f32 %v3738, %v3739
        %v3741 = vrot.slane %v3740, 2
        %v3742 = vmax.f32 %v3740, %v3741
        %v3743 = vrot.slane %v3742, 1
        %v3744 = vmax.f32 %v3742, %v3743
        %v3745 = vsel %vm349, %v3724, -inf
        %v3746 = vrot.slane %v3745, 4
        %v3747 = vmax.f32 %v3745, %v3746
        %v3748 = vrot.slane %v3747, 2
        %v3749 = vmax.f32 %v3747, %v3748
        %v3750 = vrot.slane %v3749, 1
        %v3751 = vmax.f32 %v3749, %v3750
        %v3752 = vsel %vm349, %v3726, -inf
        %v3753 = vrot.slane %v3752, 4
        %v3754 = vmax.f32 %v3752, %v3753
        %v3755 = vrot.slane %v3754, 2
        %v3756 = vmax.f32 %v3754, %v3755
        %v3757 = vrot.slane %v3756, 1
        %v3758 = vmax.f32 %v3756, %v3757
        %s3759 = sld [smem:[#allocation2 + $0x18]]
        %v3760 = vstv %s3759
        %v3761 = vmul.f32 %v3760, %v226
        %s3762 = sld [smem:[#allocation2 + $0x38]]
        %v3763 = vstv %s3762
        %v3764 = vmul.f32 %v3763, %v226
        %3766 = vrot.lane.b32.xlu0 %v3764, 127
        %v3767 = vpop.permute.xlu0 %3766
        %v3769 = vadd.f32 %v3761, %v3767
        %s3770 = sld [smem:[#allocation2 + $0x58]]
        %v3771 = vstv %s3770
        %v3772 = vmul.f32 %v3771, %v226
        %3774 = vrot.lane.b32.xlu0 %v3772, 126
        %v3775 = vpop.permute.xlu0 %3774
        %v3777 = vadd.f32 %v3769, %v3775
        %s3778 = sld [smem:[#allocation2 + $0x78]]
        %v3779 = vstv %s3778
        %v3780 = vmul.f32 %v3779, %v226
        %v3781 = vmul.f32 %v3779, %v227
        %v3784 = vrot.slane %v3780, 1
        %v3785 = vrot.slane %v3781, 1
        %v3786 = vsel %vm253, %v3784, %v3785
        %v3788 = vadd.f32 %v3777, %v3786
        %s3789 = sld [smem:[#allocation2 + $0x98]]
        %v3790 = vstv %s3789
        %v3791 = vmul.f32 %v3790, %v226
        %v3792 = vmul.f32 %v3790, %v227
        %v3795 = vrot.slane %v3791, 1
        %v3796 = vrot.slane %v3792, 1
        %v3797 = vsel %vm253, %v3795, %v3796
        %3798 = vrot.lane.b32.xlu0 %v3797, 127
        %v3799 = vpop.permute.xlu0 %3798
        %v3801 = vadd.f32 %v3788, %v3799
        %s3802 = sld [smem:[#allocation2 + $0xb8]]
        %v3803 = vstv %s3802
        %v3804 = vmul.f32 %v3803, %v226
        %v3805 = vmul.f32 %v3803, %v227
        %v3808 = vrot.slane %v3804, 1
        %v3809 = vrot.slane %v3805, 1
        %v3810 = vsel %vm253, %v3808, %v3809
        %3811 = vrot.lane.b32.xlu0 %v3810, 126
        %v3812 = vpop.permute.xlu0 %3811
        %v3814 = vadd.f32 %v3801, %v3812
        %s3815 = sld [smem:[#allocation2 + $0xd8]]
        %v3816 = vstv %s3815
        %v3817 = vmul.f32 %v3816, %v226
        %v3818 = vmul.f32 %v3816, %v227
        %v3821 = vrot.slane %v3817, 2
        %v3822 = vrot.slane %v3818, 2
        %v3823 = vsel %vm291, %v3821, %v3822
        %v3825 = vadd.f32 %v3814, %v3823
        %s3826 = sld [smem:[#allocation2 + $0xf8]]
        %v3827 = vstv %s3826
        %v3828 = vmul.f32 %v3827, %v226
        %v3829 = vmul.f32 %v3827, %v227
        %v3832 = vrot.slane %v3828, 2
        %v3833 = vrot.slane %v3829, 2
        %v3834 = vsel %vm291, %v3832, %v3833
        %3835 = vrot.lane.b32.xlu0 %v3834, 127
        %v3836 = vpop.permute.xlu0 %3835
        %v3838 = vadd.f32 %v3825, %v3836
        %s3839 = sld [smem:[#allocation2 + $0x118]]
        %v3840 = vstv %s3839
        %v3841 = vmul.f32 %v3840, %v226
        %v3842 = vmul.f32 %v3840, %v227
        %v3845 = vrot.slane %v3841, 2
        %v3846 = vrot.slane %v3842, 2
        %v3847 = vsel %vm291, %v3845, %v3846
        %3848 = vrot.lane.b32.xlu0 %v3847, 126
        %v3849 = vpop.permute.xlu0 %3848
        %v3851 = vadd.f32 %v3838, %v3849
        %s3852 = sld [smem:[#allocation4 + $0x18]]
        %v3853 = vstv %s3852
        %v3854 = vadd.f32 %v3851, %v3853
        %v3855 = vmax.f32 %v3854, 0.0
        %v3857 = vcombine.high %v3855, %v3855
        %v3859 = vunpack.c.l.s4 1983009808
        %v3860 = vunpack.c.0.s8 %v3859
        %v3861 = vlaneseq
        %v3862 = vshrl.u32 %v3861, 7
        %v3863 = vsub.s32 %v3860, %v3862
        %v3864 = vrot.slane %v3855, %v3863
        %v3866 = vunpack.c.l.s4 1983009808
        %v3867 = vunpack.c.0.s8 %v3866
        %v3868 = vlaneseq
        %v3869 = vshrl.u32 %v3868, 7
        %v3870 = vsub.s32 %v3867, %v3869
        %v3871 = vrot.slane %v3857, %v3870
        %v3872 = vcombine.high %v3864, %v3864
        %v3873 = vcombine.high %v3871, %v3871
        %v3878 = vsel %vm349, %v3864, -inf
        %v3879 = vrot.slane %v3878, 4
        %v3880 = vmax.f32 %v3878, %v3879
        %v3881 = vrot.slane %v3880, 2
        %v3882 = vmax.f32 %v3880, %v3881
        %v3883 = vrot.slane %v3882, 1
        %v3884 = vmax.f32 %v3882, %v3883
        %v3885 = vsel %vm349, %v3872, -inf
        %v3886 = vrot.slane %v3885, 4
        %v3887 = vmax.f32 %v3885, %v3886
        %v3888 = vrot.slane %v3887, 2
        %v3889 = vmax.f32 %v3887, %v3888
        %v3890 = vrot.slane %v3889, 1
        %v3891 = vmax.f32 %v3889, %v3890
        %v3892 = vsel %vm349, %v3871, -inf
        %v3893 = vrot.slane %v3892, 4
        %v3894 = vmax.f32 %v3892, %v3893
        %v3895 = vrot.slane %v3894, 2
        %v3896 = vmax.f32 %v3894, %v3895
        %v3897 = vrot.slane %v3896, 1
        %v3898 = vmax.f32 %v3896, %v3897
        %v3899 = vsel %vm349, %v3873, -inf
        %v3900 = vrot.slane %v3899, 4
        %v3901 = vmax.f32 %v3899, %v3900
        %v3902 = vrot.slane %v3901, 2
        %v3903 = vmax.f32 %v3901, %v3902
        %v3904 = vrot.slane %v3903, 1
        %v3905 = vmax.f32 %v3903, %v3904
        %s3906 = sld [smem:[#allocation2 + $0x19]]
        %v3907 = vstv %s3906
        %v3908 = vmul.f32 %v3907, %v226
        %s3909 = sld [smem:[#allocation2 + $0x39]]
        %v3910 = vstv %s3909
        %v3911 = vmul.f32 %v3910, %v226
        %3913 = vrot.lane.b32.xlu0 %v3911, 127
        %v3914 = vpop.permute.xlu0 %3913
        %v3916 = vadd.f32 %v3908, %v3914
        %s3917 = sld [smem:[#allocation2 + $0x59]]
        %v3918 = vstv %s3917
        %v3919 = vmul.f32 %v3918, %v226
        %3921 = vrot.lane.b32.xlu0 %v3919, 126
        %v3922 = vpop.permute.xlu0 %3921
        %v3924 = vadd.f32 %v3916, %v3922
        %s3925 = sld [smem:[#allocation2 + $0x79]]
        %v3926 = vstv %s3925
        %v3927 = vmul.f32 %v3926, %v226
        %v3928 = vmul.f32 %v3926, %v227
        %v3931 = vrot.slane %v3927, 1
        %v3932 = vrot.slane %v3928, 1
        %v3933 = vsel %vm253, %v3931, %v3932
        %v3935 = vadd.f32 %v3924, %v3933
        %s3936 = sld [smem:[#allocation2 + $0x99]]
        %v3937 = vstv %s3936
        %v3938 = vmul.f32 %v3937, %v226
        %v3939 = vmul.f32 %v3937, %v227
        %v3942 = vrot.slane %v3938, 1
        %v3943 = vrot.slane %v3939, 1
        %v3944 = vsel %vm253, %v3942, %v3943
        %3945 = vrot.lane.b32.xlu0 %v3944, 127
        %v3946 = vpop.permute.xlu0 %3945
        %v3948 = vadd.f32 %v3935, %v3946
        %s3949 = sld [smem:[#allocation2 + $0xb9]]
        %v3950 = vstv %s3949
        %v3951 = vmul.f32 %v3950, %v226
        %v3952 = vmul.f32 %v3950, %v227
        %v3955 = vrot.slane %v3951, 1
        %v3956 = vrot.slane %v3952, 1
        %v3957 = vsel %vm253, %v3955, %v3956
        %3958 = vrot.lane.b32.xlu0 %v3957, 126
        %v3959 = vpop.permute.xlu0 %3958
        %v3961 = vadd.f32 %v3948, %v3959
        %s3962 = sld [smem:[#allocation2 + $0xd9]]
        %v3963 = vstv %s3962
        %v3964 = vmul.f32 %v3963, %v226
        %v3965 = vmul.f32 %v3963, %v227
        %v3968 = vrot.slane %v3964, 2
        %v3969 = vrot.slane %v3965, 2
        %v3970 = vsel %vm291, %v3968, %v3969
        %v3972 = vadd.f32 %v3961, %v3970
        %s3973 = sld [smem:[#allocation2 + $0xf9]]
        %v3974 = vstv %s3973
        %v3975 = vmul.f32 %v3974, %v226
        %v3976 = vmul.f32 %v3974, %v227
        %v3979 = vrot.slane %v3975, 2
        %v3980 = vrot.slane %v3976, 2
        %v3981 = vsel %vm291, %v3979, %v3980
        %3982 = vrot.lane.b32.xlu0 %v3981, 127
        %v3983 = vpop.permute.xlu0 %3982
        %v3985 = vadd.f32 %v3972, %v3983
        %s3986 = sld [smem:[#allocation2 + $0x119]]
        %v3987 = vstv %s3986
        %v3988 = vmul.f32 %v3987, %v226
        %v3989 = vmul.f32 %v3987, %v227
        %v3992 = vrot.slane %v3988, 2
        %v3993 = vrot.slane %v3989, 2
        %v3994 = vsel %vm291, %v3992, %v3993
        %3995 = vrot.lane.b32.xlu0 %v3994, 126
        %v3996 = vpop.permute.xlu0 %3995
        %v3998 = vadd.f32 %v3985, %v3996
        %s3999 = sld [smem:[#allocation4 + $0x19]]
        %v4000 = vstv %s3999
        %v4001 = vadd.f32 %v3998, %v4000
        %v4002 = vmax.f32 %v4001, 0.0
        %v4004 = vcombine.high %v4002, %v4002
        %v4006 = vunpack.c.l.s4 1983009808
        %v4007 = vunpack.c.0.s8 %v4006
        %v4008 = vlaneseq
        %v4009 = vshrl.u32 %v4008, 7
        %v4010 = vsub.s32 %v4007, %v4009
        %v4011 = vrot.slane %v4002, %v4010
        %v4013 = vunpack.c.l.s4 1983009808
        %v4014 = vunpack.c.0.s8 %v4013
        %v4015 = vlaneseq
        %v4016 = vshrl.u32 %v4015, 7
        %v4017 = vsub.s32 %v4014, %v4016
        %v4018 = vrot.slane %v4004, %v4017
        %v4019 = vcombine.high %v4011, %v4011
        %v4020 = vcombine.high %v4018, %v4018
        %v4025 = vsel %vm349, %v4011, -inf
        %v4026 = vrot.slane %v4025, 4
        %v4027 = vmax.f32 %v4025, %v4026
        %v4028 = vrot.slane %v4027, 2
        %v4029 = vmax.f32 %v4027, %v4028
        %v4030 = vrot.slane %v4029, 1
        %v4031 = vmax.f32 %v4029, %v4030
        %v4032 = vsel %vm349, %v4019, -inf
        %v4033 = vrot.slane %v4032, 4
        %v4034 = vmax.f32 %v4032, %v4033
        %v4035 = vrot.slane %v4034, 2
        %v4036 = vmax.f32 %v4034, %v4035
        %v4037 = vrot.slane %v4036, 1
        %v4038 = vmax.f32 %v4036, %v4037
        %v4039 = vsel %vm349, %v4018, -inf
        %v4040 = vrot.slane %v4039, 4
        %v4041 = vmax.f32 %v4039, %v4040
        %v4042 = vrot.slane %v4041, 2
        %v4043 = vmax.f32 %v4041, %v4042
        %v4044 = vrot.slane %v4043, 1
        %v4045 = vmax.f32 %v4043, %v4044
        %v4046 = vsel %vm349, %v4020, -inf
        %v4047 = vrot.slane %v4046, 4
        %v4048 = vmax.f32 %v4046, %v4047
        %v4049 = vrot.slane %v4048, 2
        %v4050 = vmax.f32 %v4048, %v4049
        %v4051 = vrot.slane %v4050, 1
        %v4052 = vmax.f32 %v4050, %v4051
        %s4053 = sld [smem:[#allocation2 + $0x1a]]
        %v4054 = vstv %s4053
        %v4055 = vmul.f32 %v4054, %v226
        %s4056 = sld [smem:[#allocation2 + $0x3a]]
        %v4057 = vstv %s4056
        %v4058 = vmul.f32 %v4057, %v226
        %4060 = vrot.lane.b32.xlu0 %v4058, 127
        %v4061 = vpop.permute.xlu0 %4060
        %v4063 = vadd.f32 %v4055, %v4061
        %s4064 = sld [smem:[#allocation2 + $0x5a]]
        %v4065 = vstv %s4064
        %v4066 = vmul.f32 %v4065, %v226
        %4068 = vrot.lane.b32.xlu0 %v4066, 126
        %v4069 = vpop.permute.xlu0 %4068
        %v4071 = vadd.f32 %v4063, %v4069
        %s4072 = sld [smem:[#allocation2 + $0x7a]]
        %v4073 = vstv %s4072
        %v4074 = vmul.f32 %v4073, %v226
        %v4075 = vmul.f32 %v4073, %v227
        %v4078 = vrot.slane %v4074, 1
        %v4079 = vrot.slane %v4075, 1
        %v4080 = vsel %vm253, %v4078, %v4079
        %v4082 = vadd.f32 %v4071, %v4080
        %s4083 = sld [smem:[#allocation2 + $0x9a]]
        %v4084 = vstv %s4083
        %v4085 = vmul.f32 %v4084, %v226
        %v4086 = vmul.f32 %v4084, %v227
        %v4089 = vrot.slane %v4085, 1
        %v4090 = vrot.slane %v4086, 1
        %v4091 = vsel %vm253, %v4089, %v4090
        %4092 = vrot.lane.b32.xlu0 %v4091, 127
        %v4093 = vpop.permute.xlu0 %4092
        %v4095 = vadd.f32 %v4082, %v4093
        %s4096 = sld [smem:[#allocation2 + $0xba]]
        %v4097 = vstv %s4096
        %v4098 = vmul.f32 %v4097, %v226
        %v4099 = vmul.f32 %v4097, %v227
        %v4102 = vrot.slane %v4098, 1
        %v4103 = vrot.slane %v4099, 1
        %v4104 = vsel %vm253, %v4102, %v4103
        %4105 = vrot.lane.b32.xlu0 %v4104, 126
        %v4106 = vpop.permute.xlu0 %4105
        %v4108 = vadd.f32 %v4095, %v4106
        %s4109 = sld [smem:[#allocation2 + $0xda]]
        %v4110 = vstv %s4109
        %v4111 = vmul.f32 %v4110, %v226
        %v4112 = vmul.f32 %v4110, %v227
        %v4115 = vrot.slane %v4111, 2
        %v4116 = vrot.slane %v4112, 2
        %v4117 = vsel %vm291, %v4115, %v4116
        %v4119 = vadd.f32 %v4108, %v4117
        %s4120 = sld [smem:[#allocation2 + $0xfa]]
        %v4121 = vstv %s4120
        %v4122 = vmul.f32 %v4121, %v226
        %v4123 = vmul.f32 %v4121, %v227
        %v4126 = vrot.slane %v4122, 2
        %v4127 = vrot.slane %v4123, 2
        %v4128 = vsel %vm291, %v4126, %v4127
        %4129 = vrot.lane.b32.xlu0 %v4128, 127
        %v4130 = vpop.permute.xlu0 %4129
        %v4132 = vadd.f32 %v4119, %v4130
        %s4133 = sld [smem:[#allocation2 + $0x11a]]
        %v4134 = vstv %s4133
        %v4135 = vmul.f32 %v4134, %v226
        %v4136 = vmul.f32 %v4134, %v227
        %v4139 = vrot.slane %v4135, 2
        %v4140 = vrot.slane %v4136, 2
        %v4141 = vsel %vm291, %v4139, %v4140
        %4142 = vrot.lane.b32.xlu0 %v4141, 126
        %v4143 = vpop.permute.xlu0 %4142
        %v4145 = vadd.f32 %v4132, %v4143
        %s4146 = sld [smem:[#allocation4 + $0x1a]]
        %v4147 = vstv %s4146
        %v4148 = vadd.f32 %v4145, %v4147
        %v4149 = vmax.f32 %v4148, 0.0
        %v4151 = vcombine.high %v4149, %v4149
        %v4153 = vunpack.c.l.s4 1983009808
        %v4154 = vunpack.c.0.s8 %v4153
        %v4155 = vlaneseq
        %v4156 = vshrl.u32 %v4155, 7
        %v4157 = vsub.s32 %v4154, %v4156
        %v4158 = vrot.slane %v4149, %v4157
        %v4160 = vunpack.c.l.s4 1983009808
        %v4161 = vunpack.c.0.s8 %v4160
        %v4162 = vlaneseq
        %v4163 = vshrl.u32 %v4162, 7
        %v4164 = vsub.s32 %v4161, %v4163
        %v4165 = vrot.slane %v4151, %v4164
        %v4166 = vcombine.high %v4158, %v4158
        %v4167 = vcombine.high %v4165, %v4165
        %v4172 = vsel %vm349, %v4158, -inf
        %v4173 = vrot.slane %v4172, 4
        %v4174 = vmax.f32 %v4172, %v4173
        %v4175 = vrot.slane %v4174, 2
        %v4176 = vmax.f32 %v4174, %v4175
        %v4177 = vrot.slane %v4176, 1
        %v4178 = vmax.f32 %v4176, %v4177
        %v4179 = vsel %vm349, %v4166, -inf
        %v4180 = vrot.slane %v4179, 4
        %v4181 = vmax.f32 %v4179, %v4180
        %v4182 = vrot.slane %v4181, 2
        %v4183 = vmax.f32 %v4181, %v4182
        %v4184 = vrot.slane %v4183, 1
        %v4185 = vmax.f32 %v4183, %v4184
        %v4186 = vsel %vm349, %v4165, -inf
        %v4187 = vrot.slane %v4186, 4
        %v4188 = vmax.f32 %v4186, %v4187
        %v4189 = vrot.slane %v4188, 2
        %v4190 = vmax.f32 %v4188, %v4189
        %v4191 = vrot.slane %v4190, 1
        %v4192 = vmax.f32 %v4190, %v4191
        %v4193 = vsel %vm349, %v4167, -inf
        %v4194 = vrot.slane %v4193, 4
        %v4195 = vmax.f32 %v4193, %v4194
        %v4196 = vrot.slane %v4195, 2
        %v4197 = vmax.f32 %v4195, %v4196
        %v4198 = vrot.slane %v4197, 1
        %v4199 = vmax.f32 %v4197, %v4198
        %s4200 = sld [smem:[#allocation2 + $0x1b]]
        %v4201 = vstv %s4200
        %v4202 = vmul.f32 %v4201, %v226
        %s4203 = sld [smem:[#allocation2 + $0x3b]]
        %v4204 = vstv %s4203
        %v4205 = vmul.f32 %v4204, %v226
        %4207 = vrot.lane.b32.xlu0 %v4205, 127
        %v4208 = vpop.permute.xlu0 %4207
        %v4210 = vadd.f32 %v4202, %v4208
        %s4211 = sld [smem:[#allocation2 + $0x5b]]
        %v4212 = vstv %s4211
        %v4213 = vmul.f32 %v4212, %v226
        %4215 = vrot.lane.b32.xlu0 %v4213, 126
        %v4216 = vpop.permute.xlu0 %4215
        %v4218 = vadd.f32 %v4210, %v4216
        %s4219 = sld [smem:[#allocation2 + $0x7b]]
        %v4220 = vstv %s4219
        %v4221 = vmul.f32 %v4220, %v226
        %v4222 = vmul.f32 %v4220, %v227
        %v4225 = vrot.slane %v4221, 1
        %v4226 = vrot.slane %v4222, 1
        %v4227 = vsel %vm253, %v4225, %v4226
        %v4229 = vadd.f32 %v4218, %v4227
        %s4230 = sld [smem:[#allocation2 + $0x9b]]
        %v4231 = vstv %s4230
        %v4232 = vmul.f32 %v4231, %v226
        %v4233 = vmul.f32 %v4231, %v227
        %v4236 = vrot.slane %v4232, 1
        %v4237 = vrot.slane %v4233, 1
        %v4238 = vsel %vm253, %v4236, %v4237
        %4239 = vrot.lane.b32.xlu0 %v4238, 127
        %v4240 = vpop.permute.xlu0 %4239
        %v4242 = vadd.f32 %v4229, %v4240
        %s4243 = sld [smem:[#allocation2 + $0xbb]]
        %v4244 = vstv %s4243
        %v4245 = vmul.f32 %v4244, %v226
        %v4246 = vmul.f32 %v4244, %v227
        %v4249 = vrot.slane %v4245, 1
        %v4250 = vrot.slane %v4246, 1
        %v4251 = vsel %vm253, %v4249, %v4250
        %4252 = vrot.lane.b32.xlu0 %v4251, 126
        %v4253 = vpop.permute.xlu0 %4252
        %v4255 = vadd.f32 %v4242, %v4253
        %s4256 = sld [smem:[#allocation2 + $0xdb]]
        %v4257 = vstv %s4256
        %v4258 = vmul.f32 %v4257, %v226
        %v4259 = vmul.f32 %v4257, %v227
        %v4262 = vrot.slane %v4258, 2
        %v4263 = vrot.slane %v4259, 2
        %v4264 = vsel %vm291, %v4262, %v4263
        %v4266 = vadd.f32 %v4255, %v4264
        %s4267 = sld [smem:[#allocation2 + $0xfb]]
        %v4268 = vstv %s4267
        %v4269 = vmul.f32 %v4268, %v226
        %v4270 = vmul.f32 %v4268, %v227
        %v4273 = vrot.slane %v4269, 2
        %v4274 = vrot.slane %v4270, 2
        %v4275 = vsel %vm291, %v4273, %v4274
        %4276 = vrot.lane.b32.xlu0 %v4275, 127
        %v4277 = vpop.permute.xlu0 %4276
        %v4279 = vadd.f32 %v4266, %v4277
        %s4280 = sld [smem:[#allocation2 + $0x11b]]
        %v4281 = vstv %s4280
        %v4282 = vmul.f32 %v4281, %v226
        %v4283 = vmul.f32 %v4281, %v227
        %v4286 = vrot.slane %v4282, 2
        %v4287 = vrot.slane %v4283, 2
        %v4288 = vsel %vm291, %v4286, %v4287
        %4289 = vrot.lane.b32.xlu0 %v4288, 126
        %v4290 = vpop.permute.xlu0 %4289
        %v4292 = vadd.f32 %v4279, %v4290
        %s4293 = sld [smem:[#allocation4 + $0x1b]]
        %v4294 = vstv %s4293
        %v4295 = vadd.f32 %v4292, %v4294
        %v4296 = vmax.f32 %v4295, 0.0
        %v4298 = vcombine.high %v4296, %v4296
        %v4300 = vunpack.c.l.s4 1983009808
        %v4301 = vunpack.c.0.s8 %v4300
        %v4302 = vlaneseq
        %v4303 = vshrl.u32 %v4302, 7
        %v4304 = vsub.s32 %v4301, %v4303
        %v4305 = vrot.slane %v4296, %v4304
        %v4307 = vunpack.c.l.s4 1983009808
        %v4308 = vunpack.c.0.s8 %v4307
        %v4309 = vlaneseq
        %v4310 = vshrl.u32 %v4309, 7
        %v4311 = vsub.s32 %v4308, %v4310
        %v4312 = vrot.slane %v4298, %v4311
        %v4313 = vcombine.high %v4305, %v4305
        %v4314 = vcombine.high %v4312, %v4312
        %v4319 = vsel %vm349, %v4305, -inf
        %v4320 = vrot.slane %v4319, 4
        %v4321 = vmax.f32 %v4319, %v4320
        %v4322 = vrot.slane %v4321, 2
        %v4323 = vmax.f32 %v4321, %v4322
        %v4324 = vrot.slane %v4323, 1
        %v4325 = vmax.f32 %v4323, %v4324
        %v4326 = vsel %vm349, %v4313, -inf
        %v4327 = vrot.slane %v4326, 4
        %v4328 = vmax.f32 %v4326, %v4327
        %v4329 = vrot.slane %v4328, 2
        %v4330 = vmax.f32 %v4328, %v4329
        %v4331 = vrot.slane %v4330, 1
        %v4332 = vmax.f32 %v4330, %v4331
        %v4333 = vsel %vm349, %v4312, -inf
        %v4334 = vrot.slane %v4333, 4
        %v4335 = vmax.f32 %v4333, %v4334
        %v4336 = vrot.slane %v4335, 2
        %v4337 = vmax.f32 %v4335, %v4336
        %v4338 = vrot.slane %v4337, 1
        %v4339 = vmax.f32 %v4337, %v4338
        %v4340 = vsel %vm349, %v4314, -inf
        %v4341 = vrot.slane %v4340, 4
        %v4342 = vmax.f32 %v4340, %v4341
        %v4343 = vrot.slane %v4342, 2
        %v4344 = vmax.f32 %v4342, %v4343
        %v4345 = vrot.slane %v4344, 1
        %v4346 = vmax.f32 %v4344, %v4345
        %s4347 = sld [smem:[#allocation2 + $0x1c]]
        %v4348 = vstv %s4347
        %v4349 = vmul.f32 %v4348, %v226
        %s4350 = sld [smem:[#allocation2 + $0x3c]]
        %v4351 = vstv %s4350
        %v4352 = vmul.f32 %v4351, %v226
        %4354 = vrot.lane.b32.xlu0 %v4352, 127
        %v4355 = vpop.permute.xlu0 %4354
        %v4357 = vadd.f32 %v4349, %v4355
        %s4358 = sld [smem:[#allocation2 + $0x5c]]
        %v4359 = vstv %s4358
        %v4360 = vmul.f32 %v4359, %v226
        %4362 = vrot.lane.b32.xlu0 %v4360, 126
        %v4363 = vpop.permute.xlu0 %4362
        %v4365 = vadd.f32 %v4357, %v4363
        %s4366 = sld [smem:[#allocation2 + $0x7c]]
        %v4367 = vstv %s4366
        %v4368 = vmul.f32 %v4367, %v226
        %v4369 = vmul.f32 %v4367, %v227
        %v4372 = vrot.slane %v4368, 1
        %v4373 = vrot.slane %v4369, 1
        %v4374 = vsel %vm253, %v4372, %v4373
        %v4376 = vadd.f32 %v4365, %v4374
        %s4377 = sld [smem:[#allocation2 + $0x9c]]
        %v4378 = vstv %s4377
        %v4379 = vmul.f32 %v4378, %v226
        %v4380 = vmul.f32 %v4378, %v227
        %v4383 = vrot.slane %v4379, 1
        %v4384 = vrot.slane %v4380, 1
        %v4385 = vsel %vm253, %v4383, %v4384
        %4386 = vrot.lane.b32.xlu0 %v4385, 127
        %v4387 = vpop.permute.xlu0 %4386
        %v4389 = vadd.f32 %v4376, %v4387
        %s4390 = sld [smem:[#allocation2 + $0xbc]]
        %v4391 = vstv %s4390
        %v4392 = vmul.f32 %v4391, %v226
        %v4393 = vmul.f32 %v4391, %v227
        %v4396 = vrot.slane %v4392, 1
        %v4397 = vrot.slane %v4393, 1
        %v4398 = vsel %vm253, %v4396, %v4397
        %4399 = vrot.lane.b32.xlu0 %v4398, 126
        %v4400 = vpop.permute.xlu0 %4399
        %v4402 = vadd.f32 %v4389, %v4400
        %s4403 = sld [smem:[#allocation2 + $0xdc]]
        %v4404 = vstv %s4403
        %v4405 = vmul.f32 %v4404, %v226
        %v4406 = vmul.f32 %v4404, %v227
        %v4409 = vrot.slane %v4405, 2
        %v4410 = vrot.slane %v4406, 2
        %v4411 = vsel %vm291, %v4409, %v4410
        %v4413 = vadd.f32 %v4402, %v4411
        %s4414 = sld [smem:[#allocation2 + $0xfc]]
        %v4415 = vstv %s4414
        %v4416 = vmul.f32 %v4415, %v226
        %v4417 = vmul.f32 %v4415, %v227
        %v4420 = vrot.slane %v4416, 2
        %v4421 = vrot.slane %v4417, 2
        %v4422 = vsel %vm291, %v4420, %v4421
        %4423 = vrot.lane.b32.xlu0 %v4422, 127
        %v4424 = vpop.permute.xlu0 %4423
        %v4426 = vadd.f32 %v4413, %v4424
        %s4427 = sld [smem:[#allocation2 + $0x11c]]
        %v4428 = vstv %s4427
        %v4429 = vmul.f32 %v4428, %v226
        %v4430 = vmul.f32 %v4428, %v227
        %v4433 = vrot.slane %v4429, 2
        %v4434 = vrot.slane %v4430, 2
        %v4435 = vsel %vm291, %v4433, %v4434
        %4436 = vrot.lane.b32.xlu0 %v4435, 126
        %v4437 = vpop.permute.xlu0 %4436
        %v4439 = vadd.f32 %v4426, %v4437
        %s4440 = sld [smem:[#allocation4 + $0x1c]]
        %v4441 = vstv %s4440
        %v4442 = vadd.f32 %v4439, %v4441
        %v4443 = vmax.f32 %v4442, 0.0
        %v4445 = vcombine.high %v4443, %v4443
        %v4447 = vunpack.c.l.s4 1983009808
        %v4448 = vunpack.c.0.s8 %v4447
        %v4449 = vlaneseq
        %v4450 = vshrl.u32 %v4449, 7
        %v4451 = vsub.s32 %v4448, %v4450
        %v4452 = vrot.slane %v4443, %v4451
        %v4454 = vunpack.c.l.s4 1983009808
        %v4455 = vunpack.c.0.s8 %v4454
        %v4456 = vlaneseq
        %v4457 = vshrl.u32 %v4456, 7
        %v4458 = vsub.s32 %v4455, %v4457
        %v4459 = vrot.slane %v4445, %v4458
        %v4460 = vcombine.high %v4452, %v4452
        %v4461 = vcombine.high %v4459, %v4459
        %v4466 = vsel %vm349, %v4452, -inf
        %v4467 = vrot.slane %v4466, 4
        %v4468 = vmax.f32 %v4466, %v4467
        %v4469 = vrot.slane %v4468, 2
        %v4470 = vmax.f32 %v4468, %v4469
        %v4471 = vrot.slane %v4470, 1
        %v4472 = vmax.f32 %v4470, %v4471
        %v4473 = vsel %vm349, %v4460, -inf
        %v4474 = vrot.slane %v4473, 4
        %v4475 = vmax.f32 %v4473, %v4474
        %v4476 = vrot.slane %v4475, 2
        %v4477 = vmax.f32 %v4475, %v4476
        %v4478 = vrot.slane %v4477, 1
        %v4479 = vmax.f32 %v4477, %v4478
        %v4480 = vsel %vm349, %v4459, -inf
        %v4481 = vrot.slane %v4480, 4
        %v4482 = vmax.f32 %v4480, %v4481
        %v4483 = vrot.slane %v4482, 2
        %v4484 = vmax.f32 %v4482, %v4483
        %v4485 = vrot.slane %v4484, 1
        %v4486 = vmax.f32 %v4484, %v4485
        %v4487 = vsel %vm349, %v4461, -inf
        %v4488 = vrot.slane %v4487, 4
        %v4489 = vmax.f32 %v4487, %v4488
        %v4490 = vrot.slane %v4489, 2
        %v4491 = vmax.f32 %v4489, %v4490
        %v4492 = vrot.slane %v4491, 1
        %v4493 = vmax.f32 %v4491, %v4492
        %s4494 = sld [smem:[#allocation2 + $0x1d]]
        %v4495 = vstv %s4494
        %v4496 = vmul.f32 %v4495, %v226
        %s4497 = sld [smem:[#allocation2 + $0x3d]]
        %v4498 = vstv %s4497
        %v4499 = vmul.f32 %v4498, %v226
        %4501 = vrot.lane.b32.xlu0 %v4499, 127
        %v4502 = vpop.permute.xlu0 %4501
        %v4504 = vadd.f32 %v4496, %v4502
        %s4505 = sld [smem:[#allocation2 + $0x5d]]
        %v4506 = vstv %s4505
        %v4507 = vmul.f32 %v4506, %v226
        %4509 = vrot.lane.b32.xlu0 %v4507, 126
        %v4510 = vpop.permute.xlu0 %4509
        %v4512 = vadd.f32 %v4504, %v4510
        %s4513 = sld [smem:[#allocation2 + $0x7d]]
        %v4514 = vstv %s4513
        %v4515 = vmul.f32 %v4514, %v226
        %v4516 = vmul.f32 %v4514, %v227
        %v4519 = vrot.slane %v4515, 1
        %v4520 = vrot.slane %v4516, 1
        %v4521 = vsel %vm253, %v4519, %v4520
        %v4523 = vadd.f32 %v4512, %v4521
        %s4524 = sld [smem:[#allocation2 + $0x9d]]
        %v4525 = vstv %s4524
        %v4526 = vmul.f32 %v4525, %v226
        %v4527 = vmul.f32 %v4525, %v227
        %v4530 = vrot.slane %v4526, 1
        %v4531 = vrot.slane %v4527, 1
        %v4532 = vsel %vm253, %v4530, %v4531
        %4533 = vrot.lane.b32.xlu0 %v4532, 127
        %v4534 = vpop.permute.xlu0 %4533
        %v4536 = vadd.f32 %v4523, %v4534
        %s4537 = sld [smem:[#allocation2 + $0xbd]]
        %v4538 = vstv %s4537
        %v4539 = vmul.f32 %v4538, %v226
        %v4540 = vmul.f32 %v4538, %v227
        %v4543 = vrot.slane %v4539, 1
        %v4544 = vrot.slane %v4540, 1
        %v4545 = vsel %vm253, %v4543, %v4544
        %4546 = vrot.lane.b32.xlu0 %v4545, 126
        %v4547 = vpop.permute.xlu0 %4546
        %v4549 = vadd.f32 %v4536, %v4547
        %s4550 = sld [smem:[#allocation2 + $0xdd]]
        %v4551 = vstv %s4550
        %v4552 = vmul.f32 %v4551, %v226
        %v4553 = vmul.f32 %v4551, %v227
        %v4556 = vrot.slane %v4552, 2
        %v4557 = vrot.slane %v4553, 2
        %v4558 = vsel %vm291, %v4556, %v4557
        %v4560 = vadd.f32 %v4549, %v4558
        %s4561 = sld [smem:[#allocation2 + $0xfd]]
        %v4562 = vstv %s4561
        %v4563 = vmul.f32 %v4562, %v226
        %v4564 = vmul.f32 %v4562, %v227
        %v4567 = vrot.slane %v4563, 2
        %v4568 = vrot.slane %v4564, 2
        %v4569 = vsel %vm291, %v4567, %v4568
        %4570 = vrot.lane.b32.xlu0 %v4569, 127
        %v4571 = vpop.permute.xlu0 %4570
        %v4573 = vadd.f32 %v4560, %v4571
        %s4574 = sld [smem:[#allocation2 + $0x11d]]
        %v4575 = vstv %s4574
        %v4576 = vmul.f32 %v4575, %v226
        %v4577 = vmul.f32 %v4575, %v227
        %v4580 = vrot.slane %v4576, 2
        %v4581 = vrot.slane %v4577, 2
        %v4582 = vsel %vm291, %v4580, %v4581
        %4583 = vrot.lane.b32.xlu0 %v4582, 126
        %v4584 = vpop.permute.xlu0 %4583
        %v4586 = vadd.f32 %v4573, %v4584
        %s4587 = sld [smem:[#allocation4 + $0x1d]]
        %v4588 = vstv %s4587
        %v4589 = vadd.f32 %v4586, %v4588
        %v4590 = vmax.f32 %v4589, 0.0
        %v4592 = vcombine.high %v4590, %v4590
        %v4594 = vunpack.c.l.s4 1983009808
        %v4595 = vunpack.c.0.s8 %v4594
        %v4596 = vlaneseq
        %v4597 = vshrl.u32 %v4596, 7
        %v4598 = vsub.s32 %v4595, %v4597
        %v4599 = vrot.slane %v4590, %v4598
        %v4601 = vunpack.c.l.s4 1983009808
        %v4602 = vunpack.c.0.s8 %v4601
        %v4603 = vlaneseq
        %v4604 = vshrl.u32 %v4603, 7
        %v4605 = vsub.s32 %v4602, %v4604
        %v4606 = vrot.slane %v4592, %v4605
        %v4607 = vcombine.high %v4599, %v4599
        %v4608 = vcombine.high %v4606, %v4606
        %v4613 = vsel %vm349, %v4599, -inf
        %v4614 = vrot.slane %v4613, 4
        %v4615 = vmax.f32 %v4613, %v4614
        %v4616 = vrot.slane %v4615, 2
        %v4617 = vmax.f32 %v4615, %v4616
        %v4618 = vrot.slane %v4617, 1
        %v4619 = vmax.f32 %v4617, %v4618
        %v4620 = vsel %vm349, %v4607, -inf
        %v4621 = vrot.slane %v4620, 4
        %v4622 = vmax.f32 %v4620, %v4621
        %v4623 = vrot.slane %v4622, 2
        %v4624 = vmax.f32 %v4622, %v4623
        %v4625 = vrot.slane %v4624, 1
        %v4626 = vmax.f32 %v4624, %v4625
        %v4627 = vsel %vm349, %v4606, -inf
        %v4628 = vrot.slane %v4627, 4
        %v4629 = vmax.f32 %v4627, %v4628
        %v4630 = vrot.slane %v4629, 2
        %v4631 = vmax.f32 %v4629, %v4630
        %v4632 = vrot.slane %v4631, 1
        %v4633 = vmax.f32 %v4631, %v4632
        %v4634 = vsel %vm349, %v4608, -inf
        %v4635 = vrot.slane %v4634, 4
        %v4636 = vmax.f32 %v4634, %v4635
        %v4637 = vrot.slane %v4636, 2
        %v4638 = vmax.f32 %v4636, %v4637
        %v4639 = vrot.slane %v4638, 1
        %v4640 = vmax.f32 %v4638, %v4639
        %s4641 = sld [smem:[#allocation2 + $0x1e]]
        %v4642 = vstv %s4641
        %v4643 = vmul.f32 %v4642, %v226
        %s4644 = sld [smem:[#allocation2 + $0x3e]]
        %v4645 = vstv %s4644
        %v4646 = vmul.f32 %v4645, %v226
        %4648 = vrot.lane.b32.xlu0 %v4646, 127
        %v4649 = vpop.permute.xlu0 %4648
        %v4651 = vadd.f32 %v4643, %v4649
        %s4652 = sld [smem:[#allocation2 + $0x5e]]
        %v4653 = vstv %s4652
        %v4654 = vmul.f32 %v4653, %v226
        %4656 = vrot.lane.b32.xlu0 %v4654, 126
        %v4657 = vpop.permute.xlu0 %4656
        %v4659 = vadd.f32 %v4651, %v4657
        %s4660 = sld [smem:[#allocation2 + $0x7e]]
        %v4661 = vstv %s4660
        %v4662 = vmul.f32 %v4661, %v226
        %v4663 = vmul.f32 %v4661, %v227
        %v4666 = vrot.slane %v4662, 1
        %v4667 = vrot.slane %v4663, 1
        %v4668 = vsel %vm253, %v4666, %v4667
        %v4670 = vadd.f32 %v4659, %v4668
        %s4671 = sld [smem:[#allocation2 + $0x9e]]
        %v4672 = vstv %s4671
        %v4673 = vmul.f32 %v4672, %v226
        %v4674 = vmul.f32 %v4672, %v227
        %v4677 = vrot.slane %v4673, 1
        %v4678 = vrot.slane %v4674, 1
        %v4679 = vsel %vm253, %v4677, %v4678
        %4680 = vrot.lane.b32.xlu0 %v4679, 127
        %v4681 = vpop.permute.xlu0 %4680
        %v4683 = vadd.f32 %v4670, %v4681
        %s4684 = sld [smem:[#allocation2 + $0xbe]]
        %v4685 = vstv %s4684
        %v4686 = vmul.f32 %v4685, %v226
        %v4687 = vmul.f32 %v4685, %v227
        %v4690 = vrot.slane %v4686, 1
        %v4691 = vrot.slane %v4687, 1
        %v4692 = vsel %vm253, %v4690, %v4691
        %4693 = vrot.lane.b32.xlu0 %v4692, 126
        %v4694 = vpop.permute.xlu0 %4693
        %v4696 = vadd.f32 %v4683, %v4694
        %s4697 = sld [smem:[#allocation2 + $0xde]]
        %v4698 = vstv %s4697
        %v4699 = vmul.f32 %v4698, %v226
        %v4700 = vmul.f32 %v4698, %v227
        %v4703 = vrot.slane %v4699, 2
        %v4704 = vrot.slane %v4700, 2
        %v4705 = vsel %vm291, %v4703, %v4704
        %v4707 = vadd.f32 %v4696, %v4705
        %s4708 = sld [smem:[#allocation2 + $0xfe]]
        %v4709 = vstv %s4708
        %v4710 = vmul.f32 %v4709, %v226
        %v4711 = vmul.f32 %v4709, %v227
        %v4714 = vrot.slane %v4710, 2
        %v4715 = vrot.slane %v4711, 2
        %v4716 = vsel %vm291, %v4714, %v4715
        %4717 = vrot.lane.b32.xlu0 %v4716, 127
        %v4718 = vpop.permute.xlu0 %4717
        %v4720 = vadd.f32 %v4707, %v4718
        %s4721 = sld [smem:[#allocation2 + $0x11e]]
        %v4722 = vstv %s4721
        %v4723 = vmul.f32 %v4722, %v226
        %v4724 = vmul.f32 %v4722, %v227
        %v4727 = vrot.slane %v4723, 2
        %v4728 = vrot.slane %v4724, 2
        %v4729 = vsel %vm291, %v4727, %v4728
        %4730 = vrot.lane.b32.xlu0 %v4729, 126
        %v4731 = vpop.permute.xlu0 %4730
        %v4733 = vadd.f32 %v4720, %v4731
        %s4734 = sld [smem:[#allocation4 + $0x1e]]
        %v4735 = vstv %s4734
        %v4736 = vadd.f32 %v4733, %v4735
        %v4737 = vmax.f32 %v4736, 0.0
        %v4739 = vcombine.high %v4737, %v4737
        %v4741 = vunpack.c.l.s4 1983009808
        %v4742 = vunpack.c.0.s8 %v4741
        %v4743 = vlaneseq
        %v4744 = vshrl.u32 %v4743, 7
        %v4745 = vsub.s32 %v4742, %v4744
        %v4746 = vrot.slane %v4737, %v4745
        %v4748 = vunpack.c.l.s4 1983009808
        %v4749 = vunpack.c.0.s8 %v4748
        %v4750 = vlaneseq
        %v4751 = vshrl.u32 %v4750, 7
        %v4752 = vsub.s32 %v4749, %v4751
        %v4753 = vrot.slane %v4739, %v4752
        %v4754 = vcombine.high %v4746, %v4746
        %v4755 = vcombine.high %v4753, %v4753
        %v4760 = vsel %vm349, %v4746, -inf
        %v4761 = vrot.slane %v4760, 4
        %v4762 = vmax.f32 %v4760, %v4761
        %v4763 = vrot.slane %v4762, 2
        %v4764 = vmax.f32 %v4762, %v4763
        %v4765 = vrot.slane %v4764, 1
        %v4766 = vmax.f32 %v4764, %v4765
        %v4767 = vsel %vm349, %v4754, -inf
        %v4768 = vrot.slane %v4767, 4
        %v4769 = vmax.f32 %v4767, %v4768
        %v4770 = vrot.slane %v4769, 2
        %v4771 = vmax.f32 %v4769, %v4770
        %v4772 = vrot.slane %v4771, 1
        %v4773 = vmax.f32 %v4771, %v4772
        %v4774 = vsel %vm349, %v4753, -inf
        %v4775 = vrot.slane %v4774, 4
        %v4776 = vmax.f32 %v4774, %v4775
        %v4777 = vrot.slane %v4776, 2
        %v4778 = vmax.f32 %v4776, %v4777
        %v4779 = vrot.slane %v4778, 1
        %v4780 = vmax.f32 %v4778, %v4779
        %v4781 = vsel %vm349, %v4755, -inf
        %v4782 = vrot.slane %v4781, 4
        %v4783 = vmax.f32 %v4781, %v4782
        %v4784 = vrot.slane %v4783, 2
        %v4785 = vmax.f32 %v4783, %v4784
        %v4786 = vrot.slane %v4785, 1
        %v4787 = vmax.f32 %v4785, %v4786
        %s4788 = sld [smem:[#allocation2 + $0x1f]]
        %v4789 = vstv %s4788
        %v4790 = vmul.f32 %v4789, %v226
        %s4791 = sld [smem:[#allocation2 + $0x3f]]
        %v4792 = vstv %s4791
        %v4793 = vmul.f32 %v4792, %v226
        %4795 = vrot.lane.b32.xlu0 %v4793, 127
        %v4796 = vpop.permute.xlu0 %4795
        %v4798 = vadd.f32 %v4790, %v4796
        %s4799 = sld [smem:[#allocation2 + $0x5f]]
        %v4800 = vstv %s4799
        %v4801 = vmul.f32 %v4800, %v226
        %4803 = vrot.lane.b32.xlu0 %v4801, 126
        %v4804 = vpop.permute.xlu0 %4803
        %v4806 = vadd.f32 %v4798, %v4804
        %s4807 = sld [smem:[#allocation2 + $0x7f]]
        %v4808 = vstv %s4807
        %v4809 = vmul.f32 %v4808, %v226
        %v4810 = vmul.f32 %v4808, %v227
        %v4813 = vrot.slane %v4809, 1
        %v4814 = vrot.slane %v4810, 1
        %v4815 = vsel %vm253, %v4813, %v4814
        %v4817 = vadd.f32 %v4806, %v4815
        %s4818 = sld [smem:[#allocation2 + $0x9f]]
        %v4819 = vstv %s4818
        %v4820 = vmul.f32 %v4819, %v226
        %v4821 = vmul.f32 %v4819, %v227
        %v4824 = vrot.slane %v4820, 1
        %v4825 = vrot.slane %v4821, 1
        %v4826 = vsel %vm253, %v4824, %v4825
        %4827 = vrot.lane.b32.xlu0 %v4826, 127
        %v4828 = vpop.permute.xlu0 %4827
        %v4830 = vadd.f32 %v4817, %v4828
        %s4831 = sld [smem:[#allocation2 + $0xbf]]
        %v4832 = vstv %s4831
        %v4833 = vmul.f32 %v4832, %v226
        %v4834 = vmul.f32 %v4832, %v227
        %v4837 = vrot.slane %v4833, 1
        %v4838 = vrot.slane %v4834, 1
        %v4839 = vsel %vm253, %v4837, %v4838
        %4840 = vrot.lane.b32.xlu0 %v4839, 126
        %v4841 = vpop.permute.xlu0 %4840
        %v4843 = vadd.f32 %v4830, %v4841
        %s4844 = sld [smem:[#allocation2 + $0xdf]]
        %v4845 = vstv %s4844
        %v4846 = vmul.f32 %v4845, %v226
        %v4847 = vmul.f32 %v4845, %v227
        %v4850 = vrot.slane %v4846, 2
        %v4851 = vrot.slane %v4847, 2
        %v4852 = vsel %vm291, %v4850, %v4851
        %v4854 = vadd.f32 %v4843, %v4852
        %s4855 = sld [smem:[#allocation2 + $0xff]]
        %v4856 = vstv %s4855
        %v4857 = vmul.f32 %v4856, %v226
        %v4858 = vmul.f32 %v4856, %v227
        %v4861 = vrot.slane %v4857, 2
        %v4862 = vrot.slane %v4858, 2
        %v4863 = vsel %vm291, %v4861, %v4862
        %4864 = vrot.lane.b32.xlu0 %v4863, 127
        %v4865 = vpop.permute.xlu0 %4864
        %v4867 = vadd.f32 %v4854, %v4865
        %s4868 = sld [smem:[#allocation2 + $0x11f]]
        %v4869 = vstv %s4868
        %v4870 = vmul.f32 %v4869, %v226
        %v4871 = vmul.f32 %v4869, %v227
        %v4874 = vrot.slane %v4870, 2
        %v4875 = vrot.slane %v4871, 2
        %v4876 = vsel %vm291, %v4874, %v4875
        %4877 = vrot.lane.b32.xlu0 %v4876, 126
        %v4878 = vpop.permute.xlu0 %4877
        %v4880 = vadd.f32 %v4867, %v4878
        %s4881 = sld [smem:[#allocation4 + $0x1f]]
        %v4882 = vstv %s4881
        %v4883 = vadd.f32 %v4880, %v4882
        %v4884 = vmax.f32 %v4883, 0.0
        %v4886 = vcombine.high %v4884, %v4884
        %v4888 = vunpack.c.l.s4 1983009808
        %v4889 = vunpack.c.0.s8 %v4888
        %v4890 = vlaneseq
        %v4891 = vshrl.u32 %v4890, 7
        %v4892 = vsub.s32 %v4889, %v4891
        %v4893 = vrot.slane %v4884, %v4892
        %v4895 = vunpack.c.l.s4 1983009808
        %v4896 = vunpack.c.0.s8 %v4895
        %v4897 = vlaneseq
        %v4898 = vshrl.u32 %v4897, 7
        %v4899 = vsub.s32 %v4896, %v4898
        %v4900 = vrot.slane %v4886, %v4899
        %v4901 = vcombine.high %v4893, %v4893
        %v4902 = vcombine.high %v4900, %v4900
        %v4907 = vsel %vm349, %v4893, -inf
        %v4908 = vrot.slane %v4907, 4
        %v4909 = vmax.f32 %v4907, %v4908
        %v4910 = vrot.slane %v4909, 2
        %v4911 = vmax.f32 %v4909, %v4910
        %v4912 = vrot.slane %v4911, 1
        %v4913 = vmax.f32 %v4911, %v4912
        %v4914 = vsel %vm349, %v4901, -inf
        %v4915 = vrot.slane %v4914, 4
        %v4916 = vmax.f32 %v4914, %v4915
        %v4917 = vrot.slane %v4916, 2
        %v4918 = vmax.f32 %v4916, %v4917
        %v4919 = vrot.slane %v4918, 1
        %v4920 = vmax.f32 %v4918, %v4919
        %v4921 = vsel %vm349, %v4900, -inf
        %v4922 = vrot.slane %v4921, 4
        %v4923 = vmax.f32 %v4921, %v4922
        %v4924 = vrot.slane %v4923, 2
        %v4925 = vmax.f32 %v4923, %v4924
        %v4926 = vrot.slane %v4925, 1
        %v4927 = vmax.f32 %v4925, %v4926
        %v4928 = vsel %vm349, %v4902, -inf
        %v4929 = vrot.slane %v4928, 4
        %v4930 = vmax.f32 %v4928, %v4929
        %v4931 = vrot.slane %v4930, 2
        %v4932 = vmax.f32 %v4930, %v4931
        %v4933 = vrot.slane %v4932, 1
        %v4934 = vmax.f32 %v4932, %v4933
        %vm4939 = vcmask 1041409
        %v4940 = vsel %vm4939, %v363, %v356
        %vm4941 = vcmask 1042434
        %v4942 = vsel %vm4941, %v370, %v4940
        %vm4943 = vcmask 1043459
        %v4944 = vsel %vm4943, %v377, %v4942
        %vm4950 = vcmask 1045509
        %v4951 = vsel %vm4950, %v510, %v503
        %vm4952 = vcmask 1046534
        %v4953 = vsel %vm4952, %v517, %v4951
        %vm4954 = vcmask 1047559
        %v4955 = vsel %vm4954, %v524, %v4953
        %v4961 = vsel %vm4939, %v657, %v650
        %v4962 = vsel %vm4941, %v664, %v4961
        %v4963 = vsel %vm4943, %v671, %v4962
        %v4969 = vsel %vm4950, %v804, %v797
        %v4970 = vsel %vm4952, %v811, %v4969
        %v4971 = vsel %vm4954, %v818, %v4970
        %v4977 = vsel %vm4939, %v951, %v944
        %v4978 = vsel %vm4941, %v958, %v4977
        %v4979 = vsel %vm4943, %v965, %v4978
        %v4985 = vsel %vm4950, %v1098, %v1091
        %v4986 = vsel %vm4952, %v1105, %v4985
        %v4987 = vsel %vm4954, %v1112, %v4986
        %v4993 = vsel %vm4939, %v1245, %v1238
        %v4994 = vsel %vm4941, %v1252, %v4993
        %v4995 = vsel %vm4943, %v1259, %v4994
        %v5001 = vsel %vm4950, %v1392, %v1385
        %v5002 = vsel %vm4952, %v1399, %v5001
        %v5003 = vsel %vm4954, %v1406, %v5002
        %v5009 = vsel %vm4939, %v1539, %v1532
        %v5010 = vsel %vm4941, %v1546, %v5009
        %v5011 = vsel %vm4943, %v1553, %v5010
        %v5017 = vsel %vm4950, %v1686, %v1679
        %v5018 = vsel %vm4952, %v1693, %v5017
        %v5019 = vsel %vm4954, %v1700, %v5018
        %v5025 = vsel %vm4939, %v1833, %v1826
        %v5026 = vsel %vm4941, %v1840, %v5025
        %v5027 = vsel %vm4943, %v1847, %v5026
        %v5033 = vsel %vm4950, %v1980, %v1973
        %v5034 = vsel %vm4952, %v1987, %v5033
        %v5035 = vsel %vm4954, %v1994, %v5034
        %v5041 = vsel %vm4939, %v2127, %v2120
        %v5042 = vsel %vm4941, %v2134, %v5041
        %v5043 = vsel %vm4943, %v2141, %v5042
        %v5049 = vsel %vm4950, %v2274, %v2267
        %v5050 = vsel %vm4952, %v2281, %v5049
        %v5051 = vsel %vm4954, %v2288, %v5050
        %v5057 = vsel %vm4939, %v2421, %v2414
        %v5058 = vsel %vm4941, %v2428, %v5057
        %v5059 = vsel %vm4943, %v2435, %v5058
        %v5065 = vsel %vm4950, %v2568, %v2561
        %v5066 = vsel %vm4952, %v2575, %v5065
        %v5067 = vsel %vm4954, %v2582, %v5066
        %vm5069 = vcmask 1043456
        %v5070 = vsel %vm5069, %v4944, %v4955
        %v5071 = vsel %vm5069, %v4963, %v4971
        %v5072 = vsel %vm5069, %v4979, %v4987
        %v5073 = vsel %vm5069, %v4995, %v5003
        %v5074 = vsel %vm5069, %v5011, %v5019
        %v5075 = vsel %vm5069, %v5027, %v5035
        %v5076 = vsel %vm5069, %v5043, %v5051
        %v5077 = vsel %vm5069, %v5059, %v5067
        %v5082 = vsel %vm4939, %v2715, %v2708
        %v5083 = vsel %vm4941, %v2722, %v5082
        %v5084 = vsel %vm4943, %v2729, %v5083
        %v5090 = vsel %vm4950, %v2862, %v2855
        %v5091 = vsel %vm4952, %v2869, %v5090
        %v5092 = vsel %vm4954, %v2876, %v5091
        %v5098 = vsel %vm4939, %v3009, %v3002
        %v5099 = vsel %vm4941, %v3016, %v5098
        %v5100 = vsel %vm4943, %v3023, %v5099
        %v5106 = vsel %vm4950, %v3156, %v3149
        %v5107 = vsel %vm4952, %v3163, %v5106
        %v5108 = vsel %vm4954, %v3170, %v5107
        %v5114 = vsel %vm4939, %v3303, %v3296
        %v5115 = vsel %vm4941, %v3310, %v5114
        %v5116 = vsel %vm4943, %v3317, %v5115
        %v5122 = vsel %vm4950, %v3450, %v3443
        %v5123 = vsel %vm4952, %v3457, %v5122
        %v5124 = vsel %vm4954, %v3464, %v5123
        %v5130 = vsel %vm4939, %v3597, %v3590
        %v5131 = vsel %vm4941, %v3604, %v5130
        %v5132 = vsel %vm4943, %v3611, %v5131
        %v5138 = vsel %vm4950, %v3744, %v3737
        %v5139 = vsel %vm4952, %v3751, %v5138
        %v5140 = vsel %vm4954, %v3758, %v5139
        %v5146 = vsel %vm4939, %v3891, %v3884
        %v5147 = vsel %vm4941, %v3898, %v5146
        %v5148 = vsel %vm4943, %v3905, %v5147
        %v5154 = vsel %vm4950, %v4038, %v4031
        %v5155 = vsel %vm4952, %v4045, %v5154
        %v5156 = vsel %vm4954, %v4052, %v5155
        %v5162 = vsel %vm4939, %v4185, %v4178
        %v5163 = vsel %vm4941, %v4192, %v5162
        %v5164 = vsel %vm4943, %v4199, %v5163
        %v5170 = vsel %vm4950, %v4332, %v4325
        %v5171 = vsel %vm4952, %v4339, %v5170
        %v5172 = vsel %vm4954, %v4346, %v5171
        %v5178 = vsel %vm4939, %v4479, %v4472
        %v5179 = vsel %vm4941, %v4486, %v5178
        %v5180 = vsel %vm4943, %v4493, %v5179
        %v5186 = vsel %vm4950, %v4626, %v4619
        %v5187 = vsel %vm4952, %v4633, %v5186
        %v5188 = vsel %vm4954, %v4640, %v5187
        %v5194 = vsel %vm4939, %v4773, %v4766
        %v5195 = vsel %vm4941, %v4780, %v5194
        %v5196 = vsel %vm4943, %v4787, %v5195
        %v5202 = vsel %vm4950, %v4920, %v4913
        %v5203 = vsel %vm4952, %v4927, %v5202
        %v5204 = vsel %vm4954, %v4934, %v5203
        %v5206 = vsel %vm5069, %v5084, %v5092
        %v5207 = vsel %vm5069, %v5100, %v5108
        %v5208 = vsel %vm5069, %v5116, %v5124
        %v5209 = vsel %vm5069, %v5132, %v5140
        %v5210 = vsel %vm5069, %v5148, %v5156
        %v5211 = vsel %vm5069, %v5164, %v5172
        %v5212 = vsel %vm5069, %v5180, %v5188
        %v5213 = vsel %vm5069, %v5196, %v5204
        %5214 = vxpose.xlu0.b32.start [1/16] %v5070, 128
        %5215 = vxpose.xlu0.b32.cont [2/16] %v5071, 128
        %5216 = vxpose.xlu0.b32.cont [3/16] %v5072, 128
        %5217 = vxpose.xlu0.b32.cont [4/16] %v5073, 128
        %5218 = vxpose.xlu0.b32.cont [5/16] %v5074, 128
        %5219 = vxpose.xlu0.b32.cont [6/16] %v5075, 128
        %5220 = vxpose.xlu0.b32.cont [7/16] %v5076, 128
        %5221 = vxpose.xlu0.b32.cont [8/16] %v5077, 128
        %5222 = vxpose.xlu0.b32.cont [9/16] %v5206, 128
        %5223 = vxpose.xlu0.b32.cont [10/16] %v5207, 128
        %5224 = vxpose.xlu0.b32.cont [11/16] %v5208, 128
        %5225 = vxpose.xlu0.b32.cont [12/16] %v5209, 128
        %5226 = vxpose.xlu0.b32.cont [13/16] %v5210, 128
        %5227 = vxpose.xlu0.b32.cont [14/16] %v5211, 128
        %5228 = vxpose.xlu0.b32.cont [15/16] %v5212, 128
        %5229 = vxpose.xlu0.b32.end [16/16] %v5213, 128
        %v5230 = vpop.trf.xlu0
        %v5231 = vpop.trf.xlu0
        %v5232 = vpop.trf.xlu0
        %v5233 = vpop.trf.xlu0
        %v5234 = vpop.trf.xlu0
        %v5235 = vpop.trf.xlu0
        %v5236 = vpop.trf.xlu0
        %v5237 = vpop.trf.xlu0
        %v5238 = vpop.trf.xlu0
        %v5239 = vpop.trf.xlu0
        %v5240 = vpop.trf.xlu0
        %v5241 = vpop.trf.xlu0
        %v5242 = vpop.trf.xlu0
        %v5243 = vpop.trf.xlu0
        %v5244 = vpop.trf.xlu0
        %v5245 = vpop.trf.xlu0
        %v5246 = vpack.c.bf16 %v5230, %v5230
        %5247 = vst [vmem:[%s225] sm:$0xf] %v5246
        %p5248 = scmp.lt.s32.totalorder %s20, 1
        %s5249 = scalar_select %p5248, %s20, 1
        %p5250 = scmp.lt.s32.totalorder %s21, 0
        %s5251 = scalar_select %p5250, %s21, 0
        %s5252 = sadd.s32 %s5251, %s5249
        %s5253 = smul.addr %s5252, 4
        %s5254 = scalar_lea.vmem %s3, %s5253
        // Predicated region
        $region41: #{asr_forward.4} parent=31 // pred_check
          %p5255 = pneg %p118
        $region42: #{asr_forward.4} parent=31 // pred_check_branch
          %5257 = sbr.rel (%p5255) target = $region44
        $region43: #{asr_forward.4} parent=31 // pred_region
          _
        $region44: #{asr_forward.4} parent=31 // pred_fallthru
          _
      $region32: #{asr_forward.4} parent=5 // pred_fallthru
        _
      %p5258 = scmp.le.s32.totalorder 2, %s11
      // Predicated region
      $region45: #{asr_forward.4} parent=5 // pred_check
        %p5259 = pneg %p5258
      $region46: #{asr_forward.4} parent=5 // pred_check_branch
        %5261 = sbr.rel (%p5259) target = $region48
      $region47: #{asr_forward.4} parent=5 // pred_region
        %s5262 = ssub.s32 %s11, 2
        // Predicated region
        $region49: #{asr_forward.4} parent=47 // pred_check
          %p5263 = pneg %p124
        $region50: #{asr_forward.4} parent=47 // pred_check_branch
          %5265 = sbr.rel (%p5263) target = $region52
        $region51: #{asr_forward.4} parent=47 // pred_region
          %p5266 = scmp.lt.s32.totalorder %s22, 1
          %s5267 = scalar_select %p5266, %s22, 1
          %p5268 = scmp.lt.s32.totalorder %s23, 0
          %s5269 = scalar_select %p5268, %s23, 0
          %s5270 = sadd.s32 %s5269, %s5267
          %s5271 = smul.addr %s5270, 4
          %s5272 = scalar_lea.vmem %s3, %s5271
        $region52: #{asr_forward.4} parent=47 // pred_fallthru
          _
      $region48: #{asr_forward.4} parent=5 // pred_fallthru
        _
    $region6: #{asr_forward.4} parent=1 // loop_footer
      %s15 = sadd.s32 1, %s11
    $region7: #{asr_forward.4} parent=1 // loop_footer_branch
      %10 = sbr.rel target = $region3
    $region8: #{asr_forward.4} parent=1 // loop_exit
      _
    %5273 = vsyncpa [#allocation3], 1
    %s5274 = scalar_lea.sflag [#allocation3], 1
    %5275 = vsyncpa %s5274, 1
    %5276 = vsyncpa [#allocation5], 1

</llo_original>
